<compile_context>
chip_gen: v7x
topology: tpu7x:2x2x1
jax: 0.10.0
libtpu: 0.0.40
codegen_flags: <defaults>
</compile_context>

<pallas_src>
import math
from functools import partial

import jax
import jax.numpy as jnp
from jax import lax
from jax.experimental import pallas as pl
from jax.experimental.pallas import tpu as pltpu

F32 = jnp.float32
BF16 = jnp.bfloat16
I32 = jnp.int32
LN_EPS = 1e-5   # torch.nn.LayerNorm default eps
VN_EPS = 1e-6   # EPS in VNLeakyReLU

WEIGHT_ORDER = (
    "gv4_w1", "gv4_w2", "gv4_ws", "gv4_gw", "gv4_gb",
    "gve_w1", "gve_w2", "gve_ws", "gve_gw", "gve_gb",
    "e_act_wd", "act_wd", "es_w", "es_b", "n2e_w", "n2e_b",
    "evn_w", "evn_b", "w_ee", "ln_sca", "ln_vec",
)


# ----------------------------------------------------------------------------
# In-kernel building blocks (values are f32, MXU matmuls run in bf16/f32-acc)
# ----------------------------------------------------------------------------
def _mxu(a, b):
    return jnp.dot(a.astype(BF16), b.astype(BF16), preferred_element_type=F32)


def _gvlinear(sca, vecf, m, w1, w2, ws, gw, gb):
    """GVLinear on flat vectors.  sca: (m, in_s); vecf: (3m, in_v).

    ws is the fused [ws_v ; ws_s] so the scalar output is a single
    [vnorm || sca] matmul.
    """
    vh = _mxu(vecf, w1)                                    # (3m, h)
    vx, vy, vz = vh[0:m], vh[m:2 * m], vh[2 * m:]
    vnorm = jnp.sqrt(vx * vx + vy * vy + vz * vz)          # (m, h)
    out_sca = _mxu(jnp.concatenate([vnorm, sca], axis=-1), ws)   # (m, out_s)
    gate = jax.nn.sigmoid(_mxu(out_sca, gw) + gb)          # (m, out_v)
    vout = _mxu(vh, w2)                                    # (3m, out_v)
    vout = jnp.concatenate(
        [vout[0:m] * gate, vout[m:2 * m] * gate, vout[2 * m:] * gate], axis=0)
    return out_sca, vout


def _gv_act(sca, vecf, m, wd):
    """Scalar LeakyReLU(0.01) + VNLeakyReLU(0.2) on flat (3m, c) vectors."""
    sca_out = jnp.where(sca >= 0.0, sca, 0.01 * sca)
    d = _mxu(vecf, wd)                                     # map_to_dir, (3m, c)
    v0, v1, v2 = vecf[0:m], vecf[m:2 * m], vecf[2 * m:]
    d0, d1, d2 = d[0:m], d[m:2 * m], d[2 * m:]
    dotp = v0 * d0 + v1 * d1 + v2 * d2
    dsq = d0 * d0 + d1 * d1 + d2 * d2
    mask = (dotp >= 0.0).astype(F32)
    coef = dotp / (dsq + VN_EPS)

    def leak(v_a, d_a):
        return 0.2 * v_a + 0.8 * (mask * v_a + (1.0 - mask) * (v_a - coef * d_a))

    vec_out = jnp.concatenate([leak(v0, d0), leak(v1, d1), leak(v2, d2)], axis=0)
    return sca_out, vec_out


# ----------------------------------------------------------------------------
# Whole-encoder fused kernel: grid = (num_blocks, num_edge_tiles)
# ----------------------------------------------------------------------------
def _make_encoder_kernel(npad, s, v, ec, te):
    def kernel(node_ref, eslab_ref, row_ref,
               gv4_w1, gv4_w2, gv4_ws, gv4_gw, gv4_gb,
               gve_w1, gve_w2, gve_ws, gve_gw, gve_gb,
               e_act_wd, act_wd, es_w, es_b, n2e_w, n2e_b, evn_w, evn_b,
               w_ee, ln_sca, ln_vec,
               out_ref, st_sca, st_vec, nslab, acc):
        b = pl.program_id(0)
        t = pl.program_id(1)
        nb = pl.num_programs(0)
        nt = pl.num_programs(1)

        # gv4 index: 0=node_gvlinear, 1=out_gvlinear, 2=centroid_lin, 3=out_transform
        def gv4(k):
            return (gv4_w1[0, k], gv4_w2[0, k], gv4_ws[0, k],
                    gv4_gw[0, k], gv4_gb[0, k])

        # -------- one-time init of the persistent node state (VMEM scratch) ----
        @pl.when(jnp.logical_and(b == 0, t == 0))
        def _():
            slab = node_ref[...]                                    # (N, S+3V)
            st_sca[...] = slab[:, :s]
            st_vec[...] = jnp.concatenate(
                [slab[:, s:s + v], slab[:, s + v:s + 2 * v],
                 slab[:, s + 2 * v:s + 3 * v]], axis=0)             # (3N, V)

        # -------- per block: node_gvlinear on resident state + zero accumulator -
        @pl.when(t == 0)
        def _():
            n_sca, n_vec = _gvlinear(st_sca[...], st_vec[...], npad, *gv4(0))
            nslab[...] = jnp.concatenate(
                [n_sca, n_vec[0:npad], n_vec[npad:2 * npad], n_vec[2 * npad:]],
                axis=-1)                                            # (N, S+3V)
            acc[...] = jnp.zeros_like(acc)

        # -------- per edge tile: message module + fused gather / scatter -------
        eslab = eslab_ref[...]                                      # (TE, EC+5)
        e_feat = eslab[:, :ec]
        cw = eslab[:, ec + 3:ec + 4]                                # (TE, 1)
        col = eslab[:, ec + 4:ec + 5].astype(I32)                   # (TE, 1)

        # gather of the target-node feature slab via a bf16 one-hot matmul
        col_oh = (col == lax.broadcasted_iota(I32, (te, npad), 1))
        col_oh = col_oh.astype(F32).astype(BF16)                    # (TE, N)
        gath = jnp.dot(col_oh, nslab[...].astype(BF16),
                       preferred_element_type=F32)                  # (TE, S+3V)
        ns_j = gath[:, :s]

        # EdgeExpansion: unit edge vector outer-product with Linear(1, EC)
        w_ee0 = w_ee[0]                                             # (1, EC)
        evf = jnp.concatenate(
            [eslab[:, ec + a:ec + a + 1] * w_ee0 for a in range(3)], axis=0)

        e_sca, e_vec = _gvlinear(e_feat, evf, te, gve_w1[0], gve_w2[0],
                                 gve_ws[0], gve_gw[0], gve_gb[0])
        e_sca, e_vec = _gv_act(e_sca, e_vec, te, e_act_wd[0])

        # sca_linear and e2n_linear share the e_sca LHS -> single fused matmul
        es = _mxu(e_sca, es_w[0]) + es_b[0]                         # (TE, S+V)
        y_sca = ns_j * es[:, :s]
        g_e2n = es[:, s:]
        g_n2e = _mxu(ns_j, n2e_w[0]) + n2e_b[0]                     # (TE, V)
        ev_vn = _mxu(e_vec, evn_w[0]) + evn_b[0]                    # (3TE, V)
        y_vec = jnp.concatenate(
            [g_e2n * gath[:, s + a * v:s + (a + 1) * v]
             + g_n2e * ev_vn[a * te:(a + 1) * te] for a in range(3)], axis=0)

        m_sca, m_vec = _gvlinear(y_sca, y_vec, te, *gv4(1))

        # cosine-cutoff weighted scatter-sum over row via bf16 one-hot matmul
        msg = jnp.concatenate(
            [m_sca * cw, m_vec[0:te] * cw, m_vec[te:2 * te] * cw,
             m_vec[2 * te:] * cw], axis=-1).astype(BF16)            # (TE, S+3V)
        row_oh = (row_ref[...] == lax.broadcasted_iota(I32, (npad, te), 0))
        row_oh = row_oh.astype(F32).astype(BF16)                    # (N, TE)
        acc[...] += jnp.dot(row_oh, msg, preferred_element_type=F32)

        # -------- per block finalize: centroid + LayerNorms + out_transform ----
        @pl.when(t == nt - 1)
        def _():
            sca0 = st_sca[...]
            vec0 = st_vec[...]
            c_sca, c_vec = _gvlinear(sca0, vec0, npad, *gv4(2))
            accv = acc[...]
            agg_sca = accv[:, :s] + c_sca
            aggv = [accv[:, s + k * v:s + (k + 1) * v]
                    + c_vec[k * npad:(k + 1) * npad] for k in range(3)]

            ln = ln_sca[0]                                          # (2, S)
            mu = jnp.mean(agg_sca, axis=-1, keepdims=True)
            var = jnp.mean((agg_sca - mu) ** 2, axis=-1, keepdims=True)
            h_sca = (agg_sca - mu) * lax.rsqrt(var + LN_EPS) * ln[0:1] + ln[1:2]

            lnv = ln_vec[0]                                         # (6, V)
            n_elem = 3.0 * v                       # torch LayerNorm([V, 3])
            vsum = aggv[0] + aggv[1] + aggv[2]
            vmu = jnp.sum(vsum, axis=-1, keepdims=True) / n_elem
            dev = [av - vmu for av in aggv]
            vvar = (jnp.sum(dev[0] * dev[0], -1, keepdims=True)
                    + jnp.sum(dev[1] * dev[1], -1, keepdims=True)
                    + jnp.sum(dev[2] * dev[2], -1, keepdims=True)) / n_elem
            inv = lax.rsqrt(vvar + LN_EPS)
            h_vec = jnp.concatenate(
                [dev[k] * inv * lnv[k:k + 1] + lnv[3 + k:4 + k] for k in range(3)],
                axis=0)                                             # (3N, V)

            a_sca, a_vec = _gv_act(h_sca, h_vec, npad, act_wd[0])
            d_sca, d_vec = _gvlinear(a_sca, a_vec, npad, *gv4(3))

            st_sca[...] = sca0 + d_sca                              # residual
            st_vec[...] = vec0 + d_vec

        # -------- write the final node state once, as one lane-dense slab ------
        @pl.when(jnp.logical_and(b == nb - 1, t == nt - 1))
        def _():
            sv = st_vec[...]
            out_ref[...] = jnp.concatenate(
                [st_sca[...], sv[0:npad], sv[npad:2 * npad], sv[2 * npad:]],
                axis=-1)

    return kernel


# ----------------------------------------------------------------------------
# Parameter init (deterministic, torch-Linear-style uniform bounds) + packing
# ----------------------------------------------------------------------------
def _uniform(key, shape, bound):
    return jax.random.uniform(key, shape, F32, -bound, bound)


def _init_linear(key, fan_in, fan_out):
    k1, k2 = jax.random.split(key)
    bd = 1.0 / math.sqrt(fan_in)
    return _uniform(k1, (fan_in, fan_out), bd), _uniform(k2, (1, fan_out), bd)


def _init_gvlinear(key, in_s, in_v, out_s, out_v):
    h = max(in_v, out_v)
    k = jax.random.split(key, 5)
    bs = 1.0 / math.sqrt(in_s + h)
    gw, gb = _init_linear(k[4], out_s, out_v)
    return {
        "w1": _uniform(k[0], (in_v, h), 1.0 / math.sqrt(in_v)).astype(BF16),
        "w2": _uniform(k[1], (h, out_v), 1.0 / math.sqrt(h)).astype(BF16),
        # fused [ws_v ; ws_s]: scalar output is a single [vnorm || sca] matmul
        "ws": jnp.concatenate([_uniform(k[2], (h, out_s), bs),
                               _uniform(k[3], (in_s, out_s), bs)],
                              axis=0).astype(BF16),
        "gw": gw.astype(BF16),
        "gb": gb,
    }


def _init_block(key, s, v, ec):
    ks = jax.random.split(key, 12)
    sca_w, sca_b = _init_linear(ks[5], ec, s)
    e2n_w, e2n_b = _init_linear(ks[6], ec, v)
    n2e_w, n2e_b = _init_linear(ks[7], s, v)
    evn_w, evn_b = _init_linear(ks[8], ec, v)
    return {
        "gv_node": _init_gvlinear(ks[0], s, v, s, v),
        "gv_out": _init_gvlinear(ks[1], s, v, s, v),
        "gv_centroid": _init_gvlinear(ks[2], s, v, s, v),
        "gv_ot": _init_gvlinear(ks[3], s, v, s, v),
        "gv_edge": _init_gvlinear(ks[4], ec, ec, ec, ec),
        "e_act_wd": _uniform(ks[9], (ec, ec), 1.0 / math.sqrt(ec)).astype(BF16),
        "act_wd": _uniform(ks[10], (v, v), 1.0 / math.sqrt(v)).astype(BF16),
        # sca_linear (EC->S) and e2n_linear (EC->V) share the LHS e_sca -> fused
        "es_w": jnp.concatenate([sca_w, e2n_w], axis=1).astype(BF16),
        "es_b": jnp.concatenate([sca_b, e2n_b], axis=1),
        "n2e_w": n2e_w.astype(BF16), "n2e_b": n2e_b,
        "evn_w": evn_w.astype(BF16), "evn_b": evn_b,
        "w_ee": _uniform(ks[11], (1, ec), 1.0),     # EdgeExpansion Linear(1, EC)
        "ln_sca": jnp.concatenate([jnp.ones((1, s), F32),
                                   jnp.zeros((1, s), F32)], axis=0),
        # rows 0..2 = gamma(x,y,z), rows 3..5 = beta.
        # TODO(synk): torch LayerNorm([V,3]) affine is (V,3); transpose when
        #             importing a real checkpoint.
        "ln_vec": jnp.concatenate([jnp.ones((3, v), F32),
                                   jnp.zeros((3, v), F32)], axis=0),
    }


def _pack_blocks(blocks):
    """Stack per-block params into few arrays with a leading block dimension."""
    gvn = ("gv_node", "gv_out", "gv_centroid", "gv_ot")

    def stk(fn):
        return jnp.stack([fn(p) for p in blocks], axis=0)

    packed = {
        "gv4_w1": stk(lambda p: jnp.stack([p[n]["w1"] for n in gvn], 0)),
        "gv4_w2": stk(lambda p: jnp.stack([p[n]["w2"] for n in gvn], 0)),
        "gv4_ws": stk(lambda p: jnp.stack([p[n]["ws"] for n in gvn], 0)),
        "gv4_gw": stk(lambda p: jnp.stack([p[n]["gw"] for n in gvn], 0)),
        "gv4_gb": stk(lambda p: jnp.stack([p[n]["gb"] for n in gvn], 0)),
        "gve_w1": stk(lambda p: p["gv_edge"]["w1"]),
        "gve_w2": stk(lambda p: p["gv_edge"]["w2"]),
        "gve_ws": stk(lambda p: p["gv_edge"]["ws"]),
        "gve_gw": stk(lambda p: p["gv_edge"]["gw"]),
        "gve_gb": stk(lambda p: p["gv_edge"]["gb"]),
    }
    for name in ("e_act_wd", "act_wd", "es_w", "es_b", "n2e_w", "n2e_b",
                 "evn_w", "evn_b", "w_ee", "ln_sca", "ln_vec"):
        packed[name] = stk(lambda p, _n=name: p[_n])
    return packed


# ----------------------------------------------------------------------------
# Wrapper: edge-geometry preprocessing, padding, single fused pallas_call
# ----------------------------------------------------------------------------
def _round_up(x, m):
    return ((x + m - 1) // m) * m


@partial(jax.jit, static_argnames=("cutoff", "annealing", "edge_tile"))
def context_encoder_forward(params, node_sca, node_vec, pos, edge_index,
                            edge_feature, *, cutoff, annealing, edge_tile=256):
    sca = node_sca.astype(F32)                      # (N, S)
    vec = node_vec.astype(F32)                      # (N, V, 3)
    n, s = sca.shape
    v = vec.shape[1]
    row = edge_index[0].astype(I32)
    col = edge_index[1].astype(I32)
    e = row.shape[0]
    ec = params["gve_w1"].shape[-1]
    nb = params["gve_w1"].shape[0]

    assert edge_tile % 128 == 0                     # lane-aligned edge tiles
    npad = _round_up(n, 8)
    epad = _round_up(max(e, 1), edge_tile)
    n_tiles = epad // edge_tile

    # ---- geometry-only edge preprocessing, computed ONCE and packed lane-dense:
    #      slab lanes = [ RBF ++ edge_type | ev_x ev_y ev_z | cutoff_w | col ]
    edge_vector = pos[row] - pos[col]               # (E, 3)
    edge_dist = jnp.linalg.norm(edge_vector, axis=-1)
    ev_unit = edge_vector / (edge_dist[:, None] + 1e-7)
    d = edge_dist[:, None] - params["offsets"][None, :]
    rbf = jnp.exp(params["coeff"] * d * d)
    if annealing:
        cw = 0.5 * (jnp.cos(edge_dist * jnp.pi / cutoff) + 1.0)
        cw = cw * (edge_dist <= cutoff)
    else:
        cw = jnp.ones_like(edge_dist)
    eslab = jnp.concatenate(
        [rbf, edge_feature.astype(F32), ev_unit, cw[:, None],
         col[:, None].astype(F32)], axis=-1)        # (E, EC+5)
    eslab = jnp.pad(eslab, ((0, epad - e), (0, 0)))  # pad edges: cw=0 -> no-op
    row2d = jnp.pad(row, (0, epad - e))[None, :]     # (1, Epad) i32

    # ---- node state packed as one lane-dense slab [sca | vx | vy | vz]
    nslab_in = jnp.concatenate(
        [sca, vec[:, :, 0], vec[:, :, 1], vec[:, :, 2]], axis=-1)
    nslab_in = jnp.pad(nslab_in, ((0, npad - n), (0, 0)))

    kernel = _make_encoder_kernel(npad, s, v, ec, edge_tile)

    def _const_spec(shape):
        nd = len(shape)
        return pl.BlockSpec(shape, lambda b, t, _nd=nd: (0,) * _nd)

    def _wspec(arr):
        nd = arr.ndim
        return pl.BlockSpec((1,) + arr.shape[1:],
                            lambda b, t, _nd=nd: (b,) + (0,) * (_nd - 1))

    weights = [params[k] for k in WEIGHT_ORDER]
    in_specs = ([_const_spec((npad, s + 3 * v)),
                 pl.BlockSpec((edge_tile, ec + 5), lambda b, t: (t, 0)),
                 pl.BlockSpec((1, edge_tile), lambda b, t: (0, t))]
                + [_wspec(w) for w in weights])

    # VMEM budget (per tile): edge slab 2*T_E*(EC+5)*4 + node slabs/scratch
    # 4*Npad*(S+3V)*4 + ~10 live (T_E, S+3V)-sized temporaries.  32 MiB is far
    # above demo needs and safe on v5e/v6e/v7x; shrink T_E on v7x (64 MiB VMEM)
    # for production graph sizes.
    out = pl.pallas_call(
        kernel,
        grid=(nb, n_tiles),
        in_specs=in_specs,
        out_specs=pl.BlockSpec((npad, s + 3 * v), lambda b, t: (0, 0)),
        out_shape=jax.ShapeDtypeStruct((npad, s + 3 * v), F32),
        scratch_shapes=[pltpu.VMEM((npad, s), F32),          # node scalar state
                        pltpu.VMEM((3 * npad, v), F32),      # node vector state
                        pltpu.VMEM((npad, s + 3 * v), F32),  # node_gvlinear slab
                        pltpu.VMEM((npad, s + 3 * v), F32)], # scatter accumulator
        compiler_params=pltpu.CompilerParams(
            dimension_semantics=("arbitrary", "arbitrary"),
            vmem_limit_bytes=32 * 1024 * 1024),
    )(nslab_in, eslab, row2d, *weights)

    out_sca = out[:n, :s]
    out_vec = jnp.stack([out[:n, s:s + v], out[:n, s + v:s + 2 * v],
                         out[:n, s + 2 * v:]], axis=-1)      # (N, V, 3)
    return out_sca, out_vec


# ----------------------------------------------------------------------------
class ContextEncoderPallas:
    def __init__(self, key, hidden_channels=(256, 64), edge_channels=64,
                 num_edge_types=4, key_channels=128, num_heads=4,
                 num_interactions=6, k=32, cutoff=10.0, bottleneck=1,
                 use_conv1d=False, no_protein=False, edge_tile=256):
        assert bottleneck == 1 and not use_conv1d
        self.hidden_channels = tuple(hidden_channels)
        self.cutoff = float(cutoff)
        self.edge_tile = int(edge_tile)
        g = edge_channels - num_edge_types          # Gaussian RBF width
        assert g >= 2
        offsets = jnp.linspace(0.0, cutoff, g).astype(F32)
        coeff = jnp.asarray(-0.5 / float(offsets[1] - offsets[0]) ** 2, F32)
        keys = jax.random.split(key, num_interactions)
        blocks = [_init_block(keys[i], hidden_channels[0], hidden_channels[1],
                              edge_channels) for i in range(num_interactions)]
        self.params = dict(_pack_blocks(blocks), offsets=offsets, coeff=coeff)

    @property
    def out_sca(self):
        return self.hidden_channels[0]

    @property
    def out_vec(self):
        return self.hidden_channels[1]

    def __call__(self, node_attr, pos, edge_index, edge_feature, annealing=True):
        node_sca, node_vec = node_attr              # (N, S), (N, V, 3)
        return context_encoder_forward(self.params, node_sca, node_vec, pos,
                                       edge_index, edge_feature,
                                       cutoff=self.cutoff,
                                       annealing=bool(annealing),
                                       edge_tile=self.edge_tile)


# ----------------------------------------------------------------------------
if __name__ == "__main__":
    key = jax.random.PRNGKey(0)
    k_param, k_sca, k_vec, k_pos, k_ei, k_et = jax.random.split(key, 6)

    N, E = 20, 200                    # deliberately unaligned: wrapper pads
    hidden = (32, 8)
    edge_channels = 16
    num_edge_types = 4
    num_interactions = 2
    edge_tile = 128                   # -> Epad = 256 -> two edge tiles

    enc = ContextEncoderPallas(k_param, hidden_channels=hidden,
                               edge_channels=edge_channels,
                               num_edge_types=num_edge_types, num_heads=4,
                               num_interactions=num_interactions, cutoff=10.0,
                               edge_tile=edge_tile)

    node_sca = jax.random.normal(k_sca, (N, hidden[0]), F32)
    node_vec = jax.random.normal(k_vec, (N, hidden[1], 3), F32)
    pos = jax.random.normal(k_pos, (N, 3), F32) * 3.0
    edge_index = jax.random.randint(k_ei, (2, E), 0, N)
    edge_types = jax.random.randint(k_et, (E,), 0, num_edge_types)
    edge_feature = jax.nn.one_hot(edge_types, num_edge_types, dtype=F32)

    out_sca, out_vec = enc((node_sca, node_vec), pos, edge_index, edge_feature,
                           annealing=True)
    jax.block_until_ready((out_sca, out_vec))
    assert out_sca.shape == (N, hidden[0])
    assert out_vec.shape == (N, hidden[1], 3)
    assert bool(jnp.all(jnp.isfinite(out_sca))) and bool(jnp.all(jnp.isfinite(out_vec)))
    print("KERNEL_OK")
</pallas_src>

<mosaic_0001>
module attributes {stable_mosaic.version = 11 : i64} {
  func.func @kernel(%arg0: i32, %arg1: i32, %arg2: memref<24x56xf32, #tpu.memory_space<vmem>>, %arg3: memref<128x21xf32, #tpu.memory_space<vmem>>, %arg4: memref<1x128xi32, #tpu.memory_space<vmem>>, %arg5: memref<1x4x8x8xbf16, #tpu.memory_space<vmem>>, %arg6: memref<1x4x8x8xbf16, #tpu.memory_space<vmem>>, %arg7: memref<1x4x40x32xbf16, #tpu.memory_space<vmem>>, %arg8: memref<1x4x32x8xbf16, #tpu.memory_space<vmem>>, %arg9: memref<1x4x1x8xf32, #tpu.memory_space<vmem>>, %arg10: memref<1x16x16xbf16, #tpu.memory_space<vmem>>, %arg11: memref<1x16x16xbf16, #tpu.memory_space<vmem>>, %arg12: memref<1x32x16xbf16, #tpu.memory_space<vmem>>, %arg13: memref<1x16x16xbf16, #tpu.memory_space<vmem>>, %arg14: memref<1x1x16xf32, #tpu.memory_space<vmem>>, %arg15: memref<1x16x16xbf16, #tpu.memory_space<vmem>>, %arg16: memref<1x8x8xbf16, #tpu.memory_space<vmem>>, %arg17: memref<1x16x40xbf16, #tpu.memory_space<vmem>>, %arg18: memref<1x1x40xf32, #tpu.memory_space<vmem>>, %arg19: memref<1x32x8xbf16, #tpu.memory_space<vmem>>, %arg20: memref<1x1x8xf32, #tpu.memory_space<vmem>>, %arg21: memref<1x16x8xbf16, #tpu.memory_space<vmem>>, %arg22: memref<1x1x8xf32, #tpu.memory_space<vmem>>, %arg23: memref<1x1x16xf32, #tpu.memory_space<vmem>>, %arg24: memref<1x2x32xf32, #tpu.memory_space<vmem>>, %arg25: memref<1x6x8xf32, #tpu.memory_space<vmem>>, %arg26: memref<24x56xf32, #tpu.memory_space<vmem>>, %arg27: memref<24x32xf32, #tpu.memory_space<vmem>>, %arg28: memref<72x8xf32, #tpu.memory_space<vmem>>, %arg29: memref<24x56xf32, #tpu.memory_space<vmem>>, %arg30: memref<24x56xf32, #tpu.memory_space<vmem>>) attributes {dimension_semantics = [#tpu.dimension_semantics<arbitrary>, #tpu.dimension_semantics<arbitrary>], iteration_bounds = array<i64: 2, 2>, scalar_prefetch = 0 : i64, scratch_operands = 4 : i64, tpu.core_type = #tpu.core_type<tc>, window_params = [{pipeline_mode = #tpu.pipeline_mode<synchronous>, transform_indices = @transform_0, window_bounds = array<i64: 24, 56>}, {transform_indices = @transform_1, window_bounds = array<i64: 128, 21>}, {transform_indices = @transform_2, window_bounds = array<i64: 1, 128>}, {transform_indices = @transform_3, window_bounds = array<i64: 1, 4, 8, 8>}, {transform_indices = @transform_4, window_bounds = array<i64: 1, 4, 8, 8>}, {transform_indices = @transform_5, window_bounds = array<i64: 1, 4, 40, 32>}, {transform_indices = @transform_6, window_bounds = array<i64: 1, 4, 32, 8>}, {transform_indices = @transform_7, window_bounds = array<i64: 1, 4, 1, 8>}, {transform_indices = @transform_8, window_bounds = array<i64: 1, 16, 16>}, {transform_indices = @transform_9, window_bounds = array<i64: 1, 16, 16>}, {transform_indices = @transform_10, window_bounds = array<i64: 1, 32, 16>}, {transform_indices = @transform_11, window_bounds = array<i64: 1, 16, 16>}, {transform_indices = @transform_12, window_bounds = array<i64: 1, 1, 16>}, {transform_indices = @transform_13, window_bounds = array<i64: 1, 16, 16>}, {transform_indices = @transform_14, window_bounds = array<i64: 1, 8, 8>}, {transform_indices = @transform_15, window_bounds = array<i64: 1, 16, 40>}, {transform_indices = @transform_16, window_bounds = array<i64: 1, 1, 40>}, {transform_indices = @transform_17, window_bounds = array<i64: 1, 32, 8>}, {transform_indices = @transform_18, window_bounds = array<i64: 1, 1, 8>}, {transform_indices = @transform_19, window_bounds = array<i64: 1, 16, 8>}, {transform_indices = @transform_20, window_bounds = array<i64: 1, 1, 8>}, {transform_indices = @transform_21, window_bounds = array<i64: 1, 1, 16>}, {transform_indices = @transform_22, window_bounds = array<i64: 1, 2, 32>}, {transform_indices = @transform_23, window_bounds = array<i64: 1, 6, 8>}, {pipeline_mode = #tpu.pipeline_mode<synchronous>, transform_indices = @transform_24, window_bounds = array<i64: 24, 56>}]} {
    %c0_i32 = arith.constant 0 : i32
    %0 = arith.cmpi eq, %arg0, %c0_i32 : i32
    %c0_i32_0 = arith.constant 0 : i32
    %1 = arith.cmpi eq, %arg1, %c0_i32_0 : i32
    %2 = arith.andi %0, %1 : i1
    %3 = arith.extui %2 : i1 to i32
    %c0_i32_1 = arith.constant 0 : i32
    %4 = arith.cmpi ne, %3, %c0_i32_1 : i32
    scf.if %4 {
      %c0_103 = arith.constant 0 : index
      %c0_104 = arith.constant 0 : index
      %266 = vector.load %arg2[%c0_103, %c0_104] : memref<24x56xf32, #tpu.memory_space<vmem>>, vector<24x56xf32>
      %267 = vector.extract_strided_slice %266 {offsets = [0, 0], sizes = [24, 32], strides = [1, 1]} : vector<24x56xf32> to vector<24x32xf32>
      %c0_105 = arith.constant 0 : index
      %c0_106 = arith.constant 0 : index
      %268 = vector.load %arg27[%c0_105, %c0_106] : memref<24x32xf32, #tpu.memory_space<vmem>>, vector<24x32xf32>
      tpu.vector_store %arg27[%c0_105, %c0_106], %267 {strides = array<i32>} : memref<24x32xf32, #tpu.memory_space<vmem>>, vector<24x32xf32>,
      %269 = vector.extract_strided_slice %266 {offsets = [0, 32], sizes = [24, 8], strides = [1, 1]} : vector<24x56xf32> to vector<24x8xf32>
      %270 = vector.extract_strided_slice %266 {offsets = [0, 40], sizes = [24, 8], strides = [1, 1]} : vector<24x56xf32> to vector<24x8xf32>
      %271 = vector.extract_strided_slice %266 {offsets = [0, 48], sizes = [24, 8], strides = [1, 1]} : vector<24x56xf32> to vector<24x8xf32>
      %272 = tpu.concatenate %269, %270, %271 in 0 : vector<24x8xf32>, vector<24x8xf32>, vector<24x8xf32> -> vector<72x8xf32>
      %c0_107 = arith.constant 0 : index
      %c0_108 = arith.constant 0 : index
      %273 = vector.load %arg28[%c0_107, %c0_108] : memref<72x8xf32, #tpu.memory_space<vmem>>, vector<72x8xf32>
      tpu.vector_store %arg28[%c0_107, %c0_108], %272 {strides = array<i32>} : memref<72x8xf32, #tpu.memory_space<vmem>>, vector<72x8xf32>,
    } else {
    }
    %c0_i32_2 = arith.constant 0 : i32
    %5 = arith.cmpi eq, %arg1, %c0_i32_2 : i32
    %6 = arith.extui %5 : i1 to i32
    %c0_i32_3 = arith.constant 0 : i32
    %7 = arith.cmpi ne, %6, %c0_i32_3 : i32
    scf.if %7 {
      %c0_103 = arith.constant 0 : index
      %c0_104 = arith.constant 0 : index
      %266 = vector.load %arg27[%c0_103, %c0_104] : memref<24x32xf32, #tpu.memory_space<vmem>>, vector<24x32xf32>
      %c0_105 = arith.constant 0 : index
      %c0_106 = arith.constant 0 : index
      %267 = vector.load %arg28[%c0_105, %c0_106] : memref<72x8xf32, #tpu.memory_space<vmem>>, vector<72x8xf32>
      %c0_107 = arith.constant 0 : index
      %c0_108 = arith.constant 0 : index
      %c0_109 = arith.constant 0 : index
      %c0_110 = arith.constant 0 : index
      %268 = vector.load %arg5[%c0_107, %c0_108, %c0_109, %c0_110] : memref<1x4x8x8xbf16, #tpu.memory_space<vmem>>, vector<1x1x8x8xbf16>
      %269 = vector.shape_cast %268 : vector<1x1x8x8xbf16> to vector<8x8xbf16>
      %c0_111 = arith.constant 0 : index
      %c0_112 = arith.constant 0 : index
      %c0_113 = arith.constant 0 : index
      %c0_114 = arith.constant 0 : index
      %270 = vector.load %arg6[%c0_111, %c0_112, %c0_113, %c0_114] : memref<1x4x8x8xbf16, #tpu.memory_space<vmem>>, vector<1x1x8x8xbf16>
      %271 = vector.shape_cast %270 : vector<1x1x8x8xbf16> to vector<8x8xbf16>
      %c0_115 = arith.constant 0 : index
      %c0_116 = arith.constant 0 : index
      %c0_117 = arith.constant 0 : index
      %c0_118 = arith.constant 0 : index
      %272 = vector.load %arg7[%c0_115, %c0_116, %c0_117, %c0_118] : memref<1x4x40x32xbf16, #tpu.memory_space<vmem>>, vector<1x1x40x32xbf16>
      %273 = vector.shape_cast %272 : vector<1x1x40x32xbf16> to vector<40x32xbf16>
      %c0_119 = arith.constant 0 : index
      %c0_120 = arith.constant 0 : index
      %c0_121 = arith.constant 0 : index
      %c0_122 = arith.constant 0 : index
      %274 = vector.load %arg8[%c0_119, %c0_120, %c0_121, %c0_122] : memref<1x4x32x8xbf16, #tpu.memory_space<vmem>>, vector<1x1x32x8xbf16>
      %275 = vector.shape_cast %274 : vector<1x1x32x8xbf16> to vector<32x8xbf16>
      %c0_123 = arith.constant 0 : index
      %c0_124 = arith.constant 0 : index
      %c0_125 = arith.constant 0 : index
      %c0_126 = arith.constant 0 : index
      %276 = vector.load %arg9[%c0_123, %c0_124, %c0_125, %c0_126] : memref<1x4x1x8xf32, #tpu.memory_space<vmem>>, vector<1x1x1x8xf32>
      %277 = vector.shape_cast %276 : vector<1x1x1x8xf32> to vector<1x8xf32>
      %278 = arith.truncf %267 : vector<72x8xf32> to vector<72x8xbf16>
      %cst_127 = arith.constant dense<0.000000e+00> : vector<72x8xf32>
      %279 = tpu.matmul %278, %269, %cst_127 {dimension_numbers = #tpu.dot_dimension_numbers<[1], [0], [0], [1], [0, 0, 1, 1], [], []>} : vector<72x8xbf16>, vector<8x8xbf16>, vector<72x8xf32> -> vector<72x8xf32>
      %280 = vector.extract_strided_slice %279 {offsets = [0, 0], sizes = [24, 8], strides = [1, 1]} : vector<72x8xf32> to vector<24x8xf32>
      %281 = vector.extract_strided_slice %279 {offsets = [24, 0], sizes = [24, 8], strides = [1, 1]} : vector<72x8xf32> to vector<24x8xf32>
      %282 = vector.extract_strided_slice %279 {offsets = [48, 0], sizes = [24, 8], strides = [1, 1]} : vector<72x8xf32> to vector<24x8xf32>
      %283 = arith.mulf %280, %280 : vector<24x8xf32>
      %284 = arith.mulf %281, %281 : vector<24x8xf32>
      %285 = arith.addf %283, %284 : vector<24x8xf32>
      %286 = arith.mulf %282, %282 : vector<24x8xf32>
      %287 = arith.addf %285, %286 : vector<24x8xf32>
      %288 = math.sqrt %287 : vector<24x8xf32>
      %289 = tpu.concatenate %288, %266 in 1 : vector<24x8xf32>, vector<24x32xf32> -> vector<24x40xf32>
      %290 = arith.truncf %289 : vector<24x40xf32> to vector<24x40xbf16>
      %cst_128 = arith.constant dense<0.000000e+00> : vector<24x32xf32>
      %291 = tpu.matmul %290, %273, %cst_128 {dimension_numbers = #tpu.dot_dimension_numbers<[1], [0], [0], [1], [0, 0, 1, 1], [], []>} : vector<24x40xbf16>, vector<40x32xbf16>, vector<24x32xf32> -> vector<24x32xf32>
      %292 = arith.truncf %291 : vector<24x32xf32> to vector<24x32xbf16>
      %cst_129 = arith.constant dense<0.000000e+00> : vector<24x8xf32>
      %293 = tpu.matmul %292, %275, %cst_129 {dimension_numbers = #tpu.dot_dimension_numbers<[1], [0], [0], [1], [0, 0, 1, 1], [], []>} : vector<24x32xbf16>, vector<32x8xbf16>, vector<24x8xf32> -> vector<24x8xf32>
      %294 = vector.broadcast %277 : vector<1x8xf32> to vector<24x8xf32>
      %295 = arith.addf %293, %294 : vector<24x8xf32>
      %296 = arith.negf %295 : vector<24x8xf32>
      %297 = math.exp %296 : vector<24x8xf32>
      %cst_130 = arith.constant 1.000000e+00 : f32
      %298 = vector.broadcast %cst_130 : f32 to vector<24x8xf32>
      %299 = arith.addf %298, %297 : vector<24x8xf32>
      %300 = arith.divf %298, %299 : vector<24x8xf32>
      %301 = arith.truncf %279 : vector<72x8xf32> to vector<72x8xbf16>
      %cst_131 = arith.constant dense<0.000000e+00> : vector<72x8xf32>
      %302 = tpu.matmul %301, %271, %cst_131 {dimension_numbers = #tpu.dot_dimension_numbers<[1], [0], [0], [1], [0, 0, 1, 1], [], []>} : vector<72x8xbf16>, vector<8x8xbf16>, vector<72x8xf32> -> vector<72x8xf32>
      %303 = vector.extract_strided_slice %302 {offsets = [0, 0], sizes = [24, 8], strides = [1, 1]} : vector<72x8xf32> to vector<24x8xf32>
      %304 = arith.mulf %303, %300 : vector<24x8xf32>
      %305 = vector.extract_strided_slice %302 {offsets = [24, 0], sizes = [24, 8], strides = [1, 1]} : vector<72x8xf32> to vector<24x8xf32>
      %306 = arith.mulf %305, %300 : vector<24x8xf32>
      %307 = vector.extract_strided_slice %302 {offsets = [48, 0], sizes = [24, 8], strides = [1, 1]} : vector<72x8xf32> to vector<24x8xf32>
      %308 = arith.mulf %307, %300 : vector<24x8xf32>
      %309 = tpu.concatenate %304, %306, %308 in 0 : vector<24x8xf32>, vector<24x8xf32>, vector<24x8xf32> -> vector<72x8xf32>
      %310 = vector.extract_strided_slice %309 {offsets = [0, 0], sizes = [24, 8], strides = [1, 1]} : vector<72x8xf32> to vector<24x8xf32>
      %311 = vector.extract_strided_slice %309 {offsets = [24, 0], sizes = [24, 8], strides = [1, 1]} : vector<72x8xf32> to vector<24x8xf32>
      %312 = vector.extract_strided_slice %309 {offsets = [48, 0], sizes = [24, 8], strides = [1, 1]} : vector<72x8xf32> to vector<24x8xf32>
      %313 = tpu.concatenate %291, %310, %311, %312 in 1 : vector<24x32xf32>, vector<24x8xf32>, vector<24x8xf32>, vector<24x8xf32> -> vector<24x56xf32>
      %c0_132 = arith.constant 0 : index
      %c0_133 = arith.constant 0 : index
      %314 = vector.load %arg29[%c0_132, %c0_133] : memref<24x56xf32, #tpu.memory_space<vmem>>, vector<24x56xf32>
      tpu.vector_store %arg29[%c0_132, %c0_133], %313 {strides = array<i32>} : memref<24x56xf32, #tpu.memory_space<vmem>>, vector<24x56xf32>,
      %cst_134 = arith.constant 0.000000e+00 : f32
      %315 = vector.broadcast %cst_134 : f32 to vector<24x56xf32>
      %c0_135 = arith.constant 0 : index
      %c0_136 = arith.constant 0 : index
      %316 = vector.load %arg30[%c0_135, %c0_136] : memref<24x56xf32, #tpu.memory_space<vmem>>, vector<24x56xf32>
      tpu.vector_store %arg30[%c0_135, %c0_136], %315 {strides = array<i32>} : memref<24x56xf32, #tpu.memory_space<vmem>>, vector<24x56xf32>,
    } else {
    }
    %c0 = arith.constant 0 : index
    %c0_4 = arith.constant 0 : index
    %8 = vector.load %arg3[%c0, %c0_4] : memref<128x21xf32, #tpu.memory_space<vmem>>, vector<128x21xf32>
    %9 = vector.extract_strided_slice %8 {offsets = [0, 0], sizes = [128, 16], strides = [1, 1]} : vector<128x21xf32> to vector<128x16xf32>
    %10 = vector.extract_strided_slice %8 {offsets = [0, 19], sizes = [128, 1], strides = [1, 1]} : vector<128x21xf32> to vector<128x1xf32>
    %11 = vector.extract_strided_slice %8 {offsets = [0, 20], sizes = [128, 1], strides = [1, 1]} : vector<128x21xf32> to vector<128x1xf32>
    %12 = arith.fptosi %11 : vector<128x1xf32> to vector<128x1xi32>
    %13 = tpu.iota {dimensions = array<i32: 1>} : vector<128x24xi32>
    %14 = vector.broadcast %12 : vector<128x1xi32> to vector<128x24xi32>
    %15 = arith.cmpi eq, %14, %13 : vector<128x24xi32>
    %16 = arith.extui %15 : vector<128x24xi1> to vector<128x24xi32>
    %17 = arith.sitofp %16 : vector<128x24xi32> to vector<128x24xf32>
    %18 = arith.truncf %17 : vector<128x24xf32> to vector<128x24xbf16>
    %c0_5 = arith.constant 0 : index
    %c0_6 = arith.constant 0 : index
    %19 = vector.load %arg29[%c0_5, %c0_6] : memref<24x56xf32, #tpu.memory_space<vmem>>, vector<24x56xf32>
    %20 = arith.truncf %19 : vector<24x56xf32> to vector<24x56xbf16>
    %cst = arith.constant dense<0.000000e+00> : vector<128x56xf32>
    %21 = tpu.matmul %18, %20, %cst {dimension_numbers = #tpu.dot_dimension_numbers<[1], [0], [0], [1], [0, 0, 1, 1], [], []>} : vector<128x24xbf16>, vector<24x56xbf16>, vector<128x56xf32> -> vector<128x56xf32>
    %22 = vector.extract_strided_slice %21 {offsets = [0, 0], sizes = [128, 32], strides = [1, 1]} : vector<128x56xf32> to vector<128x32xf32>
    %c0_7 = arith.constant 0 : index
    %c0_8 = arith.constant 0 : index
    %c0_9 = arith.constant 0 : index
    %23 = vector.load %arg23[%c0_7, %c0_8, %c0_9] : memref<1x1x16xf32, #tpu.memory_space<vmem>>, vector<1x1x16xf32>
    %24 = vector.shape_cast %23 : vector<1x1x16xf32> to vector<1x16xf32>
    %25 = vector.extract_strided_slice %8 {offsets = [0, 16], sizes = [128, 1], strides = [1, 1]} : vector<128x21xf32> to vector<128x1xf32>
    %26 = vector.broadcast %25 : vector<128x1xf32> to vector<128x16xf32>
    %27 = vector.broadcast %24 : vector<1x16xf32> to vector<128x16xf32>
    %28 = arith.mulf %26, %27 : vector<128x16xf32>
    %29 = vector.extract_strided_slice %8 {offsets = [0, 17], sizes = [128, 1], strides = [1, 1]} : vector<128x21xf32> to vector<128x1xf32>
    %30 = vector.broadcast %29 : vector<128x1xf32> to vector<128x16xf32>
    %31 = vector.broadcast %24 : vector<1x16xf32> to vector<128x16xf32>
    %32 = arith.mulf %30, %31 : vector<128x16xf32>
    %33 = vector.extract_strided_slice %8 {offsets = [0, 18], sizes = [128, 1], strides = [1, 1]} : vector<128x21xf32> to vector<128x1xf32>
    %34 = vector.broadcast %33 : vector<128x1xf32> to vector<128x16xf32>
    %35 = vector.broadcast %24 : vector<1x16xf32> to vector<128x16xf32>
    %36 = arith.mulf %34, %35 : vector<128x16xf32>
    %37 = tpu.concatenate %28, %32, %36 in 0 : vector<128x16xf32>, vector<128x16xf32>, vector<128x16xf32> -> vector<384x16xf32>
    %c0_10 = arith.constant 0 : index
    %c0_11 = arith.constant 0 : index
    %c0_12 = arith.constant 0 : index
    %38 = vector.load %arg10[%c0_10, %c0_11, %c0_12] : memref<1x16x16xbf16, #tpu.memory_space<vmem>>, vector<1x16x16xbf16>
    %39 = vector.shape_cast %38 : vector<1x16x16xbf16> to vector<16x16xbf16>
    %c0_13 = arith.constant 0 : index
    %c0_14 = arith.constant 0 : index
    %c0_15 = arith.constant 0 : index
    %40 = vector.load %arg11[%c0_13, %c0_14, %c0_15] : memref<1x16x16xbf16, #tpu.memory_space<vmem>>, vector<1x16x16xbf16>
    %41 = vector.shape_cast %40 : vector<1x16x16xbf16> to vector<16x16xbf16>
    %c0_16 = arith.constant 0 : index
    %c0_17 = arith.constant 0 : index
    %c0_18 = arith.constant 0 : index
    %42 = vector.load %arg12[%c0_16, %c0_17, %c0_18] : memref<1x32x16xbf16, #tpu.memory_space<vmem>>, vector<1x32x16xbf16>
    %43 = vector.shape_cast %42 : vector<1x32x16xbf16> to vector<32x16xbf16>
    %c0_19 = arith.constant 0 : index
    %c0_20 = arith.constant 0 : index
    %c0_21 = arith.constant 0 : index
    %44 = vector.load %arg13[%c0_19, %c0_20, %c0_21] : memref<1x16x16xbf16, #tpu.memory_space<vmem>>, vector<1x16x16xbf16>
    %45 = vector.shape_cast %44 : vector<1x16x16xbf16> to vector<16x16xbf16>
    %c0_22 = arith.constant 0 : index
    %c0_23 = arith.constant 0 : index
    %c0_24 = arith.constant 0 : index
    %46 = vector.load %arg14[%c0_22, %c0_23, %c0_24] : memref<1x1x16xf32, #tpu.memory_space<vmem>>, vector<1x1x16xf32>
    %47 = vector.shape_cast %46 : vector<1x1x16xf32> to vector<1x16xf32>
    %48 = arith.truncf %37 : vector<384x16xf32> to vector<384x16xbf16>
    %cst_25 = arith.constant dense<0.000000e+00> : vector<384x16xf32>
    %49 = tpu.matmul %48, %39, %cst_25 {dimension_numbers = #tpu.dot_dimension_numbers<[1], [0], [0], [1], [0, 0, 1, 1], [], []>} : vector<384x16xbf16>, vector<16x16xbf16>, vector<384x16xf32> -> vector<384x16xf32>
    %50 = vector.extract_strided_slice %49 {offsets = [0, 0], sizes = [128, 16], strides = [1, 1]} : vector<384x16xf32> to vector<128x16xf32>
    %51 = vector.extract_strided_slice %49 {offsets = [128, 0], sizes = [128, 16], strides = [1, 1]} : vector<384x16xf32> to vector<128x16xf32>
    %52 = vector.extract_strided_slice %49 {offsets = [256, 0], sizes = [128, 16], strides = [1, 1]} : vector<384x16xf32> to vector<128x16xf32>
    %53 = arith.mulf %50, %50 : vector<128x16xf32>
    %54 = arith.mulf %51, %51 : vector<128x16xf32>
    %55 = arith.addf %53, %54 : vector<128x16xf32>
    %56 = arith.mulf %52, %52 : vector<128x16xf32>
    %57 = arith.addf %55, %56 : vector<128x16xf32>
    %58 = math.sqrt %57 : vector<128x16xf32>
    %59 = tpu.concatenate %58, %9 in 1 : vector<128x16xf32>, vector<128x16xf32> -> vector<128x32xf32>
    %60 = arith.truncf %59 : vector<128x32xf32> to vector<128x32xbf16>
    %cst_26 = arith.constant dense<0.000000e+00> : vector<128x16xf32>
    %61 = tpu.matmul %60, %43, %cst_26 {dimension_numbers = #tpu.dot_dimension_numbers<[1], [0], [0], [1], [0, 0, 1, 1], [], []>} : vector<128x32xbf16>, vector<32x16xbf16>, vector<128x16xf32> -> vector<128x16xf32>
    %62 = arith.truncf %61 : vector<128x16xf32> to vector<128x16xbf16>
    %cst_27 = arith.constant dense<0.000000e+00> : vector<128x16xf32>
    %63 = tpu.matmul %62, %45, %cst_27 {dimension_numbers = #tpu.dot_dimension_numbers<[1], [0], [0], [1], [0, 0, 1, 1], [], []>} : vector<128x16xbf16>, vector<16x16xbf16>, vector<128x16xf32> -> vector<128x16xf32>
    %64 = vector.broadcast %47 : vector<1x16xf32> to vector<128x16xf32>
    %65 = arith.addf %63, %64 : vector<128x16xf32>
    %66 = arith.negf %65 : vector<128x16xf32>
    %67 = math.exp %66 : vector<128x16xf32>
    %cst_28 = arith.constant 1.000000e+00 : f32
    %68 = vector.broadcast %cst_28 : f32 to vector<128x16xf32>
    %69 = arith.addf %68, %67 : vector<128x16xf32>
    %70 = arith.divf %68, %69 : vector<128x16xf32>
    %71 = arith.truncf %49 : vector<384x16xf32> to vector<384x16xbf16>
    %cst_29 = arith.constant dense<0.000000e+00> : vector<384x16xf32>
    %72 = tpu.matmul %71, %41, %cst_29 {dimension_numbers = #tpu.dot_dimension_numbers<[1], [0], [0], [1], [0, 0, 1, 1], [], []>} : vector<384x16xbf16>, vector<16x16xbf16>, vector<384x16xf32> -> vector<384x16xf32>
    %73 = vector.extract_strided_slice %72 {offsets = [0, 0], sizes = [128, 16], strides = [1, 1]} : vector<384x16xf32> to vector<128x16xf32>
    %74 = arith.mulf %73, %70 : vector<128x16xf32>
    %75 = vector.extract_strided_slice %72 {offsets = [128, 0], sizes = [128, 16], strides = [1, 1]} : vector<384x16xf32> to vector<128x16xf32>
    %76 = arith.mulf %75, %70 : vector<128x16xf32>
    %77 = vector.extract_strided_slice %72 {offsets = [256, 0], sizes = [128, 16], strides = [1, 1]} : vector<384x16xf32> to vector<128x16xf32>
    %78 = arith.mulf %77, %70 : vector<128x16xf32>
    %79 = tpu.concatenate %74, %76, %78 in 0 : vector<128x16xf32>, vector<128x16xf32>, vector<128x16xf32> -> vector<384x16xf32>
    %c0_30 = arith.constant 0 : index
    %c0_31 = arith.constant 0 : index
    %c0_32 = arith.constant 0 : index
    %80 = vector.load %arg15[%c0_30, %c0_31, %c0_32] : memref<1x16x16xbf16, #tpu.memory_space<vmem>>, vector<1x16x16xbf16>
    %81 = vector.shape_cast %80 : vector<1x16x16xbf16> to vector<16x16xbf16>
    %cst_33 = arith.constant 0.000000e+00 : f32
    %82 = vector.broadcast %cst_33 : f32 to vector<128x16xf32>
    %83 = arith.cmpf oge, %61, %82 : vector<128x16xf32>
    %cst_34 = arith.constant 0.00999999977 : f32
    %84 = vector.broadcast %cst_34 : f32 to vector<128x16xf32>
    %85 = arith.mulf %84, %61 : vector<128x16xf32>
    %86 = arith.select %83, %61, %85 : vector<128x16xi1>, vector<128x16xf32>
    %87 = arith.truncf %79 : vector<384x16xf32> to vector<384x16xbf16>
    %cst_35 = arith.constant dense<0.000000e+00> : vector<384x16xf32>
    %88 = tpu.matmul %87, %81, %cst_35 {dimension_numbers = #tpu.dot_dimension_numbers<[1], [0], [0], [1], [0, 0, 1, 1], [], []>} : vector<384x16xbf16>, vector<16x16xbf16>, vector<384x16xf32> -> vector<384x16xf32>
    %89 = vector.extract_strided_slice %79 {offsets = [0, 0], sizes = [128, 16], strides = [1, 1]} : vector<384x16xf32> to vector<128x16xf32>
    %90 = vector.extract_strided_slice %79 {offsets = [128, 0], sizes = [128, 16], strides = [1, 1]} : vector<384x16xf32> to vector<128x16xf32>
    %91 = vector.extract_strided_slice %79 {offsets = [256, 0], sizes = [128, 16], strides = [1, 1]} : vector<384x16xf32> to vector<128x16xf32>
    %92 = vector.extract_strided_slice %88 {offsets = [0, 0], sizes = [128, 16], strides = [1, 1]} : vector<384x16xf32> to vector<128x16xf32>
    %93 = vector.extract_strided_slice %88 {offsets = [128, 0], sizes = [128, 16], strides = [1, 1]} : vector<384x16xf32> to vector<128x16xf32>
    %94 = vector.extract_strided_slice %88 {offsets = [256, 0], sizes = [128, 16], strides = [1, 1]} : vector<384x16xf32> to vector<128x16xf32>
    %95 = arith.mulf %89, %92 : vector<128x16xf32>
    %96 = arith.mulf %90, %93 : vector<128x16xf32>
    %97 = arith.addf %95, %96 : vector<128x16xf32>
    %98 = arith.mulf %91, %94 : vector<128x16xf32>
    %99 = arith.addf %97, %98 : vector<128x16xf32>
    %100 = arith.mulf %92, %92 : vector<128x16xf32>
    %101 = arith.mulf %93, %93 : vector<128x16xf32>
    %102 = arith.addf %100, %101 : vector<128x16xf32>
    %103 = arith.mulf %94, %94 : vector<128x16xf32>
    %104 = arith.addf %102, %103 : vector<128x16xf32>
    %cst_36 = arith.constant 0.000000e+00 : f32
    %105 = vector.broadcast %cst_36 : f32 to vector<128x16xf32>
    %106 = arith.cmpf oge, %99, %105 : vector<128x16xf32>
    %107 = arith.extui %106 : vector<128x16xi1> to vector<128x16xi32>
    %108 = arith.sitofp %107 : vector<128x16xi32> to vector<128x16xf32>
    %cst_37 = arith.constant 9.99999997E-7 : f32
    %109 = vector.broadcast %cst_37 : f32 to vector<128x16xf32>
    %110 = arith.addf %104, %109 : vector<128x16xf32>
    %111 = arith.divf %99, %110 : vector<128x16xf32>
    %cst_38 = arith.constant 2.000000e-01 : f32
    %112 = vector.broadcast %cst_38 : f32 to vector<128x16xf32>
    %113 = arith.mulf %112, %89 : vector<128x16xf32>
    %114 = arith.mulf %108, %89 : vector<128x16xf32>
    %cst_39 = arith.constant 1.000000e+00 : f32
    %115 = vector.broadcast %cst_39 : f32 to vector<128x16xf32>
    %116 = arith.subf %115, %108 : vector<128x16xf32>
    %117 = arith.mulf %111, %92 : vector<128x16xf32>
    %118 = arith.subf %89, %117 : vector<128x16xf32>
    %119 = arith.mulf %116, %118 : vector<128x16xf32>
    %120 = arith.addf %114, %119 : vector<128x16xf32>
    %cst_40 = arith.constant 8.000000e-01 : f32
    %121 = vector.broadcast %cst_40 : f32 to vector<128x16xf32>
    %122 = arith.mulf %121, %120 : vector<128x16xf32>
    %123 = arith.addf %113, %122 : vector<128x16xf32>
    %cst_41 = arith.constant 2.000000e-01 : f32
    %124 = vector.broadcast %cst_41 : f32 to vector<128x16xf32>
    %125 = arith.mulf %124, %90 : vector<128x16xf32>
    %126 = arith.mulf %108, %90 : vector<128x16xf32>
    %cst_42 = arith.constant 1.000000e+00 : f32
    %127 = vector.broadcast %cst_42 : f32 to vector<128x16xf32>
    %128 = arith.subf %127, %108 : vector<128x16xf32>
    %129 = arith.mulf %111, %93 : vector<128x16xf32>
    %130 = arith.subf %90, %129 : vector<128x16xf32>
    %131 = arith.mulf %128, %130 : vector<128x16xf32>
    %132 = arith.addf %126, %131 : vector<128x16xf32>
    %cst_43 = arith.constant 8.000000e-01 : f32
    %133 = vector.broadcast %cst_43 : f32 to vector<128x16xf32>
    %134 = arith.mulf %133, %132 : vector<128x16xf32>
    %135 = arith.addf %125, %134 : vector<128x16xf32>
    %cst_44 = arith.constant 2.000000e-01 : f32
    %136 = vector.broadcast %cst_44 : f32 to vector<128x16xf32>
    %137 = arith.mulf %136, %91 : vector<128x16xf32>
    %138 = arith.mulf %108, %91 : vector<128x16xf32>
    %cst_45 = arith.constant 1.000000e+00 : f32
    %139 = vector.broadcast %cst_45 : f32 to vector<128x16xf32>
    %140 = arith.subf %139, %108 : vector<128x16xf32>
    %141 = arith.mulf %111, %94 : vector<128x16xf32>
    %142 = arith.subf %91, %141 : vector<128x16xf32>
    %143 = arith.mulf %140, %142 : vector<128x16xf32>
    %144 = arith.addf %138, %143 : vector<128x16xf32>
    %cst_46 = arith.constant 8.000000e-01 : f32
    %145 = vector.broadcast %cst_46 : f32 to vector<128x16xf32>
    %146 = arith.mulf %145, %144 : vector<128x16xf32>
    %147 = arith.addf %137, %146 : vector<128x16xf32>
    %148 = tpu.concatenate %123, %135, %147 in 0 : vector<128x16xf32>, vector<128x16xf32>, vector<128x16xf32> -> vector<384x16xf32>
    %c0_47 = arith.constant 0 : index
    %c0_48 = arith.constant 0 : index
    %c0_49 = arith.constant 0 : index
    %149 = vector.load %arg17[%c0_47, %c0_48, %c0_49] : memref<1x16x40xbf16, #tpu.memory_space<vmem>>, vector<1x16x40xbf16>
    %150 = vector.shape_cast %149 : vector<1x16x40xbf16> to vector<16x40xbf16>
    %151 = arith.truncf %86 : vector<128x16xf32> to vector<128x16xbf16>
    %cst_50 = arith.constant dense<0.000000e+00> : vector<128x40xf32>
    %152 = tpu.matmul %151, %150, %cst_50 {dimension_numbers = #tpu.dot_dimension_numbers<[1], [0], [0], [1], [0, 0, 1, 1], [], []>} : vector<128x16xbf16>, vector<16x40xbf16>, vector<128x40xf32> -> vector<128x40xf32>
    %c0_51 = arith.constant 0 : index
    %c0_52 = arith.constant 0 : index
    %c0_53 = arith.constant 0 : index
    %153 = vector.load %arg18[%c0_51, %c0_52, %c0_53] : memref<1x1x40xf32, #tpu.memory_space<vmem>>, vector<1x1x40xf32>
    %154 = vector.shape_cast %153 : vector<1x1x40xf32> to vector<1x40xf32>
    %155 = vector.broadcast %154 : vector<1x40xf32> to vector<128x40xf32>
    %156 = arith.addf %152, %155 : vector<128x40xf32>
    %157 = vector.extract_strided_slice %156 {offsets = [0, 0], sizes = [128, 32], strides = [1, 1]} : vector<128x40xf32> to vector<128x32xf32>
    %158 = arith.mulf %22, %157 : vector<128x32xf32>
    %159 = vector.extract_strided_slice %156 {offsets = [0, 32], sizes = [128, 8], strides = [1, 1]} : vector<128x40xf32> to vector<128x8xf32>
    %c0_54 = arith.constant 0 : index
    %c0_55 = arith.constant 0 : index
    %c0_56 = arith.constant 0 : index
    %160 = vector.load %arg19[%c0_54, %c0_55, %c0_56] : memref<1x32x8xbf16, #tpu.memory_space<vmem>>, vector<1x32x8xbf16>
    %161 = vector.shape_cast %160 : vector<1x32x8xbf16> to vector<32x8xbf16>
    %162 = arith.truncf %22 : vector<128x32xf32> to vector<128x32xbf16>
    %cst_57 = arith.constant dense<0.000000e+00> : vector<128x8xf32>
    %163 = tpu.matmul %162, %161, %cst_57 {dimension_numbers = #tpu.dot_dimension_numbers<[1], [0], [0], [1], [0, 0, 1, 1], [], []>} : vector<128x32xbf16>, vector<32x8xbf16>, vector<128x8xf32> -> vector<128x8xf32>
    %c0_58 = arith.constant 0 : index
    %c0_59 = arith.constant 0 : index
    %c0_60 = arith.constant 0 : index
    %164 = vector.load %arg20[%c0_58, %c0_59, %c0_60] : memref<1x1x8xf32, #tpu.memory_space<vmem>>, vector<1x1x8xf32>
    %165 = vector.shape_cast %164 : vector<1x1x8xf32> to vector<1x8xf32>
    %166 = vector.broadcast %165 : vector<1x8xf32> to vector<128x8xf32>
    %167 = arith.addf %163, %166 : vector<128x8xf32>
    %c0_61 = arith.constant 0 : index
    %c0_62 = arith.constant 0 : index
    %c0_63 = arith.constant 0 : index
    %168 = vector.load %arg21[%c0_61, %c0_62, %c0_63] : memref<1x16x8xbf16, #tpu.memory_space<vmem>>, vector<1x16x8xbf16>
    %169 = vector.shape_cast %168 : vector<1x16x8xbf16> to vector<16x8xbf16>
    %170 = arith.truncf %148 : vector<384x16xf32> to vector<384x16xbf16>
    %cst_64 = arith.constant dense<0.000000e+00> : vector<384x8xf32>
    %171 = tpu.matmul %170, %169, %cst_64 {dimension_numbers = #tpu.dot_dimension_numbers<[1], [0], [0], [1], [0, 0, 1, 1], [], []>} : vector<384x16xbf16>, vector<16x8xbf16>, vector<384x8xf32> -> vector<384x8xf32>
    %c0_65 = arith.constant 0 : index
    %c0_66 = arith.constant 0 : index
    %c0_67 = arith.constant 0 : index
    %172 = vector.load %arg22[%c0_65, %c0_66, %c0_67] : memref<1x1x8xf32, #tpu.memory_space<vmem>>, vector<1x1x8xf32>
    %173 = vector.shape_cast %172 : vector<1x1x8xf32> to vector<1x8xf32>
    %174 = vector.broadcast %173 : vector<1x8xf32> to vector<384x8xf32>
    %175 = arith.addf %171, %174 : vector<384x8xf32>
    %176 = vector.extract_strided_slice %21 {offsets = [0, 32], sizes = [128, 8], strides = [1, 1]} : vector<128x56xf32> to vector<128x8xf32>
    %177 = arith.mulf %159, %176 : vector<128x8xf32>
    %178 = vector.extract_strided_slice %175 {offsets = [0, 0], sizes = [128, 8], strides = [1, 1]} : vector<384x8xf32> to vector<128x8xf32>
    %179 = arith.mulf %167, %178 : vector<128x8xf32>
    %180 = arith.addf %177, %179 : vector<128x8xf32>
    %181 = vector.extract_strided_slice %21 {offsets = [0, 40], sizes = [128, 8], strides = [1, 1]} : vector<128x56xf32> to vector<128x8xf32>
    %182 = arith.mulf %159, %181 : vector<128x8xf32>
    %183 = vector.extract_strided_slice %175 {offsets = [128, 0], sizes = [128, 8], strides = [1, 1]} : vector<384x8xf32> to vector<128x8xf32>
    %184 = arith.mulf %167, %183 : vector<128x8xf32>
    %185 = arith.addf %182, %184 : vector<128x8xf32>
    %186 = vector.extract_strided_slice %21 {offsets = [0, 48], sizes = [128, 8], strides = [1, 1]} : vector<128x56xf32> to vector<128x8xf32>
    %187 = arith.mulf %159, %186 : vector<128x8xf32>
    %188 = vector.extract_strided_slice %175 {offsets = [256, 0], sizes = [128, 8], strides = [1, 1]} : vector<384x8xf32> to vector<128x8xf32>
    %189 = arith.mulf %167, %188 : vector<128x8xf32>
    %190 = arith.addf %187, %189 : vector<128x8xf32>
    %191 = tpu.concatenate %180, %185, %190 in 0 : vector<128x8xf32>, vector<128x8xf32>, vector<128x8xf32> -> vector<384x8xf32>
    %c0_68 = arith.constant 0 : index
    %c1 = arith.constant 1 : index
    %c0_69 = arith.constant 0 : index
    %c0_70 = arith.constant 0 : index
    %192 = vector.load %arg5[%c0_68, %c1, %c0_69, %c0_70] : memref<1x4x8x8xbf16, #tpu.memory_space<vmem>>, vector<1x1x8x8xbf16>
    %193 = vector.shape_cast %192 : vector<1x1x8x8xbf16> to vector<8x8xbf16>
    %c0_71 = arith.constant 0 : index
    %c1_72 = arith.constant 1 : index
    %c0_73 = arith.constant 0 : index
    %c0_74 = arith.constant 0 : index
    %194 = vector.load %arg6[%c0_71, %c1_72, %c0_73, %c0_74] : memref<1x4x8x8xbf16, #tpu.memory_space<vmem>>, vector<1x1x8x8xbf16>
    %195 = vector.shape_cast %194 : vector<1x1x8x8xbf16> to vector<8x8xbf16>
    %c0_75 = arith.constant 0 : index
    %c1_76 = arith.constant 1 : index
    %c0_77 = arith.constant 0 : index
    %c0_78 = arith.constant 0 : index
    %196 = vector.load %arg7[%c0_75, %c1_76, %c0_77, %c0_78] : memref<1x4x40x32xbf16, #tpu.memory_space<vmem>>, vector<1x1x40x32xbf16>
    %197 = vector.shape_cast %196 : vector<1x1x40x32xbf16> to vector<40x32xbf16>
    %c0_79 = arith.constant 0 : index
    %c1_80 = arith.constant 1 : index
    %c0_81 = arith.constant 0 : index
    %c0_82 = arith.constant 0 : index
    %198 = vector.load %arg8[%c0_79, %c1_80, %c0_81, %c0_82] : memref<1x4x32x8xbf16, #tpu.memory_space<vmem>>, vector<1x1x32x8xbf16>
    %199 = vector.shape_cast %198 : vector<1x1x32x8xbf16> to vector<32x8xbf16>
    %c0_83 = arith.constant 0 : index
    %c1_84 = arith.constant 1 : index
    %c0_85 = arith.constant 0 : index
    %c0_86 = arith.constant 0 : index
    %200 = vector.load %arg9[%c0_83, %c1_84, %c0_85, %c0_86] : memref<1x4x1x8xf32, #tpu.memory_space<vmem>>, vector<1x1x1x8xf32>
    %201 = vector.shape_cast %200 : vector<1x1x1x8xf32> to vector<1x8xf32>
    %202 = arith.truncf %191 : vector<384x8xf32> to vector<384x8xbf16>
    %cst_87 = arith.constant dense<0.000000e+00> : vector<384x8xf32>
    %203 = tpu.matmul %202, %193, %cst_87 {dimension_numbers = #tpu.dot_dimension_numbers<[1], [0], [0], [1], [0, 0, 1, 1], [], []>} : vector<384x8xbf16>, vector<8x8xbf16>, vector<384x8xf32> -> vector<384x8xf32>
    %204 = vector.extract_strided_slice %203 {offsets = [0, 0], sizes = [128, 8], strides = [1, 1]} : vector<384x8xf32> to vector<128x8xf32>
    %205 = vector.extract_strided_slice %203 {offsets = [128, 0], sizes = [128, 8], strides = [1, 1]} : vector<384x8xf32> to vector<128x8xf32>
    %206 = vector.extract_strided_slice %203 {offsets = [256, 0], sizes = [128, 8], strides = [1, 1]} : vector<384x8xf32> to vector<128x8xf32>
    %207 = arith.mulf %204, %204 : vector<128x8xf32>
    %208 = arith.mulf %205, %205 : vector<128x8xf32>
    %209 = arith.addf %207, %208 : vector<128x8xf32>
    %210 = arith.mulf %206, %206 : vector<128x8xf32>
    %211 = arith.addf %209, %210 : vector<128x8xf32>
    %212 = math.sqrt %211 : vector<128x8xf32>
    %213 = tpu.concatenate %212, %158 in 1 : vector<128x8xf32>, vector<128x32xf32> -> vector<128x40xf32>
    %214 = arith.truncf %213 : vector<128x40xf32> to vector<128x40xbf16>
    %cst_88 = arith.constant dense<0.000000e+00> : vector<128x32xf32>
    %215 = tpu.matmul %214, %197, %cst_88 {dimension_numbers = #tpu.dot_dimension_numbers<[1], [0], [0], [1], [0, 0, 1, 1], [], []>} : vector<128x40xbf16>, vector<40x32xbf16>, vector<128x32xf32> -> vector<128x32xf32>
    %216 = arith.truncf %215 : vector<128x32xf32> to vector<128x32xbf16>
    %cst_89 = arith.constant dense<0.000000e+00> : vector<128x8xf32>
    %217 = tpu.matmul %216, %199, %cst_89 {dimension_numbers = #tpu.dot_dimension_numbers<[1], [0], [0], [1], [0, 0, 1, 1], [], []>} : vector<128x32xbf16>, vector<32x8xbf16>, vector<128x8xf32> -> vector<128x8xf32>
    %218 = vector.broadcast %201 : vector<1x8xf32> to vector<128x8xf32>
    %219 = arith.addf %217, %218 : vector<128x8xf32>
    %220 = arith.negf %219 : vector<128x8xf32>
    %221 = math.exp %220 : vector<128x8xf32>
    %cst_90 = arith.constant 1.000000e+00 : f32
    %222 = vector.broadcast %cst_90 : f32 to vector<128x8xf32>
    %223 = arith.addf %222, %221 : vector<128x8xf32>
    %224 = arith.divf %222, %223 : vector<128x8xf32>
    %225 = arith.truncf %203 : vector<384x8xf32> to vector<384x8xbf16>
    %cst_91 = arith.constant dense<0.000000e+00> : vector<384x8xf32>
    %226 = tpu.matmul %225, %195, %cst_91 {dimension_numbers = #tpu.dot_dimension_numbers<[1], [0], [0], [1], [0, 0, 1, 1], [], []>} : vector<384x8xbf16>, vector<8x8xbf16>, vector<384x8xf32> -> vector<384x8xf32>
    %227 = vector.extract_strided_slice %226 {offsets = [0, 0], sizes = [128, 8], strides = [1, 1]} : vector<384x8xf32> to vector<128x8xf32>
    %228 = arith.mulf %227, %224 : vector<128x8xf32>
    %229 = vector.extract_strided_slice %226 {offsets = [128, 0], sizes = [128, 8], strides = [1, 1]} : vector<384x8xf32> to vector<128x8xf32>
    %230 = arith.mulf %229, %224 : vector<128x8xf32>
    %231 = vector.extract_strided_slice %226 {offsets = [256, 0], sizes = [128, 8], strides = [1, 1]} : vector<384x8xf32> to vector<128x8xf32>
    %232 = arith.mulf %231, %224 : vector<128x8xf32>
    %233 = tpu.concatenate %228, %230, %232 in 0 : vector<128x8xf32>, vector<128x8xf32>, vector<128x8xf32> -> vector<384x8xf32>
    %234 = vector.broadcast %10 : vector<128x1xf32> to vector<128x32xf32>
    %235 = arith.mulf %215, %234 : vector<128x32xf32>
    %236 = vector.extract_strided_slice %233 {offsets = [0, 0], sizes = [128, 8], strides = [1, 1]} : vector<384x8xf32> to vector<128x8xf32>
    %237 = vector.broadcast %10 : vector<128x1xf32> to vector<128x8xf32>
    %238 = arith.mulf %236, %237 : vector<128x8xf32>
    %239 = vector.extract_strided_slice %233 {offsets = [128, 0], sizes = [128, 8], strides = [1, 1]} : vector<384x8xf32> to vector<128x8xf32>
    %240 = vector.broadcast %10 : vector<128x1xf32> to vector<128x8xf32>
    %241 = arith.mulf %239, %240 : vector<128x8xf32>
    %242 = vector.extract_strided_slice %233 {offsets = [256, 0], sizes = [128, 8], strides = [1, 1]} : vector<384x8xf32> to vector<128x8xf32>
    %243 = vector.broadcast %10 : vector<128x1xf32> to vector<128x8xf32>
    %244 = arith.mulf %242, %243 : vector<128x8xf32>
    %245 = tpu.concatenate %235, %238, %241, %244 in 1 : vector<128x32xf32>, vector<128x8xf32>, vector<128x8xf32>, vector<128x8xf32> -> vector<128x56xf32>
    %246 = arith.truncf %245 : vector<128x56xf32> to vector<128x56xbf16>
    %c0_92 = arith.constant 0 : index
    %c0_93 = arith.constant 0 : index
    %247 = vector.load %arg4[%c0_92, %c0_93] : memref<1x128xi32, #tpu.memory_space<vmem>>, vector<1x128xi32>
    %248 = tpu.iota {dimensions = array<i32: 0>} : vector<24x128xi32>
    %249 = vector.broadcast %247 : vector<1x128xi32> to vector<24x128xi32>
    %250 = arith.cmpi eq, %249, %248 : vector<24x128xi32>
    %251 = arith.extui %250 : vector<24x128xi1> to vector<24x128xi32>
    %252 = arith.sitofp %251 : vector<24x128xi32> to vector<24x128xf32>
    %253 = arith.truncf %252 : vector<24x128xf32> to vector<24x128xbf16>
    %c0_94 = arith.constant 0 : index
    %c0_95 = arith.constant 0 : index
    %254 = vector.load %arg30[%c0_94, %c0_95] : memref<24x56xf32, #tpu.memory_space<vmem>>, vector<24x56xf32>
    %cst_96 = arith.constant dense<0.000000e+00> : vector<24x56xf32>
    %255 = tpu.matmul %253, %246, %cst_96 {dimension_numbers = #tpu.dot_dimension_numbers<[1], [0], [0], [1], [0, 0, 1, 1], [], []>} : vector<24x128xbf16>, vector<128x56xbf16>, vector<24x56xf32> -> vector<24x56xf32>
    %256 = arith.addf %254, %255 : vector<24x56xf32>
    %c0_97 = arith.constant 0 : index
    %c0_98 = arith.constant 0 : index
    %257 = vector.load %arg30[%c0_97, %c0_98] : memref<24x56xf32, #tpu.memory_space<vmem>>, vector<24x56xf32>
    tpu.vector_store %arg30[%c0_97, %c0_98], %256 {strides = array<i32>} : memref<24x56xf32, #tpu.memory_space<vmem>>, vector<24x56xf32>,
    %c1_i32 = arith.constant 1 : i32
    %258 = arith.cmpi eq, %arg1, %c1_i32 : i32
    %259 = arith.extui %258 : i1 to i32
    %c0_i32_99 = arith.constant 0 : i32
    %260 = arith.cmpi ne, %259, %c0_i32_99 : i32
    scf.if %260 {
      %c0_103 = arith.constant 0 : index
      %c0_104 = arith.constant 0 : index
      %266 = vector.load %arg27[%c0_103, %c0_104] : memref<24x32xf32, #tpu.memory_space<vmem>>, vector<24x32xf32>
      %c0_105 = arith.constant 0 : index
      %c0_106 = arith.constant 0 : index
      %267 = vector.load %arg28[%c0_105, %c0_106] : memref<72x8xf32, #tpu.memory_space<vmem>>, vector<72x8xf32>
      %c0_107 = arith.constant 0 : index
      %c2 = arith.constant 2 : index
      %c0_108 = arith.constant 0 : index
      %c0_109 = arith.constant 0 : index
      %268 = vector.load %arg5[%c0_107, %c2, %c0_108, %c0_109] : memref<1x4x8x8xbf16, #tpu.memory_space<vmem>>, vector<1x1x8x8xbf16>
      %269 = vector.shape_cast %268 : vector<1x1x8x8xbf16> to vector<8x8xbf16>
      %c0_110 = arith.constant 0 : index
      %c2_111 = arith.constant 2 : index
      %c0_112 = arith.constant 0 : index
      %c0_113 = arith.constant 0 : index
      %270 = vector.load %arg6[%c0_110, %c2_111, %c0_112, %c0_113] : memref<1x4x8x8xbf16, #tpu.memory_space<vmem>>, vector<1x1x8x8xbf16>
      %271 = vector.shape_cast %270 : vector<1x1x8x8xbf16> to vector<8x8xbf16>
      %c0_114 = arith.constant 0 : index
      %c2_115 = arith.constant 2 : index
      %c0_116 = arith.constant 0 : index
      %c0_117 = arith.constant 0 : index
      %272 = vector.load %arg7[%c0_114, %c2_115, %c0_116, %c0_117] : memref<1x4x40x32xbf16, #tpu.memory_space<vmem>>, vector<1x1x40x32xbf16>
      %273 = vector.shape_cast %272 : vector<1x1x40x32xbf16> to vector<40x32xbf16>
      %c0_118 = arith.constant 0 : index
      %c2_119 = arith.constant 2 : index
      %c0_120 = arith.constant 0 : index
      %c0_121 = arith.constant 0 : index
      %274 = vector.load %arg8[%c0_118, %c2_119, %c0_120, %c0_121] : memref<1x4x32x8xbf16, #tpu.memory_space<vmem>>, vector<1x1x32x8xbf16>
      %275 = vector.shape_cast %274 : vector<1x1x32x8xbf16> to vector<32x8xbf16>
      %c0_122 = arith.constant 0 : index
      %c2_123 = arith.constant 2 : index
      %c0_124 = arith.constant 0 : index
      %c0_125 = arith.constant 0 : index
      %276 = vector.load %arg9[%c0_122, %c2_123, %c0_124, %c0_125] : memref<1x4x1x8xf32, #tpu.memory_space<vmem>>, vector<1x1x1x8xf32>
      %277 = vector.shape_cast %276 : vector<1x1x1x8xf32> to vector<1x8xf32>
      %278 = arith.truncf %267 : vector<72x8xf32> to vector<72x8xbf16>
      %cst_126 = arith.constant dense<0.000000e+00> : vector<72x8xf32>
      %279 = tpu.matmul %278, %269, %cst_126 {dimension_numbers = #tpu.dot_dimension_numbers<[1], [0], [0], [1], [0, 0, 1, 1], [], []>} : vector<72x8xbf16>, vector<8x8xbf16>, vector<72x8xf32> -> vector<72x8xf32>
      %280 = vector.extract_strided_slice %279 {offsets = [0, 0], sizes = [24, 8], strides = [1, 1]} : vector<72x8xf32> to vector<24x8xf32>
      %281 = vector.extract_strided_slice %279 {offsets = [24, 0], sizes = [24, 8], strides = [1, 1]} : vector<72x8xf32> to vector<24x8xf32>
      %282 = vector.extract_strided_slice %279 {offsets = [48, 0], sizes = [24, 8], strides = [1, 1]} : vector<72x8xf32> to vector<24x8xf32>
      %283 = arith.mulf %280, %280 : vector<24x8xf32>
      %284 = arith.mulf %281, %281 : vector<24x8xf32>
      %285 = arith.addf %283, %284 : vector<24x8xf32>
      %286 = arith.mulf %282, %282 : vector<24x8xf32>
      %287 = arith.addf %285, %286 : vector<24x8xf32>
      %288 = math.sqrt %287 : vector<24x8xf32>
      %289 = tpu.concatenate %288, %266 in 1 : vector<24x8xf32>, vector<24x32xf32> -> vector<24x40xf32>
      %290 = arith.truncf %289 : vector<24x40xf32> to vector<24x40xbf16>
      %cst_127 = arith.constant dense<0.000000e+00> : vector<24x32xf32>
      %291 = tpu.matmul %290, %273, %cst_127 {dimension_numbers = #tpu.dot_dimension_numbers<[1], [0], [0], [1], [0, 0, 1, 1], [], []>} : vector<24x40xbf16>, vector<40x32xbf16>, vector<24x32xf32> -> vector<24x32xf32>
      %292 = arith.truncf %291 : vector<24x32xf32> to vector<24x32xbf16>
      %cst_128 = arith.constant dense<0.000000e+00> : vector<24x8xf32>
      %293 = tpu.matmul %292, %275, %cst_128 {dimension_numbers = #tpu.dot_dimension_numbers<[1], [0], [0], [1], [0, 0, 1, 1], [], []>} : vector<24x32xbf16>, vector<32x8xbf16>, vector<24x8xf32> -> vector<24x8xf32>
      %294 = vector.broadcast %277 : vector<1x8xf32> to vector<24x8xf32>
      %295 = arith.addf %293, %294 : vector<24x8xf32>
      %296 = arith.negf %295 : vector<24x8xf32>
      %297 = math.exp %296 : vector<24x8xf32>
      %cst_129 = arith.constant 1.000000e+00 : f32
      %298 = vector.broadcast %cst_129 : f32 to vector<24x8xf32>
      %299 = arith.addf %298, %297 : vector<24x8xf32>
      %300 = arith.divf %298, %299 : vector<24x8xf32>
      %301 = arith.truncf %279 : vector<72x8xf32> to vector<72x8xbf16>
      %cst_130 = arith.constant dense<0.000000e+00> : vector<72x8xf32>
      %302 = tpu.matmul %301, %271, %cst_130 {dimension_numbers = #tpu.dot_dimension_numbers<[1], [0], [0], [1], [0, 0, 1, 1], [], []>} : vector<72x8xbf16>, vector<8x8xbf16>, vector<72x8xf32> -> vector<72x8xf32>
      %303 = vector.extract_strided_slice %302 {offsets = [0, 0], sizes = [24, 8], strides = [1, 1]} : vector<72x8xf32> to vector<24x8xf32>
      %304 = arith.mulf %303, %300 : vector<24x8xf32>
      %305 = vector.extract_strided_slice %302 {offsets = [24, 0], sizes = [24, 8], strides = [1, 1]} : vector<72x8xf32> to vector<24x8xf32>
      %306 = arith.mulf %305, %300 : vector<24x8xf32>
      %307 = vector.extract_strided_slice %302 {offsets = [48, 0], sizes = [24, 8], strides = [1, 1]} : vector<72x8xf32> to vector<24x8xf32>
      %308 = arith.mulf %307, %300 : vector<24x8xf32>
      %309 = tpu.concatenate %304, %306, %308 in 0 : vector<24x8xf32>, vector<24x8xf32>, vector<24x8xf32> -> vector<72x8xf32>
      %c0_131 = arith.constant 0 : index
      %c0_132 = arith.constant 0 : index
      %310 = vector.load %arg30[%c0_131, %c0_132] : memref<24x56xf32, #tpu.memory_space<vmem>>, vector<24x56xf32>
      %311 = vector.extract_strided_slice %310 {offsets = [0, 0], sizes = [24, 32], strides = [1, 1]} : vector<24x56xf32> to vector<24x32xf32>
      %312 = arith.addf %311, %291 : vector<24x32xf32>
      %313 = vector.extract_strided_slice %310 {offsets = [0, 32], sizes = [24, 8], strides = [1, 1]} : vector<24x56xf32> to vector<24x8xf32>
      %314 = vector.extract_strided_slice %309 {offsets = [0, 0], sizes = [24, 8], strides = [1, 1]} : vector<72x8xf32> to vector<24x8xf32>
      %315 = arith.addf %313, %314 : vector<24x8xf32>
      %316 = vector.extract_strided_slice %310 {offsets = [0, 40], sizes = [24, 8], strides = [1, 1]} : vector<24x56xf32> to vector<24x8xf32>
      %317 = vector.extract_strided_slice %309 {offsets = [24, 0], sizes = [24, 8], strides = [1, 1]} : vector<72x8xf32> to vector<24x8xf32>
      %318 = arith.addf %316, %317 : vector<24x8xf32>
      %319 = vector.extract_strided_slice %310 {offsets = [0, 48], sizes = [24, 8], strides = [1, 1]} : vector<24x56xf32> to vector<24x8xf32>
      %320 = vector.extract_strided_slice %309 {offsets = [48, 0], sizes = [24, 8], strides = [1, 1]} : vector<72x8xf32> to vector<24x8xf32>
      %321 = arith.addf %319, %320 : vector<24x8xf32>
      %c0_133 = arith.constant 0 : index
      %c0_134 = arith.constant 0 : index
      %c0_135 = arith.constant 0 : index
      %322 = vector.load %arg24[%c0_133, %c0_134, %c0_135] : memref<1x2x32xf32, #tpu.memory_space<vmem>>, vector<1x2x32xf32>
      %323 = vector.shape_cast %322 : vector<1x2x32xf32> to vector<2x32xf32>
      %cst_136 = arith.constant dense<0.000000e+00> : vector<24xf32>
      %324 = vector.multi_reduction <add>, %312, %cst_136 [1] : vector<24x32xf32> to vector<24xf32>
      %325 = vector.shape_cast %324 : vector<24xf32> to vector<24x1xf32>
      %cst_137 = arith.constant 3.200000e+01 : f32
      %326 = vector.broadcast %cst_137 : f32 to vector<24x1xf32>
      %327 = arith.divf %325, %326 : vector<24x1xf32>
      %328 = vector.broadcast %327 : vector<24x1xf32> to vector<24x32xf32>
      %329 = arith.subf %312, %328 : vector<24x32xf32>
      %330 = arith.mulf %329, %329 : vector<24x32xf32>
      %cst_138 = arith.constant dense<0.000000e+00> : vector<24xf32>
      %331 = vector.multi_reduction <add>, %330, %cst_138 [1] : vector<24x32xf32> to vector<24xf32>
      %332 = vector.shape_cast %331 : vector<24xf32> to vector<24x1xf32>
      %cst_139 = arith.constant 3.200000e+01 : f32
      %333 = vector.broadcast %cst_139 : f32 to vector<24x1xf32>
      %334 = arith.divf %332, %333 : vector<24x1xf32>
      %335 = vector.broadcast %327 : vector<24x1xf32> to vector<24x32xf32>
      %336 = arith.subf %312, %335 : vector<24x32xf32>
      %cst_140 = arith.constant 9.99999974E-6 : f32
      %337 = vector.broadcast %cst_140 : f32 to vector<24x1xf32>
      %338 = arith.addf %334, %337 : vector<24x1xf32>
      %339 = math.rsqrt %338 : vector<24x1xf32>
      %340 = vector.broadcast %339 : vector<24x1xf32> to vector<24x32xf32>
      %341 = arith.mulf %336, %340 : vector<24x32xf32>
      %342 = vector.extract_strided_slice %323 {offsets = [0, 0], sizes = [1, 32], strides = [1, 1]} : vector<2x32xf32> to vector<1x32xf32>
      %343 = vector.broadcast %342 : vector<1x32xf32> to vector<24x32xf32>
      %344 = arith.mulf %341, %343 : vector<24x32xf32>
      %345 = vector.extract_strided_slice %323 {offsets = [1, 0], sizes = [1, 32], strides = [1, 1]} : vector<2x32xf32> to vector<1x32xf32>
      %346 = vector.broadcast %345 : vector<1x32xf32> to vector<24x32xf32>
      %347 = arith.addf %344, %346 : vector<24x32xf32>
      %c0_141 = arith.constant 0 : index
      %c0_142 = arith.constant 0 : index
      %c0_143 = arith.constant 0 : index
      %348 = vector.load %arg25[%c0_141, %c0_142, %c0_143] : memref<1x6x8xf32, #tpu.memory_space<vmem>>, vector<1x6x8xf32>
      %349 = vector.shape_cast %348 : vector<1x6x8xf32> to vector<6x8xf32>
      %350 = arith.addf %315, %318 : vector<24x8xf32>
      %351 = arith.addf %350, %321 : vector<24x8xf32>
      %cst_144 = arith.constant dense<0.000000e+00> : vector<24xf32>
      %352 = vector.multi_reduction <add>, %351, %cst_144 [1] : vector<24x8xf32> to vector<24xf32>
      %353 = vector.shape_cast %352 : vector<24xf32> to vector<24x1xf32>
      %cst_145 = arith.constant 2.400000e+01 : f32
      %354 = vector.broadcast %cst_145 : f32 to vector<24x1xf32>
      %355 = arith.divf %353, %354 : vector<24x1xf32>
      %356 = vector.broadcast %355 : vector<24x1xf32> to vector<24x8xf32>
      %357 = arith.subf %315, %356 : vector<24x8xf32>
      %358 = vector.broadcast %355 : vector<24x1xf32> to vector<24x8xf32>
      %359 = arith.subf %318, %358 : vector<24x8xf32>
      %360 = vector.broadcast %355 : vector<24x1xf32> to vector<24x8xf32>
      %361 = arith.subf %321, %360 : vector<24x8xf32>
      %362 = arith.mulf %357, %357 : vector<24x8xf32>
      %cst_146 = arith.constant dense<0.000000e+00> : vector<24xf32>
      %363 = vector.multi_reduction <add>, %362, %cst_146 [1] : vector<24x8xf32> to vector<24xf32>
      %364 = vector.shape_cast %363 : vector<24xf32> to vector<24x1xf32>
      %365 = arith.mulf %359, %359 : vector<24x8xf32>
      %cst_147 = arith.constant dense<0.000000e+00> : vector<24xf32>
      %366 = vector.multi_reduction <add>, %365, %cst_147 [1] : vector<24x8xf32> to vector<24xf32>
      %367 = vector.shape_cast %366 : vector<24xf32> to vector<24x1xf32>
      %368 = arith.addf %364, %367 : vector<24x1xf32>
      %369 = arith.mulf %361, %361 : vector<24x8xf32>
      %cst_148 = arith.constant dense<0.000000e+00> : vector<24xf32>
      %370 = vector.multi_reduction <add>, %369, %cst_148 [1] : vector<24x8xf32> to vector<24xf32>
      %371 = vector.shape_cast %370 : vector<24xf32> to vector<24x1xf32>
      %372 = arith.addf %368, %371 : vector<24x1xf32>
      %cst_149 = arith.constant 2.400000e+01 : f32
      %373 = vector.broadcast %cst_149 : f32 to vector<24x1xf32>
      %374 = arith.divf %372, %373 : vector<24x1xf32>
      %cst_150 = arith.constant 9.99999974E-6 : f32
      %375 = vector.broadcast %cst_150 : f32 to vector<24x1xf32>
      %376 = arith.addf %374, %375 : vector<24x1xf32>
      %377 = math.rsqrt %376 : vector<24x1xf32>
      %378 = vector.broadcast %377 : vector<24x1xf32> to vector<24x8xf32>
      %379 = arith.mulf %357, %378 : vector<24x8xf32>
      %380 = vector.extract_strided_slice %349 {offsets = [0, 0], sizes = [1, 8], strides = [1, 1]} : vector<6x8xf32> to vector<1x8xf32>
      %381 = vector.broadcast %380 : vector<1x8xf32> to vector<24x8xf32>
      %382 = arith.mulf %379, %381 : vector<24x8xf32>
      %383 = vector.extract_strided_slice %349 {offsets = [3, 0], sizes = [1, 8], strides = [1, 1]} : vector<6x8xf32> to vector<1x8xf32>
      %384 = vector.broadcast %383 : vector<1x8xf32> to vector<24x8xf32>
      %385 = arith.addf %382, %384 : vector<24x8xf32>
      %386 = vector.broadcast %377 : vector<24x1xf32> to vector<24x8xf32>
      %387 = arith.mulf %359, %386 : vector<24x8xf32>
      %388 = vector.extract_strided_slice %349 {offsets = [1, 0], sizes = [1, 8], strides = [1, 1]} : vector<6x8xf32> to vector<1x8xf32>
      %389 = vector.broadcast %388 : vector<1x8xf32> to vector<24x8xf32>
      %390 = arith.mulf %387, %389 : vector<24x8xf32>
      %391 = vector.extract_strided_slice %349 {offsets = [4, 0], sizes = [1, 8], strides = [1, 1]} : vector<6x8xf32> to vector<1x8xf32>
      %392 = vector.broadcast %391 : vector<1x8xf32> to vector<24x8xf32>
      %393 = arith.addf %390, %392 : vector<24x8xf32>
      %394 = vector.broadcast %377 : vector<24x1xf32> to vector<24x8xf32>
      %395 = arith.mulf %361, %394 : vector<24x8xf32>
      %396 = vector.extract_strided_slice %349 {offsets = [2, 0], sizes = [1, 8], strides = [1, 1]} : vector<6x8xf32> to vector<1x8xf32>
      %397 = vector.broadcast %396 : vector<1x8xf32> to vector<24x8xf32>
      %398 = arith.mulf %395, %397 : vector<24x8xf32>
      %399 = vector.extract_strided_slice %349 {offsets = [5, 0], sizes = [1, 8], strides = [1, 1]} : vector<6x8xf32> to vector<1x8xf32>
      %400 = vector.broadcast %399 : vector<1x8xf32> to vector<24x8xf32>
      %401 = arith.addf %398, %400 : vector<24x8xf32>
      %402 = tpu.concatenate %385, %393, %401 in 0 : vector<24x8xf32>, vector<24x8xf32>, vector<24x8xf32> -> vector<72x8xf32>
      %c0_151 = arith.constant 0 : index
      %c0_152 = arith.constant 0 : index
      %c0_153 = arith.constant 0 : index
      %403 = vector.load %arg16[%c0_151, %c0_152, %c0_153] : memref<1x8x8xbf16, #tpu.memory_space<vmem>>, vector<1x8x8xbf16>
      %404 = vector.shape_cast %403 : vector<1x8x8xbf16> to vector<8x8xbf16>
      %cst_154 = arith.constant 0.000000e+00 : f32
      %405 = vector.broadcast %cst_154 : f32 to vector<24x32xf32>
      %406 = arith.cmpf oge, %347, %405 : vector<24x32xf32>
      %cst_155 = arith.constant 0.00999999977 : f32
      %407 = vector.broadcast %cst_155 : f32 to vector<24x32xf32>
      %408 = arith.mulf %407, %347 : vector<24x32xf32>
      %409 = arith.select %406, %347, %408 : vector<24x32xi1>, vector<24x32xf32>
      %410 = arith.truncf %402 : vector<72x8xf32> to vector<72x8xbf16>
      %cst_156 = arith.constant dense<0.000000e+00> : vector<72x8xf32>
      %411 = tpu.matmul %410, %404, %cst_156 {dimension_numbers = #tpu.dot_dimension_numbers<[1], [0], [0], [1], [0, 0, 1, 1], [], []>} : vector<72x8xbf16>, vector<8x8xbf16>, vector<72x8xf32> -> vector<72x8xf32>
      %412 = vector.extract_strided_slice %402 {offsets = [0, 0], sizes = [24, 8], strides = [1, 1]} : vector<72x8xf32> to vector<24x8xf32>
      %413 = vector.extract_strided_slice %402 {offsets = [24, 0], sizes = [24, 8], strides = [1, 1]} : vector<72x8xf32> to vector<24x8xf32>
      %414 = vector.extract_strided_slice %402 {offsets = [48, 0], sizes = [24, 8], strides = [1, 1]} : vector<72x8xf32> to vector<24x8xf32>
      %415 = vector.extract_strided_slice %411 {offsets = [0, 0], sizes = [24, 8], strides = [1, 1]} : vector<72x8xf32> to vector<24x8xf32>
      %416 = vector.extract_strided_slice %411 {offsets = [24, 0], sizes = [24, 8], strides = [1, 1]} : vector<72x8xf32> to vector<24x8xf32>
      %417 = vector.extract_strided_slice %411 {offsets = [48, 0], sizes = [24, 8], strides = [1, 1]} : vector<72x8xf32> to vector<24x8xf32>
      %418 = arith.mulf %412, %415 : vector<24x8xf32>
      %419 = arith.mulf %413, %416 : vector<24x8xf32>
      %420 = arith.addf %418, %419 : vector<24x8xf32>
      %421 = arith.mulf %414, %417 : vector<24x8xf32>
      %422 = arith.addf %420, %421 : vector<24x8xf32>
      %423 = arith.mulf %415, %415 : vector<24x8xf32>
      %424 = arith.mulf %416, %416 : vector<24x8xf32>
      %425 = arith.addf %423, %424 : vector<24x8xf32>
      %426 = arith.mulf %417, %417 : vector<24x8xf32>
      %427 = arith.addf %425, %426 : vector<24x8xf32>
      %cst_157 = arith.constant 0.000000e+00 : f32
      %428 = vector.broadcast %cst_157 : f32 to vector<24x8xf32>
      %429 = arith.cmpf oge, %422, %428 : vector<24x8xf32>
      %430 = arith.extui %429 : vector<24x8xi1> to vector<24x8xi32>
      %431 = arith.sitofp %430 : vector<24x8xi32> to vector<24x8xf32>
      %cst_158 = arith.constant 9.99999997E-7 : f32
      %432 = vector.broadcast %cst_158 : f32 to vector<24x8xf32>
      %433 = arith.addf %427, %432 : vector<24x8xf32>
      %434 = arith.divf %422, %433 : vector<24x8xf32>
      %cst_159 = arith.constant 2.000000e-01 : f32
      %435 = vector.broadcast %cst_159 : f32 to vector<24x8xf32>
      %436 = arith.mulf %435, %412 : vector<24x8xf32>
      %437 = arith.mulf %431, %412 : vector<24x8xf32>
      %cst_160 = arith.constant 1.000000e+00 : f32
      %438 = vector.broadcast %cst_160 : f32 to vector<24x8xf32>
      %439 = arith.subf %438, %431 : vector<24x8xf32>
      %440 = arith.mulf %434, %415 : vector<24x8xf32>
      %441 = arith.subf %412, %440 : vector<24x8xf32>
      %442 = arith.mulf %439, %441 : vector<24x8xf32>
      %443 = arith.addf %437, %442 : vector<24x8xf32>
      %cst_161 = arith.constant 8.000000e-01 : f32
      %444 = vector.broadcast %cst_161 : f32 to vector<24x8xf32>
      %445 = arith.mulf %444, %443 : vector<24x8xf32>
      %446 = arith.addf %436, %445 : vector<24x8xf32>
      %cst_162 = arith.constant 2.000000e-01 : f32
      %447 = vector.broadcast %cst_162 : f32 to vector<24x8xf32>
      %448 = arith.mulf %447, %413 : vector<24x8xf32>
      %449 = arith.mulf %431, %413 : vector<24x8xf32>
      %cst_163 = arith.constant 1.000000e+00 : f32
      %450 = vector.broadcast %cst_163 : f32 to vector<24x8xf32>
      %451 = arith.subf %450, %431 : vector<24x8xf32>
      %452 = arith.mulf %434, %416 : vector<24x8xf32>
      %453 = arith.subf %413, %452 : vector<24x8xf32>
      %454 = arith.mulf %451, %453 : vector<24x8xf32>
      %455 = arith.addf %449, %454 : vector<24x8xf32>
      %cst_164 = arith.constant 8.000000e-01 : f32
      %456 = vector.broadcast %cst_164 : f32 to vector<24x8xf32>
      %457 = arith.mulf %456, %455 : vector<24x8xf32>
      %458 = arith.addf %448, %457 : vector<24x8xf32>
      %cst_165 = arith.constant 2.000000e-01 : f32
      %459 = vector.broadcast %cst_165 : f32 to vector<24x8xf32>
      %460 = arith.mulf %459, %414 : vector<24x8xf32>
      %461 = arith.mulf %431, %414 : vector<24x8xf32>
      %cst_166 = arith.constant 1.000000e+00 : f32
      %462 = vector.broadcast %cst_166 : f32 to vector<24x8xf32>
      %463 = arith.subf %462, %431 : vector<24x8xf32>
      %464 = arith.mulf %434, %417 : vector<24x8xf32>
      %465 = arith.subf %414, %464 : vector<24x8xf32>
      %466 = arith.mulf %463, %465 : vector<24x8xf32>
      %467 = arith.addf %461, %466 : vector<24x8xf32>
      %cst_167 = arith.constant 8.000000e-01 : f32
      %468 = vector.broadcast %cst_167 : f32 to vector<24x8xf32>
      %469 = arith.mulf %468, %467 : vector<24x8xf32>
      %470 = arith.addf %460, %469 : vector<24x8xf32>
      %471 = tpu.concatenate %446, %458, %470 in 0 : vector<24x8xf32>, vector<24x8xf32>, vector<24x8xf32> -> vector<72x8xf32>
      %c0_168 = arith.constant 0 : index
      %c3 = arith.constant 3 : index
      %c0_169 = arith.constant 0 : index
      %c0_170 = arith.constant 0 : index
      %472 = vector.load %arg5[%c0_168, %c3, %c0_169, %c0_170] : memref<1x4x8x8xbf16, #tpu.memory_space<vmem>>, vector<1x1x8x8xbf16>
      %473 = vector.shape_cast %472 : vector<1x1x8x8xbf16> to vector<8x8xbf16>
      %c0_171 = arith.constant 0 : index
      %c3_172 = arith.constant 3 : index
      %c0_173 = arith.constant 0 : index
      %c0_174 = arith.constant 0 : index
      %474 = vector.load %arg6[%c0_171, %c3_172, %c0_173, %c0_174] : memref<1x4x8x8xbf16, #tpu.memory_space<vmem>>, vector<1x1x8x8xbf16>
      %475 = vector.shape_cast %474 : vector<1x1x8x8xbf16> to vector<8x8xbf16>
      %c0_175 = arith.constant 0 : index
      %c3_176 = arith.constant 3 : index
      %c0_177 = arith.constant 0 : index
      %c0_178 = arith.constant 0 : index
      %476 = vector.load %arg7[%c0_175, %c3_176, %c0_177, %c0_178] : memref<1x4x40x32xbf16, #tpu.memory_space<vmem>>, vector<1x1x40x32xbf16>
      %477 = vector.shape_cast %476 : vector<1x1x40x32xbf16> to vector<40x32xbf16>
      %c0_179 = arith.constant 0 : index
      %c3_180 = arith.constant 3 : index
      %c0_181 = arith.constant 0 : index
      %c0_182 = arith.constant 0 : index
      %478 = vector.load %arg8[%c0_179, %c3_180, %c0_181, %c0_182] : memref<1x4x32x8xbf16, #tpu.memory_space<vmem>>, vector<1x1x32x8xbf16>
      %479 = vector.shape_cast %478 : vector<1x1x32x8xbf16> to vector<32x8xbf16>
      %c0_183 = arith.constant 0 : index
      %c3_184 = arith.constant 3 : index
      %c0_185 = arith.constant 0 : index
      %c0_186 = arith.constant 0 : index
      %480 = vector.load %arg9[%c0_183, %c3_184, %c0_185, %c0_186] : memref<1x4x1x8xf32, #tpu.memory_space<vmem>>, vector<1x1x1x8xf32>
      %481 = vector.shape_cast %480 : vector<1x1x1x8xf32> to vector<1x8xf32>
      %482 = arith.truncf %471 : vector<72x8xf32> to vector<72x8xbf16>
      %cst_187 = arith.constant dense<0.000000e+00> : vector<72x8xf32>
      %483 = tpu.matmul %482, %473, %cst_187 {dimension_numbers = #tpu.dot_dimension_numbers<[1], [0], [0], [1], [0, 0, 1, 1], [], []>} : vector<72x8xbf16>, vector<8x8xbf16>, vector<72x8xf32> -> vector<72x8xf32>
      %484 = vector.extract_strided_slice %483 {offsets = [0, 0], sizes = [24, 8], strides = [1, 1]} : vector<72x8xf32> to vector<24x8xf32>
      %485 = vector.extract_strided_slice %483 {offsets = [24, 0], sizes = [24, 8], strides = [1, 1]} : vector<72x8xf32> to vector<24x8xf32>
      %486 = vector.extract_strided_slice %483 {offsets = [48, 0], sizes = [24, 8], strides = [1, 1]} : vector<72x8xf32> to vector<24x8xf32>
      %487 = arith.mulf %484, %484 : vector<24x8xf32>
      %488 = arith.mulf %485, %485 : vector<24x8xf32>
      %489 = arith.addf %487, %488 : vector<24x8xf32>
      %490 = arith.mulf %486, %486 : vector<24x8xf32>
      %491 = arith.addf %489, %490 : vector<24x8xf32>
      %492 = math.sqrt %491 : vector<24x8xf32>
      %493 = tpu.concatenate %492, %409 in 1 : vector<24x8xf32>, vector<24x32xf32> -> vector<24x40xf32>
      %494 = arith.truncf %493 : vector<24x40xf32> to vector<24x40xbf16>
      %cst_188 = arith.constant dense<0.000000e+00> : vector<24x32xf32>
      %495 = tpu.matmul %494, %477, %cst_188 {dimension_numbers = #tpu.dot_dimension_numbers<[1], [0], [0], [1], [0, 0, 1, 1], [], []>} : vector<24x40xbf16>, vector<40x32xbf16>, vector<24x32xf32> -> vector<24x32xf32>
      %496 = arith.truncf %495 : vector<24x32xf32> to vector<24x32xbf16>
      %cst_189 = arith.constant dense<0.000000e+00> : vector<24x8xf32>
      %497 = tpu.matmul %496, %479, %cst_189 {dimension_numbers = #tpu.dot_dimension_numbers<[1], [0], [0], [1], [0, 0, 1, 1], [], []>} : vector<24x32xbf16>, vector<32x8xbf16>, vector<24x8xf32> -> vector<24x8xf32>
      %498 = vector.broadcast %481 : vector<1x8xf32> to vector<24x8xf32>
      %499 = arith.addf %497, %498 : vector<24x8xf32>
      %500 = arith.negf %499 : vector<24x8xf32>
      %501 = math.exp %500 : vector<24x8xf32>
      %cst_190 = arith.constant 1.000000e+00 : f32
      %502 = vector.broadcast %cst_190 : f32 to vector<24x8xf32>
      %503 = arith.addf %502, %501 : vector<24x8xf32>
      %504 = arith.divf %502, %503 : vector<24x8xf32>
      %505 = arith.truncf %483 : vector<72x8xf32> to vector<72x8xbf16>
      %cst_191 = arith.constant dense<0.000000e+00> : vector<72x8xf32>
      %506 = tpu.matmul %505, %475, %cst_191 {dimension_numbers = #tpu.dot_dimension_numbers<[1], [0], [0], [1], [0, 0, 1, 1], [], []>} : vector<72x8xbf16>, vector<8x8xbf16>, vector<72x8xf32> -> vector<72x8xf32>
      %507 = vector.extract_strided_slice %506 {offsets = [0, 0], sizes = [24, 8], strides = [1, 1]} : vector<72x8xf32> to vector<24x8xf32>
      %508 = arith.mulf %507, %504 : vector<24x8xf32>
      %509 = vector.extract_strided_slice %506 {offsets = [24, 0], sizes = [24, 8], strides = [1, 1]} : vector<72x8xf32> to vector<24x8xf32>
      %510 = arith.mulf %509, %504 : vector<24x8xf32>
      %511 = vector.extract_strided_slice %506 {offsets = [48, 0], sizes = [24, 8], strides = [1, 1]} : vector<72x8xf32> to vector<24x8xf32>
      %512 = arith.mulf %511, %504 : vector<24x8xf32>
      %513 = tpu.concatenate %508, %510, %512 in 0 : vector<24x8xf32>, vector<24x8xf32>, vector<24x8xf32> -> vector<72x8xf32>
      %514 = arith.addf %266, %495 : vector<24x32xf32>
      %c0_192 = arith.constant 0 : index
      %c0_193 = arith.constant 0 : index
      %515 = vector.load %arg27[%c0_192, %c0_193] : memref<24x32xf32, #tpu.memory_space<vmem>>, vector<24x32xf32>
      tpu.vector_store %arg27[%c0_192, %c0_193], %514 {strides = array<i32>} : memref<24x32xf32, #tpu.memory_space<vmem>>, vector<24x32xf32>,
      %516 = arith.addf %267, %513 : vector<72x8xf32>
      %c0_194 = arith.constant 0 : index
      %c0_195 = arith.constant 0 : index
      %517 = vector.load %arg28[%c0_194, %c0_195] : memref<72x8xf32, #tpu.memory_space<vmem>>, vector<72x8xf32>
      tpu.vector_store %arg28[%c0_194, %c0_195], %516 {strides = array<i32>} : memref<72x8xf32, #tpu.memory_space<vmem>>, vector<72x8xf32>,
    } else {
    }
    %c1_i32_100 = arith.constant 1 : i32
    %261 = arith.cmpi eq, %arg0, %c1_i32_100 : i32
    %c1_i32_101 = arith.constant 1 : i32
    %262 = arith.cmpi eq, %arg1, %c1_i32_101 : i32
    %263 = arith.andi %261, %262 : i1
    %264 = arith.extui %263 : i1 to i32
    %c0_i32_102 = arith.constant 0 : i32
    %265 = arith.cmpi ne, %264, %c0_i32_102 : i32
    scf.if %265 {
      %c0_103 = arith.constant 0 : index
      %c0_104 = arith.constant 0 : index
      %266 = vector.load %arg28[%c0_103, %c0_104] : memref<72x8xf32, #tpu.memory_space<vmem>>, vector<72x8xf32>
      %c0_105 = arith.constant 0 : index
      %c0_106 = arith.constant 0 : index
      %267 = vector.load %arg27[%c0_105, %c0_106] : memref<24x32xf32, #tpu.memory_space<vmem>>, vector<24x32xf32>
      %268 = vector.extract_strided_slice %266 {offsets = [0, 0], sizes = [24, 8], strides = [1, 1]} : vector<72x8xf32> to vector<24x8xf32>
      %269 = vector.extract_strided_slice %266 {offsets = [24, 0], sizes = [24, 8], strides = [1, 1]} : vector<72x8xf32> to vector<24x8xf32>
      %270 = vector.extract_strided_slice %266 {offsets = [48, 0], sizes = [24, 8], strides = [1, 1]} : vector<72x8xf32> to vector<24x8xf32>
      %271 = tpu.concatenate %267, %268, %269, %270 in 1 : vector<24x32xf32>, vector<24x8xf32>, vector<24x8xf32>, vector<24x8xf32> -> vector<24x56xf32>
      %c0_107 = arith.constant 0 : index
      %c0_108 = arith.constant 0 : index
      %272 = vector.load %arg26[%c0_107, %c0_108] : memref<24x56xf32, #tpu.memory_space<vmem>>, vector<24x56xf32>
      tpu.vector_store %arg26[%c0_107, %c0_108], %271 {strides = array<i32>} : memref<24x56xf32, #tpu.memory_space<vmem>>, vector<24x56xf32>,
    } else {
    }
    return
  }
  func.func @transform_0(%arg0: i32, %arg1: i32) -> (i32, i32) {
    %c0_i32 = arith.constant 0 : i32
    %c0_i32_0 = arith.constant 0 : i32
    %c0_i32_1 = arith.constant 0 : i32
    return %c0_i32, %c0_i32_0 : i32, i32
  }
  func.func @transform_1(%arg0: i32, %arg1: i32) -> (i32, i32) {
    %c0_i32 = arith.constant 0 : i32
    %c0_i32_0 = arith.constant 0 : i32
    return %arg1, %c0_i32 : i32, i32
  }
  func.func @transform_2(%arg0: i32, %arg1: i32) -> (i32, i32) {
    %c0_i32 = arith.constant 0 : i32
    %c0_i32_0 = arith.constant 0 : i32
    return %c0_i32, %arg1 : i32, i32
  }
  func.func @transform_3(%arg0: i32, %arg1: i32) -> (i32, i32, i32, i32) {
    %c0_i32 = arith.constant 0 : i32
    %c0_i32_0 = arith.constant 0 : i32
    %c0_i32_1 = arith.constant 0 : i32
    %c0_i32_2 = arith.constant 0 : i32
    return %arg0, %c0_i32, %c0_i32_0, %c0_i32_1 : i32, i32, i32, i32
  }
  func.func @transform_4(%arg0: i32, %arg1: i32) -> (i32, i32, i32, i32) {
    %c0_i32 = arith.constant 0 : i32
    %c0_i32_0 = arith.constant 0 : i32
    %c0_i32_1 = arith.constant 0 : i32
    %c0_i32_2 = arith.constant 0 : i32
    return %arg0, %c0_i32, %c0_i32_0, %c0_i32_1 : i32, i32, i32, i32
  }
  func.func @transform_5(%arg0: i32, %arg1: i32) -> (i32, i32, i32, i32) {
    %c0_i32 = arith.constant 0 : i32
    %c0_i32_0 = arith.constant 0 : i32
    %c0_i32_1 = arith.constant 0 : i32
    %c0_i32_2 = arith.constant 0 : i32
    return %arg0, %c0_i32, %c0_i32_0, %c0_i32_1 : i32, i32, i32, i32
  }
  func.func @transform_6(%arg0: i32, %arg1: i32) -> (i32, i32, i32, i32) {
    %c0_i32 = arith.constant 0 : i32
    %c0_i32_0 = arith.constant 0 : i32
    %c0_i32_1 = arith.constant 0 : i32
    %c0_i32_2 = arith.constant 0 : i32
    return %arg0, %c0_i32, %c0_i32_0, %c0_i32_1 : i32, i32, i32, i32
  }
  func.func @transform_7(%arg0: i32, %arg1: i32) -> (i32, i32, i32, i32) {
    %c0_i32 = arith.constant 0 : i32
    %c0_i32_0 = arith.constant 0 : i32
    %c0_i32_1 = arith.constant 0 : i32
    %c0_i32_2 = arith.constant 0 : i32
    return %arg0, %c0_i32, %c0_i32_0, %c0_i32_1 : i32, i32, i32, i32
  }
  func.func @transform_8(%arg0: i32, %arg1: i32) -> (i32, i32, i32) {
    %c0_i32 = arith.constant 0 : i32
    %c0_i32_0 = arith.constant 0 : i32
    %c0_i32_1 = arith.constant 0 : i32
    return %arg0, %c0_i32, %c0_i32_0 : i32, i32, i32
  }
  func.func @transform_9(%arg0: i32, %arg1: i32) -> (i32, i32, i32) {
    %c0_i32 = arith.constant 0 : i32
    %c0_i32_0 = arith.constant 0 : i32
    %c0_i32_1 = arith.constant 0 : i32
    return %arg0, %c0_i32, %c0_i32_0 : i32, i32, i32
  }
  func.func @transform_10(%arg0: i32, %arg1: i32) -> (i32, i32, i32) {
    %c0_i32 = arith.constant 0 : i32
    %c0_i32_0 = arith.constant 0 : i32
    %c0_i32_1 = arith.constant 0 : i32
    return %arg0, %c0_i32, %c0_i32_0 : i32, i32, i32
  }
  func.func @transform_11(%arg0: i32, %arg1: i32) -> (i32, i32, i32) {
    %c0_i32 = arith.constant 0 : i32
    %c0_i32_0 = arith.constant 0 : i32
    %c0_i32_1 = arith.constant 0 : i32
    return %arg0, %c0_i32, %c0_i32_0 : i32, i32, i32
  }
  func.func @transform_12(%arg0: i32, %arg1: i32) -> (i32, i32, i32) {
    %c0_i32 = arith.constant 0 : i32
    %c0_i32_0 = arith.constant 0 : i32
    %c0_i32_1 = arith.constant 0 : i32
    return %arg0, %c0_i32, %c0_i32_0 : i32, i32, i32
  }
  func.func @transform_13(%arg0: i32, %arg1: i32) -> (i32, i32, i32) {
    %c0_i32 = arith.constant 0 : i32
    %c0_i32_0 = arith.constant 0 : i32
    %c0_i32_1 = arith.constant 0 : i32
    return %arg0, %c0_i32, %c0_i32_0 : i32, i32, i32
  }
  func.func @transform_14(%arg0: i32, %arg1: i32) -> (i32, i32, i32) {
    %c0_i32 = arith.constant 0 : i32
    %c0_i32_0 = arith.constant 0 : i32
    %c0_i32_1 = arith.constant 0 : i32
    return %arg0, %c0_i32, %c0_i32_0 : i32, i32, i32
  }
  func.func @transform_15(%arg0: i32, %arg1: i32) -> (i32, i32, i32) {
    %c0_i32 = arith.constant 0 : i32
    %c0_i32_0 = arith.constant 0 : i32
    %c0_i32_1 = arith.constant 0 : i32
    return %arg0, %c0_i32, %c0_i32_0 : i32, i32, i32
  }
  func.func @transform_16(%arg0: i32, %arg1: i32) -> (i32, i32, i32) {
    %c0_i32 = arith.constant 0 : i32
    %c0_i32_0 = arith.constant 0 : i32
    %c0_i32_1 = arith.constant 0 : i32
    return %arg0, %c0_i32, %c0_i32_0 : i32, i32, i32
  }
  func.func @transform_17(%arg0: i32, %arg1: i32) -> (i32, i32, i32) {
    %c0_i32 = arith.constant 0 : i32
    %c0_i32_0 = arith.constant 0 : i32
    %c0_i32_1 = arith.constant 0 : i32
    return %arg0, %c0_i32, %c0_i32_0 : i32, i32, i32
  }
  func.func @transform_18(%arg0: i32, %arg1: i32) -> (i32, i32, i32) {
    %c0_i32 = arith.constant 0 : i32
    %c0_i32_0 = arith.constant 0 : i32
    %c0_i32_1 = arith.constant 0 : i32
    return %arg0, %c0_i32, %c0_i32_0 : i32, i32, i32
  }
  func.func @transform_19(%arg0: i32, %arg1: i32) -> (i32, i32, i32) {
    %c0_i32 = arith.constant 0 : i32
    %c0_i32_0 = arith.constant 0 : i32
    %c0_i32_1 = arith.constant 0 : i32
    return %arg0, %c0_i32, %c0_i32_0 : i32, i32, i32
  }
  func.func @transform_20(%arg0: i32, %arg1: i32) -> (i32, i32, i32) {
    %c0_i32 = arith.constant 0 : i32
    %c0_i32_0 = arith.constant 0 : i32
    %c0_i32_1 = arith.constant 0 : i32
    return %arg0, %c0_i32, %c0_i32_0 : i32, i32, i32
  }
  func.func @transform_21(%arg0: i32, %arg1: i32) -> (i32, i32, i32) {
    %c0_i32 = arith.constant 0 : i32
    %c0_i32_0 = arith.constant 0 : i32
    %c0_i32_1 = arith.constant 0 : i32
    return %arg0, %c0_i32, %c0_i32_0 : i32, i32, i32
  }
  func.func @transform_22(%arg0: i32, %arg1: i32) -> (i32, i32, i32) {
    %c0_i32 = arith.constant 0 : i32
    %c0_i32_0 = arith.constant 0 : i32
    %c0_i32_1 = arith.constant 0 : i32
    return %arg0, %c0_i32, %c0_i32_0 : i32, i32, i32
  }
  func.func @transform_23(%arg0: i32, %arg1: i32) -> (i32, i32, i32) {
    %c0_i32 = arith.constant 0 : i32
    %c0_i32_0 = arith.constant 0 : i32
    %c0_i32_1 = arith.constant 0 : i32
    return %arg0, %c0_i32, %c0_i32_0 : i32, i32, i32
  }
  func.func @transform_24(%arg0: i32, %arg1: i32) -> (i32, i32) {
    %c0_i32 = arith.constant 0 : i32
    %c0_i32_0 = arith.constant 0 : i32
    %c0_i32_1 = arith.constant 0 : i32
    return %c0_i32, %c0_i32_0 : i32, i32
  }
}

</mosaic_0001>

<llo_original>
// kernel: context_encoder_forward.1
$region0: #{context_encoder_forward.1}
  #allocation0 [shape = 'u32[]', space=smem, size = 0x4, offset = 0x4, fixed_abs, tag = 'smem constant byte address 0x4 - core index']
  #allocation1 [shape = 'u32[144,128]{1,0:T(1,128)}', space=vmem, size = 0x12000, scoped, tag = 'internal scratch']
  #allocation2 [shape = 'f32[24,32]{1,0:T(8,128)}', space=vmem, size = 0x3000, scoped, tag = 'scratch operand']
  #allocation3 [shape = 'f32[72,8]{1,0:T(8,128)}', space=vmem, size = 0x9000, scoped, tag = 'scratch operand']
  #allocation4 [shape = 'f32[24,56]{1,0:T(8,128)}', space=vmem, size = 0x3000, scoped, tag = 'scratch operand']
  #allocation5 [shape = 'f32[24,56]{1,0:T(8,128)}', space=vmem, size = 0x3000, scoped, tag = 'scratch operand']
  %s0 = inlined_call_operand.vmem [shape: f32[24,56], index: 0, kind: input, shape index: {}]
  %s1 = inlined_call_operand.vmem [shape: f32[256,21], index: 1, kind: input, shape index: {}]
  %s2 = inlined_call_operand.vmem [shape: s32[1,256], index: 2, kind: input, shape index: {}]
  %s3 = inlined_call_operand.vmem [shape: bf16[2,4,8,8], index: 3, kind: input, shape index: {}]
  %s4 = inlined_call_operand.vmem [shape: bf16[2,4,8,8], index: 4, kind: input, shape index: {}]
  %s5 = inlined_call_operand.vmem [shape: bf16[2,4,40,32], index: 5, kind: input, shape index: {}]
  %s6 = inlined_call_operand.vmem [shape: bf16[2,4,32,8], index: 6, kind: input, shape index: {}]
  %s7 = inlined_call_operand.vmem [shape: f32[2,4,1,8], index: 7, kind: input, shape index: {}]
  %s8 = inlined_call_operand.vmem [shape: bf16[2,16,16], index: 8, kind: input, shape index: {}]
  %s9 = inlined_call_operand.vmem [shape: bf16[2,16,16], index: 9, kind: input, shape index: {}]
  %s10 = inlined_call_operand.vmem [shape: bf16[2,32,16], index: 10, kind: input, shape index: {}]
  %s11 = inlined_call_operand.vmem [shape: bf16[2,16,16], index: 11, kind: input, shape index: {}]
  %s12 = inlined_call_operand.vmem [shape: f32[2,1,16], index: 12, kind: input, shape index: {}]
  %s13 = inlined_call_operand.vmem [shape: bf16[2,16,16], index: 13, kind: input, shape index: {}]
  %s14 = inlined_call_operand.vmem [shape: bf16[2,8,8], index: 14, kind: input, shape index: {}]
  %s15 = inlined_call_operand.vmem [shape: bf16[2,16,40], index: 15, kind: input, shape index: {}]
  %s16 = inlined_call_operand.vmem [shape: f32[2,1,40], index: 16, kind: input, shape index: {}]
  %s17 = inlined_call_operand.vmem [shape: bf16[2,32,8], index: 17, kind: input, shape index: {}]
  %s18 = inlined_call_operand.vmem [shape: f32[2,1,8], index: 18, kind: input, shape index: {}]
  %s19 = inlined_call_operand.vmem [shape: bf16[2,16,8], index: 19, kind: input, shape index: {}]
  %s20 = inlined_call_operand.vmem [shape: f32[2,1,8], index: 20, kind: input, shape index: {}]
  %s21 = inlined_call_operand.vmem [shape: f32[2,1,16], index: 21, kind: input, shape index: {}]
  %s22 = inlined_call_operand.vmem [shape: f32[2,2,32], index: 22, kind: input, shape index: {}]
  %s23 = inlined_call_operand.vmem [shape: f32[2,6,8], index: 23, kind: input, shape index: {}]
  %s24 = inlined_call_operand.vmem [shape: f32[24,56], index: 24, kind: output, shape index: {}]
  %s25 = sld [smem:[#allocation0]]
  $region145: #{context_encoder_forward.1} parent=0
    _
  %s27 = ssub.s32 1, %s25
  %s28 = scalar_select 0, %s27, %s25
  loop: start=0, step=1, limit=6
  $region2: #{context_encoder_forward.1} parent=0 // loop_pre_header
    _
  $region3: #{context_encoder_forward.1} parent=0 // loop_header
    %s30 = sphi 0, %s34
    %p31 = scmp.ge.s32.totalorder %s30, 6
    %s37 = sphi 0, %s49
    %s38 = sphi 0, %s45
    %s39 = sphi 0, %s37
    %s40 = sphi 0, %s38
    %s41 = sphi 0, %s39
    %s42 = sphi 0, %s40
    %s50 = sphi 0, %s50
    %s52 = sphi 0, %s50
    %s53 = sphi 0, %s52
    %s67 = sphi 0, %s53
    %s73 = sphi 0, %s75
    %s76 = sphi 0, %s73
    %s77 = sphi 0, %s76
    %s93 = sphi 0, %s77
    %s99 = sphi 0, %s101
    %s102 = sphi 0, %s99
    %s103 = sphi 0, %s102
    %s119 = sphi 0, %s103
    %s125 = sphi 0, %s127
    %s128 = sphi 0, %s125
    %s129 = sphi 0, %s128
    %s145 = sphi 0, %s129
    %s151 = sphi 0, %s153
    %s154 = sphi 0, %s151
    %s155 = sphi 0, %s154
    %s171 = sphi 0, %s155
    %s177 = sphi 0, %s179
    %s180 = sphi 0, %s177
    %s181 = sphi 0, %s180
    %s197 = sphi 0, %s181
    %s203 = sphi 0, %s205
    %s206 = sphi 0, %s203
    %s207 = sphi 0, %s206
    %s223 = sphi 0, %s207
    %s229 = sphi 0, %s231
    %s232 = sphi 0, %s229
    %s233 = sphi 0, %s232
    %s249 = sphi 0, %s233
    %s255 = sphi 0, %s257
    %s258 = sphi 0, %s255
    %s259 = sphi 0, %s258
    %s275 = sphi 0, %s259
    %s281 = sphi 0, %s283
    %s284 = sphi 0, %s281
    %s285 = sphi 0, %s284
    %s301 = sphi 0, %s285
    %s307 = sphi 0, %s309
    %s310 = sphi 0, %s307
    %s311 = sphi 0, %s310
    %s327 = sphi 0, %s311
    %s333 = sphi 0, %s335
    %s336 = sphi 0, %s333
    %s337 = sphi 0, %s336
    %s353 = sphi 0, %s337
    %s359 = sphi 0, %s361
    %s362 = sphi 0, %s359
    %s363 = sphi 0, %s362
    %s379 = sphi 0, %s363
    %s385 = sphi 0, %s387
    %s388 = sphi 0, %s385
    %s389 = sphi 0, %s388
    %s405 = sphi 0, %s389
    %s411 = sphi 0, %s413
    %s414 = sphi 0, %s411
    %s415 = sphi 0, %s414
    %s431 = sphi 0, %s415
    %s437 = sphi 0, %s439
    %s440 = sphi 0, %s437
    %s441 = sphi 0, %s440
    %s457 = sphi 0, %s441
    %s463 = sphi 0, %s465
    %s466 = sphi 0, %s463
    %s467 = sphi 0, %s466
    %s483 = sphi 0, %s467
    %s489 = sphi 0, %s491
    %s492 = sphi 0, %s489
    %s493 = sphi 0, %s492
    %s509 = sphi 0, %s493
    %s515 = sphi 0, %s517
    %s518 = sphi 0, %s515
    %s519 = sphi 0, %s518
    %s535 = sphi 0, %s519
    %s541 = sphi 0, %s543
    %s544 = sphi 0, %s541
    %s545 = sphi 0, %s544
    %s561 = sphi 0, %s545
    %s567 = sphi 0, %s569
    %s570 = sphi 0, %s567
    %s571 = sphi 0, %s570
    %s587 = sphi 0, %s571
    %s593 = sphi 0, %s595
    %s596 = sphi 0, %s593
    %s597 = sphi 0, %s596
    %s613 = sphi 0, %s597
    %s619 = sphi 0, %s621
    %s622 = sphi 0, %s619
    %s623 = sphi 0, %s622
    %s639 = sphi 0, %s623
    %s645 = sphi 0, %s647
    %s648 = sphi 0, %s645
    %s649 = sphi 0, %s648
    %s665 = sphi 0, %s649
    %s669 = sphi 0, %s669
    %s671 = sphi 0, %s669
    %s672 = sphi 0, %s671
    %s686 = sphi 0, %s672
  $region4: #{context_encoder_forward.1} parent=0 // loop_header_branch
    %33 = sbr.rel (%p31) target = $region8
  $region5: #{context_encoder_forward.1} parent=0 // loop_body
    %s35 = ssub.s32 %s30, 1
    %s36 = ssub.s32 %s30, 2
    %s43 = sadd.s32 1, %s38
    %p44 = scmp.ge.s32.totalorder %s43, 2
    %s45 = scalar_select %p44, 0, %s43
    %s46 = sadd.s32 1, %s37
    %s47 = scalar_select %p44, %s46, %s37
    %p48 = scmp.ge.s32.totalorder %s47, 2
    %s49 = scalar_select %p48, 0, %s47
    %s51 = sadd.s32 %s50, 1
    %p54 = scmp.eq.s32.totalorder %s30, 3
    %p55 = scmp.ne.s32.totalorder %s50, %s52
    %p56 = scmp.eq.s32.totalorder %s30, 0
    %p57 = por %p55, %p56
    %p58 = scmp.ne.s32.totalorder %s50, %s52
    %p59 = scmp.eq.s32.totalorder %s35, 3
    %p60 = por %p58, %p59
    %p61 = scmp.ne.s32.totalorder %s52, %s53
    %p62 = scmp.eq.s32.totalorder %s35, 0
    %p63 = por %p61, %p62
    %p64 = scmp.ne.s32.totalorder %s52, %s53
    %p65 = scmp.eq.s32.totalorder %s36, 3
    %p66 = por %p64, %p65
    %p68 = scmp.ne.s32.totalorder %s53, %s67
    %p69 = scmp.eq.s32.totalorder %s36, 0
    %p70 = por %p68, %p69
    %s71 = ssub.s32 %s38, %s45
    %p72 = scmp.eq.s32.totalorder %s71, 0
    %s74 = sadd.s32 %s73, 1
    %s75 = scalar_select %p72, %s73, %s74
    %p78 = pneg %p72
    %p79 = scmp.eq.s32.totalorder %s30, 3
    %p80 = por %p78, %p79
    %p81 = scmp.ne.s32.totalorder %s73, %s76
    %p82 = scmp.eq.s32.totalorder %s30, 0
    %p83 = por %p81, %p82
    %p84 = scmp.ne.s32.totalorder %s73, %s76
    %p85 = scmp.eq.s32.totalorder %s35, 3
    %p86 = por %p84, %p85
    %p87 = scmp.ne.s32.totalorder %s76, %s77
    %p88 = scmp.eq.s32.totalorder %s35, 0
    %p89 = por %p87, %p88
    %p90 = scmp.ne.s32.totalorder %s76, %s77
    %p91 = scmp.eq.s32.totalorder %s36, 3
    %p92 = por %p90, %p91
    %p94 = scmp.ne.s32.totalorder %s77, %s93
    %p95 = scmp.eq.s32.totalorder %s36, 0
    %p96 = por %p94, %p95
    %s97 = ssub.s32 %s38, %s45
    %p98 = scmp.eq.s32.totalorder %s97, 0
    %s100 = sadd.s32 %s99, 1
    %s101 = scalar_select %p98, %s99, %s100
    %p104 = pneg %p98
    %p105 = scmp.eq.s32.totalorder %s30, 3
    %p106 = por %p104, %p105
    %p107 = scmp.ne.s32.totalorder %s99, %s102
    %p108 = scmp.eq.s32.totalorder %s30, 0
    %p109 = por %p107, %p108
    %p110 = scmp.ne.s32.totalorder %s99, %s102
    %p111 = scmp.eq.s32.totalorder %s35, 3
    %p112 = por %p110, %p111
    %p113 = scmp.ne.s32.totalorder %s102, %s103
    %p114 = scmp.eq.s32.totalorder %s35, 0
    %p115 = por %p113, %p114
    %p116 = scmp.ne.s32.totalorder %s102, %s103
    %p117 = scmp.eq.s32.totalorder %s36, 3
    %p118 = por %p116, %p117
    %p120 = scmp.ne.s32.totalorder %s103, %s119
    %p121 = scmp.eq.s32.totalorder %s36, 0
    %p122 = por %p120, %p121
    %s123 = ssub.s32 %s37, %s49
    %p124 = scmp.eq.s32.totalorder %s123, 0
    %s126 = sadd.s32 %s125, 1
    %s127 = scalar_select %p124, %s125, %s126
    %p130 = pneg %p124
    %p131 = scmp.eq.s32.totalorder %s30, 3
    %p132 = por %p130, %p131
    %p133 = scmp.ne.s32.totalorder %s125, %s128
    %p134 = scmp.eq.s32.totalorder %s30, 0
    %p135 = por %p133, %p134
    %p136 = scmp.ne.s32.totalorder %s125, %s128
    %p137 = scmp.eq.s32.totalorder %s35, 3
    %p138 = por %p136, %p137
    %p139 = scmp.ne.s32.totalorder %s128, %s129
    %p140 = scmp.eq.s32.totalorder %s35, 0
    %p141 = por %p139, %p140
    %p142 = scmp.ne.s32.totalorder %s128, %s129
    %p143 = scmp.eq.s32.totalorder %s36, 3
    %p144 = por %p142, %p143
    %p146 = scmp.ne.s32.totalorder %s129, %s145
    %p147 = scmp.eq.s32.totalorder %s36, 0
    %p148 = por %p146, %p147
    %s149 = ssub.s32 %s37, %s49
    %p150 = scmp.eq.s32.totalorder %s149, 0
    %s152 = sadd.s32 %s151, 1
    %s153 = scalar_select %p150, %s151, %s152
    %p156 = pneg %p150
    %p157 = scmp.eq.s32.totalorder %s30, 3
    %p158 = por %p156, %p157
    %p159 = scmp.ne.s32.totalorder %s151, %s154
    %p160 = scmp.eq.s32.totalorder %s30, 0
    %p161 = por %p159, %p160
    %p162 = scmp.ne.s32.totalorder %s151, %s154
    %p163 = scmp.eq.s32.totalorder %s35, 3
    %p164 = por %p162, %p163
    %p165 = scmp.ne.s32.totalorder %s154, %s155
    %p166 = scmp.eq.s32.totalorder %s35, 0
    %p167 = por %p165, %p166
    %p168 = scmp.ne.s32.totalorder %s154, %s155
    %p169 = scmp.eq.s32.totalorder %s36, 3
    %p170 = por %p168, %p169
    %p172 = scmp.ne.s32.totalorder %s155, %s171
    %p173 = scmp.eq.s32.totalorder %s36, 0
    %p174 = por %p172, %p173
    %s175 = ssub.s32 %s37, %s49
    %p176 = scmp.eq.s32.totalorder %s175, 0
    %s178 = sadd.s32 %s177, 1
    %s179 = scalar_select %p176, %s177, %s178
    %p182 = pneg %p176
    %p183 = scmp.eq.s32.totalorder %s30, 3
    %p184 = por %p182, %p183
    %p185 = scmp.ne.s32.totalorder %s177, %s180
    %p186 = scmp.eq.s32.totalorder %s30, 0
    %p187 = por %p185, %p186
    %p188 = scmp.ne.s32.totalorder %s177, %s180
    %p189 = scmp.eq.s32.totalorder %s35, 3
    %p190 = por %p188, %p189
    %p191 = scmp.ne.s32.totalorder %s180, %s181
    %p192 = scmp.eq.s32.totalorder %s35, 0
    %p193 = por %p191, %p192
    %p194 = scmp.ne.s32.totalorder %s180, %s181
    %p195 = scmp.eq.s32.totalorder %s36, 3
    %p196 = por %p194, %p195
    %p198 = scmp.ne.s32.totalorder %s181, %s197
    %p199 = scmp.eq.s32.totalorder %s36, 0
    %p200 = por %p198, %p199
    %s201 = ssub.s32 %s37, %s49
    %p202 = scmp.eq.s32.totalorder %s201, 0
    %s204 = sadd.s32 %s203, 1
    %s205 = scalar_select %p202, %s203, %s204
    %p208 = pneg %p202
    %p209 = scmp.eq.s32.totalorder %s30, 3
    %p210 = por %p208, %p209
    %p211 = scmp.ne.s32.totalorder %s203, %s206
    %p212 = scmp.eq.s32.totalorder %s30, 0
    %p213 = por %p211, %p212
    %p214 = scmp.ne.s32.totalorder %s203, %s206
    %p215 = scmp.eq.s32.totalorder %s35, 3
    %p216 = por %p214, %p215
    %p217 = scmp.ne.s32.totalorder %s206, %s207
    %p218 = scmp.eq.s32.totalorder %s35, 0
    %p219 = por %p217, %p218
    %p220 = scmp.ne.s32.totalorder %s206, %s207
    %p221 = scmp.eq.s32.totalorder %s36, 3
    %p222 = por %p220, %p221
    %p224 = scmp.ne.s32.totalorder %s207, %s223
    %p225 = scmp.eq.s32.totalorder %s36, 0
    %p226 = por %p224, %p225
    %s227 = ssub.s32 %s37, %s49
    %p228 = scmp.eq.s32.totalorder %s227, 0
    %s230 = sadd.s32 %s229, 1
    %s231 = scalar_select %p228, %s229, %s230
    %p234 = pneg %p228
    %p235 = scmp.eq.s32.totalorder %s30, 3
    %p236 = por %p234, %p235
    %p237 = scmp.ne.s32.totalorder %s229, %s232
    %p238 = scmp.eq.s32.totalorder %s30, 0
    %p239 = por %p237, %p238
    %p240 = scmp.ne.s32.totalorder %s229, %s232
    %p241 = scmp.eq.s32.totalorder %s35, 3
    %p242 = por %p240, %p241
    %p243 = scmp.ne.s32.totalorder %s232, %s233
    %p244 = scmp.eq.s32.totalorder %s35, 0
    %p245 = por %p243, %p244
    %p246 = scmp.ne.s32.totalorder %s232, %s233
    %p247 = scmp.eq.s32.totalorder %s36, 3
    %p248 = por %p246, %p247
    %p250 = scmp.ne.s32.totalorder %s233, %s249
    %p251 = scmp.eq.s32.totalorder %s36, 0
    %p252 = por %p250, %p251
    %s253 = ssub.s32 %s37, %s49
    %p254 = scmp.eq.s32.totalorder %s253, 0
    %s256 = sadd.s32 %s255, 1
    %s257 = scalar_select %p254, %s255, %s256
    %p260 = pneg %p254
    %p261 = scmp.eq.s32.totalorder %s30, 3
    %p262 = por %p260, %p261
    %p263 = scmp.ne.s32.totalorder %s255, %s258
    %p264 = scmp.eq.s32.totalorder %s30, 0
    %p265 = por %p263, %p264
    %p266 = scmp.ne.s32.totalorder %s255, %s258
    %p267 = scmp.eq.s32.totalorder %s35, 3
    %p268 = por %p266, %p267
    %p269 = scmp.ne.s32.totalorder %s258, %s259
    %p270 = scmp.eq.s32.totalorder %s35, 0
    %p271 = por %p269, %p270
    %p272 = scmp.ne.s32.totalorder %s258, %s259
    %p273 = scmp.eq.s32.totalorder %s36, 3
    %p274 = por %p272, %p273
    %p276 = scmp.ne.s32.totalorder %s259, %s275
    %p277 = scmp.eq.s32.totalorder %s36, 0
    %p278 = por %p276, %p277
    %s279 = ssub.s32 %s37, %s49
    %p280 = scmp.eq.s32.totalorder %s279, 0
    %s282 = sadd.s32 %s281, 1
    %s283 = scalar_select %p280, %s281, %s282
    %p286 = pneg %p280
    %p287 = scmp.eq.s32.totalorder %s30, 3
    %p288 = por %p286, %p287
    %p289 = scmp.ne.s32.totalorder %s281, %s284
    %p290 = scmp.eq.s32.totalorder %s30, 0
    %p291 = por %p289, %p290
    %p292 = scmp.ne.s32.totalorder %s281, %s284
    %p293 = scmp.eq.s32.totalorder %s35, 3
    %p294 = por %p292, %p293
    %p295 = scmp.ne.s32.totalorder %s284, %s285
    %p296 = scmp.eq.s32.totalorder %s35, 0
    %p297 = por %p295, %p296
    %p298 = scmp.ne.s32.totalorder %s284, %s285
    %p299 = scmp.eq.s32.totalorder %s36, 3
    %p300 = por %p298, %p299
    %p302 = scmp.ne.s32.totalorder %s285, %s301
    %p303 = scmp.eq.s32.totalorder %s36, 0
    %p304 = por %p302, %p303
    %s305 = ssub.s32 %s37, %s49
    %p306 = scmp.eq.s32.totalorder %s305, 0
    %s308 = sadd.s32 %s307, 1
    %s309 = scalar_select %p306, %s307, %s308
    %p312 = pneg %p306
    %p313 = scmp.eq.s32.totalorder %s30, 3
    %p314 = por %p312, %p313
    %p315 = scmp.ne.s32.totalorder %s307, %s310
    %p316 = scmp.eq.s32.totalorder %s30, 0
    %p317 = por %p315, %p316
    %p318 = scmp.ne.s32.totalorder %s307, %s310
    %p319 = scmp.eq.s32.totalorder %s35, 3
    %p320 = por %p318, %p319
    %p321 = scmp.ne.s32.totalorder %s310, %s311
    %p322 = scmp.eq.s32.totalorder %s35, 0
    %p323 = por %p321, %p322
    %p324 = scmp.ne.s32.totalorder %s310, %s311
    %p325 = scmp.eq.s32.totalorder %s36, 3
    %p326 = por %p324, %p325
    %p328 = scmp.ne.s32.totalorder %s311, %s327
    %p329 = scmp.eq.s32.totalorder %s36, 0
    %p330 = por %p328, %p329
    %s331 = ssub.s32 %s37, %s49
    %p332 = scmp.eq.s32.totalorder %s331, 0
    %s334 = sadd.s32 %s333, 1
    %s335 = scalar_select %p332, %s333, %s334
    %p338 = pneg %p332
    %p339 = scmp.eq.s32.totalorder %s30, 3
    %p340 = por %p338, %p339
    %p341 = scmp.ne.s32.totalorder %s333, %s336
    %p342 = scmp.eq.s32.totalorder %s30, 0
    %p343 = por %p341, %p342
    %p344 = scmp.ne.s32.totalorder %s333, %s336
    %p345 = scmp.eq.s32.totalorder %s35, 3
    %p346 = por %p344, %p345
    %p347 = scmp.ne.s32.totalorder %s336, %s337
    %p348 = scmp.eq.s32.totalorder %s35, 0
    %p349 = por %p347, %p348
    %p350 = scmp.ne.s32.totalorder %s336, %s337
    %p351 = scmp.eq.s32.totalorder %s36, 3
    %p352 = por %p350, %p351
    %p354 = scmp.ne.s32.totalorder %s337, %s353
    %p355 = scmp.eq.s32.totalorder %s36, 0
    %p356 = por %p354, %p355
    %s357 = ssub.s32 %s37, %s49
    %p358 = scmp.eq.s32.totalorder %s357, 0
    %s360 = sadd.s32 %s359, 1
    %s361 = scalar_select %p358, %s359, %s360
    %p364 = pneg %p358
    %p365 = scmp.eq.s32.totalorder %s30, 3
    %p366 = por %p364, %p365
    %p367 = scmp.ne.s32.totalorder %s359, %s362
    %p368 = scmp.eq.s32.totalorder %s30, 0
    %p369 = por %p367, %p368
    %p370 = scmp.ne.s32.totalorder %s359, %s362
    %p371 = scmp.eq.s32.totalorder %s35, 3
    %p372 = por %p370, %p371
    %p373 = scmp.ne.s32.totalorder %s362, %s363
    %p374 = scmp.eq.s32.totalorder %s35, 0
    %p375 = por %p373, %p374
    %p376 = scmp.ne.s32.totalorder %s362, %s363
    %p377 = scmp.eq.s32.totalorder %s36, 3
    %p378 = por %p376, %p377
    %p380 = scmp.ne.s32.totalorder %s363, %s379
    %p381 = scmp.eq.s32.totalorder %s36, 0
    %p382 = por %p380, %p381
    %s383 = ssub.s32 %s37, %s49
    %p384 = scmp.eq.s32.totalorder %s383, 0
    %s386 = sadd.s32 %s385, 1
    %s387 = scalar_select %p384, %s385, %s386
    %p390 = pneg %p384
    %p391 = scmp.eq.s32.totalorder %s30, 3
    %p392 = por %p390, %p391
    %p393 = scmp.ne.s32.totalorder %s385, %s388
    %p394 = scmp.eq.s32.totalorder %s30, 0
    %p395 = por %p393, %p394
    %p396 = scmp.ne.s32.totalorder %s385, %s388
    %p397 = scmp.eq.s32.totalorder %s35, 3
    %p398 = por %p396, %p397
    %p399 = scmp.ne.s32.totalorder %s388, %s389
    %p400 = scmp.eq.s32.totalorder %s35, 0
    %p401 = por %p399, %p400
    %p402 = scmp.ne.s32.totalorder %s388, %s389
    %p403 = scmp.eq.s32.totalorder %s36, 3
    %p404 = por %p402, %p403
    %p406 = scmp.ne.s32.totalorder %s389, %s405
    %p407 = scmp.eq.s32.totalorder %s36, 0
    %p408 = por %p406, %p407
    %s409 = ssub.s32 %s37, %s49
    %p410 = scmp.eq.s32.totalorder %s409, 0
    %s412 = sadd.s32 %s411, 1
    %s413 = scalar_select %p410, %s411, %s412
    %p416 = pneg %p410
    %p417 = scmp.eq.s32.totalorder %s30, 3
    %p418 = por %p416, %p417
    %p419 = scmp.ne.s32.totalorder %s411, %s414
    %p420 = scmp.eq.s32.totalorder %s30, 0
    %p421 = por %p419, %p420
    %p422 = scmp.ne.s32.totalorder %s411, %s414
    %p423 = scmp.eq.s32.totalorder %s35, 3
    %p424 = por %p422, %p423
    %p425 = scmp.ne.s32.totalorder %s414, %s415
    %p426 = scmp.eq.s32.totalorder %s35, 0
    %p427 = por %p425, %p426
    %p428 = scmp.ne.s32.totalorder %s414, %s415
    %p429 = scmp.eq.s32.totalorder %s36, 3
    %p430 = por %p428, %p429
    %p432 = scmp.ne.s32.totalorder %s415, %s431
    %p433 = scmp.eq.s32.totalorder %s36, 0
    %p434 = por %p432, %p433
    %s435 = ssub.s32 %s37, %s49
    %p436 = scmp.eq.s32.totalorder %s435, 0
    %s438 = sadd.s32 %s437, 1
    %s439 = scalar_select %p436, %s437, %s438
    %p442 = pneg %p436
    %p443 = scmp.eq.s32.totalorder %s30, 3
    %p444 = por %p442, %p443
    %p445 = scmp.ne.s32.totalorder %s437, %s440
    %p446 = scmp.eq.s32.totalorder %s30, 0
    %p447 = por %p445, %p446
    %p448 = scmp.ne.s32.totalorder %s437, %s440
    %p449 = scmp.eq.s32.totalorder %s35, 3
    %p450 = por %p448, %p449
    %p451 = scmp.ne.s32.totalorder %s440, %s441
    %p452 = scmp.eq.s32.totalorder %s35, 0
    %p453 = por %p451, %p452
    %p454 = scmp.ne.s32.totalorder %s440, %s441
    %p455 = scmp.eq.s32.totalorder %s36, 3
    %p456 = por %p454, %p455
    %p458 = scmp.ne.s32.totalorder %s441, %s457
    %p459 = scmp.eq.s32.totalorder %s36, 0
    %p460 = por %p458, %p459
    %s461 = ssub.s32 %s37, %s49
    %p462 = scmp.eq.s32.totalorder %s461, 0
    %s464 = sadd.s32 %s463, 1
    %s465 = scalar_select %p462, %s463, %s464
    %p468 = pneg %p462
    %p469 = scmp.eq.s32.totalorder %s30, 3
    %p470 = por %p468, %p469
    %p471 = scmp.ne.s32.totalorder %s463, %s466
    %p472 = scmp.eq.s32.totalorder %s30, 0
    %p473 = por %p471, %p472
    %p474 = scmp.ne.s32.totalorder %s463, %s466
    %p475 = scmp.eq.s32.totalorder %s35, 3
    %p476 = por %p474, %p475
    %p477 = scmp.ne.s32.totalorder %s466, %s467
    %p478 = scmp.eq.s32.totalorder %s35, 0
    %p479 = por %p477, %p478
    %p480 = scmp.ne.s32.totalorder %s466, %s467
    %p481 = scmp.eq.s32.totalorder %s36, 3
    %p482 = por %p480, %p481
    %p484 = scmp.ne.s32.totalorder %s467, %s483
    %p485 = scmp.eq.s32.totalorder %s36, 0
    %p486 = por %p484, %p485
    %s487 = ssub.s32 %s37, %s49
    %p488 = scmp.eq.s32.totalorder %s487, 0
    %s490 = sadd.s32 %s489, 1
    %s491 = scalar_select %p488, %s489, %s490
    %p494 = pneg %p488
    %p495 = scmp.eq.s32.totalorder %s30, 3
    %p496 = por %p494, %p495
    %p497 = scmp.ne.s32.totalorder %s489, %s492
    %p498 = scmp.eq.s32.totalorder %s30, 0
    %p499 = por %p497, %p498
    %p500 = scmp.ne.s32.totalorder %s489, %s492
    %p501 = scmp.eq.s32.totalorder %s35, 3
    %p502 = por %p500, %p501
    %p503 = scmp.ne.s32.totalorder %s492, %s493
    %p504 = scmp.eq.s32.totalorder %s35, 0
    %p505 = por %p503, %p504
    %p506 = scmp.ne.s32.totalorder %s492, %s493
    %p507 = scmp.eq.s32.totalorder %s36, 3
    %p508 = por %p506, %p507
    %p510 = scmp.ne.s32.totalorder %s493, %s509
    %p511 = scmp.eq.s32.totalorder %s36, 0
    %p512 = por %p510, %p511
    %s513 = ssub.s32 %s37, %s49
    %p514 = scmp.eq.s32.totalorder %s513, 0
    %s516 = sadd.s32 %s515, 1
    %s517 = scalar_select %p514, %s515, %s516
    %p520 = pneg %p514
    %p521 = scmp.eq.s32.totalorder %s30, 3
    %p522 = por %p520, %p521
    %p523 = scmp.ne.s32.totalorder %s515, %s518
    %p524 = scmp.eq.s32.totalorder %s30, 0
    %p525 = por %p523, %p524
    %p526 = scmp.ne.s32.totalorder %s515, %s518
    %p527 = scmp.eq.s32.totalorder %s35, 3
    %p528 = por %p526, %p527
    %p529 = scmp.ne.s32.totalorder %s518, %s519
    %p530 = scmp.eq.s32.totalorder %s35, 0
    %p531 = por %p529, %p530
    %p532 = scmp.ne.s32.totalorder %s518, %s519
    %p533 = scmp.eq.s32.totalorder %s36, 3
    %p534 = por %p532, %p533
    %p536 = scmp.ne.s32.totalorder %s519, %s535
    %p537 = scmp.eq.s32.totalorder %s36, 0
    %p538 = por %p536, %p537
    %s539 = ssub.s32 %s37, %s49
    %p540 = scmp.eq.s32.totalorder %s539, 0
    %s542 = sadd.s32 %s541, 1
    %s543 = scalar_select %p540, %s541, %s542
    %p546 = pneg %p540
    %p547 = scmp.eq.s32.totalorder %s30, 3
    %p548 = por %p546, %p547
    %p549 = scmp.ne.s32.totalorder %s541, %s544
    %p550 = scmp.eq.s32.totalorder %s30, 0
    %p551 = por %p549, %p550
    %p552 = scmp.ne.s32.totalorder %s541, %s544
    %p553 = scmp.eq.s32.totalorder %s35, 3
    %p554 = por %p552, %p553
    %p555 = scmp.ne.s32.totalorder %s544, %s545
    %p556 = scmp.eq.s32.totalorder %s35, 0
    %p557 = por %p555, %p556
    %p558 = scmp.ne.s32.totalorder %s544, %s545
    %p559 = scmp.eq.s32.totalorder %s36, 3
    %p560 = por %p558, %p559
    %p562 = scmp.ne.s32.totalorder %s545, %s561
    %p563 = scmp.eq.s32.totalorder %s36, 0
    %p564 = por %p562, %p563
    %s565 = ssub.s32 %s37, %s49
    %p566 = scmp.eq.s32.totalorder %s565, 0
    %s568 = sadd.s32 %s567, 1
    %s569 = scalar_select %p566, %s567, %s568
    %p572 = pneg %p566
    %p573 = scmp.eq.s32.totalorder %s30, 3
    %p574 = por %p572, %p573
    %p575 = scmp.ne.s32.totalorder %s567, %s570
    %p576 = scmp.eq.s32.totalorder %s30, 0
    %p577 = por %p575, %p576
    %p578 = scmp.ne.s32.totalorder %s567, %s570
    %p579 = scmp.eq.s32.totalorder %s35, 3
    %p580 = por %p578, %p579
    %p581 = scmp.ne.s32.totalorder %s570, %s571
    %p582 = scmp.eq.s32.totalorder %s35, 0
    %p583 = por %p581, %p582
    %p584 = scmp.ne.s32.totalorder %s570, %s571
    %p585 = scmp.eq.s32.totalorder %s36, 3
    %p586 = por %p584, %p585
    %p588 = scmp.ne.s32.totalorder %s571, %s587
    %p589 = scmp.eq.s32.totalorder %s36, 0
    %p590 = por %p588, %p589
    %s591 = ssub.s32 %s37, %s49
    %p592 = scmp.eq.s32.totalorder %s591, 0
    %s594 = sadd.s32 %s593, 1
    %s595 = scalar_select %p592, %s593, %s594
    %p598 = pneg %p592
    %p599 = scmp.eq.s32.totalorder %s30, 3
    %p600 = por %p598, %p599
    %p601 = scmp.ne.s32.totalorder %s593, %s596
    %p602 = scmp.eq.s32.totalorder %s30, 0
    %p603 = por %p601, %p602
    %p604 = scmp.ne.s32.totalorder %s593, %s596
    %p605 = scmp.eq.s32.totalorder %s35, 3
    %p606 = por %p604, %p605
    %p607 = scmp.ne.s32.totalorder %s596, %s597
    %p608 = scmp.eq.s32.totalorder %s35, 0
    %p609 = por %p607, %p608
    %p610 = scmp.ne.s32.totalorder %s596, %s597
    %p611 = scmp.eq.s32.totalorder %s36, 3
    %p612 = por %p610, %p611
    %p614 = scmp.ne.s32.totalorder %s597, %s613
    %p615 = scmp.eq.s32.totalorder %s36, 0
    %p616 = por %p614, %p615
    %s617 = ssub.s32 %s37, %s49
    %p618 = scmp.eq.s32.totalorder %s617, 0
    %s620 = sadd.s32 %s619, 1
    %s621 = scalar_select %p618, %s619, %s620
    %p624 = pneg %p618
    %p625 = scmp.eq.s32.totalorder %s30, 3
    %p626 = por %p624, %p625
    %p627 = scmp.ne.s32.totalorder %s619, %s622
    %p628 = scmp.eq.s32.totalorder %s30, 0
    %p629 = por %p627, %p628
    %p630 = scmp.ne.s32.totalorder %s619, %s622
    %p631 = scmp.eq.s32.totalorder %s35, 3
    %p632 = por %p630, %p631
    %p633 = scmp.ne.s32.totalorder %s622, %s623
    %p634 = scmp.eq.s32.totalorder %s35, 0
    %p635 = por %p633, %p634
    %p636 = scmp.ne.s32.totalorder %s622, %s623
    %p637 = scmp.eq.s32.totalorder %s36, 3
    %p638 = por %p636, %p637
    %p640 = scmp.ne.s32.totalorder %s623, %s639
    %p641 = scmp.eq.s32.totalorder %s36, 0
    %p642 = por %p640, %p641
    %s643 = ssub.s32 %s37, %s49
    %p644 = scmp.eq.s32.totalorder %s643, 0
    %s646 = sadd.s32 %s645, 1
    %s647 = scalar_select %p644, %s645, %s646
    %p650 = pneg %p644
    %p651 = scmp.eq.s32.totalorder %s30, 3
    %p652 = por %p650, %p651
    %p653 = scmp.ne.s32.totalorder %s645, %s648
    %p654 = scmp.eq.s32.totalorder %s30, 0
    %p655 = por %p653, %p654
    %p656 = scmp.ne.s32.totalorder %s645, %s648
    %p657 = scmp.eq.s32.totalorder %s35, 3
    %p658 = por %p656, %p657
    %p659 = scmp.ne.s32.totalorder %s648, %s649
    %p660 = scmp.eq.s32.totalorder %s35, 0
    %p661 = por %p659, %p660
    %p662 = scmp.ne.s32.totalorder %s648, %s649
    %p663 = scmp.eq.s32.totalorder %s36, 3
    %p664 = por %p662, %p663
    %p666 = scmp.ne.s32.totalorder %s649, %s665
    %p667 = scmp.eq.s32.totalorder %s36, 0
    %p668 = por %p666, %p667
    %s670 = sadd.s32 %s669, 1
    %p673 = scmp.eq.s32.totalorder %s30, 3
    %p674 = scmp.ne.s32.totalorder %s669, %s671
    %p675 = scmp.eq.s32.totalorder %s30, 0
    %p676 = por %p674, %p675
    %p677 = scmp.ne.s32.totalorder %s669, %s671
    %p678 = scmp.eq.s32.totalorder %s35, 3
    %p679 = por %p677, %p678
    %p680 = scmp.ne.s32.totalorder %s671, %s672
    %p681 = scmp.eq.s32.totalorder %s35, 0
    %p682 = por %p680, %p681
    %p683 = scmp.ne.s32.totalorder %s671, %s672
    %p684 = scmp.eq.s32.totalorder %s36, 3
    %p685 = por %p683, %p684
    %p687 = scmp.ne.s32.totalorder %s672, %s686
    %p688 = scmp.eq.s32.totalorder %s36, 0
    %p689 = por %p687, %p688
    %p690 = scmp.le.s32.totalorder 1, %s30
    %p691 = scmp.lt.s32.totalorder %s30, 5
    %p692 = pnand %p690, %p691
    %p693 = pneg %p692
    // Predicated region
    $region9: #{context_encoder_forward.1} parent=5 // pred_check
      _
    $region10: #{context_encoder_forward.1} parent=5 // pred_check_branch
      %695 = sbr.rel (%p692) target = $region12
    $region11: #{context_encoder_forward.1} parent=5 // pred_region
      %s696 = ssub.s32 %s30, 1
      // Predicated region
      $region13: #{context_encoder_forward.1} parent=11 // pred_check
        %p697 = pneg %p63
      $region14: #{context_encoder_forward.1} parent=11 // pred_check_branch
        %699 = sbr.rel (%p697) target = $region16
      $region15: #{context_encoder_forward.1} parent=11 // pred_region
        _
      $region16: #{context_encoder_forward.1} parent=11 // pred_fallthru
        _
    $region12: #{context_encoder_forward.1} parent=5 // pred_fallthru
      _
    %p700 = scmp.lt.s32.totalorder %s30, 4
    // Predicated region
    $region17: #{context_encoder_forward.1} parent=5 // pred_check
      %p701 = pneg %p700
    $region18: #{context_encoder_forward.1} parent=5 // pred_check_branch
      %703 = sbr.rel (%p701) target = $region20
    $region19: #{context_encoder_forward.1} parent=5 // pred_region
      // Predicated region
      $region21: #{context_encoder_forward.1} parent=19 // pred_check
        %p704 = pneg %p83
      $region22: #{context_encoder_forward.1} parent=19 // pred_check_branch
        %706 = sbr.rel (%p704) target = $region24
      $region23: #{context_encoder_forward.1} parent=19 // pred_region
        %s707 = smul.u32 16, %s38
        %p708 = scmp.lt.s32.totalorder %s707, 31
        %s709 = scalar_select %p708, %s707, 31
        %s710 = smul.addr %s709, 8
        %s711 = scalar_lea.vmem %s1, %s710
        %s712 = smul.u32 16, %s38
      $region24: #{context_encoder_forward.1} parent=19 // pred_fallthru
        _
      // Predicated region
      $region25: #{context_encoder_forward.1} parent=19 // pred_check
        %p713 = pneg %p109
      $region26: #{context_encoder_forward.1} parent=19 // pred_check_branch
        %715 = sbr.rel (%p713) target = $region28
      $region27: #{context_encoder_forward.1} parent=19 // pred_region
        %p716 = scmp.lt.s32.totalorder %s38, 1
        %s717 = scalar_select %p716, %s38, 1
        %s718 = scalar_lea.vmem %s2, %s717
      $region28: #{context_encoder_forward.1} parent=19 // pred_fallthru
        _
      // Predicated region
      $region29: #{context_encoder_forward.1} parent=19 // pred_check
        %p719 = pneg %p135
      $region30: #{context_encoder_forward.1} parent=19 // pred_check_branch
        %721 = sbr.rel (%p719) target = $region32
      $region31: #{context_encoder_forward.1} parent=19 // pred_region
        %p722 = scmp.lt.s32.totalorder %s37, 1
        %s723 = scalar_select %p722, %s37, 1
        %s724 = smul.addr %s723, 4
        %s725 = smul.addr %s724, 4
        %s726 = scalar_lea.vmem %s3, %s725
      $region32: #{context_encoder_forward.1} parent=19 // pred_fallthru
        _
      // Predicated region
      $region33: #{context_encoder_forward.1} parent=19 // pred_check
        %p727 = pneg %p161
      $region34: #{context_encoder_forward.1} parent=19 // pred_check_branch
        %729 = sbr.rel (%p727) target = $region36
      $region35: #{context_encoder_forward.1} parent=19 // pred_region
        %p730 = scmp.lt.s32.totalorder %s37, 1
        %s731 = scalar_select %p730, %s37, 1
        %s732 = smul.addr %s731, 4
        %s733 = smul.addr %s732, 4
        %s734 = scalar_lea.vmem %s4, %s733
      $region36: #{context_encoder_forward.1} parent=19 // pred_fallthru
        _
      // Predicated region
      $region37: #{context_encoder_forward.1} parent=19 // pred_check
        %p735 = pneg %p187
      $region38: #{context_encoder_forward.1} parent=19 // pred_check_branch
        %737 = sbr.rel (%p735) target = $region40
      $region39: #{context_encoder_forward.1} parent=19 // pred_region
        %p738 = scmp.lt.s32.totalorder %s37, 1
        %s739 = scalar_select %p738, %s37, 1
        %s740 = smul.addr %s739, 20
        %s741 = smul.addr %s740, 4
        %s742 = scalar_lea.vmem %s5, %s741
      $region40: #{context_encoder_forward.1} parent=19 // pred_fallthru
        _
      // Predicated region
      $region41: #{context_encoder_forward.1} parent=19 // pred_check
        %p743 = pneg %p213
      $region42: #{context_encoder_forward.1} parent=19 // pred_check_branch
        %745 = sbr.rel (%p743) target = $region44
      $region43: #{context_encoder_forward.1} parent=19 // pred_region
        %p746 = scmp.lt.s32.totalorder %s37, 1
        %s747 = scalar_select %p746, %s37, 1
        %s748 = smul.addr %s747, 16
        %s749 = smul.addr %s748, 4
        %s750 = scalar_lea.vmem %s6, %s749
      $region44: #{context_encoder_forward.1} parent=19 // pred_fallthru
        _
      // Predicated region
      $region45: #{context_encoder_forward.1} parent=19 // pred_check
        %p751 = pneg %p239
      $region46: #{context_encoder_forward.1} parent=19 // pred_check_branch
        %753 = sbr.rel (%p751) target = $region48
      $region47: #{context_encoder_forward.1} parent=19 // pred_region
        %p754 = scmp.lt.s32.totalorder %s37, 1
        %s755 = scalar_select %p754, %s37, 1
        %s756 = smul.addr %s755, 4
        %s757 = scalar_lea.vmem %s7, %s756
      $region48: #{context_encoder_forward.1} parent=19 // pred_fallthru
        _
      // Predicated region
      $region49: #{context_encoder_forward.1} parent=19 // pred_check
        %p758 = pneg %p265
      $region50: #{context_encoder_forward.1} parent=19 // pred_check_branch
        %760 = sbr.rel (%p758) target = $region52
      $region51: #{context_encoder_forward.1} parent=19 // pred_region
        %p761 = scmp.lt.s32.totalorder %s37, 1
        %s762 = scalar_select %p761, %s37, 1
        %s763 = smul.addr %s762, 2
        %s764 = smul.addr %s763, 4
        %s765 = scalar_lea.vmem %s8, %s764
      $region52: #{context_encoder_forward.1} parent=19 // pred_fallthru
        _
      // Predicated region
      $region53: #{context_encoder_forward.1} parent=19 // pred_check
        %p766 = pneg %p291
      $region54: #{context_encoder_forward.1} parent=19 // pred_check_branch
        %768 = sbr.rel (%p766) target = $region56
      $region55: #{context_encoder_forward.1} parent=19 // pred_region
        %p769 = scmp.lt.s32.totalorder %s37, 1
        %s770 = scalar_select %p769, %s37, 1
        %s771 = smul.addr %s770, 2
        %s772 = smul.addr %s771, 4
        %s773 = scalar_lea.vmem %s9, %s772
      $region56: #{context_encoder_forward.1} parent=19 // pred_fallthru
        _
      // Predicated region
      $region57: #{context_encoder_forward.1} parent=19 // pred_check
        %p774 = pneg %p317
      $region58: #{context_encoder_forward.1} parent=19 // pred_check_branch
        %776 = sbr.rel (%p774) target = $region60
      $region59: #{context_encoder_forward.1} parent=19 // pred_region
        %p777 = scmp.lt.s32.totalorder %s37, 1
        %s778 = scalar_select %p777, %s37, 1
        %s779 = smul.addr %s778, 4
        %s780 = smul.addr %s779, 4
        %s781 = scalar_lea.vmem %s10, %s780
      $region60: #{context_encoder_forward.1} parent=19 // pred_fallthru
        _
      // Predicated region
      $region61: #{context_encoder_forward.1} parent=19 // pred_check
        %p782 = pneg %p343
      $region62: #{context_encoder_forward.1} parent=19 // pred_check_branch
        %784 = sbr.rel (%p782) target = $region64
      $region63: #{context_encoder_forward.1} parent=19 // pred_region
        %p785 = scmp.lt.s32.totalorder %s37, 1
        %s786 = scalar_select %p785, %s37, 1
        %s787 = smul.addr %s786, 2
        %s788 = smul.addr %s787, 4
        %s789 = scalar_lea.vmem %s11, %s788
      $region64: #{context_encoder_forward.1} parent=19 // pred_fallthru
        _
      // Predicated region
      $region65: #{context_encoder_forward.1} parent=19 // pred_check
        %p790 = pneg %p369
      $region66: #{context_encoder_forward.1} parent=19 // pred_check_branch
        %792 = sbr.rel (%p790) target = $region68
      $region67: #{context_encoder_forward.1} parent=19 // pred_region
        %p793 = scmp.lt.s32.totalorder %s37, 1
        %s794 = scalar_select %p793, %s37, 1
        %s795 = scalar_lea.vmem %s12, %s794
      $region68: #{context_encoder_forward.1} parent=19 // pred_fallthru
        _
      // Predicated region
      $region69: #{context_encoder_forward.1} parent=19 // pred_check
        %p796 = pneg %p395
      $region70: #{context_encoder_forward.1} parent=19 // pred_check_branch
        %798 = sbr.rel (%p796) target = $region72
      $region71: #{context_encoder_forward.1} parent=19 // pred_region
        %p799 = scmp.lt.s32.totalorder %s37, 1
        %s800 = scalar_select %p799, %s37, 1
        %s801 = smul.addr %s800, 2
        %s802 = smul.addr %s801, 4
        %s803 = scalar_lea.vmem %s13, %s802
      $region72: #{context_encoder_forward.1} parent=19 // pred_fallthru
        _
      // Predicated region
      $region73: #{context_encoder_forward.1} parent=19 // pred_check
        %p804 = pneg %p421
      $region74: #{context_encoder_forward.1} parent=19 // pred_check_branch
        %806 = sbr.rel (%p804) target = $region76
      $region75: #{context_encoder_forward.1} parent=19 // pred_region
        %p807 = scmp.lt.s32.totalorder %s37, 1
        %s808 = scalar_select %p807, %s37, 1
        %s809 = smul.addr %s808, 4
        %s810 = scalar_lea.vmem %s14, %s809
      $region76: #{context_encoder_forward.1} parent=19 // pred_fallthru
        _
      // Predicated region
      $region77: #{context_encoder_forward.1} parent=19 // pred_check
        %p811 = pneg %p447
      $region78: #{context_encoder_forward.1} parent=19 // pred_check_branch
        %813 = sbr.rel (%p811) target = $region80
      $region79: #{context_encoder_forward.1} parent=19 // pred_region
        %p814 = scmp.lt.s32.totalorder %s37, 1
        %s815 = scalar_select %p814, %s37, 1
        %s816 = smul.addr %s815, 2
        %s817 = smul.addr %s816, 4
        %s818 = scalar_lea.vmem %s15, %s817
      $region80: #{context_encoder_forward.1} parent=19 // pred_fallthru
        _
      // Predicated region
      $region81: #{context_encoder_forward.1} parent=19 // pred_check
        %p819 = pneg %p473
      $region82: #{context_encoder_forward.1} parent=19 // pred_check_branch
        %821 = sbr.rel (%p819) target = $region84
      $region83: #{context_encoder_forward.1} parent=19 // pred_region
        %p822 = scmp.lt.s32.totalorder %s37, 1
        %s823 = scalar_select %p822, %s37, 1
        %s824 = scalar_lea.vmem %s16, %s823
      $region84: #{context_encoder_forward.1} parent=19 // pred_fallthru
        _
      // Predicated region
      $region85: #{context_encoder_forward.1} parent=19 // pred_check
        %p825 = pneg %p499
      $region86: #{context_encoder_forward.1} parent=19 // pred_check_branch
        %827 = sbr.rel (%p825) target = $region88
      $region87: #{context_encoder_forward.1} parent=19 // pred_region
        %p828 = scmp.lt.s32.totalorder %s37, 1
        %s829 = scalar_select %p828, %s37, 1
        %s830 = smul.addr %s829, 4
        %s831 = smul.addr %s830, 4
        %s832 = scalar_lea.vmem %s17, %s831
      $region88: #{context_encoder_forward.1} parent=19 // pred_fallthru
        _
      // Predicated region
      $region89: #{context_encoder_forward.1} parent=19 // pred_check
        %p833 = pneg %p525
      $region90: #{context_encoder_forward.1} parent=19 // pred_check_branch
        %835 = sbr.rel (%p833) target = $region92
      $region91: #{context_encoder_forward.1} parent=19 // pred_region
        %p836 = scmp.lt.s32.totalorder %s37, 1
        %s837 = scalar_select %p836, %s37, 1
        %s838 = scalar_lea.vmem %s18, %s837
      $region92: #{context_encoder_forward.1} parent=19 // pred_fallthru
        _
      // Predicated region
      $region93: #{context_encoder_forward.1} parent=19 // pred_check
        %p839 = pneg %p551
      $region94: #{context_encoder_forward.1} parent=19 // pred_check_branch
        %841 = sbr.rel (%p839) target = $region96
      $region95: #{context_encoder_forward.1} parent=19 // pred_region
        %p842 = scmp.lt.s32.totalorder %s37, 1
        %s843 = scalar_select %p842, %s37, 1
        %s844 = smul.addr %s843, 2
        %s845 = smul.addr %s844, 4
        %s846 = scalar_lea.vmem %s19, %s845
      $region96: #{context_encoder_forward.1} parent=19 // pred_fallthru
        _
      // Predicated region
      $region97: #{context_encoder_forward.1} parent=19 // pred_check
        %p847 = pneg %p577
      $region98: #{context_encoder_forward.1} parent=19 // pred_check_branch
        %849 = sbr.rel (%p847) target = $region100
      $region99: #{context_encoder_forward.1} parent=19 // pred_region
        %p850 = scmp.lt.s32.totalorder %s37, 1
        %s851 = scalar_select %p850, %s37, 1
        %s852 = scalar_lea.vmem %s20, %s851
      $region100: #{context_encoder_forward.1} parent=19 // pred_fallthru
        _
      // Predicated region
      $region101: #{context_encoder_forward.1} parent=19 // pred_check
        %p853 = pneg %p603
      $region102: #{context_encoder_forward.1} parent=19 // pred_check_branch
        %855 = sbr.rel (%p853) target = $region104
      $region103: #{context_encoder_forward.1} parent=19 // pred_region
        %p856 = scmp.lt.s32.totalorder %s37, 1
        %s857 = scalar_select %p856, %s37, 1
        %s858 = scalar_lea.vmem %s21, %s857
      $region104: #{context_encoder_forward.1} parent=19 // pred_fallthru
        _
      // Predicated region
      $region105: #{context_encoder_forward.1} parent=19 // pred_check
        %p859 = pneg %p629
      $region106: #{context_encoder_forward.1} parent=19 // pred_check_branch
        %861 = sbr.rel (%p859) target = $region108
      $region107: #{context_encoder_forward.1} parent=19 // pred_region
        %p862 = scmp.lt.s32.totalorder %s37, 1
        %s863 = scalar_select %p862, %s37, 1
        %s864 = smul.addr %s863, 2
        %s865 = scalar_lea.vmem %s22, %s864
      $region108: #{context_encoder_forward.1} parent=19 // pred_fallthru
        _
      // Predicated region
      $region109: #{context_encoder_forward.1} parent=19 // pred_check
        %p866 = pneg %p655
      $region110: #{context_encoder_forward.1} parent=19 // pred_check_branch
        %868 = sbr.rel (%p866) target = $region112
      $region111: #{context_encoder_forward.1} parent=19 // pred_region
        %p869 = scmp.lt.s32.totalorder %s37, 1
        %s870 = scalar_select %p869, %s37, 1
        %s871 = smul.addr %s870, 8
        %s872 = scalar_lea.vmem %s23, %s871
      $region112: #{context_encoder_forward.1} parent=19 // pred_fallthru
        _
    $region20: #{context_encoder_forward.1} parent=5 // pred_fallthru
      _
    %p873 = scmp.le.s32.totalorder 1, %s30
    %p874 = scmp.lt.s32.totalorder %s30, 5
    %p875 = pnand %p873, %p874
    %p876 = pneg %p875
    // Predicated region
    $region113: #{context_encoder_forward.1} parent=5 // pred_check
      _
    $region114: #{context_encoder_forward.1} parent=5 // pred_check_branch
      %878 = sbr.rel (%p875) target = $region116
    $region115: #{context_encoder_forward.1} parent=5 // pred_region
      %s879 = ssub.s32 %s30, 1
      %p880 = pneg %p63
      %p881 = pneg %p60
      %s882 = smul.u32 16, %s40
      %p883 = scmp.lt.s32.totalorder %s882, 31
      %s884 = scalar_select %p883, %s882, 31
      %s885 = smul.addr %s884, 8
      %s886 = scalar_lea.vmem %s1, %s885
      %p887 = pneg %p89
      %p888 = pneg %p86
      %p889 = scmp.lt.s32.totalorder %s40, 1
      %s890 = scalar_select %p889, %s40, 1
      %s891 = scalar_lea.vmem %s2, %s890
      %p892 = pneg %p115
      %p893 = pneg %p112
      %p894 = scmp.lt.s32.totalorder %s39, 1
      %s895 = scalar_select %p894, %s39, 1
      %s896 = smul.addr %s895, 4
      %s897 = smul.addr %s896, 4
      %s898 = scalar_lea.vmem %s3, %s897
      %p899 = pneg %p141
      %p900 = pneg %p138
      %p901 = scmp.lt.s32.totalorder %s39, 1
      %s902 = scalar_select %p901, %s39, 1
      %s903 = smul.addr %s902, 4
      %s904 = smul.addr %s903, 4
      %s905 = scalar_lea.vmem %s4, %s904
      %p906 = pneg %p167
      %p907 = pneg %p164
      %p908 = scmp.lt.s32.totalorder %s39, 1
      %s909 = scalar_select %p908, %s39, 1
      %s910 = smul.addr %s909, 20
      %s911 = smul.addr %s910, 4
      %s912 = scalar_lea.vmem %s5, %s911
      %p913 = pneg %p193
      %p914 = pneg %p190
      %p915 = scmp.lt.s32.totalorder %s39, 1
      %s916 = scalar_select %p915, %s39, 1
      %s917 = smul.addr %s916, 16
      %s918 = smul.addr %s917, 4
      %s919 = scalar_lea.vmem %s6, %s918
      %p920 = pneg %p219
      %p921 = pneg %p216
      %p922 = scmp.lt.s32.totalorder %s39, 1
      %s923 = scalar_select %p922, %s39, 1
      %s924 = smul.addr %s923, 4
      %s925 = scalar_lea.vmem %s7, %s924
      %p926 = pneg %p245
      %p927 = pneg %p242
      %p928 = scmp.lt.s32.totalorder %s39, 1
      %s929 = scalar_select %p928, %s39, 1
      %s930 = smul.addr %s929, 2
      %s931 = smul.addr %s930, 4
      %s932 = scalar_lea.vmem %s8, %s931
      %p933 = pneg %p271
      %p934 = pneg %p268
      %p935 = scmp.lt.s32.totalorder %s39, 1
      %s936 = scalar_select %p935, %s39, 1
      %s937 = smul.addr %s936, 2
      %s938 = smul.addr %s937, 4
      %s939 = scalar_lea.vmem %s9, %s938
      %p940 = pneg %p297
      %p941 = pneg %p294
      %p942 = scmp.lt.s32.totalorder %s39, 1
      %s943 = scalar_select %p942, %s39, 1
      %s944 = smul.addr %s943, 4
      %s945 = smul.addr %s944, 4
      %s946 = scalar_lea.vmem %s10, %s945
      %p947 = pneg %p323
      %p948 = pneg %p320
      %p949 = scmp.lt.s32.totalorder %s39, 1
      %s950 = scalar_select %p949, %s39, 1
      %s951 = smul.addr %s950, 2
      %s952 = smul.addr %s951, 4
      %s953 = scalar_lea.vmem %s11, %s952
      %p954 = pneg %p349
      %p955 = pneg %p346
      %p956 = scmp.lt.s32.totalorder %s39, 1
      %s957 = scalar_select %p956, %s39, 1
      %s958 = scalar_lea.vmem %s12, %s957
      %p959 = pneg %p375
      %p960 = pneg %p372
      %p961 = scmp.lt.s32.totalorder %s39, 1
      %s962 = scalar_select %p961, %s39, 1
      %s963 = smul.addr %s962, 2
      %s964 = smul.addr %s963, 4
      %s965 = scalar_lea.vmem %s13, %s964
      %p966 = pneg %p401
      %p967 = pneg %p398
      %p968 = scmp.lt.s32.totalorder %s39, 1
      %s969 = scalar_select %p968, %s39, 1
      %s970 = smul.addr %s969, 4
      %s971 = scalar_lea.vmem %s14, %s970
      %p972 = pneg %p427
      %p973 = pneg %p424
      %p974 = scmp.lt.s32.totalorder %s39, 1
      %s975 = scalar_select %p974, %s39, 1
      %s976 = smul.addr %s975, 2
      %s977 = smul.addr %s976, 4
      %s978 = scalar_lea.vmem %s15, %s977
      %p979 = pneg %p453
      %p980 = pneg %p450
      %p981 = scmp.lt.s32.totalorder %s39, 1
      %s982 = scalar_select %p981, %s39, 1
      %s983 = scalar_lea.vmem %s16, %s982
      %p984 = pneg %p479
      %p985 = pneg %p476
      %p986 = scmp.lt.s32.totalorder %s39, 1
      %s987 = scalar_select %p986, %s39, 1
      %s988 = smul.addr %s987, 4
      %s989 = smul.addr %s988, 4
      %s990 = scalar_lea.vmem %s17, %s989
      %p991 = pneg %p505
      %p992 = pneg %p502
      %p993 = scmp.lt.s32.totalorder %s39, 1
      %s994 = scalar_select %p993, %s39, 1
      %s995 = scalar_lea.vmem %s18, %s994
      %p996 = pneg %p531
      %p997 = pneg %p528
      %p998 = scmp.lt.s32.totalorder %s39, 1
      %s999 = scalar_select %p998, %s39, 1
      %s1000 = smul.addr %s999, 2
      %s1001 = smul.addr %s1000, 4
      %s1002 = scalar_lea.vmem %s19, %s1001
      %p1003 = pneg %p557
      %p1004 = pneg %p554
      %p1005 = scmp.lt.s32.totalorder %s39, 1
      %s1006 = scalar_select %p1005, %s39, 1
      %s1007 = scalar_lea.vmem %s20, %s1006
      %p1008 = pneg %p583
      %p1009 = pneg %p580
      %p1010 = scmp.lt.s32.totalorder %s39, 1
      %s1011 = scalar_select %p1010, %s39, 1
      %s1012 = scalar_lea.vmem %s21, %s1011
      %p1013 = pneg %p609
      %p1014 = pneg %p606
      %p1015 = scmp.lt.s32.totalorder %s39, 1
      %s1016 = scalar_select %p1015, %s39, 1
      %s1017 = smul.addr %s1016, 2
      %s1018 = scalar_lea.vmem %s22, %s1017
      %p1019 = pneg %p635
      %p1020 = pneg %p632
      %p1021 = scmp.lt.s32.totalorder %s39, 1
      %s1022 = scalar_select %p1021, %s39, 1
      %s1023 = smul.addr %s1022, 8
      %s1024 = scalar_lea.vmem %s23, %s1023
      %p1025 = pneg %p661
      %p1026 = pneg %p658
      %p1027 = pneg %p682
      %p1028 = pneg %p679
      %s1029 = smul.u32 16, %s40
      %p1030 = scmp.lt.s32.totalorder %s1029, 31
      %s1031 = scalar_select %p1030, %s1029, 31
      %s1032 = smul.addr %s1031, 8
      %s1033 = scalar_lea.vmem %s1, %s1032
      %s1034 = smul.u32 16, %s40
      %p1035 = scmp.lt.s32.totalorder %s40, 1
      %s1036 = scalar_select %p1035, %s40, 1
      %s1037 = scalar_lea.vmem %s2, %s1036
      %p1038 = scmp.lt.s32.totalorder %s39, 1
      %s1039 = scalar_select %p1038, %s39, 1
      %s1040 = smul.addr %s1039, 4
      %s1041 = smul.addr %s1040, 4
      %s1042 = scalar_lea.vmem %s3, %s1041
      %p1043 = scmp.lt.s32.totalorder %s39, 1
      %s1044 = scalar_select %p1043, %s39, 1
      %s1045 = smul.addr %s1044, 4
      %s1046 = smul.addr %s1045, 4
      %s1047 = scalar_lea.vmem %s4, %s1046
      %p1048 = scmp.lt.s32.totalorder %s39, 1
      %s1049 = scalar_select %p1048, %s39, 1
      %s1050 = smul.addr %s1049, 20
      %s1051 = smul.addr %s1050, 4
      %s1052 = scalar_lea.vmem %s5, %s1051
      %p1053 = scmp.lt.s32.totalorder %s39, 1
      %s1054 = scalar_select %p1053, %s39, 1
      %s1055 = smul.addr %s1054, 16
      %s1056 = smul.addr %s1055, 4
      %s1057 = scalar_lea.vmem %s6, %s1056
      %p1058 = scmp.lt.s32.totalorder %s39, 1
      %s1059 = scalar_select %p1058, %s39, 1
      %s1060 = smul.addr %s1059, 4
      %s1061 = scalar_lea.vmem %s7, %s1060
      %p1062 = scmp.lt.s32.totalorder %s39, 1
      %s1063 = scalar_select %p1062, %s39, 1
      %s1064 = smul.addr %s1063, 2
      %s1065 = smul.addr %s1064, 4
      %s1066 = scalar_lea.vmem %s8, %s1065
      %p1067 = scmp.lt.s32.totalorder %s39, 1
      %s1068 = scalar_select %p1067, %s39, 1
      %s1069 = smul.addr %s1068, 2
      %s1070 = smul.addr %s1069, 4
      %s1071 = scalar_lea.vmem %s9, %s1070
      %p1072 = scmp.lt.s32.totalorder %s39, 1
      %s1073 = scalar_select %p1072, %s39, 1
      %s1074 = smul.addr %s1073, 4
      %s1075 = smul.addr %s1074, 4
      %s1076 = scalar_lea.vmem %s10, %s1075
      %p1077 = scmp.lt.s32.totalorder %s39, 1
      %s1078 = scalar_select %p1077, %s39, 1
      %s1079 = smul.addr %s1078, 2
      %s1080 = smul.addr %s1079, 4
      %s1081 = scalar_lea.vmem %s11, %s1080
      %p1082 = scmp.lt.s32.totalorder %s39, 1
      %s1083 = scalar_select %p1082, %s39, 1
      %s1084 = scalar_lea.vmem %s12, %s1083
      %p1085 = scmp.lt.s32.totalorder %s39, 1
      %s1086 = scalar_select %p1085, %s39, 1
      %s1087 = smul.addr %s1086, 2
      %s1088 = smul.addr %s1087, 4
      %s1089 = scalar_lea.vmem %s13, %s1088
      %p1090 = scmp.lt.s32.totalorder %s39, 1
      %s1091 = scalar_select %p1090, %s39, 1
      %s1092 = smul.addr %s1091, 4
      %s1093 = scalar_lea.vmem %s14, %s1092
      %p1094 = scmp.lt.s32.totalorder %s39, 1
      %s1095 = scalar_select %p1094, %s39, 1
      %s1096 = smul.addr %s1095, 2
      %s1097 = smul.addr %s1096, 4
      %s1098 = scalar_lea.vmem %s15, %s1097
      %p1099 = scmp.lt.s32.totalorder %s39, 1
      %s1100 = scalar_select %p1099, %s39, 1
      %s1101 = scalar_lea.vmem %s16, %s1100
      %p1102 = scmp.lt.s32.totalorder %s39, 1
      %s1103 = scalar_select %p1102, %s39, 1
      %s1104 = smul.addr %s1103, 4
      %s1105 = smul.addr %s1104, 4
      %s1106 = scalar_lea.vmem %s17, %s1105
      %p1107 = scmp.lt.s32.totalorder %s39, 1
      %s1108 = scalar_select %p1107, %s39, 1
      %s1109 = scalar_lea.vmem %s18, %s1108
      %p1110 = scmp.lt.s32.totalorder %s39, 1
      %s1111 = scalar_select %p1110, %s39, 1
      %s1112 = smul.addr %s1111, 2
      %s1113 = smul.addr %s1112, 4
      %s1114 = scalar_lea.vmem %s19, %s1113
      %p1115 = scmp.lt.s32.totalorder %s39, 1
      %s1116 = scalar_select %p1115, %s39, 1
      %s1117 = scalar_lea.vmem %s20, %s1116
      %p1118 = scmp.lt.s32.totalorder %s39, 1
      %s1119 = scalar_select %p1118, %s39, 1
      %s1120 = scalar_lea.vmem %s21, %s1119
      %p1121 = scmp.lt.s32.totalorder %s39, 1
      %s1122 = scalar_select %p1121, %s39, 1
      %s1123 = smul.addr %s1122, 2
      %s1124 = scalar_lea.vmem %s22, %s1123
      %p1125 = scmp.lt.s32.totalorder %s39, 1
      %s1126 = scalar_select %p1125, %s39, 1
      %s1127 = smul.addr %s1126, 8
      %s1128 = scalar_lea.vmem %s23, %s1127
      %p1130 = scmp.eq.s32.totalorder %s39, 0
      %p1131 = scmp.eq.s32.totalorder %s40, 0
      %p1132 = pnand %p1130, %p1131
      %p1133 = pneg %p1132
      // Predicated region
      $region117: #{context_encoder_forward.1} parent=115 // pred_check
        _
      $region118: #{context_encoder_forward.1} parent=115 // pred_check_branch
        %1135 = sbr.rel (%p1132) target = $region120
      $region119: #{context_encoder_forward.1} parent=115 // pred_region
        %v1136 = vld [vmem:[%s0] sm:$0xff]
        %v1137 = vld [vmem:[%s0 + $0x8] sm:$0xff]
        %v1138 = vld [vmem:[%s0 + $0x10] sm:$0xff]
        %vm1139 = vcmask 261120
        %1140 = vst.msk [vmem:[#allocation2] sm:$0xff] %vm1139, %v1136
        %1141 = vst.msk [vmem:[#allocation2 + $0x8] sm:$0xff] %vm1139, %v1137
        %1142 = vst.msk [vmem:[#allocation2 + $0x10] sm:$0xff] %vm1139, %v1138
        %1146 = vrot.lane.b32.xlu0 %v1136, 120
        %v1147 = vpop.permute.xlu0 %1146
        %1148 = vrot.lane.b32.xlu0 %v1137, 120
        %v1149 = vpop.permute.xlu0 %1148
        %1150 = vrot.lane.b32.xlu0 %v1138, 120
        %v1151 = vpop.permute.xlu0 %1150
        %1152 = vrot.lane.b32.xlu0 %v1136, 112
        %v1153 = vpop.permute.xlu0 %1152
        %1154 = vrot.lane.b32.xlu0 %v1137, 112
        %v1155 = vpop.permute.xlu0 %1154
        %1156 = vrot.lane.b32.xlu0 %v1138, 112
        %v1157 = vpop.permute.xlu0 %1156
        %1158 = vrot.lane.b32.xlu0 %v1136, 96
        %v1159 = vpop.permute.xlu0 %1158
        %1160 = vrot.lane.b32.xlu0 %v1137, 96
        %v1161 = vpop.permute.xlu0 %1160
        %1162 = vrot.lane.b32.xlu0 %v1138, 96
        %v1163 = vpop.permute.xlu0 %1162
        %1164 = vrot.lane.b32.xlu0 %v1147, 96
        %v1165 = vpop.permute.xlu0 %1164
        %1166 = vrot.lane.b32.xlu0 %v1149, 96
        %v1167 = vpop.permute.xlu0 %1166
        %1168 = vrot.lane.b32.xlu0 %v1151, 96
        %v1169 = vpop.permute.xlu0 %1168
        %1170 = vrot.lane.b32.xlu0 %v1153, 96
        %v1171 = vpop.permute.xlu0 %1170
        %1172 = vrot.lane.b32.xlu0 %v1155, 96
        %v1173 = vpop.permute.xlu0 %1172
        %1174 = vrot.lane.b32.xlu0 %v1157, 96
        %v1175 = vpop.permute.xlu0 %1174
        %vm1185 = vcmask 64512
        %1186 = vst.msk [vmem:[#allocation3] sm:$0xff] %vm1185, %v1159
        %1187 = vst.msk [vmem:[#allocation3 + $0x8] sm:$0xff] %vm1185, %v1161
        %1188 = vst.msk [vmem:[#allocation3 + $0x10] sm:$0xff] %vm1185, %v1163
        %1189 = vst.msk [vmem:[#allocation3 + $0x18] sm:$0xff] %vm1185, %v1165
        %1190 = vst.msk [vmem:[#allocation3 + $0x20] sm:$0xff] %vm1185, %v1167
        %1191 = vst.msk [vmem:[#allocation3 + $0x28] sm:$0xff] %vm1185, %v1169
        %1192 = vst.msk [vmem:[#allocation3 + $0x30] sm:$0xff] %vm1185, %v1171
        %1193 = vst.msk [vmem:[#allocation3 + $0x38] sm:$0xff] %vm1185, %v1173
        %1194 = vst.msk [vmem:[#allocation3 + $0x40] sm:$0xff] %vm1185, %v1175
      $region120: #{context_encoder_forward.1} parent=115 // pred_fallthru
        _
      // Predicated region
      $region121: #{context_encoder_forward.1} parent=115 // pred_check
        %p1195 = pneg %p1131
      $region122: #{context_encoder_forward.1} parent=115 // pred_check_branch
        %1197 = sbr.rel (%p1195) target = $region124
      $region123: #{context_encoder_forward.1} parent=115 // pred_region
        %v1198 = vld [vmem:[#allocation2] sm:$0xff]
        %v1199 = vld [vmem:[#allocation2 + $0x8] sm:$0xff]
        %v1200 = vld [vmem:[#allocation2 + $0x10] sm:$0xff]
        %v1201 = vld [vmem:[#allocation3] sm:$0xff]
        %v1202 = vld [vmem:[#allocation3 + $0x8] sm:$0xff]
        %v1203 = vld [vmem:[#allocation3 + $0x10] sm:$0xff]
        %v1204 = vld [vmem:[#allocation3 + $0x18] sm:$0xff]
        %v1205 = vld [vmem:[#allocation3 + $0x20] sm:$0xff]
        %v1206 = vld [vmem:[#allocation3 + $0x28] sm:$0xff]
        %v1207 = vld [vmem:[#allocation3 + $0x30] sm:$0xff]
        %v1208 = vld [vmem:[#allocation3 + $0x38] sm:$0xff]
        %v1209 = vld [vmem:[#allocation3 + $0x40] sm:$0xff]
        %v1210 = vld [vmem:[%s1042] sm:$0xf]
        %v1211 = vld [vmem:[%s1047] sm:$0xf]
        %v1212 = vld [vmem:[%s1052] sm:$0xf]
        %v1213 = vld [vmem:[%s1052 + $0x4] sm:$0xf]
        %v1214 = vld [vmem:[%s1052 + $0x8] sm:$0xf]
        %v1215 = vld [vmem:[%s1052 + $0xc] sm:$0xf]
        %v1216 = vld [vmem:[%s1052 + $0x10] sm:$0xf]
        %v1217 = vld [vmem:[%s1057] sm:$0xf]
        %v1218 = vld [vmem:[%s1057 + $0x4] sm:$0xf]
        %v1219 = vld [vmem:[%s1057 + $0x8] sm:$0xf]
        %v1220 = vld [vmem:[%s1057 + $0xc] sm:$0xf]
        %v1221 = vld [vmem:[%s1061] sm:$0x1]
        %v1222 = vpack.c.bf16 %v1202, %v1201
        %v1223 = vpack.c.bf16 %v1204, %v1203
        %v1224 = vpack.c.bf16 %v1206, %v1205
        %v1225 = vpack.c.bf16 %v1208, %v1207
        %v1226 = vpack.c.bf16 %v1209, %v1209
        %vm1227 = vcmask 64512
        %v1229 = vsel %vm1227, %v1222, 0
        %v1232 = vsel %vm1227, %v1223, 0
        %v1235 = vsel %vm1227, %v1224, 0
        %v1238 = vsel %vm1227, %v1225, 0
        %v1241 = vsel %vm1227, %v1226, 0
        %vm1243 = vcmask 1043456
        %v1245 = vsel %vm1243, %v1210, 0
        %1247 = vmatprep.subr.bf16.mxu0 0
        %1248 = vmatpush1.bf16.msra.mxu0 %v1245
        %1249 = vmatprep.subr.bf16.mxu0 0
        %1250 = vmatpush1.bf16.msra.mxu0 0
        %1251 = vmatprep.subr.bf16.mxu0 0
        %1252 = vmatpush1.bf16.msra.mxu0 0
        %1253 = vmatprep.subr.bf16.mxu0 0
        %1254 = vmatpush1.bf16.msra.mxu0 0
        %1255 = vmatprep.subr.bf16.mxu0 0
        %1256 = vmatpush1.bf16.msra.mxu0 0
        %1257 = vmatprep.subr.bf16.mxu0 0
        %1258 = vmatpush1.bf16.msra.mxu0 0
        %1259 = vmatprep.subr.bf16.mxu0 0
        %1260 = vmatpush1.bf16.msra.mxu0 0
        %1261 = vmatprep.subr.bf16.mxu0 0
        %1262 = vmatpush1.bf16.msra.mxu0 0
        %1263 = vmatprep.subr.bf16.mxu0 0
        %1264 = vmatpush1.bf16.msra.mxu0 0
        %1265 = vmatprep.subr.bf16.mxu0 0
        %1266 = vmatpush1.bf16.msra.mxu0 0
        %1267 = vmatprep.subr.bf16.mxu0 0
        %1268 = vmatpush1.bf16.msra.mxu0 0
        %1269 = vmatprep.subr.bf16.mxu0 0
        %1270 = vmatpush1.bf16.msra.mxu0 0
        %1271 = vmatprep.subr.bf16.mxu0 0
        %1272 = vmatpush1.bf16.msra.mxu0 0
        %1273 = vmatprep.subr.bf16.mxu0 0
        %1274 = vmatpush1.bf16.msra.mxu0 0
        %1275 = vmatprep.subr.bf16.mxu0 0
        %1276 = vmatpush1.bf16.msra.mxu0 0
        %1277 = vmatprep.subr.bf16.mxu0 0
        %1278 = vmatpush1.bf16.msra.mxu0 0
        %1279 = vmatprep.mubr.bf16.mxu0 0
        %1280 = vmatmul.mubr.bf16.gmra.mrb[0].mxu0 %v1229
        %v1281 = vpop.f32.mrb[0].mxu0
        %v1282 = vadd.f32 0.0, %v1281
        %v1283 = vpop.f32.mrb[0].mxu0
        %v1284 = vpop.f32.mrb[0].mxu0
        %v1285 = vadd.f32 0.0, %v1284
        %v1286 = vpop.f32.mrb[0].mxu0
        %1287 = vmatprep.mubr.bf16.mxu0 0
        %1288 = vmatmul.mubr.bf16.gmra.mrb[0].mxu0 %v1232
        %v1289 = vpop.f32.mrb[0].mxu0
        %v1290 = vadd.f32 0.0, %v1289
        %v1291 = vpop.f32.mrb[0].mxu0
        %v1292 = vpop.f32.mrb[0].mxu0
        %v1293 = vadd.f32 0.0, %v1292
        %v1294 = vpop.f32.mrb[0].mxu0
        %1295 = vmatprep.mubr.bf16.mxu0 0
        %1296 = vmatmul.mubr.bf16.gmra.mrb[0].mxu0 %v1235
        %v1297 = vpop.f32.mrb[0].mxu0
        %v1298 = vadd.f32 0.0, %v1297
        %v1299 = vpop.f32.mrb[0].mxu0
        %v1300 = vpop.f32.mrb[0].mxu0
        %v1301 = vadd.f32 0.0, %v1300
        %v1302 = vpop.f32.mrb[0].mxu0
        %1303 = vmatprep.mubr.bf16.mxu0 0
        %1304 = vmatmul.mubr.bf16.gmra.mrb[0].mxu0 %v1238
        %v1305 = vpop.f32.mrb[0].mxu0
        %v1306 = vadd.f32 0.0, %v1305
        %v1307 = vpop.f32.mrb[0].mxu0
        %v1308 = vpop.f32.mrb[0].mxu0
        %v1309 = vadd.f32 0.0, %v1308
        %v1310 = vpop.f32.mrb[0].mxu0
        %1311 = vmatprep.mubr.bf16.mxu0 0
        %1312 = vmatmul.mubr.bf16.gmra.mrb[0].mxu0 %v1241
        %v1313 = vpop.f32.mrb[0].mxu0
        %v1314 = vadd.f32 0.0, %v1313
        %v1315 = vpop.f32.mrb[0].mxu0
        %v1316 = vpop.f32.mrb[0].mxu0
        %v1317 = vpop.f32.mrb[0].mxu0
        %1318 = vdwg.mxu0
        %v1319 = vmul.f32 %v1282, %v1282
        %v1320 = vmul.f32 %v1285, %v1285
        %v1321 = vmul.f32 %v1290, %v1290
        %v1322 = vmul.f32 %v1293, %v1293
        %v1323 = vmul.f32 %v1298, %v1298
        %v1324 = vmul.f32 %v1301, %v1301
        %v1325 = vadd.f32 %v1319, %v1322
        %v1326 = vadd.f32 %v1320, %v1323
        %v1327 = vadd.f32 %v1321, %v1324
        %v1328 = vmul.f32 %v1306, %v1306
        %v1329 = vmul.f32 %v1309, %v1309
        %v1330 = vmul.f32 %v1314, %v1314
        %v1331 = vadd.f32 %v1325, %v1328
        %v1332 = vadd.f32 %v1326, %v1329
        %v1333 = vadd.f32 %v1327, %v1330
        %v1334 = vrsqrt.pop %v1331
        %v1335 = vmul.f32 %v1331, %v1334
        %vm1336 = vcmp.eq.f32.partialorder %v1331, inf
        %v1337 = vsel %vm1336, %v1331, %v1335
        %vm1338 = vcmp.eq.f32.partialorder %v1331, 0.0
        %v1339 = vand.u32 %v1331, 2147483648
        %v1340 = vsel %vm1338, %v1339, %v1337
        %v1341 = vrsqrt.pop %v1332
        %v1342 = vmul.f32 %v1332, %v1341
        %vm1343 = vcmp.eq.f32.partialorder %v1332, inf
        %v1344 = vsel %vm1343, %v1332, %v1342
        %vm1345 = vcmp.eq.f32.partialorder %v1332, 0.0
        %v1346 = vand.u32 %v1332, 2147483648
        %v1347 = vsel %vm1345, %v1346, %v1344
        %v1348 = vrsqrt.pop %v1333
        %v1349 = vmul.f32 %v1333, %v1348
        %vm1350 = vcmp.eq.f32.partialorder %v1333, inf
        %v1351 = vsel %vm1350, %v1333, %v1349
        %vm1352 = vcmp.eq.f32.partialorder %v1333, 0.0
        %v1353 = vand.u32 %v1333, 2147483648
        %v1354 = vsel %vm1352, %v1353, %v1351
        %1358 = vrot.lane.b32.xlu0 %v1198, 8
        %v1359 = vpop.permute.xlu0 %1358
        %1360 = vrot.lane.b32.xlu0 %v1199, 8
        %v1361 = vpop.permute.xlu0 %1360
        %1362 = vrot.lane.b32.xlu0 %v1200, 8
        %v1363 = vpop.permute.xlu0 %1362
        %v1367 = vsel %vm1227, %v1340, %v1359
        %v1368 = vsel %vm1227, %v1347, %v1361
        %v1369 = vsel %vm1227, %v1354, %v1363
        %v1370 = vpack.c.bf16 %v1368, %v1367
        %v1371 = vpack.c.bf16 %v1369, %v1369
        %v1377 = vunpack.c.l.b16 %v1212
        %v1378 = vunpack.c.l.b16 %v1213
        %v1379 = vunpack.c.l.b16 %v1214
        %v1380 = vunpack.c.l.b16 %v1215
        %v1381 = vunpack.c.l.b16 %v1216
        %v1382 = vpack.c.b16 %v1378, %v1377
        %v1383 = vpack.c.b16 %v1380, %v1379
        %v1384 = vpack.c.b16 %v1381, %v1381
        %vm1387 = vcmask 326656
        %v1389 = vsel %vm1387, %v1370, 0
        %v1392 = vsel %vm1387, %v1371, 0
        %v1395 = vsel %vm1243, %v1384, 0
        %1397 = vmatprep.subr.bf16.mxu0 0
        %1398 = vmatpush1.bf16.msra.mxu0 %v1382
        %1399 = vmatprep.subr.bf16.mxu0 0
        %1400 = vmatpush1.bf16.msra.mxu0 %v1383
        %1401 = vmatprep.subr.bf16.mxu0 0
        %1402 = vmatpush1.bf16.msra.mxu0 %v1395
        %1403 = vmatprep.subr.bf16.mxu0 0
        %1404 = vmatpush1.bf16.msra.mxu0 0
        %1405 = vmatprep.subr.bf16.mxu0 0
        %1406 = vmatpush1.bf16.msra.mxu0 0
        %1407 = vmatprep.subr.bf16.mxu0 0
        %1408 = vmatpush1.bf16.msra.mxu0 0
        %1409 = vmatprep.subr.bf16.mxu0 0
        %1410 = vmatpush1.bf16.msra.mxu0 0
        %1411 = vmatprep.subr.bf16.mxu0 0
        %1412 = vmatpush1.bf16.msra.mxu0 0
        %1413 = vmatprep.subr.bf16.mxu0 0
        %1414 = vmatpush1.bf16.msra.mxu0 0
        %1415 = vmatprep.subr.bf16.mxu0 0
        %1416 = vmatpush1.bf16.msra.mxu0 0
        %1417 = vmatprep.subr.bf16.mxu0 0
        %1418 = vmatpush1.bf16.msra.mxu0 0
        %1419 = vmatprep.subr.bf16.mxu0 0
        %1420 = vmatpush1.bf16.msra.mxu0 0
        %1421 = vmatprep.subr.bf16.mxu0 0
        %1422 = vmatpush1.bf16.msra.mxu0 0
        %1423 = vmatprep.subr.bf16.mxu0 0
        %1424 = vmatpush1.bf16.msra.mxu0 0
        %1425 = vmatprep.subr.bf16.mxu0 0
        %1426 = vmatpush1.bf16.msra.mxu0 0
        %1427 = vmatprep.subr.bf16.mxu0 0
        %1428 = vmatpush1.bf16.msra.mxu0 0
        %1429 = vmatprep.mubr.bf16.mxu0 0
        %1430 = vmatmul.mubr.bf16.gmra.mrb[0].mxu0 %v1389
        %v1431 = vpop.f32.mrb[0].mxu0
        %v1432 = vadd.f32 0.0, %v1431
        %v1433 = vpop.f32.mrb[0].mxu0
        %v1434 = vpop.f32.mrb[0].mxu0
        %v1435 = vadd.f32 0.0, %v1434
        %v1436 = vpop.f32.mrb[0].mxu0
        %1437 = vmatprep.mubr.bf16.mxu0 0
        %1438 = vmatmul.mubr.bf16.gmra.mrb[0].mxu0 %v1392
        %v1439 = vpop.f32.mrb[0].mxu0
        %v1440 = vadd.f32 0.0, %v1439
        %v1441 = vpop.f32.mrb[0].mxu0
        %v1442 = vpop.f32.mrb[0].mxu0
        %v1443 = vpop.f32.mrb[0].mxu0
        %1444 = vdwg.mxu0
        %v1445 = vpack.c.bf16 %v1435, %v1432
        %v1446 = vpack.c.bf16 %v1440, %v1440
        %v1448 = vlaneseq
        %v1449 = vshrl.u32 %v1448, 7
        %v1450 = vsub.s32 0, %v1449
        %v1451 = vrot.slane %v1221, %v1450
        %v1457 = vunpack.c.l.b16 %v1217
        %v1458 = vunpack.c.l.b16 %v1218
        %v1459 = vunpack.c.l.b16 %v1219
        %v1460 = vunpack.c.l.b16 %v1220
        %v1461 = vpack.c.b16 %v1458, %v1457
        %v1462 = vpack.c.b16 %v1460, %v1459
        %vm1465 = vcmask 261120
        %v1467 = vsel %vm1465, %v1445, 0
        %v1470 = vsel %vm1465, %v1446, 0
        %1472 = vmatprep.subr.bf16.mxu0 0
        %1473 = vmatpush1.bf16.msra.mxu0 %v1461
        %1474 = vmatprep.subr.bf16.mxu0 0
        %1475 = vmatpush1.bf16.msra.mxu0 %v1462
        %1476 = vmatprep.subr.bf16.mxu0 0
        %1477 = vmatpush1.bf16.msra.mxu0 0
        %1478 = vmatprep.subr.bf16.mxu0 0
        %1479 = vmatpush1.bf16.msra.mxu0 0
        %1480 = vmatprep.subr.bf16.mxu0 0
        %1481 = vmatpush1.bf16.msra.mxu0 0
        %1482 = vmatprep.subr.bf16.mxu0 0
        %1483 = vmatpush1.bf16.msra.mxu0 0
        %1484 = vmatprep.subr.bf16.mxu0 0
        %1485 = vmatpush1.bf16.msra.mxu0 0
        %1486 = vmatprep.subr.bf16.mxu0 0
        %1487 = vmatpush1.bf16.msra.mxu0 0
        %1488 = vmatprep.subr.bf16.mxu0 0
        %1489 = vmatpush1.bf16.msra.mxu0 0
        %1490 = vmatprep.subr.bf16.mxu0 0
        %1491 = vmatpush1.bf16.msra.mxu0 0
        %1492 = vmatprep.subr.bf16.mxu0 0
        %1493 = vmatpush1.bf16.msra.mxu0 0
        %1494 = vmatprep.subr.bf16.mxu0 0
        %1495 = vmatpush1.bf16.msra.mxu0 0
        %1496 = vmatprep.subr.bf16.mxu0 0
        %1497 = vmatpush1.bf16.msra.mxu0 0
        %1498 = vmatprep.subr.bf16.mxu0 0
        %1499 = vmatpush1.bf16.msra.mxu0 0
        %1500 = vmatprep.subr.bf16.mxu0 0
        %1501 = vmatpush1.bf16.msra.mxu0 0
        %1502 = vmatprep.subr.bf16.mxu0 0
        %1503 = vmatpush1.bf16.msra.mxu0 0
        %1504 = vmatprep.mubr.bf16.mxu0 0
        %1505 = vmatmul.mubr.bf16.gmra.mrb[0].mxu0 %v1467
        %v1506 = vpop.f32.mrb[0].mxu0
        %v1507 = vadd.f32 %v1451, %v1506
        %v1508 = vpop.f32.mrb[0].mxu0
        %v1509 = vpop.f32.mrb[0].mxu0
        %v1510 = vadd.f32 %v1451, %v1509
        %v1511 = vpop.f32.mrb[0].mxu0
        %1512 = vmatprep.mubr.bf16.mxu0 0
        %1513 = vmatmul.mubr.bf16.gmra.mrb[0].mxu0 %v1470
        %v1514 = vpop.f32.mrb[0].mxu0
        %v1515 = vadd.f32 %v1451, %v1514
        %v1516 = vpop.f32.mrb[0].mxu0
        %v1517 = vpop.f32.mrb[0].mxu0
        %v1518 = vpop.f32.mrb[0].mxu0
        %1519 = vdwg.mxu0
        %v1520 = vxor.u32 %v1507, 2147483648
        %v1521 = vxor.u32 %v1510, 2147483648
        %v1522 = vxor.u32 %v1515, 2147483648
        %v1523 = vmul.f32 %v1520, 1.442695
        %v1524 = vpow.pop %v1523
        %v1525 = vmul.f32 %v1521, 1.442695
        %v1526 = vpow.pop %v1525
        %v1527 = vmul.f32 %v1522, 1.442695
        %v1528 = vpow.pop %v1527
        %v1529 = vadd.f32 %v1524, 1.0
        %v1530 = vadd.f32 %v1526, 1.0
        %v1531 = vadd.f32 %v1528, 1.0
        %v1532 = vrcp.pop %v1529
        %v1533 = vmul.f32 1.0, %v1532
        %v1534 = vrcp.pop %v1530
        %v1535 = vmul.f32 1.0, %v1534
        %v1536 = vrcp.pop %v1531
        %v1537 = vmul.f32 1.0, %v1536
        %v1538 = vpack.c.bf16 %v1285, %v1282
        %v1539 = vpack.c.bf16 %v1293, %v1290
        %v1540 = vpack.c.bf16 %v1301, %v1298
        %v1541 = vpack.c.bf16 %v1309, %v1306
        %v1542 = vpack.c.bf16 %v1314, %v1314
        %v1544 = vsel %vm1227, %v1538, 0
        %v1547 = vsel %vm1227, %v1539, 0
        %v1550 = vsel %vm1227, %v1540, 0
        %v1553 = vsel %vm1227, %v1541, 0
        %v1556 = vsel %vm1227, %v1542, 0
        %v1559 = vsel %vm1243, %v1211, 0
        %1561 = vmatprep.subr.bf16.mxu0 0
        %1562 = vmatpush1.bf16.msra.mxu0 %v1559
        %1563 = vmatprep.subr.bf16.mxu0 0
        %1564 = vmatpush1.bf16.msra.mxu0 0
        %1565 = vmatprep.subr.bf16.mxu0 0
        %1566 = vmatpush1.bf16.msra.mxu0 0
        %1567 = vmatprep.subr.bf16.mxu0 0
        %1568 = vmatpush1.bf16.msra.mxu0 0
        %1569 = vmatprep.subr.bf16.mxu0 0
        %1570 = vmatpush1.bf16.msra.mxu0 0
        %1571 = vmatprep.subr.bf16.mxu0 0
        %1572 = vmatpush1.bf16.msra.mxu0 0
        %1573 = vmatprep.subr.bf16.mxu0 0
        %1574 = vmatpush1.bf16.msra.mxu0 0
        %1575 = vmatprep.subr.bf16.mxu0 0
        %1576 = vmatpush1.bf16.msra.mxu0 0
        %1577 = vmatprep.subr.bf16.mxu0 0
        %1578 = vmatpush1.bf16.msra.mxu0 0
        %1579 = vmatprep.subr.bf16.mxu0 0
        %1580 = vmatpush1.bf16.msra.mxu0 0
        %1581 = vmatprep.subr.bf16.mxu0 0
        %1582 = vmatpush1.bf16.msra.mxu0 0
        %1583 = vmatprep.subr.bf16.mxu0 0
        %1584 = vmatpush1.bf16.msra.mxu0 0
        %1585 = vmatprep.subr.bf16.mxu0 0
        %1586 = vmatpush1.bf16.msra.mxu0 0
        %1587 = vmatprep.subr.bf16.mxu0 0
        %1588 = vmatpush1.bf16.msra.mxu0 0
        %1589 = vmatprep.subr.bf16.mxu0 0
        %1590 = vmatpush1.bf16.msra.mxu0 0
        %1591 = vmatprep.subr.bf16.mxu0 0
        %1592 = vmatpush1.bf16.msra.mxu0 0
        %1593 = vmatprep.mubr.bf16.mxu0 0
        %1594 = vmatmul.mubr.bf16.gmra.mrb[0].mxu0 %v1544
        %v1595 = vpop.f32.mrb[0].mxu0
        %v1596 = vadd.f32 0.0, %v1595
        %v1597 = vpop.f32.mrb[0].mxu0
        %v1598 = vpop.f32.mrb[0].mxu0
        %v1599 = vadd.f32 0.0, %v1598
        %v1600 = vpop.f32.mrb[0].mxu0
        %1601 = vmatprep.mubr.bf16.mxu0 0
        %1602 = vmatmul.mubr.bf16.gmra.mrb[0].mxu0 %v1547
        %v1603 = vpop.f32.mrb[0].mxu0
        %v1604 = vadd.f32 0.0, %v1603
        %v1605 = vpop.f32.mrb[0].mxu0
        %v1606 = vpop.f32.mrb[0].mxu0
        %v1607 = vadd.f32 0.0, %v1606
        %v1608 = vpop.f32.mrb[0].mxu0
        %1609 = vmatprep.mubr.bf16.mxu0 0
        %1610 = vmatmul.mubr.bf16.gmra.mrb[0].mxu0 %v1550
        %v1611 = vpop.f32.mrb[0].mxu0
        %v1612 = vadd.f32 0.0, %v1611
        %v1613 = vpop.f32.mrb[0].mxu0
        %v1614 = vpop.f32.mrb[0].mxu0
        %v1615 = vadd.f32 0.0, %v1614
        %v1616 = vpop.f32.mrb[0].mxu0
        %1617 = vmatprep.mubr.bf16.mxu0 0
        %1618 = vmatmul.mubr.bf16.gmra.mrb[0].mxu0 %v1553
        %v1619 = vpop.f32.mrb[0].mxu0
        %v1620 = vadd.f32 0.0, %v1619
        %v1621 = vpop.f32.mrb[0].mxu0
        %v1622 = vpop.f32.mrb[0].mxu0
        %v1623 = vadd.f32 0.0, %v1622
        %v1624 = vpop.f32.mrb[0].mxu0
        %1625 = vmatprep.mubr.bf16.mxu0 0
        %1626 = vmatmul.mubr.bf16.gmra.mrb[0].mxu0 %v1556
        %v1627 = vpop.f32.mrb[0].mxu0
        %v1628 = vadd.f32 0.0, %v1627
        %v1629 = vpop.f32.mrb[0].mxu0
        %v1630 = vpop.f32.mrb[0].mxu0
        %v1631 = vpop.f32.mrb[0].mxu0
        %1632 = vdwg.mxu0
        %v1633 = vmul.f32 %v1596, %v1533
        %v1634 = vmul.f32 %v1599, %v1535
        %v1635 = vmul.f32 %v1604, %v1537
        %v1636 = vmul.f32 %v1607, %v1533
        %v1637 = vmul.f32 %v1612, %v1535
        %v1638 = vmul.f32 %v1615, %v1537
        %v1639 = vmul.f32 %v1620, %v1533
        %v1640 = vmul.f32 %v1623, %v1535
        %v1641 = vmul.f32 %v1628, %v1537
        %1645 = vrot.lane.b32.xlu0 %v1633, 32
        %v1646 = vpop.permute.xlu0 %1645
        %1647 = vrot.lane.b32.xlu0 %v1634, 32
        %v1648 = vpop.permute.xlu0 %1647
        %1649 = vrot.lane.b32.xlu0 %v1635, 32
        %v1650 = vpop.permute.xlu0 %1649
        %1657 = vrot.lane.b32.xlu0 %v1636, 40
        %v1658 = vpop.permute.xlu0 %1657
        %1659 = vrot.lane.b32.xlu0 %v1637, 40
        %v1660 = vpop.permute.xlu0 %1659
        %1661 = vrot.lane.b32.xlu0 %v1638, 40
        %v1662 = vpop.permute.xlu0 %1661
        %1669 = vrot.lane.b32.xlu0 %v1639, 48
        %v1670 = vpop.permute.xlu0 %1669
        %1671 = vrot.lane.b32.xlu0 %v1640, 48
        %v1672 = vpop.permute.xlu0 %1671
        %1673 = vrot.lane.b32.xlu0 %v1641, 48
        %v1674 = vpop.permute.xlu0 %1673
        %v1678 = vsel %vm1465, %v1432, %v1646
        %v1679 = vsel %vm1465, %v1435, %v1648
        %v1680 = vsel %vm1465, %v1440, %v1650
        %v1681 = vsel %vm1387, %v1678, %v1658
        %v1682 = vsel %vm1387, %v1679, %v1660
        %v1683 = vsel %vm1387, %v1680, %v1662
        %vm1684 = vcmask 392192
        %v1685 = vsel %vm1684, %v1681, %v1670
        %v1686 = vsel %vm1684, %v1682, %v1672
        %v1687 = vsel %vm1684, %v1683, %v1674
        %vm1688 = vcmask 457728
        %1689 = vst.msk [vmem:[#allocation4] sm:$0xff] %vm1688, %v1685
        %1690 = vst.msk [vmem:[#allocation4 + $0x8] sm:$0xff] %vm1688, %v1686
        %1691 = vst.msk [vmem:[#allocation4 + $0x10] sm:$0xff] %vm1688, %v1687
        %1692 = vst.msk [vmem:[#allocation5] sm:$0xff] %vm1688, 0.0
        %1693 = vst.msk [vmem:[#allocation5 + $0x8] sm:$0xff] %vm1688, 0.0
        %1694 = vst.msk [vmem:[#allocation5 + $0x10] sm:$0xff] %vm1688, 0.0
      $region124: #{context_encoder_forward.1} parent=115 // pred_fallthru
        _
      %v1695 = vld [vmem:[%s1033] sm:$0xff]
      %v1696 = vld [vmem:[%s1033 + $0x8] sm:$0xff]
      %v1697 = vld [vmem:[%s1033 + $0x10] sm:$0xff]
      %v1698 = vld [vmem:[%s1033 + $0x18] sm:$0xff]
      %v1699 = vld [vmem:[%s1033 + $0x20] sm:$0xff]
      %v1700 = vld [vmem:[%s1033 + $0x28] sm:$0xff]
      %v1701 = vld [vmem:[%s1033 + $0x30] sm:$0xff]
      %v1702 = vld [vmem:[%s1033 + $0x38] sm:$0xff]
      %v1703 = vld [vmem:[%s1033 + $0x40] sm:$0xff]
      %v1704 = vld [vmem:[%s1033 + $0x48] sm:$0xff]
      %v1705 = vld [vmem:[%s1033 + $0x50] sm:$0xff]
      %v1706 = vld [vmem:[%s1033 + $0x58] sm:$0xff]
      %v1707 = vld [vmem:[%s1033 + $0x60] sm:$0xff]
      %v1708 = vld [vmem:[%s1033 + $0x68] sm:$0xff]
      %v1709 = vld [vmem:[%s1033 + $0x70] sm:$0xff]
      %v1710 = vld [vmem:[%s1033 + $0x78] sm:$0xff]
      %v1711 = vcvt.f32.s32.to.zero.pseudo %v1695
      %v1712 = vcvt.f32.s32.to.zero.pseudo %v1696
      %v1713 = vcvt.f32.s32.to.zero.pseudo %v1697
      %v1714 = vcvt.f32.s32.to.zero.pseudo %v1698
      %v1715 = vcvt.f32.s32.to.zero.pseudo %v1699
      %v1716 = vcvt.f32.s32.to.zero.pseudo %v1700
      %v1717 = vcvt.f32.s32.to.zero.pseudo %v1701
      %v1718 = vcvt.f32.s32.to.zero.pseudo %v1702
      %v1719 = vcvt.f32.s32.to.zero.pseudo %v1703
      %v1720 = vcvt.f32.s32.to.zero.pseudo %v1704
      %v1721 = vcvt.f32.s32.to.zero.pseudo %v1705
      %v1722 = vcvt.f32.s32.to.zero.pseudo %v1706
      %v1723 = vcvt.f32.s32.to.zero.pseudo %v1707
      %v1724 = vcvt.f32.s32.to.zero.pseudo %v1708
      %v1725 = vcvt.f32.s32.to.zero.pseudo %v1709
      %v1726 = vcvt.f32.s32.to.zero.pseudo %v1710
      %v1727 = vlaneseq
      %v1728 = vand.u32 %v1727, 127
      %1729 = vset.pattern.permute.xlu0 20
      %1730 = vperm.xlu0 %1729, %v1711
      %v1731 = vpop.permute.xlu0 %1730
      %1732 = vset.pattern.permute.xlu0 20
      %1733 = vperm.xlu0 %1732, %v1712
      %v1734 = vpop.permute.xlu0 %1733
      %1735 = vset.pattern.permute.xlu0 20
      %1736 = vperm.xlu0 %1735, %v1713
      %v1737 = vpop.permute.xlu0 %1736
      %1738 = vset.pattern.permute.xlu0 20
      %1739 = vperm.xlu0 %1738, %v1714
      %v1740 = vpop.permute.xlu0 %1739
      %1741 = vset.pattern.permute.xlu0 20
      %1742 = vperm.xlu0 %1741, %v1715
      %v1743 = vpop.permute.xlu0 %1742
      %1744 = vset.pattern.permute.xlu0 20
      %1745 = vperm.xlu0 %1744, %v1716
      %v1746 = vpop.permute.xlu0 %1745
      %1747 = vset.pattern.permute.xlu0 20
      %1748 = vperm.xlu0 %1747, %v1717
      %v1749 = vpop.permute.xlu0 %1748
      %1750 = vset.pattern.permute.xlu0 20
      %1751 = vperm.xlu0 %1750, %v1718
      %v1752 = vpop.permute.xlu0 %1751
      %1753 = vset.pattern.permute.xlu0 20
      %1754 = vperm.xlu0 %1753, %v1719
      %v1755 = vpop.permute.xlu0 %1754
      %1756 = vset.pattern.permute.xlu0 20
      %1757 = vperm.xlu0 %1756, %v1720
      %v1758 = vpop.permute.xlu0 %1757
      %1759 = vset.pattern.permute.xlu0 20
      %1760 = vperm.xlu0 %1759, %v1721
      %v1761 = vpop.permute.xlu0 %1760
      %1762 = vset.pattern.permute.xlu0 20
      %1763 = vperm.xlu0 %1762, %v1722
      %v1764 = vpop.permute.xlu0 %1763
      %1765 = vset.pattern.permute.xlu0 20
      %1766 = vperm.xlu0 %1765, %v1723
      %v1767 = vpop.permute.xlu0 %1766
      %1768 = vset.pattern.permute.xlu0 20
      %1769 = vperm.xlu0 %1768, %v1724
      %v1770 = vpop.permute.xlu0 %1769
      %1771 = vset.pattern.permute.xlu0 20
      %1772 = vperm.xlu0 %1771, %v1725
      %v1773 = vpop.permute.xlu0 %1772
      %1774 = vset.pattern.permute.xlu0 20
      %1775 = vperm.xlu0 %1774, %v1726
      %v1776 = vpop.permute.xlu0 %1775
      %vm1777 = vcmp.eq.s32.totalorder %v1731, %v1728
      %vm1778 = vcmp.eq.s32.totalorder %v1734, %v1728
      %vm1779 = vcmp.eq.s32.totalorder %v1737, %v1728
      %vm1780 = vcmp.eq.s32.totalorder %v1740, %v1728
      %vm1781 = vcmp.eq.s32.totalorder %v1743, %v1728
      %vm1782 = vcmp.eq.s32.totalorder %v1746, %v1728
      %vm1783 = vcmp.eq.s32.totalorder %v1749, %v1728
      %vm1784 = vcmp.eq.s32.totalorder %v1752, %v1728
      %vm1785 = vcmp.eq.s32.totalorder %v1755, %v1728
      %vm1786 = vcmp.eq.s32.totalorder %v1758, %v1728
      %vm1787 = vcmp.eq.s32.totalorder %v1761, %v1728
      %vm1788 = vcmp.eq.s32.totalorder %v1764, %v1728
      %vm1789 = vcmp.eq.s32.totalorder %v1767, %v1728
      %vm1790 = vcmp.eq.s32.totalorder %v1770, %v1728
      %vm1791 = vcmp.eq.s32.totalorder %v1773, %v1728
      %vm1792 = vcmp.eq.s32.totalorder %v1776, %v1728
      %v1793 = vsel %vm1777, 1, 0
      %v1794 = vsel %vm1778, 1, 0
      %v1795 = vsel %vm1779, 1, 0
      %v1796 = vsel %vm1780, 1, 0
      %v1797 = vsel %vm1781, 1, 0
      %v1798 = vsel %vm1782, 1, 0
      %v1799 = vsel %vm1783, 1, 0
      %v1800 = vsel %vm1784, 1, 0
      %v1801 = vsel %vm1785, 1, 0
      %v1802 = vsel %vm1786, 1, 0
      %v1803 = vsel %vm1787, 1, 0
      %v1804 = vsel %vm1788, 1, 0
      %v1805 = vsel %vm1789, 1, 0
      %v1806 = vsel %vm1790, 1, 0
      %v1807 = vsel %vm1791, 1, 0
      %v1808 = vsel %vm1792, 1, 0
      %v1809 = vcvt.s32.f32 %v1793
      %v1810 = vcvt.s32.f32 %v1794
      %v1811 = vcvt.s32.f32 %v1795
      %v1812 = vcvt.s32.f32 %v1796
      %v1813 = vcvt.s32.f32 %v1797
      %v1814 = vcvt.s32.f32 %v1798
      %v1815 = vcvt.s32.f32 %v1799
      %v1816 = vcvt.s32.f32 %v1800
      %v1817 = vcvt.s32.f32 %v1801
      %v1818 = vcvt.s32.f32 %v1802
      %v1819 = vcvt.s32.f32 %v1803
      %v1820 = vcvt.s32.f32 %v1804
      %v1821 = vcvt.s32.f32 %v1805
      %v1822 = vcvt.s32.f32 %v1806
      %v1823 = vcvt.s32.f32 %v1807
      %v1824 = vcvt.s32.f32 %v1808
      %v1825 = vpack.c.bf16 %v1810, %v1809
      %v1826 = vpack.c.bf16 %v1812, %v1811
      %v1827 = vpack.c.bf16 %v1814, %v1813
      %v1828 = vpack.c.bf16 %v1816, %v1815
      %v1829 = vpack.c.bf16 %v1818, %v1817
      %v1830 = vpack.c.bf16 %v1820, %v1819
      %v1831 = vpack.c.bf16 %v1822, %v1821
      %v1832 = vpack.c.bf16 %v1824, %v1823
      %v1833 = vld [vmem:[#allocation4] sm:$0xff]
      %v1834 = vld [vmem:[#allocation4 + $0x8] sm:$0xff]
      %v1835 = vld [vmem:[#allocation4 + $0x10] sm:$0xff]
      %v1836 = vpack.c.bf16 %v1834, %v1833
      %v1837 = vpack.c.bf16 %v1835, %v1835
      %vm1838 = vcmask 195584
      %v1840 = vsel %vm1838, %v1825, 0
      %v1843 = vsel %vm1838, %v1826, 0
      %v1846 = vsel %vm1838, %v1827, 0
      %v1849 = vsel %vm1838, %v1828, 0
      %v1852 = vsel %vm1838, %v1829, 0
      %v1855 = vsel %vm1838, %v1830, 0
      %v1858 = vsel %vm1838, %v1831, 0
      %v1861 = vsel %vm1838, %v1832, 0
      %vm1863 = vcmask 1043456
      %v1865 = vsel %vm1863, %v1837, 0
      %1867 = vmatprep.subr.bf16.mxu0 0
      %1868 = vmatpush1.bf16.msra.mxu0 %v1836
      %1869 = vmatprep.subr.bf16.mxu0 0
      %1870 = vmatpush1.bf16.msra.mxu0 %v1865
      %1871 = vmatprep.subr.bf16.mxu0 0
      %1872 = vmatpush1.bf16.msra.mxu0 0
      %1873 = vmatprep.subr.bf16.mxu0 0
      %1874 = vmatpush1.bf16.msra.mxu0 0
      %1875 = vmatprep.subr.bf16.mxu0 0
      %1876 = vmatpush1.bf16.msra.mxu0 0
      %1877 = vmatprep.subr.bf16.mxu0 0
      %1878 = vmatpush1.bf16.msra.mxu0 0
      %1879 = vmatprep.subr.bf16.mxu0 0
      %1880 = vmatpush1.bf16.msra.mxu0 0
      %1881 = vmatprep.subr.bf16.mxu0 0
      %1882 = vmatpush1.bf16.msra.mxu0 0
      %1883 = vmatprep.subr.bf16.mxu0 0
      %1884 = vmatpush1.bf16.msra.mxu0 0
      %1885 = vmatprep.subr.bf16.mxu0 0
      %1886 = vmatpush1.bf16.msra.mxu0 0
      %1887 = vmatprep.subr.bf16.mxu0 0
      %1888 = vmatpush1.bf16.msra.mxu0 0
      %1889 = vmatprep.subr.bf16.mxu0 0
      %1890 = vmatpush1.bf16.msra.mxu0 0
      %1891 = vmatprep.subr.bf16.mxu0 0
      %1892 = vmatpush1.bf16.msra.mxu0 0
      %1893 = vmatprep.subr.bf16.mxu0 0
      %1894 = vmatpush1.bf16.msra.mxu0 0
      %1895 = vmatprep.subr.bf16.mxu0 0
      %1896 = vmatpush1.bf16.msra.mxu0 0
      %1897 = vmatprep.subr.bf16.mxu0 0
      %1898 = vmatpush1.bf16.msra.mxu0 0
      %1899 = vmatprep.mubr.bf16.mxu0 0
      %1900 = vmatmul.mubr.bf16.gmra.mrb[0].mxu0 %v1840
      %v1901 = vpop.f32.mrb[0].mxu0
      %v1902 = vadd.f32 0.0, %v1901
      %v1903 = vpop.f32.mrb[0].mxu0
      %v1904 = vpop.f32.mrb[0].mxu0
      %v1905 = vadd.f32 0.0, %v1904
      %v1906 = vpop.f32.mrb[0].mxu0
      %1907 = vmatprep.mubr.bf16.mxu0 0
      %1908 = vmatmul.mubr.bf16.gmra.mrb[0].mxu0 %v1843
      %v1909 = vpop.f32.mrb[0].mxu0
      %v1910 = vadd.f32 0.0, %v1909
      %v1911 = vpop.f32.mrb[0].mxu0
      %v1912 = vpop.f32.mrb[0].mxu0
      %v1913 = vadd.f32 0.0, %v1912
      %v1914 = vpop.f32.mrb[0].mxu0
      %1915 = vmatprep.mubr.bf16.mxu0 0
      %1916 = vmatmul.mubr.bf16.gmra.mrb[0].mxu0 %v1846
      %v1917 = vpop.f32.mrb[0].mxu0
      %v1918 = vadd.f32 0.0, %v1917
      %v1919 = vpop.f32.mrb[0].mxu0
      %v1920 = vpop.f32.mrb[0].mxu0
      %v1921 = vadd.f32 0.0, %v1920
      %v1922 = vpop.f32.mrb[0].mxu0
      %1923 = vmatprep.mubr.bf16.mxu0 0
      %1924 = vmatmul.mubr.bf16.gmra.mrb[0].mxu0 %v1849
      %v1925 = vpop.f32.mrb[0].mxu0
      %v1926 = vadd.f32 0.0, %v1925
      %v1927 = vpop.f32.mrb[0].mxu0
      %v1928 = vpop.f32.mrb[0].mxu0
      %v1929 = vadd.f32 0.0, %v1928
      %v1930 = vpop.f32.mrb[0].mxu0
      %1931 = vmatprep.mubr.bf16.mxu0 0
      %1932 = vmatmul.mubr.bf16.gmra.mrb[0].mxu0 %v1852
      %v1933 = vpop.f32.mrb[0].mxu0
      %v1934 = vadd.f32 0.0, %v1933
      %v1935 = vpop.f32.mrb[0].mxu0
      %v1936 = vpop.f32.mrb[0].mxu0
      %v1937 = vadd.f32 0.0, %v1936
      %v1938 = vpop.f32.mrb[0].mxu0
      %1939 = vmatprep.mubr.bf16.mxu0 0
      %1940 = vmatmul.mubr.bf16.gmra.mrb[0].mxu0 %v1855
      %v1941 = vpop.f32.mrb[0].mxu0
      %v1942 = vadd.f32 0.0, %v1941
      %v1943 = vpop.f32.mrb[0].mxu0
      %v1944 = vpop.f32.mrb[0].mxu0
      %v1945 = vadd.f32 0.0, %v1944
      %v1946 = vpop.f32.mrb[0].mxu0
      %1947 = vmatprep.mubr.bf16.mxu0 0
      %1948 = vmatmul.mubr.bf16.gmra.mrb[0].mxu0 %v1858
      %v1949 = vpop.f32.mrb[0].mxu0
      %v1950 = vadd.f32 0.0, %v1949
      %v1951 = vpop.f32.mrb[0].mxu0
      %v1952 = vpop.f32.mrb[0].mxu0
      %v1953 = vadd.f32 0.0, %v1952
      %v1954 = vpop.f32.mrb[0].mxu0
      %1955 = vmatprep.mubr.bf16.mxu0 0
      %1956 = vmatmul.mubr.bf16.gmra.mrb[0].mxu0 %v1861
      %v1957 = vpop.f32.mrb[0].mxu0
      %v1958 = vadd.f32 0.0, %v1957
      %v1959 = vpop.f32.mrb[0].mxu0
      %v1960 = vpop.f32.mrb[0].mxu0
      %v1961 = vadd.f32 0.0, %v1960
      %v1962 = vpop.f32.mrb[0].mxu0
      %1963 = vdwg.mxu0
      %v1964 = vld [vmem:[%s1120] sm:$0x1]
      %1966 = vset.pattern.permute.xlu0 16
      %1967 = vperm.xlu0 %1966, %v1695
      %v1968 = vpop.permute.xlu0 %1967
      %1971 = vset.pattern.permute.xlu0 16
      %1972 = vperm.xlu0 %1971, %v1696
      %v1973 = vpop.permute.xlu0 %1972
      %1976 = vset.pattern.permute.xlu0 16
      %1977 = vperm.xlu0 %1976, %v1697
      %v1978 = vpop.permute.xlu0 %1977
      %1981 = vset.pattern.permute.xlu0 16
      %1982 = vperm.xlu0 %1981, %v1698
      %v1983 = vpop.permute.xlu0 %1982
      %1986 = vset.pattern.permute.xlu0 16
      %1987 = vperm.xlu0 %1986, %v1699
      %v1988 = vpop.permute.xlu0 %1987
      %1991 = vset.pattern.permute.xlu0 16
      %1992 = vperm.xlu0 %1991, %v1700
      %v1993 = vpop.permute.xlu0 %1992
      %1996 = vset.pattern.permute.xlu0 16
      %1997 = vperm.xlu0 %1996, %v1701
      %v1998 = vpop.permute.xlu0 %1997
      %2001 = vset.pattern.permute.xlu0 16
      %2002 = vperm.xlu0 %2001, %v1702
      %v2003 = vpop.permute.xlu0 %2002
      %2006 = vset.pattern.permute.xlu0 16
      %2007 = vperm.xlu0 %2006, %v1703
      %v2008 = vpop.permute.xlu0 %2007
      %2011 = vset.pattern.permute.xlu0 16
      %2012 = vperm.xlu0 %2011, %v1704
      %v2013 = vpop.permute.xlu0 %2012
      %2016 = vset.pattern.permute.xlu0 16
      %2017 = vperm.xlu0 %2016, %v1705
      %v2018 = vpop.permute.xlu0 %2017
      %2021 = vset.pattern.permute.xlu0 16
      %2022 = vperm.xlu0 %2021, %v1706
      %v2023 = vpop.permute.xlu0 %2022
      %2026 = vset.pattern.permute.xlu0 16
      %2027 = vperm.xlu0 %2026, %v1707
      %v2028 = vpop.permute.xlu0 %2027
      %2031 = vset.pattern.permute.xlu0 16
      %2032 = vperm.xlu0 %2031, %v1708
      %v2033 = vpop.permute.xlu0 %2032
      %2036 = vset.pattern.permute.xlu0 16
      %2037 = vperm.xlu0 %2036, %v1709
      %v2038 = vpop.permute.xlu0 %2037
      %2041 = vset.pattern.permute.xlu0 16
      %2042 = vperm.xlu0 %2041, %v1710
      %v2043 = vpop.permute.xlu0 %2042
      %v2046 = vlaneseq
      %v2047 = vshrl.u32 %v2046, 7
      %v2048 = vsub.s32 0, %v2047
      %v2049 = vrot.slane %v1964, %v2048
      %v2051 = vmul.f32 %v1968, %v2049
      %v2052 = vmul.f32 %v1973, %v2049
      %v2053 = vmul.f32 %v1978, %v2049
      %v2054 = vmul.f32 %v1983, %v2049
      %v2055 = vmul.f32 %v1988, %v2049
      %v2056 = vmul.f32 %v1993, %v2049
      %v2057 = vmul.f32 %v1998, %v2049
      %v2058 = vmul.f32 %v2003, %v2049
      %v2059 = vmul.f32 %v2008, %v2049
      %v2060 = vmul.f32 %v2013, %v2049
      %v2061 = vmul.f32 %v2018, %v2049
      %v2062 = vmul.f32 %v2023, %v2049
      %v2063 = vmul.f32 %v2028, %v2049
      %v2064 = vmul.f32 %v2033, %v2049
      %v2065 = vmul.f32 %v2038, %v2049
      %v2066 = vmul.f32 %v2043, %v2049
      %2067 = vset.pattern.permute.xlu0 17
      %2068 = vperm.xlu0 %2067, %v1695
      %v2069 = vpop.permute.xlu0 %2068
      %2071 = vset.pattern.permute.xlu0 17
      %2072 = vperm.xlu0 %2071, %v1696
      %v2073 = vpop.permute.xlu0 %2072
      %2075 = vset.pattern.permute.xlu0 17
      %2076 = vperm.xlu0 %2075, %v1697
      %v2077 = vpop.permute.xlu0 %2076
      %2079 = vset.pattern.permute.xlu0 17
      %2080 = vperm.xlu0 %2079, %v1698
      %v2081 = vpop.permute.xlu0 %2080
      %2083 = vset.pattern.permute.xlu0 17
      %2084 = vperm.xlu0 %2083, %v1699
      %v2085 = vpop.permute.xlu0 %2084
      %2087 = vset.pattern.permute.xlu0 17
      %2088 = vperm.xlu0 %2087, %v1700
      %v2089 = vpop.permute.xlu0 %2088
      %2091 = vset.pattern.permute.xlu0 17
      %2092 = vperm.xlu0 %2091, %v1701
      %v2093 = vpop.permute.xlu0 %2092
      %2095 = vset.pattern.permute.xlu0 17
      %2096 = vperm.xlu0 %2095, %v1702
      %v2097 = vpop.permute.xlu0 %2096
      %2099 = vset.pattern.permute.xlu0 17
      %2100 = vperm.xlu0 %2099, %v1703
      %v2101 = vpop.permute.xlu0 %2100
      %2103 = vset.pattern.permute.xlu0 17
      %2104 = vperm.xlu0 %2103, %v1704
      %v2105 = vpop.permute.xlu0 %2104
      %2107 = vset.pattern.permute.xlu0 17
      %2108 = vperm.xlu0 %2107, %v1705
      %v2109 = vpop.permute.xlu0 %2108
      %2111 = vset.pattern.permute.xlu0 17
      %2112 = vperm.xlu0 %2111, %v1706
      %v2113 = vpop.permute.xlu0 %2112
      %2115 = vset.pattern.permute.xlu0 17
      %2116 = vperm.xlu0 %2115, %v1707
      %v2117 = vpop.permute.xlu0 %2116
      %2119 = vset.pattern.permute.xlu0 17
      %2120 = vperm.xlu0 %2119, %v1708
      %v2121 = vpop.permute.xlu0 %2120
      %2123 = vset.pattern.permute.xlu0 17
      %2124 = vperm.xlu0 %2123, %v1709
      %v2125 = vpop.permute.xlu0 %2124
      %2127 = vset.pattern.permute.xlu0 17
      %2128 = vperm.xlu0 %2127, %v1710
      %v2129 = vpop.permute.xlu0 %2128
      %v2131 = vmul.f32 %v2069, %v2049
      %v2132 = vmul.f32 %v2073, %v2049
      %v2133 = vmul.f32 %v2077, %v2049
      %v2134 = vmul.f32 %v2081, %v2049
      %v2135 = vmul.f32 %v2085, %v2049
      %v2136 = vmul.f32 %v2089, %v2049
      %v2137 = vmul.f32 %v2093, %v2049
      %v2138 = vmul.f32 %v2097, %v2049
      %v2139 = vmul.f32 %v2101, %v2049
      %v2140 = vmul.f32 %v2105, %v2049
      %v2141 = vmul.f32 %v2109, %v2049
      %v2142 = vmul.f32 %v2113, %v2049
      %v2143 = vmul.f32 %v2117, %v2049
      %v2144 = vmul.f32 %v2121, %v2049
      %v2145 = vmul.f32 %v2125, %v2049
      %v2146 = vmul.f32 %v2129, %v2049
      %2147 = vset.pattern.permute.xlu0 18
      %2148 = vperm.xlu0 %2147, %v1695
      %v2149 = vpop.permute.xlu0 %2148
      %2151 = vset.pattern.permute.xlu0 18
      %2152 = vperm.xlu0 %2151, %v1696
      %v2153 = vpop.permute.xlu0 %2152
      %2155 = vset.pattern.permute.xlu0 18
      %2156 = vperm.xlu0 %2155, %v1697
      %v2157 = vpop.permute.xlu0 %2156
      %2159 = vset.pattern.permute.xlu0 18
      %2160 = vperm.xlu0 %2159, %v1698
      %v2161 = vpop.permute.xlu0 %2160
      %2163 = vset.pattern.permute.xlu0 18
      %2164 = vperm.xlu0 %2163, %v1699
      %v2165 = vpop.permute.xlu0 %2164
      %2167 = vset.pattern.permute.xlu0 18
      %2168 = vperm.xlu0 %2167, %v1700
      %v2169 = vpop.permute.xlu0 %2168
      %2171 = vset.pattern.permute.xlu0 18
      %2172 = vperm.xlu0 %2171, %v1701
      %v2173 = vpop.permute.xlu0 %2172
      %2175 = vset.pattern.permute.xlu0 18
      %2176 = vperm.xlu0 %2175, %v1702
      %v2177 = vpop.permute.xlu0 %2176
      %2179 = vset.pattern.permute.xlu0 18
      %2180 = vperm.xlu0 %2179, %v1703
      %v2181 = vpop.permute.xlu0 %2180
      %2183 = vset.pattern.permute.xlu0 18
      %2184 = vperm.xlu0 %2183, %v1704
      %v2185 = vpop.permute.xlu0 %2184
      %2187 = vset.pattern.permute.xlu0 18
      %2188 = vperm.xlu0 %2187, %v1705
      %v2189 = vpop.permute.xlu0 %2188
      %2191 = vset.pattern.permute.xlu0 18
      %2192 = vperm.xlu0 %2191, %v1706
      %v2193 = vpop.permute.xlu0 %2192
      %2195 = vset.pattern.permute.xlu0 18
      %2196 = vperm.xlu0 %2195, %v1707
      %v2197 = vpop.permute.xlu0 %2196
      %2199 = vset.pattern.permute.xlu0 18
      %2200 = vperm.xlu0 %2199, %v1708
      %v2201 = vpop.permute.xlu0 %2200
      %2203 = vset.pattern.permute.xlu0 18
      %2204 = vperm.xlu0 %2203, %v1709
      %v2205 = vpop.permute.xlu0 %2204
      %2207 = vset.pattern.permute.xlu0 18
      %2208 = vperm.xlu0 %2207, %v1710
      %v2209 = vpop.permute.xlu0 %2208
      %v2211 = vmul.f32 %v2149, %v2049
      %v2212 = vmul.f32 %v2153, %v2049
      %v2213 = vmul.f32 %v2157, %v2049
      %v2214 = vmul.f32 %v2161, %v2049
      %v2215 = vmul.f32 %v2165, %v2049
      %v2216 = vmul.f32 %v2169, %v2049
      %v2217 = vmul.f32 %v2173, %v2049
      %v2218 = vmul.f32 %v2177, %v2049
      %v2219 = vmul.f32 %v2181, %v2049
      %v2220 = vmul.f32 %v2185, %v2049
      %v2221 = vmul.f32 %v2189, %v2049
      %v2222 = vmul.f32 %v2193, %v2049
      %v2223 = vmul.f32 %v2197, %v2049
      %v2224 = vmul.f32 %v2201, %v2049
      %v2225 = vmul.f32 %v2205, %v2049
      %v2226 = vmul.f32 %v2209, %v2049
      %v2227 = vld [vmem:[%s1066] sm:$0xf]
      %v2228 = vld [vmem:[%s1066 + $0x4] sm:$0xf]
      %v2229 = vld [vmem:[%s1071] sm:$0xf]
      %v2230 = vld [vmem:[%s1071 + $0x4] sm:$0xf]
      %v2231 = vld [vmem:[%s1076] sm:$0xf]
      %v2232 = vld [vmem:[%s1076 + $0x4] sm:$0xf]
      %v2233 = vld [vmem:[%s1076 + $0x8] sm:$0xf]
      %v2234 = vld [vmem:[%s1076 + $0xc] sm:$0xf]
      %v2235 = vld [vmem:[%s1081] sm:$0xf]
      %v2236 = vld [vmem:[%s1081 + $0x4] sm:$0xf]
      %v2237 = vld [vmem:[%s1084] sm:$0x1]
      %v2238 = vpack.c.bf16 %v2052, %v2051
      %v2239 = vpack.c.bf16 %v2054, %v2053
      %v2240 = vpack.c.bf16 %v2056, %v2055
      %v2241 = vpack.c.bf16 %v2058, %v2057
      %v2242 = vpack.c.bf16 %v2060, %v2059
      %v2243 = vpack.c.bf16 %v2062, %v2061
      %v2244 = vpack.c.bf16 %v2064, %v2063
      %v2245 = vpack.c.bf16 %v2066, %v2065
      %v2246 = vpack.c.bf16 %v2132, %v2131
      %v2247 = vpack.c.bf16 %v2134, %v2133
      %v2248 = vpack.c.bf16 %v2136, %v2135
      %v2249 = vpack.c.bf16 %v2138, %v2137
      %v2250 = vpack.c.bf16 %v2140, %v2139
      %v2251 = vpack.c.bf16 %v2142, %v2141
      %v2252 = vpack.c.bf16 %v2144, %v2143
      %v2253 = vpack.c.bf16 %v2146, %v2145
      %v2254 = vpack.c.bf16 %v2212, %v2211
      %v2255 = vpack.c.bf16 %v2214, %v2213
      %v2256 = vpack.c.bf16 %v2216, %v2215
      %v2257 = vpack.c.bf16 %v2218, %v2217
      %v2258 = vpack.c.bf16 %v2220, %v2219
      %v2259 = vpack.c.bf16 %v2222, %v2221
      %v2260 = vpack.c.bf16 %v2224, %v2223
      %v2261 = vpack.c.bf16 %v2226, %v2225
      %v2264 = vunpack.c.l.b16 %v2227
      %v2265 = vunpack.c.l.b16 %v2228
      %v2266 = vpack.c.b16 %v2265, %v2264
      %vm2268 = vcmask 130048
      %v2270 = vsel %vm2268, %v2238, 0
      %v2273 = vsel %vm2268, %v2239, 0
      %v2276 = vsel %vm2268, %v2240, 0
      %v2279 = vsel %vm2268, %v2241, 0
      %v2282 = vsel %vm2268, %v2242, 0
      %v2285 = vsel %vm2268, %v2243, 0
      %v2288 = vsel %vm2268, %v2244, 0
      %v2291 = vsel %vm2268, %v2245, 0
      %v2294 = vsel %vm2268, %v2246, 0
      %v2297 = vsel %vm2268, %v2247, 0
      %v2300 = vsel %vm2268, %v2248, 0
      %v2303 = vsel %vm2268, %v2249, 0
      %v2306 = vsel %vm2268, %v2250, 0
      %v2309 = vsel %vm2268, %v2251, 0
      %v2312 = vsel %vm2268, %v2252, 0
      %v2315 = vsel %vm2268, %v2253, 0
      %v2318 = vsel %vm2268, %v2254, 0
      %v2321 = vsel %vm2268, %v2255, 0
      %v2324 = vsel %vm2268, %v2256, 0
      %v2327 = vsel %vm2268, %v2257, 0
      %v2330 = vsel %vm2268, %v2258, 0
      %v2333 = vsel %vm2268, %v2259, 0
      %v2336 = vsel %vm2268, %v2260, 0
      %v2339 = vsel %vm2268, %v2261, 0
      %2341 = vmatprep.subr.bf16.mxu0 0
      %2342 = vmatpush1.bf16.msra.mxu0 %v2266
      %2343 = vmatprep.subr.bf16.mxu0 0
      %2344 = vmatpush1.bf16.msra.mxu0 0
      %2345 = vmatprep.subr.bf16.mxu0 0
      %2346 = vmatpush1.bf16.msra.mxu0 0
      %2347 = vmatprep.subr.bf16.mxu0 0
      %2348 = vmatpush1.bf16.msra.mxu0 0
      %2349 = vmatprep.subr.bf16.mxu0 0
      %2350 = vmatpush1.bf16.msra.mxu0 0
      %2351 = vmatprep.subr.bf16.mxu0 0
      %2352 = vmatpush1.bf16.msra.mxu0 0
      %2353 = vmatprep.subr.bf16.mxu0 0
      %2354 = vmatpush1.bf16.msra.mxu0 0
      %2355 = vmatprep.subr.bf16.mxu0 0
      %2356 = vmatpush1.bf16.msra.mxu0 0
      %2357 = vmatprep.subr.bf16.mxu0 0
      %2358 = vmatpush1.bf16.msra.mxu0 0
      %2359 = vmatprep.subr.bf16.mxu0 0
      %2360 = vmatpush1.bf16.msra.mxu0 0
      %2361 = vmatprep.subr.bf16.mxu0 0
      %2362 = vmatpush1.bf16.msra.mxu0 0
      %2363 = vmatprep.subr.bf16.mxu0 0
      %2364 = vmatpush1.bf16.msra.mxu0 0
      %2365 = vmatprep.subr.bf16.mxu0 0
      %2366 = vmatpush1.bf16.msra.mxu0 0
      %2367 = vmatprep.subr.bf16.mxu0 0
      %2368 = vmatpush1.bf16.msra.mxu0 0
      %2369 = vmatprep.subr.bf16.mxu0 0
      %2370 = vmatpush1.bf16.msra.mxu0 0
      %2371 = vmatprep.subr.bf16.mxu0 0
      %2372 = vmatpush1.bf16.msra.mxu0 0
      %2373 = vmatprep.mubr.bf16.mxu0 0
      %2374 = vmatmul.mubr.bf16.gmra.mrb[0].mxu0 %v2270
      %v2375 = vpop.f32.mrb[0].mxu0
      %v2376 = vadd.f32 0.0, %v2375
      %v2377 = vpop.f32.mrb[0].mxu0
      %v2378 = vpop.f32.mrb[0].mxu0
      %v2379 = vadd.f32 0.0, %v2378
      %v2380 = vpop.f32.mrb[0].mxu0
      %2381 = vmatprep.mubr.bf16.mxu0 0
      %2382 = vmatmul.mubr.bf16.gmra.mrb[0].mxu0 %v2273
      %v2383 = vpop.f32.mrb[0].mxu0
      %v2384 = vadd.f32 0.0, %v2383
      %v2385 = vpop.f32.mrb[0].mxu0
      %v2386 = vpop.f32.mrb[0].mxu0
      %v2387 = vadd.f32 0.0, %v2386
      %v2388 = vpop.f32.mrb[0].mxu0
      %2389 = vmatprep.mubr.bf16.mxu0 0
      %2390 = vmatmul.mubr.bf16.gmra.mrb[0].mxu0 %v2276
      %v2391 = vpop.f32.mrb[0].mxu0
      %v2392 = vadd.f32 0.0, %v2391
      %v2393 = vpop.f32.mrb[0].mxu0
      %v2394 = vpop.f32.mrb[0].mxu0
      %v2395 = vadd.f32 0.0, %v2394
      %v2396 = vpop.f32.mrb[0].mxu0
      %2397 = vmatprep.mubr.bf16.mxu0 0
      %2398 = vmatmul.mubr.bf16.gmra.mrb[0].mxu0 %v2279
      %v2399 = vpop.f32.mrb[0].mxu0
      %v2400 = vadd.f32 0.0, %v2399
      %v2401 = vpop.f32.mrb[0].mxu0
      %v2402 = vpop.f32.mrb[0].mxu0
      %v2403 = vadd.f32 0.0, %v2402
      %v2404 = vpop.f32.mrb[0].mxu0
      %2405 = vmatprep.mubr.bf16.mxu0 0
      %2406 = vmatmul.mubr.bf16.gmra.mrb[0].mxu0 %v2282
      %v2407 = vpop.f32.mrb[0].mxu0
      %v2408 = vadd.f32 0.0, %v2407
      %v2409 = vpop.f32.mrb[0].mxu0
      %v2410 = vpop.f32.mrb[0].mxu0
      %v2411 = vadd.f32 0.0, %v2410
      %v2412 = vpop.f32.mrb[0].mxu0
      %2413 = vmatprep.mubr.bf16.mxu0 0
      %2414 = vmatmul.mubr.bf16.gmra.mrb[0].mxu0 %v2285
      %v2415 = vpop.f32.mrb[0].mxu0
      %v2416 = vadd.f32 0.0, %v2415
      %v2417 = vpop.f32.mrb[0].mxu0
      %v2418 = vpop.f32.mrb[0].mxu0
      %v2419 = vadd.f32 0.0, %v2418
      %v2420 = vpop.f32.mrb[0].mxu0
      %2421 = vmatprep.mubr.bf16.mxu0 0
      %2422 = vmatmul.mubr.bf16.gmra.mrb[0].mxu0 %v2288
      %v2423 = vpop.f32.mrb[0].mxu0
      %v2424 = vadd.f32 0.0, %v2423
      %v2425 = vpop.f32.mrb[0].mxu0
      %v2426 = vpop.f32.mrb[0].mxu0
      %v2427 = vadd.f32 0.0, %v2426
      %v2428 = vpop.f32.mrb[0].mxu0
      %2429 = vmatprep.mubr.bf16.mxu0 0
      %2430 = vmatmul.mubr.bf16.gmra.mrb[0].mxu0 %v2291
      %v2431 = vpop.f32.mrb[0].mxu0
      %v2432 = vadd.f32 0.0, %v2431
      %v2433 = vpop.f32.mrb[0].mxu0
      %v2434 = vpop.f32.mrb[0].mxu0
      %v2435 = vadd.f32 0.0, %v2434
      %v2436 = vpop.f32.mrb[0].mxu0
      %2437 = vmatprep.mubr.bf16.mxu0 0
      %2438 = vmatmul.mubr.bf16.gmra.mrb[0].mxu0 %v2294
      %v2439 = vpop.f32.mrb[0].mxu0
      %v2440 = vadd.f32 0.0, %v2439
      %v2441 = vpop.f32.mrb[0].mxu0
      %v2442 = vpop.f32.mrb[0].mxu0
      %v2443 = vadd.f32 0.0, %v2442
      %v2444 = vpop.f32.mrb[0].mxu0
      %2445 = vmatprep.mubr.bf16.mxu0 0
      %2446 = vmatmul.mubr.bf16.gmra.mrb[0].mxu0 %v2297
      %v2447 = vpop.f32.mrb[0].mxu0
      %v2448 = vadd.f32 0.0, %v2447
      %v2449 = vpop.f32.mrb[0].mxu0
      %v2450 = vpop.f32.mrb[0].mxu0
      %v2451 = vadd.f32 0.0, %v2450
      %v2452 = vpop.f32.mrb[0].mxu0
      %2453 = vmatprep.mubr.bf16.mxu0 0
      %2454 = vmatmul.mubr.bf16.gmra.mrb[0].mxu0 %v2300
      %v2455 = vpop.f32.mrb[0].mxu0
      %v2456 = vadd.f32 0.0, %v2455
      %v2457 = vpop.f32.mrb[0].mxu0
      %v2458 = vpop.f32.mrb[0].mxu0
      %v2459 = vadd.f32 0.0, %v2458
      %v2460 = vpop.f32.mrb[0].mxu0
      %2461 = vmatprep.mubr.bf16.mxu0 0
      %2462 = vmatmul.mubr.bf16.gmra.mrb[0].mxu0 %v2303
      %v2463 = vpop.f32.mrb[0].mxu0
      %v2464 = vadd.f32 0.0, %v2463
      %v2465 = vpop.f32.mrb[0].mxu0
      %v2466 = vpop.f32.mrb[0].mxu0
      %v2467 = vadd.f32 0.0, %v2466
      %v2468 = vpop.f32.mrb[0].mxu0
      %2469 = vmatprep.mubr.bf16.mxu0 0
      %2470 = vmatmul.mubr.bf16.gmra.mrb[0].mxu0 %v2306
      %v2471 = vpop.f32.mrb[0].mxu0
      %v2472 = vadd.f32 0.0, %v2471
      %v2473 = vpop.f32.mrb[0].mxu0
      %v2474 = vpop.f32.mrb[0].mxu0
      %v2475 = vadd.f32 0.0, %v2474
      %v2476 = vpop.f32.mrb[0].mxu0
      %2477 = vmatprep.mubr.bf16.mxu0 0
      %2478 = vmatmul.mubr.bf16.gmra.mrb[0].mxu0 %v2309
      %v2479 = vpop.f32.mrb[0].mxu0
      %v2480 = vadd.f32 0.0, %v2479
      %v2481 = vpop.f32.mrb[0].mxu0
      %v2482 = vpop.f32.mrb[0].mxu0
      %v2483 = vadd.f32 0.0, %v2482
      %v2484 = vpop.f32.mrb[0].mxu0
      %2485 = vmatprep.mubr.bf16.mxu0 0
      %2486 = vmatmul.mubr.bf16.gmra.mrb[0].mxu0 %v2312
      %v2487 = vpop.f32.mrb[0].mxu0
      %v2488 = vadd.f32 0.0, %v2487
      %v2489 = vpop.f32.mrb[0].mxu0
      %v2490 = vpop.f32.mrb[0].mxu0
      %v2491 = vadd.f32 0.0, %v2490
      %v2492 = vpop.f32.mrb[0].mxu0
      %2493 = vmatprep.mubr.bf16.mxu0 0
      %2494 = vmatmul.mubr.bf16.gmra.mrb[0].mxu0 %v2315
      %v2495 = vpop.f32.mrb[0].mxu0
      %v2496 = vadd.f32 0.0, %v2495
      %v2497 = vpop.f32.mrb[0].mxu0
      %v2498 = vpop.f32.mrb[0].mxu0
      %v2499 = vadd.f32 0.0, %v2498
      %v2500 = vpop.f32.mrb[0].mxu0
      %2501 = vmatprep.mubr.bf16.mxu0 0
      %2502 = vmatmul.mubr.bf16.gmra.mrb[0].mxu0 %v2318
      %v2503 = vpop.f32.mrb[0].mxu0
      %v2504 = vadd.f32 0.0, %v2503
      %v2505 = vpop.f32.mrb[0].mxu0
      %v2506 = vpop.f32.mrb[0].mxu0
      %v2507 = vadd.f32 0.0, %v2506
      %v2508 = vpop.f32.mrb[0].mxu0
      %2509 = vmatprep.mubr.bf16.mxu0 0
      %2510 = vmatmul.mubr.bf16.gmra.mrb[0].mxu0 %v2321
      %v2511 = vpop.f32.mrb[0].mxu0
      %v2512 = vadd.f32 0.0, %v2511
      %v2513 = vpop.f32.mrb[0].mxu0
      %v2514 = vpop.f32.mrb[0].mxu0
      %v2515 = vadd.f32 0.0, %v2514
      %v2516 = vpop.f32.mrb[0].mxu0
      %2517 = vmatprep.mubr.bf16.mxu0 0
      %2518 = vmatmul.mubr.bf16.gmra.mrb[0].mxu0 %v2324
      %v2519 = vpop.f32.mrb[0].mxu0
      %v2520 = vadd.f32 0.0, %v2519
      %v2521 = vpop.f32.mrb[0].mxu0
      %v2522 = vpop.f32.mrb[0].mxu0
      %v2523 = vadd.f32 0.0, %v2522
      %v2524 = vpop.f32.mrb[0].mxu0
      %2525 = vmatprep.mubr.bf16.mxu0 0
      %2526 = vmatmul.mubr.bf16.gmra.mrb[0].mxu0 %v2327
      %v2527 = vpop.f32.mrb[0].mxu0
      %v2528 = vadd.f32 0.0, %v2527
      %v2529 = vpop.f32.mrb[0].mxu0
      %v2530 = vpop.f32.mrb[0].mxu0
      %v2531 = vadd.f32 0.0, %v2530
      %v2532 = vpop.f32.mrb[0].mxu0
      %2533 = vmatprep.mubr.bf16.mxu0 0
      %2534 = vmatmul.mubr.bf16.gmra.mrb[0].mxu0 %v2330
      %v2535 = vpop.f32.mrb[0].mxu0
      %v2536 = vadd.f32 0.0, %v2535
      %v2537 = vpop.f32.mrb[0].mxu0
      %v2538 = vpop.f32.mrb[0].mxu0
      %v2539 = vadd.f32 0.0, %v2538
      %v2540 = vpop.f32.mrb[0].mxu0
      %2541 = vmatprep.mubr.bf16.mxu0 0
      %2542 = vmatmul.mubr.bf16.gmra.mrb[0].mxu0 %v2333
      %v2543 = vpop.f32.mrb[0].mxu0
      %v2544 = vadd.f32 0.0, %v2543
      %v2545 = vpop.f32.mrb[0].mxu0
      %v2546 = vpop.f32.mrb[0].mxu0
      %v2547 = vadd.f32 0.0, %v2546
      %v2548 = vpop.f32.mrb[0].mxu0
      %2549 = vmatprep.mubr.bf16.mxu0 0
      %2550 = vmatmul.mubr.bf16.gmra.mrb[0].mxu0 %v2336
      %v2551 = vpop.f32.mrb[0].mxu0
      %v2552 = vadd.f32 0.0, %v2551
      %v2553 = vpop.f32.mrb[0].mxu0
      %v2554 = vpop.f32.mrb[0].mxu0
      %v2555 = vadd.f32 0.0, %v2554
      %v2556 = vpop.f32.mrb[0].mxu0
      %2557 = vmatprep.mubr.bf16.mxu0 0
      %2558 = vmatmul.mubr.bf16.gmra.mrb[0].mxu0 %v2339
      %v2559 = vpop.f32.mrb[0].mxu0
      %v2560 = vadd.f32 0.0, %v2559
      %v2561 = vpop.f32.mrb[0].mxu0
      %v2562 = vpop.f32.mrb[0].mxu0
      %v2563 = vadd.f32 0.0, %v2562
      %v2564 = vpop.f32.mrb[0].mxu0
      %2565 = vdwg.mxu0
      %v2566 = vmul.f32 %v2376, %v2376
      %v2567 = vmul.f32 %v2379, %v2379
      %v2568 = vmul.f32 %v2384, %v2384
      %v2569 = vmul.f32 %v2387, %v2387
      %v2570 = vmul.f32 %v2392, %v2392
      %v2571 = vmul.f32 %v2395, %v2395
      %v2572 = vmul.f32 %v2400, %v2400
      %v2573 = vmul.f32 %v2403, %v2403
      %v2574 = vmul.f32 %v2408, %v2408
      %v2575 = vmul.f32 %v2411, %v2411
      %v2576 = vmul.f32 %v2416, %v2416
      %v2577 = vmul.f32 %v2419, %v2419
      %v2578 = vmul.f32 %v2424, %v2424
      %v2579 = vmul.f32 %v2427, %v2427
      %v2580 = vmul.f32 %v2432, %v2432
      %v2581 = vmul.f32 %v2435, %v2435
      %v2582 = vmul.f32 %v2440, %v2440
      %v2583 = vmul.f32 %v2443, %v2443
      %v2584 = vmul.f32 %v2448, %v2448
      %v2585 = vmul.f32 %v2451, %v2451
      %v2586 = vmul.f32 %v2456, %v2456
      %v2587 = vmul.f32 %v2459, %v2459
      %v2588 = vmul.f32 %v2464, %v2464
      %v2589 = vmul.f32 %v2467, %v2467
      %v2590 = vmul.f32 %v2472, %v2472
      %v2591 = vmul.f32 %v2475, %v2475
      %v2592 = vmul.f32 %v2480, %v2480
      %v2593 = vmul.f32 %v2483, %v2483
      %v2594 = vmul.f32 %v2488, %v2488
      %v2595 = vmul.f32 %v2491, %v2491
      %v2596 = vmul.f32 %v2496, %v2496
      %v2597 = vmul.f32 %v2499, %v2499
      %v2598 = vadd.f32 %v2566, %v2582
      %v2599 = vadd.f32 %v2567, %v2583
      %v2600 = vadd.f32 %v2568, %v2584
      %v2601 = vadd.f32 %v2569, %v2585
      %v2602 = vadd.f32 %v2570, %v2586
      %v2603 = vadd.f32 %v2571, %v2587
      %v2604 = vadd.f32 %v2572, %v2588
      %v2605 = vadd.f32 %v2573, %v2589
      %v2606 = vadd.f32 %v2574, %v2590
      %v2607 = vadd.f32 %v2575, %v2591
      %v2608 = vadd.f32 %v2576, %v2592
      %v2609 = vadd.f32 %v2577, %v2593
      %v2610 = vadd.f32 %v2578, %v2594
      %v2611 = vadd.f32 %v2579, %v2595
      %v2612 = vadd.f32 %v2580, %v2596
      %v2613 = vadd.f32 %v2581, %v2597
      %v2614 = vmul.f32 %v2504, %v2504
      %v2615 = vmul.f32 %v2507, %v2507
      %v2616 = vmul.f32 %v2512, %v2512
      %v2617 = vmul.f32 %v2515, %v2515
      %v2618 = vmul.f32 %v2520, %v2520
      %v2619 = vmul.f32 %v2523, %v2523
      %v2620 = vmul.f32 %v2528, %v2528
      %v2621 = vmul.f32 %v2531, %v2531
      %v2622 = vmul.f32 %v2536, %v2536
      %v2623 = vmul.f32 %v2539, %v2539
      %v2624 = vmul.f32 %v2544, %v2544
      %v2625 = vmul.f32 %v2547, %v2547
      %v2626 = vmul.f32 %v2552, %v2552
      %v2627 = vmul.f32 %v2555, %v2555
      %v2628 = vmul.f32 %v2560, %v2560
      %v2629 = vmul.f32 %v2563, %v2563
      %v2630 = vadd.f32 %v2598, %v2614
      %v2631 = vadd.f32 %v2599, %v2615
      %v2632 = vadd.f32 %v2600, %v2616
      %v2633 = vadd.f32 %v2601, %v2617
      %v2634 = vadd.f32 %v2602, %v2618
      %v2635 = vadd.f32 %v2603, %v2619
      %v2636 = vadd.f32 %v2604, %v2620
      %v2637 = vadd.f32 %v2605, %v2621
      %v2638 = vadd.f32 %v2606, %v2622
      %v2639 = vadd.f32 %v2607, %v2623
      %v2640 = vadd.f32 %v2608, %v2624
      %v2641 = vadd.f32 %v2609, %v2625
      %v2642 = vadd.f32 %v2610, %v2626
      %v2643 = vadd.f32 %v2611, %v2627
      %v2644 = vadd.f32 %v2612, %v2628
      %v2645 = vadd.f32 %v2613, %v2629
      %v2646 = vrsqrt.pop %v2630
      %v2647 = vmul.f32 %v2630, %v2646
      %vm2648 = vcmp.eq.f32.partialorder %v2630, inf
      %v2649 = vsel %vm2648, %v2630, %v2647
      %vm2650 = vcmp.eq.f32.partialorder %v2630, 0.0
      %v2651 = vand.u32 %v2630, 2147483648
      %v2652 = vsel %vm2650, %v2651, %v2649
      %v2653 = vrsqrt.pop %v2631
      %v2654 = vmul.f32 %v2631, %v2653
      %vm2655 = vcmp.eq.f32.partialorder %v2631, inf
      %v2656 = vsel %vm2655, %v2631, %v2654
      %vm2657 = vcmp.eq.f32.partialorder %v2631, 0.0
      %v2658 = vand.u32 %v2631, 2147483648
      %v2659 = vsel %vm2657, %v2658, %v2656
      %v2660 = vrsqrt.pop %v2632
      %v2661 = vmul.f32 %v2632, %v2660
      %vm2662 = vcmp.eq.f32.partialorder %v2632, inf
      %v2663 = vsel %vm2662, %v2632, %v2661
      %vm2664 = vcmp.eq.f32.partialorder %v2632, 0.0
      %v2665 = vand.u32 %v2632, 2147483648
      %v2666 = vsel %vm2664, %v2665, %v2663
      %v2667 = vrsqrt.pop %v2633
      %v2668 = vmul.f32 %v2633, %v2667
      %vm2669 = vcmp.eq.f32.partialorder %v2633, inf
      %v2670 = vsel %vm2669, %v2633, %v2668
      %vm2671 = vcmp.eq.f32.partialorder %v2633, 0.0
      %v2672 = vand.u32 %v2633, 2147483648
      %v2673 = vsel %vm2671, %v2672, %v2670
      %v2674 = vrsqrt.pop %v2634
      %v2675 = vmul.f32 %v2634, %v2674
      %vm2676 = vcmp.eq.f32.partialorder %v2634, inf
      %v2677 = vsel %vm2676, %v2634, %v2675
      %vm2678 = vcmp.eq.f32.partialorder %v2634, 0.0
      %v2679 = vand.u32 %v2634, 2147483648
      %v2680 = vsel %vm2678, %v2679, %v2677
      %v2681 = vrsqrt.pop %v2635
      %v2682 = vmul.f32 %v2635, %v2681
      %vm2683 = vcmp.eq.f32.partialorder %v2635, inf
      %v2684 = vsel %vm2683, %v2635, %v2682
      %vm2685 = vcmp.eq.f32.partialorder %v2635, 0.0
      %v2686 = vand.u32 %v2635, 2147483648
      %v2687 = vsel %vm2685, %v2686, %v2684
      %v2688 = vrsqrt.pop %v2636
      %v2689 = vmul.f32 %v2636, %v2688
      %vm2690 = vcmp.eq.f32.partialorder %v2636, inf
      %v2691 = vsel %vm2690, %v2636, %v2689
      %vm2692 = vcmp.eq.f32.partialorder %v2636, 0.0
      %v2693 = vand.u32 %v2636, 2147483648
      %v2694 = vsel %vm2692, %v2693, %v2691
      %v2695 = vrsqrt.pop %v2637
      %v2696 = vmul.f32 %v2637, %v2695
      %vm2697 = vcmp.eq.f32.partialorder %v2637, inf
      %v2698 = vsel %vm2697, %v2637, %v2696
      %vm2699 = vcmp.eq.f32.partialorder %v2637, 0.0
      %v2700 = vand.u32 %v2637, 2147483648
      %v2701 = vsel %vm2699, %v2700, %v2698
      %v2702 = vrsqrt.pop %v2638
      %v2703 = vmul.f32 %v2638, %v2702
      %vm2704 = vcmp.eq.f32.partialorder %v2638, inf
      %v2705 = vsel %vm2704, %v2638, %v2703
      %vm2706 = vcmp.eq.f32.partialorder %v2638, 0.0
      %v2707 = vand.u32 %v2638, 2147483648
      %v2708 = vsel %vm2706, %v2707, %v2705
      %v2709 = vrsqrt.pop %v2639
      %v2710 = vmul.f32 %v2639, %v2709
      %vm2711 = vcmp.eq.f32.partialorder %v2639, inf
      %v2712 = vsel %vm2711, %v2639, %v2710
      %vm2713 = vcmp.eq.f32.partialorder %v2639, 0.0
      %v2714 = vand.u32 %v2639, 2147483648
      %v2715 = vsel %vm2713, %v2714, %v2712
      %v2716 = vrsqrt.pop %v2640
      %v2717 = vmul.f32 %v2640, %v2716
      %vm2718 = vcmp.eq.f32.partialorder %v2640, inf
      %v2719 = vsel %vm2718, %v2640, %v2717
      %vm2720 = vcmp.eq.f32.partialorder %v2640, 0.0
      %v2721 = vand.u32 %v2640, 2147483648
      %v2722 = vsel %vm2720, %v2721, %v2719
      %v2723 = vrsqrt.pop %v2641
      %v2724 = vmul.f32 %v2641, %v2723
      %vm2725 = vcmp.eq.f32.partialorder %v2641, inf
      %v2726 = vsel %vm2725, %v2641, %v2724
      %vm2727 = vcmp.eq.f32.partialorder %v2641, 0.0
      %v2728 = vand.u32 %v2641, 2147483648
      %v2729 = vsel %vm2727, %v2728, %v2726
      %v2730 = vrsqrt.pop %v2642
      %v2731 = vmul.f32 %v2642, %v2730
      %vm2732 = vcmp.eq.f32.partialorder %v2642, inf
      %v2733 = vsel %vm2732, %v2642, %v2731
      %vm2734 = vcmp.eq.f32.partialorder %v2642, 0.0
      %v2735 = vand.u32 %v2642, 2147483648
      %v2736 = vsel %vm2734, %v2735, %v2733
      %v2737 = vrsqrt.pop %v2643
      %v2738 = vmul.f32 %v2643, %v2737
      %vm2739 = vcmp.eq.f32.partialorder %v2643, inf
      %v2740 = vsel %vm2739, %v2643, %v2738
      %vm2741 = vcmp.eq.f32.partialorder %v2643, 0.0
      %v2742 = vand.u32 %v2643, 2147483648
      %v2743 = vsel %vm2741, %v2742, %v2740
      %v2744 = vrsqrt.pop %v2644
      %v2745 = vmul.f32 %v2644, %v2744
      %vm2746 = vcmp.eq.f32.partialorder %v2644, inf
      %v2747 = vsel %vm2746, %v2644, %v2745
      %vm2748 = vcmp.eq.f32.partialorder %v2644, 0.0
      %v2749 = vand.u32 %v2644, 2147483648
      %v2750 = vsel %vm2748, %v2749, %v2747
      %v2751 = vrsqrt.pop %v2645
      %v2752 = vmul.f32 %v2645, %v2751
      %vm2753 = vcmp.eq.f32.partialorder %v2645, inf
      %v2754 = vsel %vm2753, %v2645, %v2752
      %vm2755 = vcmp.eq.f32.partialorder %v2645, 0.0
      %v2756 = vand.u32 %v2645, 2147483648
      %v2757 = vsel %vm2755, %v2756, %v2754
      %2758 = vrot.lane.b32.xlu0 %v1695, 16
      %v2759 = vpop.permute.xlu0 %2758
      %2760 = vrot.lane.b32.xlu0 %v1696, 16
      %v2761 = vpop.permute.xlu0 %2760
      %2762 = vrot.lane.b32.xlu0 %v1697, 16
      %v2763 = vpop.permute.xlu0 %2762
      %2764 = vrot.lane.b32.xlu0 %v1698, 16
      %v2765 = vpop.permute.xlu0 %2764
      %2766 = vrot.lane.b32.xlu0 %v1699, 16
      %v2767 = vpop.permute.xlu0 %2766
      %2768 = vrot.lane.b32.xlu0 %v1700, 16
      %v2769 = vpop.permute.xlu0 %2768
      %2770 = vrot.lane.b32.xlu0 %v1701, 16
      %v2771 = vpop.permute.xlu0 %2770
      %2772 = vrot.lane.b32.xlu0 %v1702, 16
      %v2773 = vpop.permute.xlu0 %2772
      %2774 = vrot.lane.b32.xlu0 %v1703, 16
      %v2775 = vpop.permute.xlu0 %2774
      %2776 = vrot.lane.b32.xlu0 %v1704, 16
      %v2777 = vpop.permute.xlu0 %2776
      %2778 = vrot.lane.b32.xlu0 %v1705, 16
      %v2779 = vpop.permute.xlu0 %2778
      %2780 = vrot.lane.b32.xlu0 %v1706, 16
      %v2781 = vpop.permute.xlu0 %2780
      %2782 = vrot.lane.b32.xlu0 %v1707, 16
      %v2783 = vpop.permute.xlu0 %2782
      %2784 = vrot.lane.b32.xlu0 %v1708, 16
      %v2785 = vpop.permute.xlu0 %2784
      %2786 = vrot.lane.b32.xlu0 %v1709, 16
      %v2787 = vpop.permute.xlu0 %2786
      %2788 = vrot.lane.b32.xlu0 %v1710, 16
      %v2789 = vpop.permute.xlu0 %2788
      %v2806 = vsel %vm2268, %v2652, %v2759
      %v2807 = vsel %vm2268, %v2659, %v2761
      %v2808 = vsel %vm2268, %v2666, %v2763
      %v2809 = vsel %vm2268, %v2673, %v2765
      %v2810 = vsel %vm2268, %v2680, %v2767
      %v2811 = vsel %vm2268, %v2687, %v2769
      %v2812 = vsel %vm2268, %v2694, %v2771
      %v2813 = vsel %vm2268, %v2701, %v2773
      %v2814 = vsel %vm2268, %v2708, %v2775
      %v2815 = vsel %vm2268, %v2715, %v2777
      %v2816 = vsel %vm2268, %v2722, %v2779
      %v2817 = vsel %vm2268, %v2729, %v2781
      %v2818 = vsel %vm2268, %v2736, %v2783
      %v2819 = vsel %vm2268, %v2743, %v2785
      %v2820 = vsel %vm2268, %v2750, %v2787
      %v2821 = vsel %vm2268, %v2757, %v2789
      %v2822 = vpack.c.bf16 %v2807, %v2806
      %v2823 = vpack.c.bf16 %v2809, %v2808
      %v2824 = vpack.c.bf16 %v2811, %v2810
      %v2825 = vpack.c.bf16 %v2813, %v2812
      %v2826 = vpack.c.bf16 %v2815, %v2814
      %v2827 = vpack.c.bf16 %v2817, %v2816
      %v2828 = vpack.c.bf16 %v2819, %v2818
      %v2829 = vpack.c.bf16 %v2821, %v2820
      %v2834 = vunpack.c.l.b16 %v2231
      %v2835 = vunpack.c.l.b16 %v2232
      %v2836 = vunpack.c.l.b16 %v2233
      %v2837 = vunpack.c.l.b16 %v2234
      %v2838 = vpack.c.b16 %v2835, %v2834
      %v2839 = vpack.c.b16 %v2837, %v2836
      %vm2842 = vcmask 261120
      %v2844 = vsel %vm2842, %v2822, 0
      %v2847 = vsel %vm2842, %v2823, 0
      %v2850 = vsel %vm2842, %v2824, 0
      %v2853 = vsel %vm2842, %v2825, 0
      %v2856 = vsel %vm2842, %v2826, 0
      %v2859 = vsel %vm2842, %v2827, 0
      %v2862 = vsel %vm2842, %v2828, 0
      %v2865 = vsel %vm2842, %v2829, 0
      %2867 = vmatprep.subr.bf16.mxu0 0
      %2868 = vmatpush1.bf16.msra.mxu0 %v2838
      %2869 = vmatprep.subr.bf16.mxu0 0
      %2870 = vmatpush1.bf16.msra.mxu0 %v2839
      %2871 = vmatprep.subr.bf16.mxu0 0
      %2872 = vmatpush1.bf16.msra.mxu0 0
      %2873 = vmatprep.subr.bf16.mxu0 0
      %2874 = vmatpush1.bf16.msra.mxu0 0
      %2875 = vmatprep.subr.bf16.mxu0 0
      %2876 = vmatpush1.bf16.msra.mxu0 0
      %2877 = vmatprep.subr.bf16.mxu0 0
      %2878 = vmatpush1.bf16.msra.mxu0 0
      %2879 = vmatprep.subr.bf16.mxu0 0
      %2880 = vmatpush1.bf16.msra.mxu0 0
      %2881 = vmatprep.subr.bf16.mxu0 0
      %2882 = vmatpush1.bf16.msra.mxu0 0
      %2883 = vmatprep.subr.bf16.mxu0 0
      %2884 = vmatpush1.bf16.msra.mxu0 0
      %2885 = vmatprep.subr.bf16.mxu0 0
      %2886 = vmatpush1.bf16.msra.mxu0 0
      %2887 = vmatprep.subr.bf16.mxu0 0
      %2888 = vmatpush1.bf16.msra.mxu0 0
      %2889 = vmatprep.subr.bf16.mxu0 0
      %2890 = vmatpush1.bf16.msra.mxu0 0
      %2891 = vmatprep.subr.bf16.mxu0 0
      %2892 = vmatpush1.bf16.msra.mxu0 0
      %2893 = vmatprep.subr.bf16.mxu0 0
      %2894 = vmatpush1.bf16.msra.mxu0 0
      %2895 = vmatprep.subr.bf16.mxu0 0
      %2896 = vmatpush1.bf16.msra.mxu0 0
      %2897 = vmatprep.subr.bf16.mxu0 0
      %2898 = vmatpush1.bf16.msra.mxu0 0
      %2899 = vmatprep.mubr.bf16.mxu0 0
      %2900 = vmatmul.mubr.bf16.gmra.mrb[0].mxu0 %v2844
      %v2901 = vpop.f32.mrb[0].mxu0
      %v2902 = vadd.f32 0.0, %v2901
      %v2903 = vpop.f32.mrb[0].mxu0
      %v2904 = vpop.f32.mrb[0].mxu0
      %v2905 = vadd.f32 0.0, %v2904
      %v2906 = vpop.f32.mrb[0].mxu0
      %2907 = vmatprep.mubr.bf16.mxu0 0
      %2908 = vmatmul.mubr.bf16.gmra.mrb[0].mxu0 %v2847
      %v2909 = vpop.f32.mrb[0].mxu0
      %v2910 = vadd.f32 0.0, %v2909
      %v2911 = vpop.f32.mrb[0].mxu0
      %v2912 = vpop.f32.mrb[0].mxu0
      %v2913 = vadd.f32 0.0, %v2912
      %v2914 = vpop.f32.mrb[0].mxu0
      %2915 = vmatprep.mubr.bf16.mxu0 0
      %2916 = vmatmul.mubr.bf16.gmra.mrb[0].mxu0 %v2850
      %v2917 = vpop.f32.mrb[0].mxu0
      %v2918 = vadd.f32 0.0, %v2917
      %v2919 = vpop.f32.mrb[0].mxu0
      %v2920 = vpop.f32.mrb[0].mxu0
      %v2921 = vadd.f32 0.0, %v2920
      %v2922 = vpop.f32.mrb[0].mxu0
      %2923 = vmatprep.mubr.bf16.mxu0 0
      %2924 = vmatmul.mubr.bf16.gmra.mrb[0].mxu0 %v2853
      %v2925 = vpop.f32.mrb[0].mxu0
      %v2926 = vadd.f32 0.0, %v2925
      %v2927 = vpop.f32.mrb[0].mxu0
      %v2928 = vpop.f32.mrb[0].mxu0
      %v2929 = vadd.f32 0.0, %v2928
      %v2930 = vpop.f32.mrb[0].mxu0
      %2931 = vmatprep.mubr.bf16.mxu0 0
      %2932 = vmatmul.mubr.bf16.gmra.mrb[0].mxu0 %v2856
      %v2933 = vpop.f32.mrb[0].mxu0
      %v2934 = vadd.f32 0.0, %v2933
      %v2935 = vpop.f32.mrb[0].mxu0
      %v2936 = vpop.f32.mrb[0].mxu0
      %v2937 = vadd.f32 0.0, %v2936
      %v2938 = vpop.f32.mrb[0].mxu0
      %2939 = vmatprep.mubr.bf16.mxu0 0
      %2940 = vmatmul.mubr.bf16.gmra.mrb[0].mxu0 %v2859
      %v2941 = vpop.f32.mrb[0].mxu0
      %v2942 = vadd.f32 0.0, %v2941
      %v2943 = vpop.f32.mrb[0].mxu0
      %v2944 = vpop.f32.mrb[0].mxu0
      %v2945 = vadd.f32 0.0, %v2944
      %v2946 = vpop.f32.mrb[0].mxu0
      %2947 = vmatprep.mubr.bf16.mxu0 0
      %2948 = vmatmul.mubr.bf16.gmra.mrb[0].mxu0 %v2862
      %v2949 = vpop.f32.mrb[0].mxu0
      %v2950 = vadd.f32 0.0, %v2949
      %v2951 = vpop.f32.mrb[0].mxu0
      %v2952 = vpop.f32.mrb[0].mxu0
      %v2953 = vadd.f32 0.0, %v2952
      %v2954 = vpop.f32.mrb[0].mxu0
      %2955 = vmatprep.mubr.bf16.mxu0 0
      %2956 = vmatmul.mubr.bf16.gmra.mrb[0].mxu0 %v2865
      %v2957 = vpop.f32.mrb[0].mxu0
      %v2958 = vadd.f32 0.0, %v2957
      %v2959 = vpop.f32.mrb[0].mxu0
      %v2960 = vpop.f32.mrb[0].mxu0
      %v2961 = vadd.f32 0.0, %v2960
      %v2962 = vpop.f32.mrb[0].mxu0
      %2963 = vdwg.mxu0
      %v2964 = vpack.c.bf16 %v2905, %v2902
      %v2965 = vpack.c.bf16 %v2913, %v2910
      %v2966 = vpack.c.bf16 %v2921, %v2918
      %v2967 = vpack.c.bf16 %v2929, %v2926
      %v2968 = vpack.c.bf16 %v2937, %v2934
      %v2969 = vpack.c.bf16 %v2945, %v2942
      %v2970 = vpack.c.bf16 %v2953, %v2950
      %v2971 = vpack.c.bf16 %v2961, %v2958
      %v2973 = vlaneseq
      %v2974 = vshrl.u32 %v2973, 7
      %v2975 = vsub.s32 0, %v2974
      %v2976 = vrot.slane %v2237, %v2975
      %v2980 = vunpack.c.l.b16 %v2235
      %v2981 = vunpack.c.l.b16 %v2236
      %v2982 = vpack.c.b16 %v2981, %v2980
      %v2985 = vsel %vm2268, %v2964, 0
      %v2988 = vsel %vm2268, %v2965, 0
      %v2991 = vsel %vm2268, %v2966, 0
      %v2994 = vsel %vm2268, %v2967, 0
      %v2997 = vsel %vm2268, %v2968, 0
      %v3000 = vsel %vm2268, %v2969, 0
      %v3003 = vsel %vm2268, %v2970, 0
      %v3006 = vsel %vm2268, %v2971, 0
      %3008 = vmatprep.subr.bf16.mxu0 0
      %3009 = vmatpush1.bf16.msra.mxu0 %v2982
      %3010 = vmatprep.subr.bf16.mxu0 0
      %3011 = vmatpush1.bf16.msra.mxu0 0
      %3012 = vmatprep.subr.bf16.mxu0 0
      %3013 = vmatpush1.bf16.msra.mxu0 0
      %3014 = vmatprep.subr.bf16.mxu0 0
      %3015 = vmatpush1.bf16.msra.mxu0 0
      %3016 = vmatprep.subr.bf16.mxu0 0
      %3017 = vmatpush1.bf16.msra.mxu0 0
      %3018 = vmatprep.subr.bf16.mxu0 0
      %3019 = vmatpush1.bf16.msra.mxu0 0
      %3020 = vmatprep.subr.bf16.mxu0 0
      %3021 = vmatpush1.bf16.msra.mxu0 0
      %3022 = vmatprep.subr.bf16.mxu0 0
      %3023 = vmatpush1.bf16.msra.mxu0 0
      %3024 = vmatprep.subr.bf16.mxu0 0
      %3025 = vmatpush1.bf16.msra.mxu0 0
      %3026 = vmatprep.subr.bf16.mxu0 0
      %3027 = vmatpush1.bf16.msra.mxu0 0
      %3028 = vmatprep.subr.bf16.mxu0 0
      %3029 = vmatpush1.bf16.msra.mxu0 0
      %3030 = vmatprep.subr.bf16.mxu0 0
      %3031 = vmatpush1.bf16.msra.mxu0 0
      %3032 = vmatprep.subr.bf16.mxu0 0
      %3033 = vmatpush1.bf16.msra.mxu0 0
      %3034 = vmatprep.subr.bf16.mxu0 0
      %3035 = vmatpush1.bf16.msra.mxu0 0
      %3036 = vmatprep.subr.bf16.mxu0 0
      %3037 = vmatpush1.bf16.msra.mxu0 0
      %3038 = vmatprep.subr.bf16.mxu0 0
      %3039 = vmatpush1.bf16.msra.mxu0 0
      %3040 = vmatprep.mubr.bf16.mxu0 0
      %3041 = vmatmul.mubr.bf16.gmra.mrb[0].mxu0 %v2985
      %v3042 = vpop.f32.mrb[0].mxu0
      %v3043 = vadd.f32 %v2976, %v3042
      %v3044 = vpop.f32.mrb[0].mxu0
      %v3045 = vpop.f32.mrb[0].mxu0
      %v3046 = vadd.f32 %v2976, %v3045
      %v3047 = vpop.f32.mrb[0].mxu0
      %3048 = vmatprep.mubr.bf16.mxu0 0
      %3049 = vmatmul.mubr.bf16.gmra.mrb[0].mxu0 %v2988
      %v3050 = vpop.f32.mrb[0].mxu0
      %v3051 = vadd.f32 %v2976, %v3050
      %v3052 = vpop.f32.mrb[0].mxu0
      %v3053 = vpop.f32.mrb[0].mxu0
      %v3054 = vadd.f32 %v2976, %v3053
      %v3055 = vpop.f32.mrb[0].mxu0
      %3056 = vmatprep.mubr.bf16.mxu0 0
      %3057 = vmatmul.mubr.bf16.gmra.mrb[0].mxu0 %v2991
      %v3058 = vpop.f32.mrb[0].mxu0
      %v3059 = vadd.f32 %v2976, %v3058
      %v3060 = vpop.f32.mrb[0].mxu0
      %v3061 = vpop.f32.mrb[0].mxu0
      %v3062 = vadd.f32 %v2976, %v3061
      %v3063 = vpop.f32.mrb[0].mxu0
      %3064 = vmatprep.mubr.bf16.mxu0 0
      %3065 = vmatmul.mubr.bf16.gmra.mrb[0].mxu0 %v2994
      %v3066 = vpop.f32.mrb[0].mxu0
      %v3067 = vadd.f32 %v2976, %v3066
      %v3068 = vpop.f32.mrb[0].mxu0
      %v3069 = vpop.f32.mrb[0].mxu0
      %v3070 = vadd.f32 %v2976, %v3069
      %v3071 = vpop.f32.mrb[0].mxu0
      %3072 = vmatprep.mubr.bf16.mxu0 0
      %3073 = vmatmul.mubr.bf16.gmra.mrb[0].mxu0 %v2997
      %v3074 = vpop.f32.mrb[0].mxu0
      %v3075 = vadd.f32 %v2976, %v3074
      %v3076 = vpop.f32.mrb[0].mxu0
      %v3077 = vpop.f32.mrb[0].mxu0
      %v3078 = vadd.f32 %v2976, %v3077
      %v3079 = vpop.f32.mrb[0].mxu0
      %3080 = vmatprep.mubr.bf16.mxu0 0
      %3081 = vmatmul.mubr.bf16.gmra.mrb[0].mxu0 %v3000
      %v3082 = vpop.f32.mrb[0].mxu0
      %v3083 = vadd.f32 %v2976, %v3082
      %v3084 = vpop.f32.mrb[0].mxu0
      %v3085 = vpop.f32.mrb[0].mxu0
      %v3086 = vadd.f32 %v2976, %v3085
      %v3087 = vpop.f32.mrb[0].mxu0
      %3088 = vmatprep.mubr.bf16.mxu0 0
      %3089 = vmatmul.mubr.bf16.gmra.mrb[0].mxu0 %v3003
      %v3090 = vpop.f32.mrb[0].mxu0
      %v3091 = vadd.f32 %v2976, %v3090
      %v3092 = vpop.f32.mrb[0].mxu0
      %v3093 = vpop.f32.mrb[0].mxu0
      %v3094 = vadd.f32 %v2976, %v3093
      %v3095 = vpop.f32.mrb[0].mxu0
      %3096 = vmatprep.mubr.bf16.mxu0 0
      %3097 = vmatmul.mubr.bf16.gmra.mrb[0].mxu0 %v3006
      %v3098 = vpop.f32.mrb[0].mxu0
      %v3099 = vadd.f32 %v2976, %v3098
      %v3100 = vpop.f32.mrb[0].mxu0
      %v3101 = vpop.f32.mrb[0].mxu0
      %v3102 = vadd.f32 %v2976, %v3101
      %v3103 = vpop.f32.mrb[0].mxu0
      %3104 = vdwg.mxu0
      %v3105 = vxor.u32 %v3043, 2147483648
      %v3106 = vxor.u32 %v3046, 2147483648
      %v3107 = vxor.u32 %v3051, 2147483648
      %v3108 = vxor.u32 %v3054, 2147483648
      %v3109 = vxor.u32 %v3059, 2147483648
      %v3110 = vxor.u32 %v3062, 2147483648
      %v3111 = vxor.u32 %v3067, 2147483648
      %v3112 = vxor.u32 %v3070, 2147483648
      %v3113 = vxor.u32 %v3075, 2147483648
      %v3114 = vxor.u32 %v3078, 2147483648
      %v3115 = vxor.u32 %v3083, 2147483648
      %v3116 = vxor.u32 %v3086, 2147483648
      %v3117 = vxor.u32 %v3091, 2147483648
      %v3118 = vxor.u32 %v3094, 2147483648
      %v3119 = vxor.u32 %v3099, 2147483648
      %v3120 = vxor.u32 %v3102, 2147483648
      %v3121 = vmul.f32 %v3105, 1.442695
      %v3122 = vpow.pop %v3121
      %v3123 = vmul.f32 %v3106, 1.442695
      %v3124 = vpow.pop %v3123
      %v3125 = vmul.f32 %v3107, 1.442695
      %v3126 = vpow.pop %v3125
      %v3127 = vmul.f32 %v3108, 1.442695
      %v3128 = vpow.pop %v3127
      %v3129 = vmul.f32 %v3109, 1.442695
      %v3130 = vpow.pop %v3129
      %v3131 = vmul.f32 %v3110, 1.442695
      %v3132 = vpow.pop %v3131
      %v3133 = vmul.f32 %v3111, 1.442695
      %v3134 = vpow.pop %v3133
      %v3135 = vmul.f32 %v3112, 1.442695
      %v3136 = vpow.pop %v3135
      %v3137 = vmul.f32 %v3113, 1.442695
      %v3138 = vpow.pop %v3137
      %v3139 = vmul.f32 %v3114, 1.442695
      %v3140 = vpow.pop %v3139
      %v3141 = vmul.f32 %v3115, 1.442695
      %v3142 = vpow.pop %v3141
      %v3143 = vmul.f32 %v3116, 1.442695
      %v3144 = vpow.pop %v3143
      %v3145 = vmul.f32 %v3117, 1.442695
      %v3146 = vpow.pop %v3145
      %v3147 = vmul.f32 %v3118, 1.442695
      %v3148 = vpow.pop %v3147
      %v3149 = vmul.f32 %v3119, 1.442695
      %v3150 = vpow.pop %v3149
      %v3151 = vmul.f32 %v3120, 1.442695
      %v3152 = vpow.pop %v3151
      %v3153 = vadd.f32 %v3122, 1.0
      %v3154 = vadd.f32 %v3124, 1.0
      %v3155 = vadd.f32 %v3126, 1.0
      %v3156 = vadd.f32 %v3128, 1.0
      %v3157 = vadd.f32 %v3130, 1.0
      %v3158 = vadd.f32 %v3132, 1.0
      %v3159 = vadd.f32 %v3134, 1.0
      %v3160 = vadd.f32 %v3136, 1.0
      %v3161 = vadd.f32 %v3138, 1.0
      %v3162 = vadd.f32 %v3140, 1.0
      %v3163 = vadd.f32 %v3142, 1.0
      %v3164 = vadd.f32 %v3144, 1.0
      %v3165 = vadd.f32 %v3146, 1.0
      %v3166 = vadd.f32 %v3148, 1.0
      %v3167 = vadd.f32 %v3150, 1.0
      %v3168 = vadd.f32 %v3152, 1.0
      %v3169 = vrcp.pop %v3153
      %v3170 = vmul.f32 1.0, %v3169
      %v3171 = vrcp.pop %v3154
      %v3172 = vmul.f32 1.0, %v3171
      %v3173 = vrcp.pop %v3155
      %v3174 = vmul.f32 1.0, %v3173
      %v3175 = vrcp.pop %v3156
      %v3176 = vmul.f32 1.0, %v3175
      %v3177 = vrcp.pop %v3157
      %v3178 = vmul.f32 1.0, %v3177
      %v3179 = vrcp.pop %v3158
      %v3180 = vmul.f32 1.0, %v3179
      %v3181 = vrcp.pop %v3159
      %v3182 = vmul.f32 1.0, %v3181
      %v3183 = vrcp.pop %v3160
      %v3184 = vmul.f32 1.0, %v3183
      %v3185 = vrcp.pop %v3161
      %v3186 = vmul.f32 1.0, %v3185
      %v3187 = vrcp.pop %v3162
      %v3188 = vmul.f32 1.0, %v3187
      %v3189 = vrcp.pop %v3163
      %v3190 = vmul.f32 1.0, %v3189
      %v3191 = vrcp.pop %v3164
      %v3192 = vmul.f32 1.0, %v3191
      %v3193 = vrcp.pop %v3165
      %v3194 = vmul.f32 1.0, %v3193
      %v3195 = vrcp.pop %v3166
      %v3196 = vmul.f32 1.0, %v3195
      %v3197 = vrcp.pop %v3167
      %v3198 = vmul.f32 1.0, %v3197
      %v3199 = vrcp.pop %v3168
      %v3200 = vmul.f32 1.0, %v3199
      %v3201 = vpack.c.bf16 %v2379, %v2376
      %v3202 = vpack.c.bf16 %v2387, %v2384
      %v3203 = vpack.c.bf16 %v2395, %v2392
      %v3204 = vpack.c.bf16 %v2403, %v2400
      %v3205 = vpack.c.bf16 %v2411, %v2408
      %v3206 = vpack.c.bf16 %v2419, %v2416
      %v3207 = vpack.c.bf16 %v2427, %v2424
      %v3208 = vpack.c.bf16 %v2435, %v2432
      %v3209 = vpack.c.bf16 %v2443, %v2440
      %v3210 = vpack.c.bf16 %v2451, %v2448
      %v3211 = vpack.c.bf16 %v2459, %v2456
      %v3212 = vpack.c.bf16 %v2467, %v2464
      %v3213 = vpack.c.bf16 %v2475, %v2472
      %v3214 = vpack.c.bf16 %v2483, %v2480
      %v3215 = vpack.c.bf16 %v2491, %v2488
      %v3216 = vpack.c.bf16 %v2499, %v2496
      %v3217 = vpack.c.bf16 %v2507, %v2504
      %v3218 = vpack.c.bf16 %v2515, %v2512
      %v3219 = vpack.c.bf16 %v2523, %v2520
      %v3220 = vpack.c.bf16 %v2531, %v2528
      %v3221 = vpack.c.bf16 %v2539, %v2536
      %v3222 = vpack.c.bf16 %v2547, %v2544
      %v3223 = vpack.c.bf16 %v2555, %v2552
      %v3224 = vpack.c.bf16 %v2563, %v2560
      %v3227 = vunpack.c.l.b16 %v2229
      %v3228 = vunpack.c.l.b16 %v2230
      %v3229 = vpack.c.b16 %v3228, %v3227
      %v3232 = vsel %vm2268, %v3201, 0
      %v3235 = vsel %vm2268, %v3202, 0
      %v3238 = vsel %vm2268, %v3203, 0
      %v3241 = vsel %vm2268, %v3204, 0
      %v3244 = vsel %vm2268, %v3205, 0
      %v3247 = vsel %vm2268, %v3206, 0
      %v3250 = vsel %vm2268, %v3207, 0
      %v3253 = vsel %vm2268, %v3208, 0
      %v3256 = vsel %vm2268, %v3209, 0
      %v3259 = vsel %vm2268, %v3210, 0
      %v3262 = vsel %vm2268, %v3211, 0
      %v3265 = vsel %vm2268, %v3212, 0
      %v3268 = vsel %vm2268, %v3213, 0
      %v3271 = vsel %vm2268, %v3214, 0
      %v3274 = vsel %vm2268, %v3215, 0
      %v3277 = vsel %vm2268, %v3216, 0
      %v3280 = vsel %vm2268, %v3217, 0
      %v3283 = vsel %vm2268, %v3218, 0
      %v3286 = vsel %vm2268, %v3219, 0
      %v3289 = vsel %vm2268, %v3220, 0
      %v3292 = vsel %vm2268, %v3221, 0
      %v3295 = vsel %vm2268, %v3222, 0
      %v3298 = vsel %vm2268, %v3223, 0
      %v3301 = vsel %vm2268, %v3224, 0
      %3303 = vmatprep.subr.bf16.mxu0 0
      %3304 = vmatpush1.bf16.msra.mxu0 %v3229
      %3305 = vmatprep.subr.bf16.mxu0 0
      %3306 = vmatpush1.bf16.msra.mxu0 0
      %3307 = vmatprep.subr.bf16.mxu0 0
      %3308 = vmatpush1.bf16.msra.mxu0 0
      %3309 = vmatprep.subr.bf16.mxu0 0
      %3310 = vmatpush1.bf16.msra.mxu0 0
      %3311 = vmatprep.subr.bf16.mxu0 0
      %3312 = vmatpush1.bf16.msra.mxu0 0
      %3313 = vmatprep.subr.bf16.mxu0 0
      %3314 = vmatpush1.bf16.msra.mxu0 0
      %3315 = vmatprep.subr.bf16.mxu0 0
      %3316 = vmatpush1.bf16.msra.mxu0 0
      %3317 = vmatprep.subr.bf16.mxu0 0
      %3318 = vmatpush1.bf16.msra.mxu0 0
      %3319 = vmatprep.subr.bf16.mxu0 0
      %3320 = vmatpush1.bf16.msra.mxu0 0
      %3321 = vmatprep.subr.bf16.mxu0 0
      %3322 = vmatpush1.bf16.msra.mxu0 0
      %3323 = vmatprep.subr.bf16.mxu0 0
      %3324 = vmatpush1.bf16.msra.mxu0 0
      %3325 = vmatprep.subr.bf16.mxu0 0
      %3326 = vmatpush1.bf16.msra.mxu0 0
      %3327 = vmatprep.subr.bf16.mxu0 0
      %3328 = vmatpush1.bf16.msra.mxu0 0
      %3329 = vmatprep.subr.bf16.mxu0 0
      %3330 = vmatpush1.bf16.msra.mxu0 0
      %3331 = vmatprep.subr.bf16.mxu0 0
      %3332 = vmatpush1.bf16.msra.mxu0 0
      %3333 = vmatprep.subr.bf16.mxu0 0
      %3334 = vmatpush1.bf16.msra.mxu0 0
      %3335 = vmatprep.mubr.bf16.mxu0 0
      %3336 = vmatmul.mubr.bf16.gmra.mrb[0].mxu0 %v3232
      %v3337 = vpop.f32.mrb[0].mxu0
      %v3338 = vadd.f32 0.0, %v3337
      %v3339 = vpop.f32.mrb[0].mxu0
      %v3340 = vpop.f32.mrb[0].mxu0
      %v3341 = vadd.f32 0.0, %v3340
      %v3342 = vpop.f32.mrb[0].mxu0
      %3343 = vmatprep.mubr.bf16.mxu0 0
      %3344 = vmatmul.mubr.bf16.gmra.mrb[0].mxu0 %v3235
      %v3345 = vpop.f32.mrb[0].mxu0
      %v3346 = vadd.f32 0.0, %v3345
      %v3347 = vpop.f32.mrb[0].mxu0
      %v3348 = vpop.f32.mrb[0].mxu0
      %v3349 = vadd.f32 0.0, %v3348
      %v3350 = vpop.f32.mrb[0].mxu0
      %3351 = vmatprep.mubr.bf16.mxu0 0
      %3352 = vmatmul.mubr.bf16.gmra.mrb[0].mxu0 %v3238
      %v3353 = vpop.f32.mrb[0].mxu0
      %v3354 = vadd.f32 0.0, %v3353
      %v3355 = vpop.f32.mrb[0].mxu0
      %v3356 = vpop.f32.mrb[0].mxu0
      %v3357 = vadd.f32 0.0, %v3356
      %v3358 = vpop.f32.mrb[0].mxu0
      %3359 = vmatprep.mubr.bf16.mxu0 0
      %3360 = vmatmul.mubr.bf16.gmra.mrb[0].mxu0 %v3241
      %v3361 = vpop.f32.mrb[0].mxu0
      %v3362 = vadd.f32 0.0, %v3361
      %v3363 = vpop.f32.mrb[0].mxu0
      %v3364 = vpop.f32.mrb[0].mxu0
      %v3365 = vadd.f32 0.0, %v3364
      %v3366 = vpop.f32.mrb[0].mxu0
      %3367 = vmatprep.mubr.bf16.mxu0 0
      %3368 = vmatmul.mubr.bf16.gmra.mrb[0].mxu0 %v3244
      %v3369 = vpop.f32.mrb[0].mxu0
      %v3370 = vadd.f32 0.0, %v3369
      %v3371 = vpop.f32.mrb[0].mxu0
      %v3372 = vpop.f32.mrb[0].mxu0
      %v3373 = vadd.f32 0.0, %v3372
      %v3374 = vpop.f32.mrb[0].mxu0
      %3375 = vmatprep.mubr.bf16.mxu0 0
      %3376 = vmatmul.mubr.bf16.gmra.mrb[0].mxu0 %v3247
      %v3377 = vpop.f32.mrb[0].mxu0
      %v3378 = vadd.f32 0.0, %v3377
      %v3379 = vpop.f32.mrb[0].mxu0
      %v3380 = vpop.f32.mrb[0].mxu0
      %v3381 = vadd.f32 0.0, %v3380
      %v3382 = vpop.f32.mrb[0].mxu0
      %3383 = vmatprep.mubr.bf16.mxu0 0
      %3384 = vmatmul.mubr.bf16.gmra.mrb[0].mxu0 %v3250
      %v3385 = vpop.f32.mrb[0].mxu0
      %v3386 = vadd.f32 0.0, %v3385
      %v3387 = vpop.f32.mrb[0].mxu0
      %v3388 = vpop.f32.mrb[0].mxu0
      %v3389 = vadd.f32 0.0, %v3388
      %v3390 = vpop.f32.mrb[0].mxu0
      %3391 = vmatprep.mubr.bf16.mxu0 0
      %3392 = vmatmul.mubr.bf16.gmra.mrb[0].mxu0 %v3253
      %v3393 = vpop.f32.mrb[0].mxu0
      %v3394 = vadd.f32 0.0, %v3393
      %v3395 = vpop.f32.mrb[0].mxu0
      %v3396 = vpop.f32.mrb[0].mxu0
      %v3397 = vadd.f32 0.0, %v3396
      %v3398 = vpop.f32.mrb[0].mxu0
      %3399 = vmatprep.mubr.bf16.mxu0 0
      %3400 = vmatmul.mubr.bf16.gmra.mrb[0].mxu0 %v3256
      %v3401 = vpop.f32.mrb[0].mxu0
      %v3402 = vadd.f32 0.0, %v3401
      %v3403 = vpop.f32.mrb[0].mxu0
      %v3404 = vpop.f32.mrb[0].mxu0
      %v3405 = vadd.f32 0.0, %v3404
      %v3406 = vpop.f32.mrb[0].mxu0
      %3407 = vmatprep.mubr.bf16.mxu0 0
      %3408 = vmatmul.mubr.bf16.gmra.mrb[0].mxu0 %v3259
      %v3409 = vpop.f32.mrb[0].mxu0
      %v3410 = vadd.f32 0.0, %v3409
      %v3411 = vpop.f32.mrb[0].mxu0
      %v3412 = vpop.f32.mrb[0].mxu0
      %v3413 = vadd.f32 0.0, %v3412
      %v3414 = vpop.f32.mrb[0].mxu0
      %3415 = vmatprep.mubr.bf16.mxu0 0
      %3416 = vmatmul.mubr.bf16.gmra.mrb[0].mxu0 %v3262
      %v3417 = vpop.f32.mrb[0].mxu0
      %v3418 = vadd.f32 0.0, %v3417
      %v3419 = vpop.f32.mrb[0].mxu0
      %v3420 = vpop.f32.mrb[0].mxu0
      %v3421 = vadd.f32 0.0, %v3420
      %v3422 = vpop.f32.mrb[0].mxu0
      %3423 = vmatprep.mubr.bf16.mxu0 0
      %3424 = vmatmul.mubr.bf16.gmra.mrb[0].mxu0 %v3265
      %v3425 = vpop.f32.mrb[0].mxu0
      %v3426 = vadd.f32 0.0, %v3425
      %v3427 = vpop.f32.mrb[0].mxu0
      %v3428 = vpop.f32.mrb[0].mxu0
      %v3429 = vadd.f32 0.0, %v3428
      %v3430 = vpop.f32.mrb[0].mxu0
      %3431 = vmatprep.mubr.bf16.mxu0 0
      %3432 = vmatmul.mubr.bf16.gmra.mrb[0].mxu0 %v3268
      %v3433 = vpop.f32.mrb[0].mxu0
      %v3434 = vadd.f32 0.0, %v3433
      %v3435 = vpop.f32.mrb[0].mxu0
      %v3436 = vpop.f32.mrb[0].mxu0
      %v3437 = vadd.f32 0.0, %v3436
      %v3438 = vpop.f32.mrb[0].mxu0
      %3439 = vmatprep.mubr.bf16.mxu0 0
      %3440 = vmatmul.mubr.bf16.gmra.mrb[0].mxu0 %v3271
      %v3441 = vpop.f32.mrb[0].mxu0
      %v3442 = vadd.f32 0.0, %v3441
      %v3443 = vpop.f32.mrb[0].mxu0
      %v3444 = vpop.f32.mrb[0].mxu0
      %v3445 = vadd.f32 0.0, %v3444
      %v3446 = vpop.f32.mrb[0].mxu0
      %3447 = vmatprep.mubr.bf16.mxu0 0
      %3448 = vmatmul.mubr.bf16.gmra.mrb[0].mxu0 %v3274
      %v3449 = vpop.f32.mrb[0].mxu0
      %v3450 = vadd.f32 0.0, %v3449
      %v3451 = vpop.f32.mrb[0].mxu0
      %v3452 = vpop.f32.mrb[0].mxu0
      %v3453 = vadd.f32 0.0, %v3452
      %v3454 = vpop.f32.mrb[0].mxu0
      %3455 = vmatprep.mubr.bf16.mxu0 0
      %3456 = vmatmul.mubr.bf16.gmra.mrb[0].mxu0 %v3277
      %v3457 = vpop.f32.mrb[0].mxu0
      %v3458 = vadd.f32 0.0, %v3457
      %v3459 = vpop.f32.mrb[0].mxu0
      %v3460 = vpop.f32.mrb[0].mxu0
      %v3461 = vadd.f32 0.0, %v3460
      %v3462 = vpop.f32.mrb[0].mxu0
      %3463 = vmatprep.mubr.bf16.mxu0 0
      %3464 = vmatmul.mubr.bf16.gmra.mrb[0].mxu0 %v3280
      %v3465 = vpop.f32.mrb[0].mxu0
      %v3466 = vadd.f32 0.0, %v3465
      %v3467 = vpop.f32.mrb[0].mxu0
      %v3468 = vpop.f32.mrb[0].mxu0
      %v3469 = vadd.f32 0.0, %v3468
      %v3470 = vpop.f32.mrb[0].mxu0
      %3471 = vmatprep.mubr.bf16.mxu0 0
      %3472 = vmatmul.mubr.bf16.gmra.mrb[0].mxu0 %v3283
      %v3473 = vpop.f32.mrb[0].mxu0
      %v3474 = vadd.f32 0.0, %v3473
      %v3475 = vpop.f32.mrb[0].mxu0
      %v3476 = vpop.f32.mrb[0].mxu0
      %v3477 = vadd.f32 0.0, %v3476
      %v3478 = vpop.f32.mrb[0].mxu0
      %3479 = vmatprep.mubr.bf16.mxu0 0
      %3480 = vmatmul.mubr.bf16.gmra.mrb[0].mxu0 %v3286
      %v3481 = vpop.f32.mrb[0].mxu0
      %v3482 = vadd.f32 0.0, %v3481
      %v3483 = vpop.f32.mrb[0].mxu0
      %v3484 = vpop.f32.mrb[0].mxu0
      %v3485 = vadd.f32 0.0, %v3484
      %v3486 = vpop.f32.mrb[0].mxu0
      %3487 = vmatprep.mubr.bf16.mxu0 0
      %3488 = vmatmul.mubr.bf16.gmra.mrb[0].mxu0 %v3289
      %v3489 = vpop.f32.mrb[0].mxu0
      %v3490 = vadd.f32 0.0, %v3489
      %v3491 = vpop.f32.mrb[0].mxu0
      %v3492 = vpop.f32.mrb[0].mxu0
      %v3493 = vadd.f32 0.0, %v3492
      %v3494 = vpop.f32.mrb[0].mxu0
      %3495 = vmatprep.mubr.bf16.mxu0 0
      %3496 = vmatmul.mubr.bf16.gmra.mrb[0].mxu0 %v3292
      %v3497 = vpop.f32.mrb[0].mxu0
      %v3498 = vadd.f32 0.0, %v3497
      %v3499 = vpop.f32.mrb[0].mxu0
      %v3500 = vpop.f32.mrb[0].mxu0
      %v3501 = vadd.f32 0.0, %v3500
      %v3502 = vpop.f32.mrb[0].mxu0
      %3503 = vmatprep.mubr.bf16.mxu0 0
      %3504 = vmatmul.mubr.bf16.gmra.mrb[0].mxu0 %v3295
      %v3505 = vpop.f32.mrb[0].mxu0
      %v3506 = vadd.f32 0.0, %v3505
      %v3507 = vpop.f32.mrb[0].mxu0
      %v3508 = vpop.f32.mrb[0].mxu0
      %v3509 = vadd.f32 0.0, %v3508
      %v3510 = vpop.f32.mrb[0].mxu0
      %3511 = vmatprep.mubr.bf16.mxu0 0
      %3512 = vmatmul.mubr.bf16.gmra.mrb[0].mxu0 %v3298
      %v3513 = vpop.f32.mrb[0].mxu0
      %v3514 = vadd.f32 0.0, %v3513
      %v3515 = vpop.f32.mrb[0].mxu0
      %v3516 = vpop.f32.mrb[0].mxu0
      %v3517 = vadd.f32 0.0, %v3516
      %v3518 = vpop.f32.mrb[0].mxu0
      %3519 = vmatprep.mubr.bf16.mxu0 0
      %3520 = vmatmul.mubr.bf16.gmra.mrb[0].mxu0 %v3301
      %v3521 = vpop.f32.mrb[0].mxu0
      %v3522 = vadd.f32 0.0, %v3521
      %v3523 = vpop.f32.mrb[0].mxu0
      %v3524 = vpop.f32.mrb[0].mxu0
      %v3525 = vadd.f32 0.0, %v3524
      %v3526 = vpop.f32.mrb[0].mxu0
      %3527 = vdwg.mxu0
      %v3528 = vmul.f32 %v3338, %v3170
      %v3529 = vmul.f32 %v3341, %v3172
      %v3530 = vmul.f32 %v3346, %v3174
      %v3531 = vmul.f32 %v3349, %v3176
      %v3532 = vmul.f32 %v3354, %v3178
      %v3533 = vmul.f32 %v3357, %v3180
      %v3534 = vmul.f32 %v3362, %v3182
      %v3535 = vmul.f32 %v3365, %v3184
      %v3536 = vmul.f32 %v3370, %v3186
      %v3537 = vmul.f32 %v3373, %v3188
      %v3538 = vmul.f32 %v3378, %v3190
      %v3539 = vmul.f32 %v3381, %v3192
      %v3540 = vmul.f32 %v3386, %v3194
      %v3541 = vmul.f32 %v3389, %v3196
      %v3542 = vmul.f32 %v3394, %v3198
      %v3543 = vmul.f32 %v3397, %v3200
      %v3544 = vmul.f32 %v3402, %v3170
      %v3545 = vmul.f32 %v3405, %v3172
      %v3546 = vmul.f32 %v3410, %v3174
      %v3547 = vmul.f32 %v3413, %v3176
      %v3548 = vmul.f32 %v3418, %v3178
      %v3549 = vmul.f32 %v3421, %v3180
      %v3550 = vmul.f32 %v3426, %v3182
      %v3551 = vmul.f32 %v3429, %v3184
      %v3552 = vmul.f32 %v3434, %v3186
      %v3553 = vmul.f32 %v3437, %v3188
      %v3554 = vmul.f32 %v3442, %v3190
      %v3555 = vmul.f32 %v3445, %v3192
      %v3556 = vmul.f32 %v3450, %v3194
      %v3557 = vmul.f32 %v3453, %v3196
      %v3558 = vmul.f32 %v3458, %v3198
      %v3559 = vmul.f32 %v3461, %v3200
      %v3560 = vmul.f32 %v3466, %v3170
      %v3561 = vmul.f32 %v3469, %v3172
      %v3562 = vmul.f32 %v3474, %v3174
      %v3563 = vmul.f32 %v3477, %v3176
      %v3564 = vmul.f32 %v3482, %v3178
      %v3565 = vmul.f32 %v3485, %v3180
      %v3566 = vmul.f32 %v3490, %v3182
      %v3567 = vmul.f32 %v3493, %v3184
      %v3568 = vmul.f32 %v3498, %v3186
      %v3569 = vmul.f32 %v3501, %v3188
      %v3570 = vmul.f32 %v3506, %v3190
      %v3571 = vmul.f32 %v3509, %v3192
      %v3572 = vmul.f32 %v3514, %v3194
      %v3573 = vmul.f32 %v3517, %v3196
      %v3574 = vmul.f32 %v3522, %v3198
      %v3575 = vmul.f32 %v3525, %v3200
      %v3576 = vld [vmem:[%s1089] sm:$0xf]
      %v3577 = vld [vmem:[%s1089 + $0x4] sm:$0xf]
      %vm3578 = vcmp.ge.f32.partialorder %v2902, 0.0
      %vm3579 = vcmp.ge.f32.partialorder %v2905, 0.0
      %vm3580 = vcmp.ge.f32.partialorder %v2910, 0.0
      %vm3581 = vcmp.ge.f32.partialorder %v2913, 0.0
      %vm3582 = vcmp.ge.f32.partialorder %v2918, 0.0
      %vm3583 = vcmp.ge.f32.partialorder %v2921, 0.0
      %vm3584 = vcmp.ge.f32.partialorder %v2926, 0.0
      %vm3585 = vcmp.ge.f32.partialorder %v2929, 0.0
      %vm3586 = vcmp.ge.f32.partialorder %v2934, 0.0
      %vm3587 = vcmp.ge.f32.partialorder %v2937, 0.0
      %vm3588 = vcmp.ge.f32.partialorder %v2942, 0.0
      %vm3589 = vcmp.ge.f32.partialorder %v2945, 0.0
      %vm3590 = vcmp.ge.f32.partialorder %v2950, 0.0
      %vm3591 = vcmp.ge.f32.partialorder %v2953, 0.0
      %vm3592 = vcmp.ge.f32.partialorder %v2958, 0.0
      %vm3593 = vcmp.ge.f32.partialorder %v2961, 0.0
      %v3594 = vmul.f32 %v2902, 0.01
      %v3595 = vmul.f32 %v2905, 0.01
      %v3596 = vmul.f32 %v2910, 0.01
      %v3597 = vmul.f32 %v2913, 0.01
      %v3598 = vmul.f32 %v2918, 0.01
      %v3599 = vmul.f32 %v2921, 0.01
      %v3600 = vmul.f32 %v2926, 0.01
      %v3601 = vmul.f32 %v2929, 0.01
      %v3602 = vmul.f32 %v2934, 0.01
      %v3603 = vmul.f32 %v2937, 0.01
      %v3604 = vmul.f32 %v2942, 0.01
      %v3605 = vmul.f32 %v2945, 0.01
      %v3606 = vmul.f32 %v2950, 0.01
      %v3607 = vmul.f32 %v2953, 0.01
      %v3608 = vmul.f32 %v2958, 0.01
      %v3609 = vmul.f32 %v2961, 0.01
      %v3610 = vsel %vm3578, %v2902, %v3594
      %v3611 = vsel %vm3579, %v2905, %v3595
      %v3612 = vsel %vm3580, %v2910, %v3596
      %v3613 = vsel %vm3581, %v2913, %v3597
      %v3614 = vsel %vm3582, %v2918, %v3598
      %v3615 = vsel %vm3583, %v2921, %v3599
      %v3616 = vsel %vm3584, %v2926, %v3600
      %v3617 = vsel %vm3585, %v2929, %v3601
      %v3618 = vsel %vm3586, %v2934, %v3602
      %v3619 = vsel %vm3587, %v2937, %v3603
      %v3620 = vsel %vm3588, %v2942, %v3604
      %v3621 = vsel %vm3589, %v2945, %v3605
      %v3622 = vsel %vm3590, %v2950, %v3606
      %v3623 = vsel %vm3591, %v2953, %v3607
      %v3624 = vsel %vm3592, %v2958, %v3608
      %v3625 = vsel %vm3593, %v2961, %v3609
      %v3626 = vpack.c.bf16 %v3529, %v3528
      %v3627 = vpack.c.bf16 %v3531, %v3530
      %v3628 = vpack.c.bf16 %v3533, %v3532
      %v3629 = vpack.c.bf16 %v3535, %v3534
      %v3630 = vpack.c.bf16 %v3537, %v3536
      %v3631 = vpack.c.bf16 %v3539, %v3538
      %v3632 = vpack.c.bf16 %v3541, %v3540
      %v3633 = vpack.c.bf16 %v3543, %v3542
      %v3634 = vpack.c.bf16 %v3545, %v3544
      %v3635 = vpack.c.bf16 %v3547, %v3546
      %v3636 = vpack.c.bf16 %v3549, %v3548
      %v3637 = vpack.c.bf16 %v3551, %v3550
      %v3638 = vpack.c.bf16 %v3553, %v3552
      %v3639 = vpack.c.bf16 %v3555, %v3554
      %v3640 = vpack.c.bf16 %v3557, %v3556
      %v3641 = vpack.c.bf16 %v3559, %v3558
      %v3642 = vpack.c.bf16 %v3561, %v3560
      %v3643 = vpack.c.bf16 %v3563, %v3562
      %v3644 = vpack.c.bf16 %v3565, %v3564
      %v3645 = vpack.c.bf16 %v3567, %v3566
      %v3646 = vpack.c.bf16 %v3569, %v3568
      %v3647 = vpack.c.bf16 %v3571, %v3570
      %v3648 = vpack.c.bf16 %v3573, %v3572
      %v3649 = vpack.c.bf16 %v3575, %v3574
      %v3652 = vunpack.c.l.b16 %v3576
      %v3653 = vunpack.c.l.b16 %v3577
      %v3654 = vpack.c.b16 %v3653, %v3652
      %v3657 = vsel %vm2268, %v3626, 0
      %v3660 = vsel %vm2268, %v3627, 0
      %v3663 = vsel %vm2268, %v3628, 0
      %v3666 = vsel %vm2268, %v3629, 0
      %v3669 = vsel %vm2268, %v3630, 0
      %v3672 = vsel %vm2268, %v3631, 0
      %v3675 = vsel %vm2268, %v3632, 0
      %v3678 = vsel %vm2268, %v3633, 0
      %v3681 = vsel %vm2268, %v3634, 0
      %v3684 = vsel %vm2268, %v3635, 0
      %v3687 = vsel %vm2268, %v3636, 0
      %v3690 = vsel %vm2268, %v3637, 0
      %v3693 = vsel %vm2268, %v3638, 0
      %v3696 = vsel %vm2268, %v3639, 0
      %v3699 = vsel %vm2268, %v3640, 0
      %v3702 = vsel %vm2268, %v3641, 0
      %v3705 = vsel %vm2268, %v3642, 0
      %v3708 = vsel %vm2268, %v3643, 0
      %v3711 = vsel %vm2268, %v3644, 0
      %v3714 = vsel %vm2268, %v3645, 0
      %v3717 = vsel %vm2268, %v3646, 0
      %v3720 = vsel %vm2268, %v3647, 0
      %v3723 = vsel %vm2268, %v3648, 0
      %v3726 = vsel %vm2268, %v3649, 0
      %3728 = vmatprep.subr.bf16.mxu0 0
      %3729 = vmatpush1.bf16.msra.mxu0 %v3654
      %3730 = vmatprep.subr.bf16.mxu0 0
      %3731 = vmatpush1.bf16.msra.mxu0 0
      %3732 = vmatprep.subr.bf16.mxu0 0
      %3733 = vmatpush1.bf16.msra.mxu0 0
      %3734 = vmatprep.subr.bf16.mxu0 0
      %3735 = vmatpush1.bf16.msra.mxu0 0
      %3736 = vmatprep.subr.bf16.mxu0 0
      %3737 = vmatpush1.bf16.msra.mxu0 0
      %3738 = vmatprep.subr.bf16.mxu0 0
      %3739 = vmatpush1.bf16.msra.mxu0 0
      %3740 = vmatprep.subr.bf16.mxu0 0
      %3741 = vmatpush1.bf16.msra.mxu0 0
      %3742 = vmatprep.subr.bf16.mxu0 0
      %3743 = vmatpush1.bf16.msra.mxu0 0
      %3744 = vmatprep.subr.bf16.mxu0 0
      %3745 = vmatpush1.bf16.msra.mxu0 0
      %3746 = vmatprep.subr.bf16.mxu0 0
      %3747 = vmatpush1.bf16.msra.mxu0 0
      %3748 = vmatprep.subr.bf16.mxu0 0
      %3749 = vmatpush1.bf16.msra.mxu0 0
      %3750 = vmatprep.subr.bf16.mxu0 0
      %3751 = vmatpush1.bf16.msra.mxu0 0
      %3752 = vmatprep.subr.bf16.mxu0 0
      %3753 = vmatpush1.bf16.msra.mxu0 0
      %3754 = vmatprep.subr.bf16.mxu0 0
      %3755 = vmatpush1.bf16.msra.mxu0 0
      %3756 = vmatprep.subr.bf16.mxu0 0
      %3757 = vmatpush1.bf16.msra.mxu0 0
      %3758 = vmatprep.subr.bf16.mxu0 0
      %3759 = vmatpush1.bf16.msra.mxu0 0
      %3760 = vmatprep.mubr.bf16.mxu0 0
      %3761 = vmatmul.mubr.bf16.gmra.mrb[0].mxu0 %v3657
      %v3762 = vpop.f32.mrb[0].mxu0
      %v3763 = vadd.f32 0.0, %v3762
      %v3764 = vpop.f32.mrb[0].mxu0
      %v3765 = vpop.f32.mrb[0].mxu0
      %v3766 = vadd.f32 0.0, %v3765
      %v3767 = vpop.f32.mrb[0].mxu0
      %3768 = vmatprep.mubr.bf16.mxu0 0
      %3769 = vmatmul.mubr.bf16.gmra.mrb[0].mxu0 %v3660
      %v3770 = vpop.f32.mrb[0].mxu0
      %v3771 = vadd.f32 0.0, %v3770
      %v3772 = vpop.f32.mrb[0].mxu0
      %v3773 = vpop.f32.mrb[0].mxu0
      %v3774 = vadd.f32 0.0, %v3773
      %v3775 = vpop.f32.mrb[0].mxu0
      %3776 = vmatprep.mubr.bf16.mxu0 0
      %3777 = vmatmul.mubr.bf16.gmra.mrb[0].mxu0 %v3663
      %v3778 = vpop.f32.mrb[0].mxu0
      %v3779 = vadd.f32 0.0, %v3778
      %v3780 = vpop.f32.mrb[0].mxu0
      %v3781 = vpop.f32.mrb[0].mxu0
      %v3782 = vadd.f32 0.0, %v3781
      %v3783 = vpop.f32.mrb[0].mxu0
      %3784 = vmatprep.mubr.bf16.mxu0 0
      %3785 = vmatmul.mubr.bf16.gmra.mrb[0].mxu0 %v3666
      %v3786 = vpop.f32.mrb[0].mxu0
      %v3787 = vadd.f32 0.0, %v3786
      %v3788 = vpop.f32.mrb[0].mxu0
      %v3789 = vpop.f32.mrb[0].mxu0
      %v3790 = vadd.f32 0.0, %v3789
      %v3791 = vpop.f32.mrb[0].mxu0
      %3792 = vmatprep.mubr.bf16.mxu0 0
      %3793 = vmatmul.mubr.bf16.gmra.mrb[0].mxu0 %v3669
      %v3794 = vpop.f32.mrb[0].mxu0
      %v3795 = vadd.f32 0.0, %v3794
      %v3796 = vpop.f32.mrb[0].mxu0
      %v3797 = vpop.f32.mrb[0].mxu0
      %v3798 = vadd.f32 0.0, %v3797
      %v3799 = vpop.f32.mrb[0].mxu0
      %3800 = vmatprep.mubr.bf16.mxu0 0
      %3801 = vmatmul.mubr.bf16.gmra.mrb[0].mxu0 %v3672
      %v3802 = vpop.f32.mrb[0].mxu0
      %v3803 = vadd.f32 0.0, %v3802
      %v3804 = vpop.f32.mrb[0].mxu0
      %v3805 = vpop.f32.mrb[0].mxu0
      %v3806 = vadd.f32 0.0, %v3805
      %v3807 = vpop.f32.mrb[0].mxu0
      %3808 = vmatprep.mubr.bf16.mxu0 0
      %3809 = vmatmul.mubr.bf16.gmra.mrb[0].mxu0 %v3675
      %v3810 = vpop.f32.mrb[0].mxu0
      %v3811 = vadd.f32 0.0, %v3810
      %v3812 = vpop.f32.mrb[0].mxu0
      %v3813 = vpop.f32.mrb[0].mxu0
      %v3814 = vadd.f32 0.0, %v3813
      %v3815 = vpop.f32.mrb[0].mxu0
      %3816 = vmatprep.mubr.bf16.mxu0 0
      %3817 = vmatmul.mubr.bf16.gmra.mrb[0].mxu0 %v3678
      %v3818 = vpop.f32.mrb[0].mxu0
      %v3819 = vadd.f32 0.0, %v3818
      %v3820 = vpop.f32.mrb[0].mxu0
      %v3821 = vpop.f32.mrb[0].mxu0
      %v3822 = vadd.f32 0.0, %v3821
      %v3823 = vpop.f32.mrb[0].mxu0
      %3824 = vmatprep.mubr.bf16.mxu0 0
      %3825 = vmatmul.mubr.bf16.gmra.mrb[0].mxu0 %v3681
      %v3826 = vpop.f32.mrb[0].mxu0
      %v3827 = vadd.f32 0.0, %v3826
      %v3828 = vpop.f32.mrb[0].mxu0
      %v3829 = vpop.f32.mrb[0].mxu0
      %v3830 = vadd.f32 0.0, %v3829
      %v3831 = vpop.f32.mrb[0].mxu0
      %3832 = vmatprep.mubr.bf16.mxu0 0
      %3833 = vmatmul.mubr.bf16.gmra.mrb[0].mxu0 %v3684
      %v3834 = vpop.f32.mrb[0].mxu0
      %v3835 = vadd.f32 0.0, %v3834
      %v3836 = vpop.f32.mrb[0].mxu0
      %v3837 = vpop.f32.mrb[0].mxu0
      %v3838 = vadd.f32 0.0, %v3837
      %v3839 = vpop.f32.mrb[0].mxu0
      %3840 = vmatprep.mubr.bf16.mxu0 0
      %3841 = vmatmul.mubr.bf16.gmra.mrb[0].mxu0 %v3687
      %v3842 = vpop.f32.mrb[0].mxu0
      %v3843 = vadd.f32 0.0, %v3842
      %v3844 = vpop.f32.mrb[0].mxu0
      %v3845 = vpop.f32.mrb[0].mxu0
      %v3846 = vadd.f32 0.0, %v3845
      %v3847 = vpop.f32.mrb[0].mxu0
      %3848 = vmatprep.mubr.bf16.mxu0 0
      %3849 = vmatmul.mubr.bf16.gmra.mrb[0].mxu0 %v3690
      %v3850 = vpop.f32.mrb[0].mxu0
      %v3851 = vadd.f32 0.0, %v3850
      %v3852 = vpop.f32.mrb[0].mxu0
      %v3853 = vpop.f32.mrb[0].mxu0
      %v3854 = vadd.f32 0.0, %v3853
      %v3855 = vpop.f32.mrb[0].mxu0
      %3856 = vmatprep.mubr.bf16.mxu0 0
      %3857 = vmatmul.mubr.bf16.gmra.mrb[0].mxu0 %v3693
      %v3858 = vpop.f32.mrb[0].mxu0
      %v3859 = vadd.f32 0.0, %v3858
      %v3860 = vpop.f32.mrb[0].mxu0
      %v3861 = vpop.f32.mrb[0].mxu0
      %v3862 = vadd.f32 0.0, %v3861
      %v3863 = vpop.f32.mrb[0].mxu0
      %3864 = vmatprep.mubr.bf16.mxu0 0
      %3865 = vmatmul.mubr.bf16.gmra.mrb[0].mxu0 %v3696
      %v3866 = vpop.f32.mrb[0].mxu0
      %v3867 = vadd.f32 0.0, %v3866
      %v3868 = vpop.f32.mrb[0].mxu0
      %v3869 = vpop.f32.mrb[0].mxu0
      %v3870 = vadd.f32 0.0, %v3869
      %v3871 = vpop.f32.mrb[0].mxu0
      %3872 = vmatprep.mubr.bf16.mxu0 0
      %3873 = vmatmul.mubr.bf16.gmra.mrb[0].mxu0 %v3699
      %v3874 = vpop.f32.mrb[0].mxu0
      %v3875 = vadd.f32 0.0, %v3874
      %v3876 = vpop.f32.mrb[0].mxu0
      %v3877 = vpop.f32.mrb[0].mxu0
      %v3878 = vadd.f32 0.0, %v3877
      %v3879 = vpop.f32.mrb[0].mxu0
      %3880 = vmatprep.mubr.bf16.mxu0 0
      %3881 = vmatmul.mubr.bf16.gmra.mrb[0].mxu0 %v3702
      %v3882 = vpop.f32.mrb[0].mxu0
      %v3883 = vadd.f32 0.0, %v3882
      %v3884 = vpop.f32.mrb[0].mxu0
      %v3885 = vpop.f32.mrb[0].mxu0
      %v3886 = vadd.f32 0.0, %v3885
      %v3887 = vpop.f32.mrb[0].mxu0
      %3888 = vmatprep.mubr.bf16.mxu0 0
      %3889 = vmatmul.mubr.bf16.gmra.mrb[0].mxu0 %v3705
      %v3890 = vpop.f32.mrb[0].mxu0
      %v3891 = vadd.f32 0.0, %v3890
      %v3892 = vpop.f32.mrb[0].mxu0
      %v3893 = vpop.f32.mrb[0].mxu0
      %v3894 = vadd.f32 0.0, %v3893
      %v3895 = vpop.f32.mrb[0].mxu0
      %3896 = vmatprep.mubr.bf16.mxu0 0
      %3897 = vmatmul.mubr.bf16.gmra.mrb[0].mxu0 %v3708
      %v3898 = vpop.f32.mrb[0].mxu0
      %v3899 = vadd.f32 0.0, %v3898
      %v3900 = vpop.f32.mrb[0].mxu0
      %v3901 = vpop.f32.mrb[0].mxu0
      %v3902 = vadd.f32 0.0, %v3901
      %v3903 = vpop.f32.mrb[0].mxu0
      %3904 = vmatprep.mubr.bf16.mxu0 0
      %3905 = vmatmul.mubr.bf16.gmra.mrb[0].mxu0 %v3711
      %v3906 = vpop.f32.mrb[0].mxu0
      %v3907 = vadd.f32 0.0, %v3906
      %v3908 = vpop.f32.mrb[0].mxu0
      %v3909 = vpop.f32.mrb[0].mxu0
      %v3910 = vadd.f32 0.0, %v3909
      %v3911 = vpop.f32.mrb[0].mxu0
      %3912 = vmatprep.mubr.bf16.mxu0 0
      %3913 = vmatmul.mubr.bf16.gmra.mrb[0].mxu0 %v3714
      %v3914 = vpop.f32.mrb[0].mxu0
      %v3915 = vadd.f32 0.0, %v3914
      %v3916 = vpop.f32.mrb[0].mxu0
      %v3917 = vpop.f32.mrb[0].mxu0
      %v3918 = vadd.f32 0.0, %v3917
      %v3919 = vpop.f32.mrb[0].mxu0
      %3920 = vmatprep.mubr.bf16.mxu0 0
      %3921 = vmatmul.mubr.bf16.gmra.mrb[0].mxu0 %v3717
      %v3922 = vpop.f32.mrb[0].mxu0
      %v3923 = vadd.f32 0.0, %v3922
      %v3924 = vpop.f32.mrb[0].mxu0
      %v3925 = vpop.f32.mrb[0].mxu0
      %v3926 = vadd.f32 0.0, %v3925
      %v3927 = vpop.f32.mrb[0].mxu0
      %3928 = vmatprep.mubr.bf16.mxu0 0
      %3929 = vmatmul.mubr.bf16.gmra.mrb[0].mxu0 %v3720
      %v3930 = vpop.f32.mrb[0].mxu0
      %v3931 = vadd.f32 0.0, %v3930
      %v3932 = vpop.f32.mrb[0].mxu0
      %v3933 = vpop.f32.mrb[0].mxu0
      %v3934 = vadd.f32 0.0, %v3933
      %v3935 = vpop.f32.mrb[0].mxu0
      %3936 = vmatprep.mubr.bf16.mxu0 0
      %3937 = vmatmul.mubr.bf16.gmra.mrb[0].mxu0 %v3723
      %v3938 = vpop.f32.mrb[0].mxu0
      %v3939 = vadd.f32 0.0, %v3938
      %v3940 = vpop.f32.mrb[0].mxu0
      %v3941 = vpop.f32.mrb[0].mxu0
      %v3942 = vadd.f32 0.0, %v3941
      %v3943 = vpop.f32.mrb[0].mxu0
      %3944 = vmatprep.mubr.bf16.mxu0 0
      %3945 = vmatmul.mubr.bf16.gmra.mrb[0].mxu0 %v3726
      %v3946 = vpop.f32.mrb[0].mxu0
      %v3947 = vadd.f32 0.0, %v3946
      %v3948 = vpop.f32.mrb[0].mxu0
      %v3949 = vpop.f32.mrb[0].mxu0
      %v3950 = vadd.f32 0.0, %v3949
      %v3951 = vpop.f32.mrb[0].mxu0
      %3952 = vdwg.mxu0
      %v3953 = vmul.f32 %v3528, %v3763
      %v3954 = vmul.f32 %v3529, %v3766
      %v3955 = vmul.f32 %v3530, %v3771
      %v3956 = vmul.f32 %v3531, %v3774
      %v3957 = vmul.f32 %v3532, %v3779
      %v3958 = vmul.f32 %v3533, %v3782
      %v3959 = vmul.f32 %v3534, %v3787
      %v3960 = vmul.f32 %v3535, %v3790
      %v3961 = vmul.f32 %v3536, %v3795
      %v3962 = vmul.f32 %v3537, %v3798
      %v3963 = vmul.f32 %v3538, %v3803
      %v3964 = vmul.f32 %v3539, %v3806
      %v3965 = vmul.f32 %v3540, %v3811
      %v3966 = vmul.f32 %v3541, %v3814
      %v3967 = vmul.f32 %v3542, %v3819
      %v3968 = vmul.f32 %v3543, %v3822
      %v3969 = vmul.f32 %v3544, %v3827
      %v3970 = vmul.f32 %v3545, %v3830
      %v3971 = vmul.f32 %v3546, %v3835
      %v3972 = vmul.f32 %v3547, %v3838
      %v3973 = vmul.f32 %v3548, %v3843
      %v3974 = vmul.f32 %v3549, %v3846
      %v3975 = vmul.f32 %v3550, %v3851
      %v3976 = vmul.f32 %v3551, %v3854
      %v3977 = vmul.f32 %v3552, %v3859
      %v3978 = vmul.f32 %v3553, %v3862
      %v3979 = vmul.f32 %v3554, %v3867
      %v3980 = vmul.f32 %v3555, %v3870
      %v3981 = vmul.f32 %v3556, %v3875
      %v3982 = vmul.f32 %v3557, %v3878
      %v3983 = vmul.f32 %v3558, %v3883
      %v3984 = vmul.f32 %v3559, %v3886
      %v3985 = vadd.f32 %v3953, %v3969
      %v3986 = vadd.f32 %v3954, %v3970
      %v3987 = vadd.f32 %v3955, %v3971
      %v3988 = vadd.f32 %v3956, %v3972
      %v3989 = vadd.f32 %v3957, %v3973
      %v3990 = vadd.f32 %v3958, %v3974
      %v3991 = vadd.f32 %v3959, %v3975
      %v3992 = vadd.f32 %v3960, %v3976
      %v3993 = vadd.f32 %v3961, %v3977
      %v3994 = vadd.f32 %v3962, %v3978
      %v3995 = vadd.f32 %v3963, %v3979
      %v3996 = vadd.f32 %v3964, %v3980
      %v3997 = vadd.f32 %v3965, %v3981
      %v3998 = vadd.f32 %v3966, %v3982
      %v3999 = vadd.f32 %v3967, %v3983
      %v4000 = vadd.f32 %v3968, %v3984
      %v4001 = vmul.f32 %v3560, %v3891
      %v4002 = vmul.f32 %v3561, %v3894
      %v4003 = vmul.f32 %v3562, %v3899
      %v4004 = vmul.f32 %v3563, %v3902
      %v4005 = vmul.f32 %v3564, %v3907
      %v4006 = vmul.f32 %v3565, %v3910
      %v4007 = vmul.f32 %v3566, %v3915
      %v4008 = vmul.f32 %v3567, %v3918
      %v4009 = vmul.f32 %v3568, %v3923
      %v4010 = vmul.f32 %v3569, %v3926
      %v4011 = vmul.f32 %v3570, %v3931
      %v4012 = vmul.f32 %v3571, %v3934
      %v4013 = vmul.f32 %v3572, %v3939
      %v4014 = vmul.f32 %v3573, %v3942
      %v4015 = vmul.f32 %v3574, %v3947
      %v4016 = vmul.f32 %v3575, %v3950
      %v4017 = vadd.f32 %v3985, %v4001
      %v4018 = vadd.f32 %v3986, %v4002
      %v4019 = vadd.f32 %v3987, %v4003
      %v4020 = vadd.f32 %v3988, %v4004
      %v4021 = vadd.f32 %v3989, %v4005
      %v4022 = vadd.f32 %v3990, %v4006
      %v4023 = vadd.f32 %v3991, %v4007
      %v4024 = vadd.f32 %v3992, %v4008
      %v4025 = vadd.f32 %v3993, %v4009
      %v4026 = vadd.f32 %v3994, %v4010
      %v4027 = vadd.f32 %v3995, %v4011
      %v4028 = vadd.f32 %v3996, %v4012
      %v4029 = vadd.f32 %v3997, %v4013
      %v4030 = vadd.f32 %v3998, %v4014
      %v4031 = vadd.f32 %v3999, %v4015
      %v4032 = vadd.f32 %v4000, %v4016
      %v4033 = vmul.f32 %v3763, %v3763
      %v4034 = vmul.f32 %v3766, %v3766
      %v4035 = vmul.f32 %v3771, %v3771
      %v4036 = vmul.f32 %v3774, %v3774
      %v4037 = vmul.f32 %v3779, %v3779
      %v4038 = vmul.f32 %v3782, %v3782
      %v4039 = vmul.f32 %v3787, %v3787
      %v4040 = vmul.f32 %v3790, %v3790
      %v4041 = vmul.f32 %v3795, %v3795
      %v4042 = vmul.f32 %v3798, %v3798
      %v4043 = vmul.f32 %v3803, %v3803
      %v4044 = vmul.f32 %v3806, %v3806
      %v4045 = vmul.f32 %v3811, %v3811
      %v4046 = vmul.f32 %v3814, %v3814
      %v4047 = vmul.f32 %v3819, %v3819
      %v4048 = vmul.f32 %v3822, %v3822
      %v4049 = vmul.f32 %v3827, %v3827
      %v4050 = vmul.f32 %v3830, %v3830
      %v4051 = vmul.f32 %v3835, %v3835
      %v4052 = vmul.f32 %v3838, %v3838
      %v4053 = vmul.f32 %v3843, %v3843
      %v4054 = vmul.f32 %v3846, %v3846
      %v4055 = vmul.f32 %v3851, %v3851
      %v4056 = vmul.f32 %v3854, %v3854
      %v4057 = vmul.f32 %v3859, %v3859
      %v4058 = vmul.f32 %v3862, %v3862
      %v4059 = vmul.f32 %v3867, %v3867
      %v4060 = vmul.f32 %v3870, %v3870
      %v4061 = vmul.f32 %v3875, %v3875
      %v4062 = vmul.f32 %v3878, %v3878
      %v4063 = vmul.f32 %v3883, %v3883
      %v4064 = vmul.f32 %v3886, %v3886
      %v4065 = vadd.f32 %v4033, %v4049
      %v4066 = vadd.f32 %v4034, %v4050
      %v4067 = vadd.f32 %v4035, %v4051
      %v4068 = vadd.f32 %v4036, %v4052
      %v4069 = vadd.f32 %v4037, %v4053
      %v4070 = vadd.f32 %v4038, %v4054
      %v4071 = vadd.f32 %v4039, %v4055
      %v4072 = vadd.f32 %v4040, %v4056
      %v4073 = vadd.f32 %v4041, %v4057
      %v4074 = vadd.f32 %v4042, %v4058
      %v4075 = vadd.f32 %v4043, %v4059
      %v4076 = vadd.f32 %v4044, %v4060
      %v4077 = vadd.f32 %v4045, %v4061
      %v4078 = vadd.f32 %v4046, %v4062
      %v4079 = vadd.f32 %v4047, %v4063
      %v4080 = vadd.f32 %v4048, %v4064
      %v4081 = vmul.f32 %v3891, %v3891
      %v4082 = vmul.f32 %v3894, %v3894
      %v4083 = vmul.f32 %v3899, %v3899
      %v4084 = vmul.f32 %v3902, %v3902
      %v4085 = vmul.f32 %v3907, %v3907
      %v4086 = vmul.f32 %v3910, %v3910
      %v4087 = vmul.f32 %v3915, %v3915
      %v4088 = vmul.f32 %v3918, %v3918
      %v4089 = vmul.f32 %v3923, %v3923
      %v4090 = vmul.f32 %v3926, %v3926
      %v4091 = vmul.f32 %v3931, %v3931
      %v4092 = vmul.f32 %v3934, %v3934
      %v4093 = vmul.f32 %v3939, %v3939
      %v4094 = vmul.f32 %v3942, %v3942
      %v4095 = vmul.f32 %v3947, %v3947
      %v4096 = vmul.f32 %v3950, %v3950
      %v4097 = vadd.f32 %v4065, %v4081
      %v4098 = vadd.f32 %v4066, %v4082
      %v4099 = vadd.f32 %v4067, %v4083
      %v4100 = vadd.f32 %v4068, %v4084
      %v4101 = vadd.f32 %v4069, %v4085
      %v4102 = vadd.f32 %v4070, %v4086
      %v4103 = vadd.f32 %v4071, %v4087
      %v4104 = vadd.f32 %v4072, %v4088
      %v4105 = vadd.f32 %v4073, %v4089
      %v4106 = vadd.f32 %v4074, %v4090
      %v4107 = vadd.f32 %v4075, %v4091
      %v4108 = vadd.f32 %v4076, %v4092
      %v4109 = vadd.f32 %v4077, %v4093
      %v4110 = vadd.f32 %v4078, %v4094
      %v4111 = vadd.f32 %v4079, %v4095
      %v4112 = vadd.f32 %v4080, %v4096
      %vm4113 = vcmp.ge.f32.partialorder %v4017, 0.0
      %vm4114 = vcmp.ge.f32.partialorder %v4018, 0.0
      %vm4115 = vcmp.ge.f32.partialorder %v4019, 0.0
      %vm4116 = vcmp.ge.f32.partialorder %v4020, 0.0
      %vm4117 = vcmp.ge.f32.partialorder %v4021, 0.0
      %vm4118 = vcmp.ge.f32.partialorder %v4022, 0.0
      %vm4119 = vcmp.ge.f32.partialorder %v4023, 0.0
      %vm4120 = vcmp.ge.f32.partialorder %v4024, 0.0
      %vm4121 = vcmp.ge.f32.partialorder %v4025, 0.0
      %vm4122 = vcmp.ge.f32.partialorder %v4026, 0.0
      %vm4123 = vcmp.ge.f32.partialorder %v4027, 0.0
      %vm4124 = vcmp.ge.f32.partialorder %v4028, 0.0
      %vm4125 = vcmp.ge.f32.partialorder %v4029, 0.0
      %vm4126 = vcmp.ge.f32.partialorder %v4030, 0.0
      %vm4127 = vcmp.ge.f32.partialorder %v4031, 0.0
      %vm4128 = vcmp.ge.f32.partialorder %v4032, 0.0
      %v4129 = vsel %vm4113, 1, 0
      %v4130 = vsel %vm4114, 1, 0
      %v4131 = vsel %vm4115, 1, 0
      %v4132 = vsel %vm4116, 1, 0
      %v4133 = vsel %vm4117, 1, 0
      %v4134 = vsel %vm4118, 1, 0
      %v4135 = vsel %vm4119, 1, 0
      %v4136 = vsel %vm4120, 1, 0
      %v4137 = vsel %vm4121, 1, 0
      %v4138 = vsel %vm4122, 1, 0
      %v4139 = vsel %vm4123, 1, 0
      %v4140 = vsel %vm4124, 1, 0
      %v4141 = vsel %vm4125, 1, 0
      %v4142 = vsel %vm4126, 1, 0
      %v4143 = vsel %vm4127, 1, 0
      %v4144 = vsel %vm4128, 1, 0
      %v4145 = vcvt.s32.f32 %v4129
      %v4146 = vcvt.s32.f32 %v4130
      %v4147 = vcvt.s32.f32 %v4131
      %v4148 = vcvt.s32.f32 %v4132
      %v4149 = vcvt.s32.f32 %v4133
      %v4150 = vcvt.s32.f32 %v4134
      %v4151 = vcvt.s32.f32 %v4135
      %v4152 = vcvt.s32.f32 %v4136
      %v4153 = vcvt.s32.f32 %v4137
      %v4154 = vcvt.s32.f32 %v4138
      %v4155 = vcvt.s32.f32 %v4139
      %v4156 = vcvt.s32.f32 %v4140
      %v4157 = vcvt.s32.f32 %v4141
      %v4158 = vcvt.s32.f32 %v4142
      %v4159 = vcvt.s32.f32 %v4143
      %v4160 = vcvt.s32.f32 %v4144
      %v4161 = vadd.f32 %v4097, 1e-06
      %v4162 = vadd.f32 %v4098, 1e-06
      %v4163 = vadd.f32 %v4099, 1e-06
      %v4164 = vadd.f32 %v4100, 1e-06
      %v4165 = vadd.f32 %v4101, 1e-06
      %v4166 = vadd.f32 %v4102, 1e-06
      %v4167 = vadd.f32 %v4103, 1e-06
      %v4168 = vadd.f32 %v4104, 1e-06
      %v4169 = vadd.f32 %v4105, 1e-06
      %v4170 = vadd.f32 %v4106, 1e-06
      %v4171 = vadd.f32 %v4107, 1e-06
      %v4172 = vadd.f32 %v4108, 1e-06
      %v4173 = vadd.f32 %v4109, 1e-06
      %v4174 = vadd.f32 %v4110, 1e-06
      %v4175 = vadd.f32 %v4111, 1e-06
      %v4176 = vadd.f32 %v4112, 1e-06
      %v4177 = vrcp.pop %v4161
      %v4178 = vmul.f32 %v4017, %v4177
      %v4179 = vrcp.pop %v4162
      %v4180 = vmul.f32 %v4018, %v4179
      %v4181 = vrcp.pop %v4163
      %v4182 = vmul.f32 %v4019, %v4181
      %v4183 = vrcp.pop %v4164
      %v4184 = vmul.f32 %v4020, %v4183
      %v4185 = vrcp.pop %v4165
      %v4186 = vmul.f32 %v4021, %v4185
      %v4187 = vrcp.pop %v4166
      %v4188 = vmul.f32 %v4022, %v4187
      %v4189 = vrcp.pop %v4167
      %v4190 = vmul.f32 %v4023, %v4189
      %v4191 = vrcp.pop %v4168
      %v4192 = vmul.f32 %v4024, %v4191
      %v4193 = vrcp.pop %v4169
      %v4194 = vmul.f32 %v4025, %v4193
      %v4195 = vrcp.pop %v4170
      %v4196 = vmul.f32 %v4026, %v4195
      %v4197 = vrcp.pop %v4171
      %v4198 = vmul.f32 %v4027, %v4197
      %v4199 = vrcp.pop %v4172
      %v4200 = vmul.f32 %v4028, %v4199
      %v4201 = vrcp.pop %v4173
      %v4202 = vmul.f32 %v4029, %v4201
      %v4203 = vrcp.pop %v4174
      %v4204 = vmul.f32 %v4030, %v4203
      %v4205 = vrcp.pop %v4175
      %v4206 = vmul.f32 %v4031, %v4205
      %v4207 = vrcp.pop %v4176
      %v4208 = vmul.f32 %v4032, %v4207
      %v4209 = vmul.f32 %v3528, 0.2
      %v4210 = vmul.f32 %v3529, 0.2
      %v4211 = vmul.f32 %v3530, 0.2
      %v4212 = vmul.f32 %v3531, 0.2
      %v4213 = vmul.f32 %v3532, 0.2
      %v4214 = vmul.f32 %v3533, 0.2
      %v4215 = vmul.f32 %v3534, 0.2
      %v4216 = vmul.f32 %v3535, 0.2
      %v4217 = vmul.f32 %v3536, 0.2
      %v4218 = vmul.f32 %v3537, 0.2
      %v4219 = vmul.f32 %v3538, 0.2
      %v4220 = vmul.f32 %v3539, 0.2
      %v4221 = vmul.f32 %v3540, 0.2
      %v4222 = vmul.f32 %v3541, 0.2
      %v4223 = vmul.f32 %v3542, 0.2
      %v4224 = vmul.f32 %v3543, 0.2
      %v4225 = vmul.f32 %v4145, %v3528
      %v4226 = vmul.f32 %v4146, %v3529
      %v4227 = vmul.f32 %v4147, %v3530
      %v4228 = vmul.f32 %v4148, %v3531
      %v4229 = vmul.f32 %v4149, %v3532
      %v4230 = vmul.f32 %v4150, %v3533
      %v4231 = vmul.f32 %v4151, %v3534
      %v4232 = vmul.f32 %v4152, %v3535
      %v4233 = vmul.f32 %v4153, %v3536
      %v4234 = vmul.f32 %v4154, %v3537
      %v4235 = vmul.f32 %v4155, %v3538
      %v4236 = vmul.f32 %v4156, %v3539
      %v4237 = vmul.f32 %v4157, %v3540
      %v4238 = vmul.f32 %v4158, %v3541
      %v4239 = vmul.f32 %v4159, %v3542
      %v4240 = vmul.f32 %v4160, %v3543
      %v4241 = vsub.f32 1.0, %v4145
      %v4242 = vsub.f32 1.0, %v4146
      %v4243 = vsub.f32 1.0, %v4147
      %v4244 = vsub.f32 1.0, %v4148
      %v4245 = vsub.f32 1.0, %v4149
      %v4246 = vsub.f32 1.0, %v4150
      %v4247 = vsub.f32 1.0, %v4151
      %v4248 = vsub.f32 1.0, %v4152
      %v4249 = vsub.f32 1.0, %v4153
      %v4250 = vsub.f32 1.0, %v4154
      %v4251 = vsub.f32 1.0, %v4155
      %v4252 = vsub.f32 1.0, %v4156
      %v4253 = vsub.f32 1.0, %v4157
      %v4254 = vsub.f32 1.0, %v4158
      %v4255 = vsub.f32 1.0, %v4159
      %v4256 = vsub.f32 1.0, %v4160
      %v4257 = vmul.f32 %v4178, %v3763
      %v4258 = vmul.f32 %v4180, %v3766
      %v4259 = vmul.f32 %v4182, %v3771
      %v4260 = vmul.f32 %v4184, %v3774
      %v4261 = vmul.f32 %v4186, %v3779
      %v4262 = vmul.f32 %v4188, %v3782
      %v4263 = vmul.f32 %v4190, %v3787
      %v4264 = vmul.f32 %v4192, %v3790
      %v4265 = vmul.f32 %v4194, %v3795
      %v4266 = vmul.f32 %v4196, %v3798
      %v4267 = vmul.f32 %v4198, %v3803
      %v4268 = vmul.f32 %v4200, %v3806
      %v4269 = vmul.f32 %v4202, %v3811
      %v4270 = vmul.f32 %v4204, %v3814
      %v4271 = vmul.f32 %v4206, %v3819
      %v4272 = vmul.f32 %v4208, %v3822
      %v4273 = vsub.f32 %v3528, %v4257
      %v4274 = vsub.f32 %v3529, %v4258
      %v4275 = vsub.f32 %v3530, %v4259
      %v4276 = vsub.f32 %v3531, %v4260
      %v4277 = vsub.f32 %v3532, %v4261
      %v4278 = vsub.f32 %v3533, %v4262
      %v4279 = vsub.f32 %v3534, %v4263
      %v4280 = vsub.f32 %v3535, %v4264
      %v4281 = vsub.f32 %v3536, %v4265
      %v4282 = vsub.f32 %v3537, %v4266
      %v4283 = vsub.f32 %v3538, %v4267
      %v4284 = vsub.f32 %v3539, %v4268
      %v4285 = vsub.f32 %v3540, %v4269
      %v4286 = vsub.f32 %v3541, %v4270
      %v4287 = vsub.f32 %v3542, %v4271
      %v4288 = vsub.f32 %v3543, %v4272
      %v4289 = vmul.f32 %v4241, %v4273
      %v4290 = vmul.f32 %v4242, %v4274
      %v4291 = vmul.f32 %v4243, %v4275
      %v4292 = vmul.f32 %v4244, %v4276
      %v4293 = vmul.f32 %v4245, %v4277
      %v4294 = vmul.f32 %v4246, %v4278
      %v4295 = vmul.f32 %v4247, %v4279
      %v4296 = vmul.f32 %v4248, %v4280
      %v4297 = vmul.f32 %v4249, %v4281
      %v4298 = vmul.f32 %v4250, %v4282
      %v4299 = vmul.f32 %v4251, %v4283
      %v4300 = vmul.f32 %v4252, %v4284
      %v4301 = vmul.f32 %v4253, %v4285
      %v4302 = vmul.f32 %v4254, %v4286
      %v4303 = vmul.f32 %v4255, %v4287
      %v4304 = vmul.f32 %v4256, %v4288
      %v4305 = vadd.f32 %v4225, %v4289
      %v4306 = vadd.f32 %v4226, %v4290
      %v4307 = vadd.f32 %v4227, %v4291
      %v4308 = vadd.f32 %v4228, %v4292
      %v4309 = vadd.f32 %v4229, %v4293
      %v4310 = vadd.f32 %v4230, %v4294
      %v4311 = vadd.f32 %v4231, %v4295
      %v4312 = vadd.f32 %v4232, %v4296
      %v4313 = vadd.f32 %v4233, %v4297
      %v4314 = vadd.f32 %v4234, %v4298
      %v4315 = vadd.f32 %v4235, %v4299
      %v4316 = vadd.f32 %v4236, %v4300
      %v4317 = vadd.f32 %v4237, %v4301
      %v4318 = vadd.f32 %v4238, %v4302
      %v4319 = vadd.f32 %v4239, %v4303
      %v4320 = vadd.f32 %v4240, %v4304
      %v4321 = vmul.f32 %v4305, 0.8
      %v4322 = vmul.f32 %v4306, 0.8
      %v4323 = vmul.f32 %v4307, 0.8
      %v4324 = vmul.f32 %v4308, 0.8
      %v4325 = vmul.f32 %v4309, 0.8
      %v4326 = vmul.f32 %v4310, 0.8
      %v4327 = vmul.f32 %v4311, 0.8
      %v4328 = vmul.f32 %v4312, 0.8
      %v4329 = vmul.f32 %v4313, 0.8
      %v4330 = vmul.f32 %v4314, 0.8
      %v4331 = vmul.f32 %v4315, 0.8
      %v4332 = vmul.f32 %v4316, 0.8
      %v4333 = vmul.f32 %v4317, 0.8
      %v4334 = vmul.f32 %v4318, 0.8
      %v4335 = vmul.f32 %v4319, 0.8
      %v4336 = vmul.f32 %v4320, 0.8
      %v4337 = vadd.f32 %v4209, %v4321
      %v4338 = vadd.f32 %v4210, %v4322
      %v4339 = vadd.f32 %v4211, %v4323
      %v4340 = vadd.f32 %v4212, %v4324
      %v4341 = vadd.f32 %v4213, %v4325
      %v4342 = vadd.f32 %v4214, %v4326
      %v4343 = vadd.f32 %v4215, %v4327
      %v4344 = vadd.f32 %v4216, %v4328
      %v4345 = vadd.f32 %v4217, %v4329
      %v4346 = vadd.f32 %v4218, %v4330
      %v4347 = vadd.f32 %v4219, %v4331
      %v4348 = vadd.f32 %v4220, %v4332
      %v4349 = vadd.f32 %v4221, %v4333
      %v4350 = vadd.f32 %v4222, %v4334
      %v4351 = vadd.f32 %v4223, %v4335
      %v4352 = vadd.f32 %v4224, %v4336
      %v4353 = vmul.f32 %v3544, 0.2
      %v4354 = vmul.f32 %v3545, 0.2
      %v4355 = vmul.f32 %v3546, 0.2
      %v4356 = vmul.f32 %v3547, 0.2
      %v4357 = vmul.f32 %v3548, 0.2
      %v4358 = vmul.f32 %v3549, 0.2
      %v4359 = vmul.f32 %v3550, 0.2
      %v4360 = vmul.f32 %v3551, 0.2
      %v4361 = vmul.f32 %v3552, 0.2
      %v4362 = vmul.f32 %v3553, 0.2
      %v4363 = vmul.f32 %v3554, 0.2
      %v4364 = vmul.f32 %v3555, 0.2
      %v4365 = vmul.f32 %v3556, 0.2
      %v4366 = vmul.f32 %v3557, 0.2
      %v4367 = vmul.f32 %v3558, 0.2
      %v4368 = vmul.f32 %v3559, 0.2
      %v4369 = vmul.f32 %v4145, %v3544
      %v4370 = vmul.f32 %v4146, %v3545
      %v4371 = vmul.f32 %v4147, %v3546
      %v4372 = vmul.f32 %v4148, %v3547
      %v4373 = vmul.f32 %v4149, %v3548
      %v4374 = vmul.f32 %v4150, %v3549
      %v4375 = vmul.f32 %v4151, %v3550
      %v4376 = vmul.f32 %v4152, %v3551
      %v4377 = vmul.f32 %v4153, %v3552
      %v4378 = vmul.f32 %v4154, %v3553
      %v4379 = vmul.f32 %v4155, %v3554
      %v4380 = vmul.f32 %v4156, %v3555
      %v4381 = vmul.f32 %v4157, %v3556
      %v4382 = vmul.f32 %v4158, %v3557
      %v4383 = vmul.f32 %v4159, %v3558
      %v4384 = vmul.f32 %v4160, %v3559
      %v4385 = vmul.f32 %v4178, %v3827
      %v4386 = vmul.f32 %v4180, %v3830
      %v4387 = vmul.f32 %v4182, %v3835
      %v4388 = vmul.f32 %v4184, %v3838
      %v4389 = vmul.f32 %v4186, %v3843
      %v4390 = vmul.f32 %v4188, %v3846
      %v4391 = vmul.f32 %v4190, %v3851
      %v4392 = vmul.f32 %v4192, %v3854
      %v4393 = vmul.f32 %v4194, %v3859
      %v4394 = vmul.f32 %v4196, %v3862
      %v4395 = vmul.f32 %v4198, %v3867
      %v4396 = vmul.f32 %v4200, %v3870
      %v4397 = vmul.f32 %v4202, %v3875
      %v4398 = vmul.f32 %v4204, %v3878
      %v4399 = vmul.f32 %v4206, %v3883
      %v4400 = vmul.f32 %v4208, %v3886
      %v4401 = vsub.f32 %v3544, %v4385
      %v4402 = vsub.f32 %v3545, %v4386
      %v4403 = vsub.f32 %v3546, %v4387
      %v4404 = vsub.f32 %v3547, %v4388
      %v4405 = vsub.f32 %v3548, %v4389
      %v4406 = vsub.f32 %v3549, %v4390
      %v4407 = vsub.f32 %v3550, %v4391
      %v4408 = vsub.f32 %v3551, %v4392
      %v4409 = vsub.f32 %v3552, %v4393
      %v4410 = vsub.f32 %v3553, %v4394
      %v4411 = vsub.f32 %v3554, %v4395
      %v4412 = vsub.f32 %v3555, %v4396
      %v4413 = vsub.f32 %v3556, %v4397
      %v4414 = vsub.f32 %v3557, %v4398
      %v4415 = vsub.f32 %v3558, %v4399
      %v4416 = vsub.f32 %v3559, %v4400
      %v4417 = vmul.f32 %v4241, %v4401
      %v4418 = vmul.f32 %v4242, %v4402
      %v4419 = vmul.f32 %v4243, %v4403
      %v4420 = vmul.f32 %v4244, %v4404
      %v4421 = vmul.f32 %v4245, %v4405
      %v4422 = vmul.f32 %v4246, %v4406
      %v4423 = vmul.f32 %v4247, %v4407
      %v4424 = vmul.f32 %v4248, %v4408
      %v4425 = vmul.f32 %v4249, %v4409
      %v4426 = vmul.f32 %v4250, %v4410
      %v4427 = vmul.f32 %v4251, %v4411
      %v4428 = vmul.f32 %v4252, %v4412
      %v4429 = vmul.f32 %v4253, %v4413
      %v4430 = vmul.f32 %v4254, %v4414
      %v4431 = vmul.f32 %v4255, %v4415
      %v4432 = vmul.f32 %v4256, %v4416
      %v4433 = vadd.f32 %v4369, %v4417
      %v4434 = vadd.f32 %v4370, %v4418
      %v4435 = vadd.f32 %v4371, %v4419
      %v4436 = vadd.f32 %v4372, %v4420
      %v4437 = vadd.f32 %v4373, %v4421
      %v4438 = vadd.f32 %v4374, %v4422
      %v4439 = vadd.f32 %v4375, %v4423
      %v4440 = vadd.f32 %v4376, %v4424
      %v4441 = vadd.f32 %v4377, %v4425
      %v4442 = vadd.f32 %v4378, %v4426
      %v4443 = vadd.f32 %v4379, %v4427
      %v4444 = vadd.f32 %v4380, %v4428
      %v4445 = vadd.f32 %v4381, %v4429
      %v4446 = vadd.f32 %v4382, %v4430
      %v4447 = vadd.f32 %v4383, %v4431
      %v4448 = vadd.f32 %v4384, %v4432
      %v4449 = vmul.f32 %v4433, 0.8
      %v4450 = vmul.f32 %v4434, 0.8
      %v4451 = vmul.f32 %v4435, 0.8
      %v4452 = vmul.f32 %v4436, 0.8
      %v4453 = vmul.f32 %v4437, 0.8
      %v4454 = vmul.f32 %v4438, 0.8
      %v4455 = vmul.f32 %v4439, 0.8
      %v4456 = vmul.f32 %v4440, 0.8
      %v4457 = vmul.f32 %v4441, 0.8
      %v4458 = vmul.f32 %v4442, 0.8
      %v4459 = vmul.f32 %v4443, 0.8
      %v4460 = vmul.f32 %v4444, 0.8
      %v4461 = vmul.f32 %v4445, 0.8
      %v4462 = vmul.f32 %v4446, 0.8
      %v4463 = vmul.f32 %v4447, 0.8
      %v4464 = vmul.f32 %v4448, 0.8
      %v4465 = vadd.f32 %v4353, %v4449
      %v4466 = vadd.f32 %v4354, %v4450
      %v4467 = vadd.f32 %v4355, %v4451
      %v4468 = vadd.f32 %v4356, %v4452
      %v4469 = vadd.f32 %v4357, %v4453
      %v4470 = vadd.f32 %v4358, %v4454
      %v4471 = vadd.f32 %v4359, %v4455
      %v4472 = vadd.f32 %v4360, %v4456
      %v4473 = vadd.f32 %v4361, %v4457
      %v4474 = vadd.f32 %v4362, %v4458
      %v4475 = vadd.f32 %v4363, %v4459
      %v4476 = vadd.f32 %v4364, %v4460
      %v4477 = vadd.f32 %v4365, %v4461
      %v4478 = vadd.f32 %v4366, %v4462
      %v4479 = vadd.f32 %v4367, %v4463
      %v4480 = vadd.f32 %v4368, %v4464
      %v4481 = vmul.f32 %v3560, 0.2
      %v4482 = vmul.f32 %v3561, 0.2
      %v4483 = vmul.f32 %v3562, 0.2
      %v4484 = vmul.f32 %v3563, 0.2
      %v4485 = vmul.f32 %v3564, 0.2
      %v4486 = vmul.f32 %v3565, 0.2
      %v4487 = vmul.f32 %v3566, 0.2
      %v4488 = vmul.f32 %v3567, 0.2
      %v4489 = vmul.f32 %v3568, 0.2
      %v4490 = vmul.f32 %v3569, 0.2
      %v4491 = vmul.f32 %v3570, 0.2
      %v4492 = vmul.f32 %v3571, 0.2
      %v4493 = vmul.f32 %v3572, 0.2
      %v4494 = vmul.f32 %v3573, 0.2
      %v4495 = vmul.f32 %v3574, 0.2
      %v4496 = vmul.f32 %v3575, 0.2
      %v4497 = vmul.f32 %v4145, %v3560
      %v4498 = vmul.f32 %v4146, %v3561
      %v4499 = vmul.f32 %v4147, %v3562
      %v4500 = vmul.f32 %v4148, %v3563
      %v4501 = vmul.f32 %v4149, %v3564
      %v4502 = vmul.f32 %v4150, %v3565
      %v4503 = vmul.f32 %v4151, %v3566
      %v4504 = vmul.f32 %v4152, %v3567
      %v4505 = vmul.f32 %v4153, %v3568
      %v4506 = vmul.f32 %v4154, %v3569
      %v4507 = vmul.f32 %v4155, %v3570
      %v4508 = vmul.f32 %v4156, %v3571
      %v4509 = vmul.f32 %v4157, %v3572
      %v4510 = vmul.f32 %v4158, %v3573
      %v4511 = vmul.f32 %v4159, %v3574
      %v4512 = vmul.f32 %v4160, %v3575
      %v4513 = vmul.f32 %v4178, %v3891
      %v4514 = vmul.f32 %v4180, %v3894
      %v4515 = vmul.f32 %v4182, %v3899
      %v4516 = vmul.f32 %v4184, %v3902
      %v4517 = vmul.f32 %v4186, %v3907
      %v4518 = vmul.f32 %v4188, %v3910
      %v4519 = vmul.f32 %v4190, %v3915
      %v4520 = vmul.f32 %v4192, %v3918
      %v4521 = vmul.f32 %v4194, %v3923
      %v4522 = vmul.f32 %v4196, %v3926
      %v4523 = vmul.f32 %v4198, %v3931
      %v4524 = vmul.f32 %v4200, %v3934
      %v4525 = vmul.f32 %v4202, %v3939
      %v4526 = vmul.f32 %v4204, %v3942
      %v4527 = vmul.f32 %v4206, %v3947
      %v4528 = vmul.f32 %v4208, %v3950
      %v4529 = vsub.f32 %v3560, %v4513
      %v4530 = vsub.f32 %v3561, %v4514
      %v4531 = vsub.f32 %v3562, %v4515
      %v4532 = vsub.f32 %v3563, %v4516
      %v4533 = vsub.f32 %v3564, %v4517
      %v4534 = vsub.f32 %v3565, %v4518
      %v4535 = vsub.f32 %v3566, %v4519
      %v4536 = vsub.f32 %v3567, %v4520
      %v4537 = vsub.f32 %v3568, %v4521
      %v4538 = vsub.f32 %v3569, %v4522
      %v4539 = vsub.f32 %v3570, %v4523
      %v4540 = vsub.f32 %v3571, %v4524
      %v4541 = vsub.f32 %v3572, %v4525
      %v4542 = vsub.f32 %v3573, %v4526
      %v4543 = vsub.f32 %v3574, %v4527
      %v4544 = vsub.f32 %v3575, %v4528
      %v4545 = vmul.f32 %v4241, %v4529
      %v4546 = vmul.f32 %v4242, %v4530
      %v4547 = vmul.f32 %v4243, %v4531
      %v4548 = vmul.f32 %v4244, %v4532
      %v4549 = vmul.f32 %v4245, %v4533
      %v4550 = vmul.f32 %v4246, %v4534
      %v4551 = vmul.f32 %v4247, %v4535
      %v4552 = vmul.f32 %v4248, %v4536
      %v4553 = vmul.f32 %v4249, %v4537
      %v4554 = vmul.f32 %v4250, %v4538
      %v4555 = vmul.f32 %v4251, %v4539
      %v4556 = vmul.f32 %v4252, %v4540
      %v4557 = vmul.f32 %v4253, %v4541
      %v4558 = vmul.f32 %v4254, %v4542
      %v4559 = vmul.f32 %v4255, %v4543
      %v4560 = vmul.f32 %v4256, %v4544
      %v4561 = vadd.f32 %v4497, %v4545
      %v4562 = vadd.f32 %v4498, %v4546
      %v4563 = vadd.f32 %v4499, %v4547
      %v4564 = vadd.f32 %v4500, %v4548
      %v4565 = vadd.f32 %v4501, %v4549
      %v4566 = vadd.f32 %v4502, %v4550
      %v4567 = vadd.f32 %v4503, %v4551
      %v4568 = vadd.f32 %v4504, %v4552
      %v4569 = vadd.f32 %v4505, %v4553
      %v4570 = vadd.f32 %v4506, %v4554
      %v4571 = vadd.f32 %v4507, %v4555
      %v4572 = vadd.f32 %v4508, %v4556
      %v4573 = vadd.f32 %v4509, %v4557
      %v4574 = vadd.f32 %v4510, %v4558
      %v4575 = vadd.f32 %v4511, %v4559
      %v4576 = vadd.f32 %v4512, %v4560
      %v4577 = vmul.f32 %v4561, 0.8
      %v4578 = vmul.f32 %v4562, 0.8
      %v4579 = vmul.f32 %v4563, 0.8
      %v4580 = vmul.f32 %v4564, 0.8
      %v4581 = vmul.f32 %v4565, 0.8
      %v4582 = vmul.f32 %v4566, 0.8
      %v4583 = vmul.f32 %v4567, 0.8
      %v4584 = vmul.f32 %v4568, 0.8
      %v4585 = vmul.f32 %v4569, 0.8
      %v4586 = vmul.f32 %v4570, 0.8
      %v4587 = vmul.f32 %v4571, 0.8
      %v4588 = vmul.f32 %v4572, 0.8
      %v4589 = vmul.f32 %v4573, 0.8
      %v4590 = vmul.f32 %v4574, 0.8
      %v4591 = vmul.f32 %v4575, 0.8
      %v4592 = vmul.f32 %v4576, 0.8
      %v4593 = vadd.f32 %v4481, %v4577
      %v4594 = vadd.f32 %v4482, %v4578
      %v4595 = vadd.f32 %v4483, %v4579
      %v4596 = vadd.f32 %v4484, %v4580
      %v4597 = vadd.f32 %v4485, %v4581
      %v4598 = vadd.f32 %v4486, %v4582
      %v4599 = vadd.f32 %v4487, %v4583
      %v4600 = vadd.f32 %v4488, %v4584
      %v4601 = vadd.f32 %v4489, %v4585
      %v4602 = vadd.f32 %v4490, %v4586
      %v4603 = vadd.f32 %v4491, %v4587
      %v4604 = vadd.f32 %v4492, %v4588
      %v4605 = vadd.f32 %v4493, %v4589
      %v4606 = vadd.f32 %v4494, %v4590
      %v4607 = vadd.f32 %v4495, %v4591
      %v4608 = vadd.f32 %v4496, %v4592
      %v4609 = vld [vmem:[%s1098] sm:$0xf]
      %v4610 = vld [vmem:[%s1098 + $0x4] sm:$0xf]
      %v4611 = vpack.c.bf16 %v3611, %v3610
      %v4612 = vpack.c.bf16 %v3613, %v3612
      %v4613 = vpack.c.bf16 %v3615, %v3614
      %v4614 = vpack.c.bf16 %v3617, %v3616
      %v4615 = vpack.c.bf16 %v3619, %v3618
      %v4616 = vpack.c.bf16 %v3621, %v3620
      %v4617 = vpack.c.bf16 %v3623, %v3622
      %v4618 = vpack.c.bf16 %v3625, %v3624
      %v4619 = vld [vmem:[%s1101] sm:$0x1]
      %v4621 = vlaneseq
      %v4622 = vshrl.u32 %v4621, 7
      %v4623 = vsub.s32 0, %v4622
      %v4624 = vrot.slane %v4619, %v4623
      %v4628 = vunpack.c.l.b16 %v4609
      %v4629 = vunpack.c.l.b16 %v4610
      %v4630 = vpack.c.b16 %v4629, %v4628
      %v4633 = vsel %vm2268, %v4611, 0
      %v4636 = vsel %vm2268, %v4612, 0
      %v4639 = vsel %vm2268, %v4613, 0
      %v4642 = vsel %vm2268, %v4614, 0
      %v4645 = vsel %vm2268, %v4615, 0
      %v4648 = vsel %vm2268, %v4616, 0
      %v4651 = vsel %vm2268, %v4617, 0
      %v4654 = vsel %vm2268, %v4618, 0
      %4656 = vmatprep.subr.bf16.mxu0 0
      %4657 = vmatpush1.bf16.msra.mxu0 %v4630
      %4658 = vmatprep.subr.bf16.mxu0 0
      %4659 = vmatpush1.bf16.msra.mxu0 0
      %4660 = vmatprep.subr.bf16.mxu0 0
      %4661 = vmatpush1.bf16.msra.mxu0 0
      %4662 = vmatprep.subr.bf16.mxu0 0
      %4663 = vmatpush1.bf16.msra.mxu0 0
      %4664 = vmatprep.subr.bf16.mxu0 0
      %4665 = vmatpush1.bf16.msra.mxu0 0
      %4666 = vmatprep.subr.bf16.mxu0 0
      %4667 = vmatpush1.bf16.msra.mxu0 0
      %4668 = vmatprep.subr.bf16.mxu0 0
      %4669 = vmatpush1.bf16.msra.mxu0 0
      %4670 = vmatprep.subr.bf16.mxu0 0
      %4671 = vmatpush1.bf16.msra.mxu0 0
      %4672 = vmatprep.subr.bf16.mxu0 0
      %4673 = vmatpush1.bf16.msra.mxu0 0
      %4674 = vmatprep.subr.bf16.mxu0 0
      %4675 = vmatpush1.bf16.msra.mxu0 0
      %4676 = vmatprep.subr.bf16.mxu0 0
      %4677 = vmatpush1.bf16.msra.mxu0 0
      %4678 = vmatprep.subr.bf16.mxu0 0
      %4679 = vmatpush1.bf16.msra.mxu0 0
      %4680 = vmatprep.subr.bf16.mxu0 0
      %4681 = vmatpush1.bf16.msra.mxu0 0
      %4682 = vmatprep.subr.bf16.mxu0 0
      %4683 = vmatpush1.bf16.msra.mxu0 0
      %4684 = vmatprep.subr.bf16.mxu0 0
      %4685 = vmatpush1.bf16.msra.mxu0 0
      %4686 = vmatprep.subr.bf16.mxu0 0
      %4687 = vmatpush1.bf16.msra.mxu0 0
      %4688 = vmatprep.mubr.bf16.mxu0 0
      %4689 = vmatmul.mubr.bf16.gmra.mrb[0].mxu0 %v4633
      %v4690 = vpop.f32.mrb[0].mxu0
      %v4691 = vadd.f32 %v4624, %v4690
      %v4692 = vpop.f32.mrb[0].mxu0
      %v4693 = vpop.f32.mrb[0].mxu0
      %v4694 = vadd.f32 %v4624, %v4693
      %v4695 = vpop.f32.mrb[0].mxu0
      %4696 = vmatprep.mubr.bf16.mxu0 0
      %4697 = vmatmul.mubr.bf16.gmra.mrb[0].mxu0 %v4636
      %v4698 = vpop.f32.mrb[0].mxu0
      %v4699 = vadd.f32 %v4624, %v4698
      %v4700 = vpop.f32.mrb[0].mxu0
      %v4701 = vpop.f32.mrb[0].mxu0
      %v4702 = vadd.f32 %v4624, %v4701
      %v4703 = vpop.f32.mrb[0].mxu0
      %4704 = vmatprep.mubr.bf16.mxu0 0
      %4705 = vmatmul.mubr.bf16.gmra.mrb[0].mxu0 %v4639
      %v4706 = vpop.f32.mrb[0].mxu0
      %v4707 = vadd.f32 %v4624, %v4706
      %v4708 = vpop.f32.mrb[0].mxu0
      %v4709 = vpop.f32.mrb[0].mxu0
      %v4710 = vadd.f32 %v4624, %v4709
      %v4711 = vpop.f32.mrb[0].mxu0
      %4712 = vmatprep.mubr.bf16.mxu0 0
      %4713 = vmatmul.mubr.bf16.gmra.mrb[0].mxu0 %v4642
      %v4714 = vpop.f32.mrb[0].mxu0
      %v4715 = vadd.f32 %v4624, %v4714
      %v4716 = vpop.f32.mrb[0].mxu0
      %v4717 = vpop.f32.mrb[0].mxu0
      %v4718 = vadd.f32 %v4624, %v4717
      %v4719 = vpop.f32.mrb[0].mxu0
      %4720 = vmatprep.mubr.bf16.mxu0 0
      %4721 = vmatmul.mubr.bf16.gmra.mrb[0].mxu0 %v4645
      %v4722 = vpop.f32.mrb[0].mxu0
      %v4723 = vadd.f32 %v4624, %v4722
      %v4724 = vpop.f32.mrb[0].mxu0
      %v4725 = vpop.f32.mrb[0].mxu0
      %v4726 = vadd.f32 %v4624, %v4725
      %v4727 = vpop.f32.mrb[0].mxu0
      %4728 = vmatprep.mubr.bf16.mxu0 0
      %4729 = vmatmul.mubr.bf16.gmra.mrb[0].mxu0 %v4648
      %v4730 = vpop.f32.mrb[0].mxu0
      %v4731 = vadd.f32 %v4624, %v4730
      %v4732 = vpop.f32.mrb[0].mxu0
      %v4733 = vpop.f32.mrb[0].mxu0
      %v4734 = vadd.f32 %v4624, %v4733
      %v4735 = vpop.f32.mrb[0].mxu0
      %4736 = vmatprep.mubr.bf16.mxu0 0
      %4737 = vmatmul.mubr.bf16.gmra.mrb[0].mxu0 %v4651
      %v4738 = vpop.f32.mrb[0].mxu0
      %v4739 = vadd.f32 %v4624, %v4738
      %v4740 = vpop.f32.mrb[0].mxu0
      %v4741 = vpop.f32.mrb[0].mxu0
      %v4742 = vadd.f32 %v4624, %v4741
      %v4743 = vpop.f32.mrb[0].mxu0
      %4744 = vmatprep.mubr.bf16.mxu0 0
      %4745 = vmatmul.mubr.bf16.gmra.mrb[0].mxu0 %v4654
      %v4746 = vpop.f32.mrb[0].mxu0
      %v4747 = vadd.f32 %v4624, %v4746
      %v4748 = vpop.f32.mrb[0].mxu0
      %v4749 = vpop.f32.mrb[0].mxu0
      %v4750 = vadd.f32 %v4624, %v4749
      %v4751 = vpop.f32.mrb[0].mxu0
      %4752 = vdwg.mxu0
      %v4753 = vmul.f32 %v1902, %v4691
      %v4754 = vmul.f32 %v1905, %v4694
      %v4755 = vmul.f32 %v1910, %v4699
      %v4756 = vmul.f32 %v1913, %v4702
      %v4757 = vmul.f32 %v1918, %v4707
      %v4758 = vmul.f32 %v1921, %v4710
      %v4759 = vmul.f32 %v1926, %v4715
      %v4760 = vmul.f32 %v1929, %v4718
      %v4761 = vmul.f32 %v1934, %v4723
      %v4762 = vmul.f32 %v1937, %v4726
      %v4763 = vmul.f32 %v1942, %v4731
      %v4764 = vmul.f32 %v1945, %v4734
      %v4765 = vmul.f32 %v1950, %v4739
      %v4766 = vmul.f32 %v1953, %v4742
      %v4767 = vmul.f32 %v1958, %v4747
      %v4768 = vmul.f32 %v1961, %v4750
      %v4769 = vld [vmem:[%s1106] sm:$0xf]
      %v4770 = vld [vmem:[%s1106 + $0x4] sm:$0xf]
      %v4771 = vld [vmem:[%s1106 + $0x8] sm:$0xf]
      %v4772 = vld [vmem:[%s1106 + $0xc] sm:$0xf]
      %v4773 = vpack.c.bf16 %v1905, %v1902
      %v4774 = vpack.c.bf16 %v1913, %v1910
      %v4775 = vpack.c.bf16 %v1921, %v1918
      %v4776 = vpack.c.bf16 %v1929, %v1926
      %v4777 = vpack.c.bf16 %v1937, %v1934
      %v4778 = vpack.c.bf16 %v1945, %v1942
      %v4779 = vpack.c.bf16 %v1953, %v1950
      %v4780 = vpack.c.bf16 %v1961, %v1958
      %v4781 = vld [vmem:[%s1109] sm:$0x1]
      %v4783 = vlaneseq
      %v4784 = vshrl.u32 %v4783, 7
      %v4785 = vsub.s32 0, %v4784
      %v4786 = vrot.slane %v4781, %v4785
      %v4792 = vunpack.c.l.b16 %v4769
      %v4793 = vunpack.c.l.b16 %v4770
      %v4794 = vunpack.c.l.b16 %v4771
      %v4795 = vunpack.c.l.b16 %v4772
      %v4796 = vpack.c.b16 %v4793, %v4792
      %v4797 = vpack.c.b16 %v4795, %v4794
      %v4801 = vsel %vm2842, %v4773, 0
      %v4804 = vsel %vm2842, %v4774, 0
      %v4807 = vsel %vm2842, %v4775, 0
      %v4810 = vsel %vm2842, %v4776, 0
      %v4813 = vsel %vm2842, %v4777, 0
      %v4816 = vsel %vm2842, %v4778, 0
      %v4819 = vsel %vm2842, %v4779, 0
      %v4822 = vsel %vm2842, %v4780, 0
      %4824 = vmatprep.subr.bf16.mxu0 0
      %4825 = vmatpush1.bf16.msra.mxu0 %v4796
      %4826 = vmatprep.subr.bf16.mxu0 0
      %4827 = vmatpush1.bf16.msra.mxu0 %v4797
      %4828 = vmatprep.subr.bf16.mxu0 0
      %4829 = vmatpush1.bf16.msra.mxu0 0
      %4830 = vmatprep.subr.bf16.mxu0 0
      %4831 = vmatpush1.bf16.msra.mxu0 0
      %4832 = vmatprep.subr.bf16.mxu0 0
      %4833 = vmatpush1.bf16.msra.mxu0 0
      %4834 = vmatprep.subr.bf16.mxu0 0
      %4835 = vmatpush1.bf16.msra.mxu0 0
      %4836 = vmatprep.subr.bf16.mxu0 0
      %4837 = vmatpush1.bf16.msra.mxu0 0
      %4838 = vmatprep.subr.bf16.mxu0 0
      %4839 = vmatpush1.bf16.msra.mxu0 0
      %4840 = vmatprep.subr.bf16.mxu0 0
      %4841 = vmatpush1.bf16.msra.mxu0 0
      %4842 = vmatprep.subr.bf16.mxu0 0
      %4843 = vmatpush1.bf16.msra.mxu0 0
      %4844 = vmatprep.subr.bf16.mxu0 0
      %4845 = vmatpush1.bf16.msra.mxu0 0
      %4846 = vmatprep.subr.bf16.mxu0 0
      %4847 = vmatpush1.bf16.msra.mxu0 0
      %4848 = vmatprep.subr.bf16.mxu0 0
      %4849 = vmatpush1.bf16.msra.mxu0 0
      %4850 = vmatprep.subr.bf16.mxu0 0
      %4851 = vmatpush1.bf16.msra.mxu0 0
      %4852 = vmatprep.subr.bf16.mxu0 0
      %4853 = vmatpush1.bf16.msra.mxu0 0
      %4854 = vmatprep.subr.bf16.mxu0 0
      %4855 = vmatpush1.bf16.msra.mxu0 0
      %4856 = vmatprep.mubr.bf16.mxu0 0
      %4857 = vmatmul.mubr.bf16.gmra.mrb[0].mxu0 %v4801
      %v4858 = vpop.f32.mrb[0].mxu0
      %v4859 = vadd.f32 %v4786, %v4858
      %v4860 = vpop.f32.mrb[0].mxu0
      %v4861 = vpop.f32.mrb[0].mxu0
      %v4862 = vadd.f32 %v4786, %v4861
      %v4863 = vpop.f32.mrb[0].mxu0
      %4864 = vmatprep.mubr.bf16.mxu0 0
      %4865 = vmatmul.mubr.bf16.gmra.mrb[0].mxu0 %v4804
      %v4866 = vpop.f32.mrb[0].mxu0
      %v4867 = vadd.f32 %v4786, %v4866
      %v4868 = vpop.f32.mrb[0].mxu0
      %v4869 = vpop.f32.mrb[0].mxu0
      %v4870 = vadd.f32 %v4786, %v4869
      %v4871 = vpop.f32.mrb[0].mxu0
      %4872 = vmatprep.mubr.bf16.mxu0 0
      %4873 = vmatmul.mubr.bf16.gmra.mrb[0].mxu0 %v4807
      %v4874 = vpop.f32.mrb[0].mxu0
      %v4875 = vadd.f32 %v4786, %v4874
      %v4876 = vpop.f32.mrb[0].mxu0
      %v4877 = vpop.f32.mrb[0].mxu0
      %v4878 = vadd.f32 %v4786, %v4877
      %v4879 = vpop.f32.mrb[0].mxu0
      %4880 = vmatprep.mubr.bf16.mxu0 0
      %4881 = vmatmul.mubr.bf16.gmra.mrb[0].mxu0 %v4810
      %v4882 = vpop.f32.mrb[0].mxu0
      %v4883 = vadd.f32 %v4786, %v4882
      %v4884 = vpop.f32.mrb[0].mxu0
      %v4885 = vpop.f32.mrb[0].mxu0
      %v4886 = vadd.f32 %v4786, %v4885
      %v4887 = vpop.f32.mrb[0].mxu0
      %4888 = vmatprep.mubr.bf16.mxu0 0
      %4889 = vmatmul.mubr.bf16.gmra.mrb[0].mxu0 %v4813
      %v4890 = vpop.f32.mrb[0].mxu0
      %v4891 = vadd.f32 %v4786, %v4890
      %v4892 = vpop.f32.mrb[0].mxu0
      %v4893 = vpop.f32.mrb[0].mxu0
      %v4894 = vadd.f32 %v4786, %v4893
      %v4895 = vpop.f32.mrb[0].mxu0
      %4896 = vmatprep.mubr.bf16.mxu0 0
      %4897 = vmatmul.mubr.bf16.gmra.mrb[0].mxu0 %v4816
      %v4898 = vpop.f32.mrb[0].mxu0
      %v4899 = vadd.f32 %v4786, %v4898
      %v4900 = vpop.f32.mrb[0].mxu0
      %v4901 = vpop.f32.mrb[0].mxu0
      %v4902 = vadd.f32 %v4786, %v4901
      %v4903 = vpop.f32.mrb[0].mxu0
      %4904 = vmatprep.mubr.bf16.mxu0 0
      %4905 = vmatmul.mubr.bf16.gmra.mrb[0].mxu0 %v4819
      %v4906 = vpop.f32.mrb[0].mxu0
      %v4907 = vadd.f32 %v4786, %v4906
      %v4908 = vpop.f32.mrb[0].mxu0
      %v4909 = vpop.f32.mrb[0].mxu0
      %v4910 = vadd.f32 %v4786, %v4909
      %v4911 = vpop.f32.mrb[0].mxu0
      %4912 = vmatprep.mubr.bf16.mxu0 0
      %4913 = vmatmul.mubr.bf16.gmra.mrb[0].mxu0 %v4822
      %v4914 = vpop.f32.mrb[0].mxu0
      %v4915 = vadd.f32 %v4786, %v4914
      %v4916 = vpop.f32.mrb[0].mxu0
      %v4917 = vpop.f32.mrb[0].mxu0
      %v4918 = vadd.f32 %v4786, %v4917
      %v4919 = vpop.f32.mrb[0].mxu0
      %4920 = vdwg.mxu0
      %v4921 = vld [vmem:[%s1114] sm:$0xf]
      %v4922 = vld [vmem:[%s1114 + $0x4] sm:$0xf]
      %v4923 = vpack.c.bf16 %v4338, %v4337
      %v4924 = vpack.c.bf16 %v4340, %v4339
      %v4925 = vpack.c.bf16 %v4342, %v4341
      %v4926 = vpack.c.bf16 %v4344, %v4343
      %v4927 = vpack.c.bf16 %v4346, %v4345
      %v4928 = vpack.c.bf16 %v4348, %v4347
      %v4929 = vpack.c.bf16 %v4350, %v4349
      %v4930 = vpack.c.bf16 %v4352, %v4351
      %v4931 = vpack.c.bf16 %v4466, %v4465
      %v4932 = vpack.c.bf16 %v4468, %v4467
      %v4933 = vpack.c.bf16 %v4470, %v4469
      %v4934 = vpack.c.bf16 %v4472, %v4471
      %v4935 = vpack.c.bf16 %v4474, %v4473
      %v4936 = vpack.c.bf16 %v4476, %v4475
      %v4937 = vpack.c.bf16 %v4478, %v4477
      %v4938 = vpack.c.bf16 %v4480, %v4479
      %v4939 = vpack.c.bf16 %v4594, %v4593
      %v4940 = vpack.c.bf16 %v4596, %v4595
      %v4941 = vpack.c.bf16 %v4598, %v4597
      %v4942 = vpack.c.bf16 %v4600, %v4599
      %v4943 = vpack.c.bf16 %v4602, %v4601
      %v4944 = vpack.c.bf16 %v4604, %v4603
      %v4945 = vpack.c.bf16 %v4606, %v4605
      %v4946 = vpack.c.bf16 %v4608, %v4607
      %v4947 = vld [vmem:[%s1117] sm:$0x1]
      %v4949 = vlaneseq
      %v4950 = vshrl.u32 %v4949, 7
      %v4951 = vsub.s32 0, %v4950
      %v4952 = vrot.slane %v4947, %v4951
      %v4956 = vunpack.c.l.b16 %v4921
      %v4957 = vunpack.c.l.b16 %v4922
      %v4958 = vpack.c.b16 %v4957, %v4956
      %v4961 = vsel %vm2268, %v4923, 0
      %v4964 = vsel %vm2268, %v4924, 0
      %v4967 = vsel %vm2268, %v4925, 0
      %v4970 = vsel %vm2268, %v4926, 0
      %v4973 = vsel %vm2268, %v4927, 0
      %v4976 = vsel %vm2268, %v4928, 0
      %v4979 = vsel %vm2268, %v4929, 0
      %v4982 = vsel %vm2268, %v4930, 0
      %v4985 = vsel %vm2268, %v4931, 0
      %v4988 = vsel %vm2268, %v4932, 0
      %v4991 = vsel %vm2268, %v4933, 0
      %v4994 = vsel %vm2268, %v4934, 0
      %v4997 = vsel %vm2268, %v4935, 0
      %v5000 = vsel %vm2268, %v4936, 0
      %v5003 = vsel %vm2268, %v4937, 0
      %v5006 = vsel %vm2268, %v4938, 0
      %v5009 = vsel %vm2268, %v4939, 0
      %v5012 = vsel %vm2268, %v4940, 0
      %v5015 = vsel %vm2268, %v4941, 0
      %v5018 = vsel %vm2268, %v4942, 0
      %v5021 = vsel %vm2268, %v4943, 0
      %v5024 = vsel %vm2268, %v4944, 0
      %v5027 = vsel %vm2268, %v4945, 0
      %v5030 = vsel %vm2268, %v4946, 0
      %5032 = vmatprep.subr.bf16.mxu0 0
      %5033 = vmatpush1.bf16.msra.mxu0 %v4958
      %5034 = vmatprep.subr.bf16.mxu0 0
      %5035 = vmatpush1.bf16.msra.mxu0 0
      %5036 = vmatprep.subr.bf16.mxu0 0
      %5037 = vmatpush1.bf16.msra.mxu0 0
      %5038 = vmatprep.subr.bf16.mxu0 0
      %5039 = vmatpush1.bf16.msra.mxu0 0
      %5040 = vmatprep.subr.bf16.mxu0 0
      %5041 = vmatpush1.bf16.msra.mxu0 0
      %5042 = vmatprep.subr.bf16.mxu0 0
      %5043 = vmatpush1.bf16.msra.mxu0 0
      %5044 = vmatprep.subr.bf16.mxu0 0
      %5045 = vmatpush1.bf16.msra.mxu0 0
      %5046 = vmatprep.subr.bf16.mxu0 0
      %5047 = vmatpush1.bf16.msra.mxu0 0
      %5048 = vmatprep.subr.bf16.mxu0 0
      %5049 = vmatpush1.bf16.msra.mxu0 0
      %5050 = vmatprep.subr.bf16.mxu0 0
      %5051 = vmatpush1.bf16.msra.mxu0 0
      %5052 = vmatprep.subr.bf16.mxu0 0
      %5053 = vmatpush1.bf16.msra.mxu0 0
      %5054 = vmatprep.subr.bf16.mxu0 0
      %5055 = vmatpush1.bf16.msra.mxu0 0
      %5056 = vmatprep.subr.bf16.mxu0 0
      %5057 = vmatpush1.bf16.msra.mxu0 0
      %5058 = vmatprep.subr.bf16.mxu0 0
      %5059 = vmatpush1.bf16.msra.mxu0 0
      %5060 = vmatprep.subr.bf16.mxu0 0
      %5061 = vmatpush1.bf16.msra.mxu0 0
      %5062 = vmatprep.subr.bf16.mxu0 0
      %5063 = vmatpush1.bf16.msra.mxu0 0
      %5064 = vmatprep.mubr.bf16.mxu0 0
      %5065 = vmatmul.mubr.bf16.gmra.mrb[0].mxu0 %v4961
      %v5066 = vpop.f32.mrb[0].mxu0
      %v5067 = vadd.f32 %v4952, %v5066
      %v5068 = vpop.f32.mrb[0].mxu0
      %v5069 = vpop.f32.mrb[0].mxu0
      %v5070 = vadd.f32 %v4952, %v5069
      %v5071 = vpop.f32.mrb[0].mxu0
      %5072 = vmatprep.mubr.bf16.mxu0 0
      %5073 = vmatmul.mubr.bf16.gmra.mrb[0].mxu0 %v4964
      %v5074 = vpop.f32.mrb[0].mxu0
      %v5075 = vadd.f32 %v4952, %v5074
      %v5076 = vpop.f32.mrb[0].mxu0
      %v5077 = vpop.f32.mrb[0].mxu0
      %v5078 = vadd.f32 %v4952, %v5077
      %v5079 = vpop.f32.mrb[0].mxu0
      %5080 = vmatprep.mubr.bf16.mxu0 0
      %5081 = vmatmul.mubr.bf16.gmra.mrb[0].mxu0 %v4967
      %v5082 = vpop.f32.mrb[0].mxu0
      %v5083 = vadd.f32 %v4952, %v5082
      %v5084 = vpop.f32.mrb[0].mxu0
      %v5085 = vpop.f32.mrb[0].mxu0
      %v5086 = vadd.f32 %v4952, %v5085
      %v5087 = vpop.f32.mrb[0].mxu0
      %5088 = vmatprep.mubr.bf16.mxu0 0
      %5089 = vmatmul.mubr.bf16.gmra.mrb[0].mxu0 %v4970
      %v5090 = vpop.f32.mrb[0].mxu0
      %v5091 = vadd.f32 %v4952, %v5090
      %v5092 = vpop.f32.mrb[0].mxu0
      %v5093 = vpop.f32.mrb[0].mxu0
      %v5094 = vadd.f32 %v4952, %v5093
      %v5095 = vpop.f32.mrb[0].mxu0
      %5096 = vmatprep.mubr.bf16.mxu0 0
      %5097 = vmatmul.mubr.bf16.gmra.mrb[0].mxu0 %v4973
      %v5098 = vpop.f32.mrb[0].mxu0
      %v5099 = vadd.f32 %v4952, %v5098
      %v5100 = vpop.f32.mrb[0].mxu0
      %v5101 = vpop.f32.mrb[0].mxu0
      %v5102 = vadd.f32 %v4952, %v5101
      %v5103 = vpop.f32.mrb[0].mxu0
      %5104 = vmatprep.mubr.bf16.mxu0 0
      %5105 = vmatmul.mubr.bf16.gmra.mrb[0].mxu0 %v4976
      %v5106 = vpop.f32.mrb[0].mxu0
      %v5107 = vadd.f32 %v4952, %v5106
      %v5108 = vpop.f32.mrb[0].mxu0
      %v5109 = vpop.f32.mrb[0].mxu0
      %v5110 = vadd.f32 %v4952, %v5109
      %v5111 = vpop.f32.mrb[0].mxu0
      %5112 = vmatprep.mubr.bf16.mxu0 0
      %5113 = vmatmul.mubr.bf16.gmra.mrb[0].mxu0 %v4979
      %v5114 = vpop.f32.mrb[0].mxu0
      %v5115 = vadd.f32 %v4952, %v5114
      %v5116 = vpop.f32.mrb[0].mxu0
      %v5117 = vpop.f32.mrb[0].mxu0
      %v5118 = vadd.f32 %v4952, %v5117
      %v5119 = vpop.f32.mrb[0].mxu0
      %5120 = vmatprep.mubr.bf16.mxu0 0
      %5121 = vmatmul.mubr.bf16.gmra.mrb[0].mxu0 %v4982
      %v5122 = vpop.f32.mrb[0].mxu0
      %v5123 = vadd.f32 %v4952, %v5122
      %v5124 = vpop.f32.mrb[0].mxu0
      %v5125 = vpop.f32.mrb[0].mxu0
      %v5126 = vadd.f32 %v4952, %v5125
      %v5127 = vpop.f32.mrb[0].mxu0
      %5128 = vmatprep.mubr.bf16.mxu0 0
      %5129 = vmatmul.mubr.bf16.gmra.mrb[0].mxu0 %v4985
      %v5130 = vpop.f32.mrb[0].mxu0
      %v5131 = vadd.f32 %v4952, %v5130
      %v5132 = vpop.f32.mrb[0].mxu0
      %v5133 = vpop.f32.mrb[0].mxu0
      %v5134 = vadd.f32 %v4952, %v5133
      %v5135 = vpop.f32.mrb[0].mxu0
      %5136 = vmatprep.mubr.bf16.mxu0 0
      %5137 = vmatmul.mubr.bf16.gmra.mrb[0].mxu0 %v4988
      %v5138 = vpop.f32.mrb[0].mxu0
      %v5139 = vadd.f32 %v4952, %v5138
      %v5140 = vpop.f32.mrb[0].mxu0
      %v5141 = vpop.f32.mrb[0].mxu0
      %v5142 = vadd.f32 %v4952, %v5141
      %v5143 = vpop.f32.mrb[0].mxu0
      %5144 = vmatprep.mubr.bf16.mxu0 0
      %5145 = vmatmul.mubr.bf16.gmra.mrb[0].mxu0 %v4991
      %v5146 = vpop.f32.mrb[0].mxu0
      %v5147 = vadd.f32 %v4952, %v5146
      %v5148 = vpop.f32.mrb[0].mxu0
      %v5149 = vpop.f32.mrb[0].mxu0
      %v5150 = vadd.f32 %v4952, %v5149
      %v5151 = vpop.f32.mrb[0].mxu0
      %5152 = vmatprep.mubr.bf16.mxu0 0
      %5153 = vmatmul.mubr.bf16.gmra.mrb[0].mxu0 %v4994
      %v5154 = vpop.f32.mrb[0].mxu0
      %v5155 = vadd.f32 %v4952, %v5154
      %v5156 = vpop.f32.mrb[0].mxu0
      %v5157 = vpop.f32.mrb[0].mxu0
      %v5158 = vadd.f32 %v4952, %v5157
      %v5159 = vpop.f32.mrb[0].mxu0
      %5160 = vmatprep.mubr.bf16.mxu0 0
      %5161 = vmatmul.mubr.bf16.gmra.mrb[0].mxu0 %v4997
      %v5162 = vpop.f32.mrb[0].mxu0
      %v5163 = vadd.f32 %v4952, %v5162
      %v5164 = vpop.f32.mrb[0].mxu0
      %v5165 = vpop.f32.mrb[0].mxu0
      %v5166 = vadd.f32 %v4952, %v5165
      %v5167 = vpop.f32.mrb[0].mxu0
      %5168 = vmatprep.mubr.bf16.mxu0 0
      %5169 = vmatmul.mubr.bf16.gmra.mrb[0].mxu0 %v5000
      %v5170 = vpop.f32.mrb[0].mxu0
      %v5171 = vadd.f32 %v4952, %v5170
      %v5172 = vpop.f32.mrb[0].mxu0
      %v5173 = vpop.f32.mrb[0].mxu0
      %v5174 = vadd.f32 %v4952, %v5173
      %v5175 = vpop.f32.mrb[0].mxu0
      %5176 = vmatprep.mubr.bf16.mxu0 0
      %5177 = vmatmul.mubr.bf16.gmra.mrb[0].mxu0 %v5003
      %v5178 = vpop.f32.mrb[0].mxu0
      %v5179 = vadd.f32 %v4952, %v5178
      %v5180 = vpop.f32.mrb[0].mxu0
      %v5181 = vpop.f32.mrb[0].mxu0
      %v5182 = vadd.f32 %v4952, %v5181
      %v5183 = vpop.f32.mrb[0].mxu0
      %5184 = vmatprep.mubr.bf16.mxu0 0
      %5185 = vmatmul.mubr.bf16.gmra.mrb[0].mxu0 %v5006
      %v5186 = vpop.f32.mrb[0].mxu0
      %v5187 = vadd.f32 %v4952, %v5186
      %v5188 = vpop.f32.mrb[0].mxu0
      %v5189 = vpop.f32.mrb[0].mxu0
      %v5190 = vadd.f32 %v4952, %v5189
      %v5191 = vpop.f32.mrb[0].mxu0
      %5192 = vmatprep.mubr.bf16.mxu0 0
      %5193 = vmatmul.mubr.bf16.gmra.mrb[0].mxu0 %v5009
      %v5194 = vpop.f32.mrb[0].mxu0
      %v5195 = vadd.f32 %v4952, %v5194
      %v5196 = vpop.f32.mrb[0].mxu0
      %v5197 = vpop.f32.mrb[0].mxu0
      %v5198 = vadd.f32 %v4952, %v5197
      %v5199 = vpop.f32.mrb[0].mxu0
      %5200 = vmatprep.mubr.bf16.mxu0 0
      %5201 = vmatmul.mubr.bf16.gmra.mrb[0].mxu0 %v5012
      %v5202 = vpop.f32.mrb[0].mxu0
      %v5203 = vadd.f32 %v4952, %v5202
      %v5204 = vpop.f32.mrb[0].mxu0
      %v5205 = vpop.f32.mrb[0].mxu0
      %v5206 = vadd.f32 %v4952, %v5205
      %v5207 = vpop.f32.mrb[0].mxu0
      %5208 = vmatprep.mubr.bf16.mxu0 0
      %5209 = vmatmul.mubr.bf16.gmra.mrb[0].mxu0 %v5015
      %v5210 = vpop.f32.mrb[0].mxu0
      %v5211 = vadd.f32 %v4952, %v5210
      %v5212 = vpop.f32.mrb[0].mxu0
      %v5213 = vpop.f32.mrb[0].mxu0
      %v5214 = vadd.f32 %v4952, %v5213
      %v5215 = vpop.f32.mrb[0].mxu0
      %5216 = vmatprep.mubr.bf16.mxu0 0
      %5217 = vmatmul.mubr.bf16.gmra.mrb[0].mxu0 %v5018
      %v5218 = vpop.f32.mrb[0].mxu0
      %v5219 = vadd.f32 %v4952, %v5218
      %v5220 = vpop.f32.mrb[0].mxu0
      %v5221 = vpop.f32.mrb[0].mxu0
      %v5222 = vadd.f32 %v4952, %v5221
      %v5223 = vpop.f32.mrb[0].mxu0
      %5224 = vmatprep.mubr.bf16.mxu0 0
      %5225 = vmatmul.mubr.bf16.gmra.mrb[0].mxu0 %v5021
      %v5226 = vpop.f32.mrb[0].mxu0
      %v5227 = vadd.f32 %v4952, %v5226
      %v5228 = vpop.f32.mrb[0].mxu0
      %v5229 = vpop.f32.mrb[0].mxu0
      %v5230 = vadd.f32 %v4952, %v5229
      %v5231 = vpop.f32.mrb[0].mxu0
      %5232 = vmatprep.mubr.bf16.mxu0 0
      %5233 = vmatmul.mubr.bf16.gmra.mrb[0].mxu0 %v5024
      %v5234 = vpop.f32.mrb[0].mxu0
      %v5235 = vadd.f32 %v4952, %v5234
      %v5236 = vpop.f32.mrb[0].mxu0
      %v5237 = vpop.f32.mrb[0].mxu0
      %v5238 = vadd.f32 %v4952, %v5237
      %v5239 = vpop.f32.mrb[0].mxu0
      %5240 = vmatprep.mubr.bf16.mxu0 0
      %5241 = vmatmul.mubr.bf16.gmra.mrb[0].mxu0 %v5027
      %v5242 = vpop.f32.mrb[0].mxu0
      %v5243 = vadd.f32 %v4952, %v5242
      %v5244 = vpop.f32.mrb[0].mxu0
      %v5245 = vpop.f32.mrb[0].mxu0
      %v5246 = vadd.f32 %v4952, %v5245
      %v5247 = vpop.f32.mrb[0].mxu0
      %5248 = vmatprep.mubr.bf16.mxu0 0
      %5249 = vmatmul.mubr.bf16.gmra.mrb[0].mxu0 %v5030
      %v5250 = vpop.f32.mrb[0].mxu0
      %v5251 = vadd.f32 %v4952, %v5250
      %v5252 = vpop.f32.mrb[0].mxu0
      %v5253 = vpop.f32.mrb[0].mxu0
      %v5254 = vadd.f32 %v4952, %v5253
      %v5255 = vpop.f32.mrb[0].mxu0
      %5256 = vdwg.mxu0
      %v5257 = vmul.f32 %v4859, %v5067
      %v5258 = vmul.f32 %v4862, %v5070
      %v5259 = vmul.f32 %v4867, %v5075
      %v5260 = vmul.f32 %v4870, %v5078
      %v5261 = vmul.f32 %v4875, %v5083
      %v5262 = vmul.f32 %v4878, %v5086
      %v5263 = vmul.f32 %v4883, %v5091
      %v5264 = vmul.f32 %v4886, %v5094
      %v5265 = vmul.f32 %v4891, %v5099
      %v5266 = vmul.f32 %v4894, %v5102
      %v5267 = vmul.f32 %v4899, %v5107
      %v5268 = vmul.f32 %v4902, %v5110
      %v5269 = vmul.f32 %v4907, %v5115
      %v5270 = vmul.f32 %v4910, %v5118
      %v5271 = vmul.f32 %v4915, %v5123
      %v5272 = vmul.f32 %v4918, %v5126
      %5289 = vrot.lane.b32.xlu0 %v5257, 32
      %v5290 = vpop.permute.xlu0 %5289
      %5291 = vrot.lane.b32.xlu0 %v5258, 32
      %v5292 = vpop.permute.xlu0 %5291
      %5293 = vrot.lane.b32.xlu0 %v5259, 32
      %v5294 = vpop.permute.xlu0 %5293
      %5295 = vrot.lane.b32.xlu0 %v5260, 32
      %v5296 = vpop.permute.xlu0 %5295
      %5297 = vrot.lane.b32.xlu0 %v5261, 32
      %v5298 = vpop.permute.xlu0 %5297
      %5299 = vrot.lane.b32.xlu0 %v5262, 32
      %v5300 = vpop.permute.xlu0 %5299
      %5301 = vrot.lane.b32.xlu0 %v5263, 32
      %v5302 = vpop.permute.xlu0 %5301
      %5303 = vrot.lane.b32.xlu0 %v5264, 32
      %v5304 = vpop.permute.xlu0 %5303
      %5305 = vrot.lane.b32.xlu0 %v5265, 32
      %v5306 = vpop.permute.xlu0 %5305
      %5307 = vrot.lane.b32.xlu0 %v5266, 32
      %v5308 = vpop.permute.xlu0 %5307
      %5309 = vrot.lane.b32.xlu0 %v5267, 32
      %v5310 = vpop.permute.xlu0 %5309
      %5311 = vrot.lane.b32.xlu0 %v5268, 32
      %v5312 = vpop.permute.xlu0 %5311
      %5313 = vrot.lane.b32.xlu0 %v5269, 32
      %v5314 = vpop.permute.xlu0 %5313
      %5315 = vrot.lane.b32.xlu0 %v5270, 32
      %v5316 = vpop.permute.xlu0 %5315
      %5317 = vrot.lane.b32.xlu0 %v5271, 32
      %v5318 = vpop.permute.xlu0 %5317
      %5319 = vrot.lane.b32.xlu0 %v5272, 32
      %v5320 = vpop.permute.xlu0 %5319
      %v5337 = vadd.f32 %v4753, %v5290
      %v5338 = vadd.f32 %v4754, %v5292
      %v5339 = vadd.f32 %v4755, %v5294
      %v5340 = vadd.f32 %v4756, %v5296
      %v5341 = vadd.f32 %v4757, %v5298
      %v5342 = vadd.f32 %v4758, %v5300
      %v5343 = vadd.f32 %v4759, %v5302
      %v5344 = vadd.f32 %v4760, %v5304
      %v5345 = vadd.f32 %v4761, %v5306
      %v5346 = vadd.f32 %v4762, %v5308
      %v5347 = vadd.f32 %v4763, %v5310
      %v5348 = vadd.f32 %v4764, %v5312
      %v5349 = vadd.f32 %v4765, %v5314
      %v5350 = vadd.f32 %v4766, %v5316
      %v5351 = vadd.f32 %v4767, %v5318
      %v5352 = vadd.f32 %v4768, %v5320
      %5369 = vrot.lane.b32.xlu0 %v1902, 120
      %v5370 = vpop.permute.xlu0 %5369
      %5371 = vrot.lane.b32.xlu0 %v1905, 120
      %v5372 = vpop.permute.xlu0 %5371
      %5373 = vrot.lane.b32.xlu0 %v1910, 120
      %v5374 = vpop.permute.xlu0 %5373
      %5375 = vrot.lane.b32.xlu0 %v1913, 120
      %v5376 = vpop.permute.xlu0 %5375
      %5377 = vrot.lane.b32.xlu0 %v1918, 120
      %v5378 = vpop.permute.xlu0 %5377
      %5379 = vrot.lane.b32.xlu0 %v1921, 120
      %v5380 = vpop.permute.xlu0 %5379
      %5381 = vrot.lane.b32.xlu0 %v1926, 120
      %v5382 = vpop.permute.xlu0 %5381
      %5383 = vrot.lane.b32.xlu0 %v1929, 120
      %v5384 = vpop.permute.xlu0 %5383
      %5385 = vrot.lane.b32.xlu0 %v1934, 120
      %v5386 = vpop.permute.xlu0 %5385
      %5387 = vrot.lane.b32.xlu0 %v1937, 120
      %v5388 = vpop.permute.xlu0 %5387
      %5389 = vrot.lane.b32.xlu0 %v1942, 120
      %v5390 = vpop.permute.xlu0 %5389
      %5391 = vrot.lane.b32.xlu0 %v1945, 120
      %v5392 = vpop.permute.xlu0 %5391
      %5393 = vrot.lane.b32.xlu0 %v1950, 120
      %v5394 = vpop.permute.xlu0 %5393
      %5395 = vrot.lane.b32.xlu0 %v1953, 120
      %v5396 = vpop.permute.xlu0 %5395
      %5397 = vrot.lane.b32.xlu0 %v1958, 120
      %v5398 = vpop.permute.xlu0 %5397
      %5399 = vrot.lane.b32.xlu0 %v1961, 120
      %v5400 = vpop.permute.xlu0 %5399
      %v5417 = vmul.f32 %v4691, %v5370
      %v5418 = vmul.f32 %v4694, %v5372
      %v5419 = vmul.f32 %v4699, %v5374
      %v5420 = vmul.f32 %v4702, %v5376
      %v5421 = vmul.f32 %v4707, %v5378
      %v5422 = vmul.f32 %v4710, %v5380
      %v5423 = vmul.f32 %v4715, %v5382
      %v5424 = vmul.f32 %v4718, %v5384
      %v5425 = vmul.f32 %v4723, %v5386
      %v5426 = vmul.f32 %v4726, %v5388
      %v5427 = vmul.f32 %v4731, %v5390
      %v5428 = vmul.f32 %v4734, %v5392
      %v5429 = vmul.f32 %v4739, %v5394
      %v5430 = vmul.f32 %v4742, %v5396
      %v5431 = vmul.f32 %v4747, %v5398
      %v5432 = vmul.f32 %v4750, %v5400
      %v5433 = vmul.f32 %v4859, %v5131
      %v5434 = vmul.f32 %v4862, %v5134
      %v5435 = vmul.f32 %v4867, %v5139
      %v5436 = vmul.f32 %v4870, %v5142
      %v5437 = vmul.f32 %v4875, %v5147
      %v5438 = vmul.f32 %v4878, %v5150
      %v5439 = vmul.f32 %v4883, %v5155
      %v5440 = vmul.f32 %v4886, %v5158
      %v5441 = vmul.f32 %v4891, %v5163
      %v5442 = vmul.f32 %v4894, %v5166
      %v5443 = vmul.f32 %v4899, %v5171
      %v5444 = vmul.f32 %v4902, %v5174
      %v5445 = vmul.f32 %v4907, %v5179
      %v5446 = vmul.f32 %v4910, %v5182
      %v5447 = vmul.f32 %v4915, %v5187
      %v5448 = vmul.f32 %v4918, %v5190
      %5465 = vrot.lane.b32.xlu0 %v5433, 32
      %v5466 = vpop.permute.xlu0 %5465
      %5467 = vrot.lane.b32.xlu0 %v5434, 32
      %v5468 = vpop.permute.xlu0 %5467
      %5469 = vrot.lane.b32.xlu0 %v5435, 32
      %v5470 = vpop.permute.xlu0 %5469
      %5471 = vrot.lane.b32.xlu0 %v5436, 32
      %v5472 = vpop.permute.xlu0 %5471
      %5473 = vrot.lane.b32.xlu0 %v5437, 32
      %v5474 = vpop.permute.xlu0 %5473
      %5475 = vrot.lane.b32.xlu0 %v5438, 32
      %v5476 = vpop.permute.xlu0 %5475
      %5477 = vrot.lane.b32.xlu0 %v5439, 32
      %v5478 = vpop.permute.xlu0 %5477
      %5479 = vrot.lane.b32.xlu0 %v5440, 32
      %v5480 = vpop.permute.xlu0 %5479
      %5481 = vrot.lane.b32.xlu0 %v5441, 32
      %v5482 = vpop.permute.xlu0 %5481
      %5483 = vrot.lane.b32.xlu0 %v5442, 32
      %v5484 = vpop.permute.xlu0 %5483
      %5485 = vrot.lane.b32.xlu0 %v5443, 32
      %v5486 = vpop.permute.xlu0 %5485
      %5487 = vrot.lane.b32.xlu0 %v5444, 32
      %v5488 = vpop.permute.xlu0 %5487
      %5489 = vrot.lane.b32.xlu0 %v5445, 32
      %v5490 = vpop.permute.xlu0 %5489
      %5491 = vrot.lane.b32.xlu0 %v5446, 32
      %v5492 = vpop.permute.xlu0 %5491
      %5493 = vrot.lane.b32.xlu0 %v5447, 32
      %v5494 = vpop.permute.xlu0 %5493
      %5495 = vrot.lane.b32.xlu0 %v5448, 32
      %v5496 = vpop.permute.xlu0 %5495
      %v5513 = vadd.f32 %v5417, %v5466
      %v5514 = vadd.f32 %v5418, %v5468
      %v5515 = vadd.f32 %v5419, %v5470
      %v5516 = vadd.f32 %v5420, %v5472
      %v5517 = vadd.f32 %v5421, %v5474
      %v5518 = vadd.f32 %v5422, %v5476
      %v5519 = vadd.f32 %v5423, %v5478
      %v5520 = vadd.f32 %v5424, %v5480
      %v5521 = vadd.f32 %v5425, %v5482
      %v5522 = vadd.f32 %v5426, %v5484
      %v5523 = vadd.f32 %v5427, %v5486
      %v5524 = vadd.f32 %v5428, %v5488
      %v5525 = vadd.f32 %v5429, %v5490
      %v5526 = vadd.f32 %v5430, %v5492
      %v5527 = vadd.f32 %v5431, %v5494
      %v5528 = vadd.f32 %v5432, %v5496
      %5529 = vrot.lane.b32.xlu0 %v1902, 112
      %v5530 = vpop.permute.xlu0 %5529
      %5531 = vrot.lane.b32.xlu0 %v1905, 112
      %v5532 = vpop.permute.xlu0 %5531
      %5533 = vrot.lane.b32.xlu0 %v1910, 112
      %v5534 = vpop.permute.xlu0 %5533
      %5535 = vrot.lane.b32.xlu0 %v1913, 112
      %v5536 = vpop.permute.xlu0 %5535
      %5537 = vrot.lane.b32.xlu0 %v1918, 112
      %v5538 = vpop.permute.xlu0 %5537
      %5539 = vrot.lane.b32.xlu0 %v1921, 112
      %v5540 = vpop.permute.xlu0 %5539
      %5541 = vrot.lane.b32.xlu0 %v1926, 112
      %v5542 = vpop.permute.xlu0 %5541
      %5543 = vrot.lane.b32.xlu0 %v1929, 112
      %v5544 = vpop.permute.xlu0 %5543
      %5545 = vrot.lane.b32.xlu0 %v1934, 112
      %v5546 = vpop.permute.xlu0 %5545
      %5547 = vrot.lane.b32.xlu0 %v1937, 112
      %v5548 = vpop.permute.xlu0 %5547
      %5549 = vrot.lane.b32.xlu0 %v1942, 112
      %v5550 = vpop.permute.xlu0 %5549
      %5551 = vrot.lane.b32.xlu0 %v1945, 112
      %v5552 = vpop.permute.xlu0 %5551
      %5553 = vrot.lane.b32.xlu0 %v1950, 112
      %v5554 = vpop.permute.xlu0 %5553
      %5555 = vrot.lane.b32.xlu0 %v1953, 112
      %v5556 = vpop.permute.xlu0 %5555
      %5557 = vrot.lane.b32.xlu0 %v1958, 112
      %v5558 = vpop.permute.xlu0 %5557
      %5559 = vrot.lane.b32.xlu0 %v1961, 112
      %v5560 = vpop.permute.xlu0 %5559
      %v5577 = vmul.f32 %v4691, %v5530
      %v5578 = vmul.f32 %v4694, %v5532
      %v5579 = vmul.f32 %v4699, %v5534
      %v5580 = vmul.f32 %v4702, %v5536
      %v5581 = vmul.f32 %v4707, %v5538
      %v5582 = vmul.f32 %v4710, %v5540
      %v5583 = vmul.f32 %v4715, %v5542
      %v5584 = vmul.f32 %v4718, %v5544
      %v5585 = vmul.f32 %v4723, %v5546
      %v5586 = vmul.f32 %v4726, %v5548
      %v5587 = vmul.f32 %v4731, %v5550
      %v5588 = vmul.f32 %v4734, %v5552
      %v5589 = vmul.f32 %v4739, %v5554
      %v5590 = vmul.f32 %v4742, %v5556
      %v5591 = vmul.f32 %v4747, %v5558
      %v5592 = vmul.f32 %v4750, %v5560
      %v5593 = vmul.f32 %v4859, %v5195
      %v5594 = vmul.f32 %v4862, %v5198
      %v5595 = vmul.f32 %v4867, %v5203
      %v5596 = vmul.f32 %v4870, %v5206
      %v5597 = vmul.f32 %v4875, %v5211
      %v5598 = vmul.f32 %v4878, %v5214
      %v5599 = vmul.f32 %v4883, %v5219
      %v5600 = vmul.f32 %v4886, %v5222
      %v5601 = vmul.f32 %v4891, %v5227
      %v5602 = vmul.f32 %v4894, %v5230
      %v5603 = vmul.f32 %v4899, %v5235
      %v5604 = vmul.f32 %v4902, %v5238
      %v5605 = vmul.f32 %v4907, %v5243
      %v5606 = vmul.f32 %v4910, %v5246
      %v5607 = vmul.f32 %v4915, %v5251
      %v5608 = vmul.f32 %v4918, %v5254
      %5625 = vrot.lane.b32.xlu0 %v5593, 32
      %v5626 = vpop.permute.xlu0 %5625
      %5627 = vrot.lane.b32.xlu0 %v5594, 32
      %v5628 = vpop.permute.xlu0 %5627
      %5629 = vrot.lane.b32.xlu0 %v5595, 32
      %v5630 = vpop.permute.xlu0 %5629
      %5631 = vrot.lane.b32.xlu0 %v5596, 32
      %v5632 = vpop.permute.xlu0 %5631
      %5633 = vrot.lane.b32.xlu0 %v5597, 32
      %v5634 = vpop.permute.xlu0 %5633
      %5635 = vrot.lane.b32.xlu0 %v5598, 32
      %v5636 = vpop.permute.xlu0 %5635
      %5637 = vrot.lane.b32.xlu0 %v5599, 32
      %v5638 = vpop.permute.xlu0 %5637
      %5639 = vrot.lane.b32.xlu0 %v5600, 32
      %v5640 = vpop.permute.xlu0 %5639
      %5641 = vrot.lane.b32.xlu0 %v5601, 32
      %v5642 = vpop.permute.xlu0 %5641
      %5643 = vrot.lane.b32.xlu0 %v5602, 32
      %v5644 = vpop.permute.xlu0 %5643
      %5645 = vrot.lane.b32.xlu0 %v5603, 32
      %v5646 = vpop.permute.xlu0 %5645
      %5647 = vrot.lane.b32.xlu0 %v5604, 32
      %v5648 = vpop.permute.xlu0 %5647
      %5649 = vrot.lane.b32.xlu0 %v5605, 32
      %v5650 = vpop.permute.xlu0 %5649
      %5651 = vrot.lane.b32.xlu0 %v5606, 32
      %v5652 = vpop.permute.xlu0 %5651
      %5653 = vrot.lane.b32.xlu0 %v5607, 32
      %v5654 = vpop.permute.xlu0 %5653
      %5655 = vrot.lane.b32.xlu0 %v5608, 32
      %v5656 = vpop.permute.xlu0 %5655
      %v5673 = vadd.f32 %v5577, %v5626
      %v5674 = vadd.f32 %v5578, %v5628
      %v5675 = vadd.f32 %v5579, %v5630
      %v5676 = vadd.f32 %v5580, %v5632
      %v5677 = vadd.f32 %v5581, %v5634
      %v5678 = vadd.f32 %v5582, %v5636
      %v5679 = vadd.f32 %v5583, %v5638
      %v5680 = vadd.f32 %v5584, %v5640
      %v5681 = vadd.f32 %v5585, %v5642
      %v5682 = vadd.f32 %v5586, %v5644
      %v5683 = vadd.f32 %v5587, %v5646
      %v5684 = vadd.f32 %v5588, %v5648
      %v5685 = vadd.f32 %v5589, %v5650
      %v5686 = vadd.f32 %v5590, %v5652
      %v5687 = vadd.f32 %v5591, %v5654
      %v5688 = vadd.f32 %v5592, %v5656
      %s5689 = scalar_lea.vmem %s1042, 4
      %v5690 = vld [vmem:[%s5689] sm:$0xf]
      %s5691 = scalar_lea.vmem %s1047, 4
      %v5692 = vld [vmem:[%s5691] sm:$0xf]
      %s5693 = scalar_lea.vmem %s1052, 20
      %v5694 = vld [vmem:[%s5693] sm:$0xf]
      %v5695 = vld [vmem:[%s5693 + $0x4] sm:$0xf]
      %v5696 = vld [vmem:[%s5693 + $0x8] sm:$0xf]
      %v5697 = vld [vmem:[%s5693 + $0xc] sm:$0xf]
      %v5698 = vld [vmem:[%s5693 + $0x10] sm:$0xf]
      %s5699 = scalar_lea.vmem %s1057, 16
      %v5700 = vld [vmem:[%s5699] sm:$0xf]
      %v5701 = vld [vmem:[%s5699 + $0x4] sm:$0xf]
      %v5702 = vld [vmem:[%s5699 + $0x8] sm:$0xf]
      %v5703 = vld [vmem:[%s5699 + $0xc] sm:$0xf]
      %s5704 = scalar_lea.vmem %s1061, 1
      %v5705 = vld [vmem:[%s5704] sm:$0x1]
      %v5706 = vpack.c.bf16 %v5338, %v5337
      %v5707 = vpack.c.bf16 %v5340, %v5339
      %v5708 = vpack.c.bf16 %v5342, %v5341
      %v5709 = vpack.c.bf16 %v5344, %v5343
      %v5710 = vpack.c.bf16 %v5346, %v5345
      %v5711 = vpack.c.bf16 %v5348, %v5347
      %v5712 = vpack.c.bf16 %v5350, %v5349
      %v5713 = vpack.c.bf16 %v5352, %v5351
      %v5714 = vpack.c.bf16 %v5514, %v5513
      %v5715 = vpack.c.bf16 %v5516, %v5515
      %v5716 = vpack.c.bf16 %v5518, %v5517
      %v5717 = vpack.c.bf16 %v5520, %v5519
      %v5718 = vpack.c.bf16 %v5522, %v5521
      %v5719 = vpack.c.bf16 %v5524, %v5523
      %v5720 = vpack.c.bf16 %v5526, %v5525
      %v5721 = vpack.c.bf16 %v5528, %v5527
      %v5722 = vpack.c.bf16 %v5674, %v5673
      %v5723 = vpack.c.bf16 %v5676, %v5675
      %v5724 = vpack.c.bf16 %v5678, %v5677
      %v5725 = vpack.c.bf16 %v5680, %v5679
      %v5726 = vpack.c.bf16 %v5682, %v5681
      %v5727 = vpack.c.bf16 %v5684, %v5683
      %v5728 = vpack.c.bf16 %v5686, %v5685
      %v5729 = vpack.c.bf16 %v5688, %v5687
      %5754 = vrot.lane.b32.xlu0 %v5706, 96
      %v5755 = vpop.permute.xlu0 %5754
      %5756 = vrot.lane.b32.xlu0 %v5707, 96
      %v5757 = vpop.permute.xlu0 %5756
      %5758 = vrot.lane.b32.xlu0 %v5708, 96
      %v5759 = vpop.permute.xlu0 %5758
      %5760 = vrot.lane.b32.xlu0 %v5709, 96
      %v5761 = vpop.permute.xlu0 %5760
      %5762 = vrot.lane.b32.xlu0 %v5710, 96
      %v5763 = vpop.permute.xlu0 %5762
      %5764 = vrot.lane.b32.xlu0 %v5711, 96
      %v5765 = vpop.permute.xlu0 %5764
      %5766 = vrot.lane.b32.xlu0 %v5712, 96
      %v5767 = vpop.permute.xlu0 %5766
      %5768 = vrot.lane.b32.xlu0 %v5713, 96
      %v5769 = vpop.permute.xlu0 %5768
      %5770 = vrot.lane.b32.xlu0 %v5714, 96
      %v5771 = vpop.permute.xlu0 %5770
      %5772 = vrot.lane.b32.xlu0 %v5715, 96
      %v5773 = vpop.permute.xlu0 %5772
      %5774 = vrot.lane.b32.xlu0 %v5716, 96
      %v5775 = vpop.permute.xlu0 %5774
      %5776 = vrot.lane.b32.xlu0 %v5717, 96
      %v5777 = vpop.permute.xlu0 %5776
      %5778 = vrot.lane.b32.xlu0 %v5718, 96
      %v5779 = vpop.permute.xlu0 %5778
      %5780 = vrot.lane.b32.xlu0 %v5719, 96
      %v5781 = vpop.permute.xlu0 %5780
      %5782 = vrot.lane.b32.xlu0 %v5720, 96
      %v5783 = vpop.permute.xlu0 %5782
      %5784 = vrot.lane.b32.xlu0 %v5721, 96
      %v5785 = vpop.permute.xlu0 %5784
      %5786 = vrot.lane.b32.xlu0 %v5722, 96
      %v5787 = vpop.permute.xlu0 %5786
      %5788 = vrot.lane.b32.xlu0 %v5723, 96
      %v5789 = vpop.permute.xlu0 %5788
      %5790 = vrot.lane.b32.xlu0 %v5724, 96
      %v5791 = vpop.permute.xlu0 %5790
      %5792 = vrot.lane.b32.xlu0 %v5725, 96
      %v5793 = vpop.permute.xlu0 %5792
      %5794 = vrot.lane.b32.xlu0 %v5726, 96
      %v5795 = vpop.permute.xlu0 %5794
      %5796 = vrot.lane.b32.xlu0 %v5727, 96
      %v5797 = vpop.permute.xlu0 %5796
      %5798 = vrot.lane.b32.xlu0 %v5728, 96
      %v5799 = vpop.permute.xlu0 %5798
      %5800 = vrot.lane.b32.xlu0 %v5729, 96
      %v5801 = vpop.permute.xlu0 %5800
      %vm5802 = vcmask 64512
      %v5804 = vsel %vm5802, %v5755, 0
      %v5807 = vsel %vm5802, %v5757, 0
      %v5810 = vsel %vm5802, %v5759, 0
      %v5813 = vsel %vm5802, %v5761, 0
      %v5816 = vsel %vm5802, %v5763, 0
      %v5819 = vsel %vm5802, %v5765, 0
      %v5822 = vsel %vm5802, %v5767, 0
      %v5825 = vsel %vm5802, %v5769, 0
      %v5828 = vsel %vm5802, %v5771, 0
      %v5831 = vsel %vm5802, %v5773, 0
      %v5834 = vsel %vm5802, %v5775, 0
      %v5837 = vsel %vm5802, %v5777, 0
      %v5840 = vsel %vm5802, %v5779, 0
      %v5843 = vsel %vm5802, %v5781, 0
      %v5846 = vsel %vm5802, %v5783, 0
      %v5849 = vsel %vm5802, %v5785, 0
      %v5852 = vsel %vm5802, %v5787, 0
      %v5855 = vsel %vm5802, %v5789, 0
      %v5858 = vsel %vm5802, %v5791, 0
      %v5861 = vsel %vm5802, %v5793, 0
      %v5864 = vsel %vm5802, %v5795, 0
      %v5867 = vsel %vm5802, %v5797, 0
      %v5870 = vsel %vm5802, %v5799, 0
      %v5873 = vsel %vm5802, %v5801, 0
      %v5876 = vsel %vm1863, %v5690, 0
      %5878 = vmatprep.subr.bf16.mxu0 0
      %5879 = vmatpush1.bf16.msra.mxu0 %v5876
      %5880 = vmatprep.subr.bf16.mxu0 0
      %5881 = vmatpush1.bf16.msra.mxu0 0
      %5882 = vmatprep.subr.bf16.mxu0 0
      %5883 = vmatpush1.bf16.msra.mxu0 0
      %5884 = vmatprep.subr.bf16.mxu0 0
      %5885 = vmatpush1.bf16.msra.mxu0 0
      %5886 = vmatprep.subr.bf16.mxu0 0
      %5887 = vmatpush1.bf16.msra.mxu0 0
      %5888 = vmatprep.subr.bf16.mxu0 0
      %5889 = vmatpush1.bf16.msra.mxu0 0
      %5890 = vmatprep.subr.bf16.mxu0 0
      %5891 = vmatpush1.bf16.msra.mxu0 0
      %5892 = vmatprep.subr.bf16.mxu0 0
      %5893 = vmatpush1.bf16.msra.mxu0 0
      %5894 = vmatprep.subr.bf16.mxu0 0
      %5895 = vmatpush1.bf16.msra.mxu0 0
      %5896 = vmatprep.subr.bf16.mxu0 0
      %5897 = vmatpush1.bf16.msra.mxu0 0
      %5898 = vmatprep.subr.bf16.mxu0 0
      %5899 = vmatpush1.bf16.msra.mxu0 0
      %5900 = vmatprep.subr.bf16.mxu0 0
      %5901 = vmatpush1.bf16.msra.mxu0 0
      %5902 = vmatprep.subr.bf16.mxu0 0
      %5903 = vmatpush1.bf16.msra.mxu0 0
      %5904 = vmatprep.subr.bf16.mxu0 0
      %5905 = vmatpush1.bf16.msra.mxu0 0
      %5906 = vmatprep.subr.bf16.mxu0 0
      %5907 = vmatpush1.bf16.msra.mxu0 0
      %5908 = vmatprep.subr.bf16.mxu0 0
      %5909 = vmatpush1.bf16.msra.mxu0 0
      %5910 = vmatprep.mubr.bf16.mxu0 0
      %5911 = vmatmul.mubr.bf16.gmra.mrb[0].mxu0 %v5804
      %v5912 = vpop.f32.mrb[0].mxu0
      %v5913 = vadd.f32 0.0, %v5912
      %v5914 = vpop.f32.mrb[0].mxu0
      %v5915 = vpop.f32.mrb[0].mxu0
      %v5916 = vadd.f32 0.0, %v5915
      %v5917 = vpop.f32.mrb[0].mxu0
      %5918 = vmatprep.mubr.bf16.mxu0 0
      %5919 = vmatmul.mubr.bf16.gmra.mrb[0].mxu0 %v5807
      %v5920 = vpop.f32.mrb[0].mxu0
      %v5921 = vadd.f32 0.0, %v5920
      %v5922 = vpop.f32.mrb[0].mxu0
      %v5923 = vpop.f32.mrb[0].mxu0
      %v5924 = vadd.f32 0.0, %v5923
      %v5925 = vpop.f32.mrb[0].mxu0
      %5926 = vmatprep.mubr.bf16.mxu0 0
      %5927 = vmatmul.mubr.bf16.gmra.mrb[0].mxu0 %v5810
      %v5928 = vpop.f32.mrb[0].mxu0
      %v5929 = vadd.f32 0.0, %v5928
      %v5930 = vpop.f32.mrb[0].mxu0
      %v5931 = vpop.f32.mrb[0].mxu0
      %v5932 = vadd.f32 0.0, %v5931
      %v5933 = vpop.f32.mrb[0].mxu0
      %5934 = vmatprep.mubr.bf16.mxu0 0
      %5935 = vmatmul.mubr.bf16.gmra.mrb[0].mxu0 %v5813
      %v5936 = vpop.f32.mrb[0].mxu0
      %v5937 = vadd.f32 0.0, %v5936
      %v5938 = vpop.f32.mrb[0].mxu0
      %v5939 = vpop.f32.mrb[0].mxu0
      %v5940 = vadd.f32 0.0, %v5939
      %v5941 = vpop.f32.mrb[0].mxu0
      %5942 = vmatprep.mubr.bf16.mxu0 0
      %5943 = vmatmul.mubr.bf16.gmra.mrb[0].mxu0 %v5816
      %v5944 = vpop.f32.mrb[0].mxu0
      %v5945 = vadd.f32 0.0, %v5944
      %v5946 = vpop.f32.mrb[0].mxu0
      %v5947 = vpop.f32.mrb[0].mxu0
      %v5948 = vadd.f32 0.0, %v5947
      %v5949 = vpop.f32.mrb[0].mxu0
      %5950 = vmatprep.mubr.bf16.mxu0 0
      %5951 = vmatmul.mubr.bf16.gmra.mrb[0].mxu0 %v5819
      %v5952 = vpop.f32.mrb[0].mxu0
      %v5953 = vadd.f32 0.0, %v5952
      %v5954 = vpop.f32.mrb[0].mxu0
      %v5955 = vpop.f32.mrb[0].mxu0
      %v5956 = vadd.f32 0.0, %v5955
      %v5957 = vpop.f32.mrb[0].mxu0
      %5958 = vmatprep.mubr.bf16.mxu0 0
      %5959 = vmatmul.mubr.bf16.gmra.mrb[0].mxu0 %v5822
      %v5960 = vpop.f32.mrb[0].mxu0
      %v5961 = vadd.f32 0.0, %v5960
      %v5962 = vpop.f32.mrb[0].mxu0
      %v5963 = vpop.f32.mrb[0].mxu0
      %v5964 = vadd.f32 0.0, %v5963
      %v5965 = vpop.f32.mrb[0].mxu0
      %5966 = vmatprep.mubr.bf16.mxu0 0
      %5967 = vmatmul.mubr.bf16.gmra.mrb[0].mxu0 %v5825
      %v5968 = vpop.f32.mrb[0].mxu0
      %v5969 = vadd.f32 0.0, %v5968
      %v5970 = vpop.f32.mrb[0].mxu0
      %v5971 = vpop.f32.mrb[0].mxu0
      %v5972 = vadd.f32 0.0, %v5971
      %v5973 = vpop.f32.mrb[0].mxu0
      %5974 = vmatprep.mubr.bf16.mxu0 0
      %5975 = vmatmul.mubr.bf16.gmra.mrb[0].mxu0 %v5828
      %v5976 = vpop.f32.mrb[0].mxu0
      %v5977 = vadd.f32 0.0, %v5976
      %v5978 = vpop.f32.mrb[0].mxu0
      %v5979 = vpop.f32.mrb[0].mxu0
      %v5980 = vadd.f32 0.0, %v5979
      %v5981 = vpop.f32.mrb[0].mxu0
      %5982 = vmatprep.mubr.bf16.mxu0 0
      %5983 = vmatmul.mubr.bf16.gmra.mrb[0].mxu0 %v5831
      %v5984 = vpop.f32.mrb[0].mxu0
      %v5985 = vadd.f32 0.0, %v5984
      %v5986 = vpop.f32.mrb[0].mxu0
      %v5987 = vpop.f32.mrb[0].mxu0
      %v5988 = vadd.f32 0.0, %v5987
      %v5989 = vpop.f32.mrb[0].mxu0
      %5990 = vmatprep.mubr.bf16.mxu0 0
      %5991 = vmatmul.mubr.bf16.gmra.mrb[0].mxu0 %v5834
      %v5992 = vpop.f32.mrb[0].mxu0
      %v5993 = vadd.f32 0.0, %v5992
      %v5994 = vpop.f32.mrb[0].mxu0
      %v5995 = vpop.f32.mrb[0].mxu0
      %v5996 = vadd.f32 0.0, %v5995
      %v5997 = vpop.f32.mrb[0].mxu0
      %5998 = vmatprep.mubr.bf16.mxu0 0
      %5999 = vmatmul.mubr.bf16.gmra.mrb[0].mxu0 %v5837
      %v6000 = vpop.f32.mrb[0].mxu0
      %v6001 = vadd.f32 0.0, %v6000
      %v6002 = vpop.f32.mrb[0].mxu0
      %v6003 = vpop.f32.mrb[0].mxu0
      %v6004 = vadd.f32 0.0, %v6003
      %v6005 = vpop.f32.mrb[0].mxu0
      %6006 = vmatprep.mubr.bf16.mxu0 0
      %6007 = vmatmul.mubr.bf16.gmra.mrb[0].mxu0 %v5840
      %v6008 = vpop.f32.mrb[0].mxu0
      %v6009 = vadd.f32 0.0, %v6008
      %v6010 = vpop.f32.mrb[0].mxu0
      %v6011 = vpop.f32.mrb[0].mxu0
      %v6012 = vadd.f32 0.0, %v6011
      %v6013 = vpop.f32.mrb[0].mxu0
      %6014 = vmatprep.mubr.bf16.mxu0 0
      %6015 = vmatmul.mubr.bf16.gmra.mrb[0].mxu0 %v5843
      %v6016 = vpop.f32.mrb[0].mxu0
      %v6017 = vadd.f32 0.0, %v6016
      %v6018 = vpop.f32.mrb[0].mxu0
      %v6019 = vpop.f32.mrb[0].mxu0
      %v6020 = vadd.f32 0.0, %v6019
      %v6021 = vpop.f32.mrb[0].mxu0
      %6022 = vmatprep.mubr.bf16.mxu0 0
      %6023 = vmatmul.mubr.bf16.gmra.mrb[0].mxu0 %v5846
      %v6024 = vpop.f32.mrb[0].mxu0
      %v6025 = vadd.f32 0.0, %v6024
      %v6026 = vpop.f32.mrb[0].mxu0
      %v6027 = vpop.f32.mrb[0].mxu0
      %v6028 = vadd.f32 0.0, %v6027
      %v6029 = vpop.f32.mrb[0].mxu0
      %6030 = vmatprep.mubr.bf16.mxu0 0
      %6031 = vmatmul.mubr.bf16.gmra.mrb[0].mxu0 %v5849
      %v6032 = vpop.f32.mrb[0].mxu0
      %v6033 = vadd.f32 0.0, %v6032
      %v6034 = vpop.f32.mrb[0].mxu0
      %v6035 = vpop.f32.mrb[0].mxu0
      %v6036 = vadd.f32 0.0, %v6035
      %v6037 = vpop.f32.mrb[0].mxu0
      %6038 = vmatprep.mubr.bf16.mxu0 0
      %6039 = vmatmul.mubr.bf16.gmra.mrb[0].mxu0 %v5852
      %v6040 = vpop.f32.mrb[0].mxu0
      %v6041 = vadd.f32 0.0, %v6040
      %v6042 = vpop.f32.mrb[0].mxu0
      %v6043 = vpop.f32.mrb[0].mxu0
      %v6044 = vadd.f32 0.0, %v6043
      %v6045 = vpop.f32.mrb[0].mxu0
      %6046 = vmatprep.mubr.bf16.mxu0 0
      %6047 = vmatmul.mubr.bf16.gmra.mrb[0].mxu0 %v5855
      %v6048 = vpop.f32.mrb[0].mxu0
      %v6049 = vadd.f32 0.0, %v6048
      %v6050 = vpop.f32.mrb[0].mxu0
      %v6051 = vpop.f32.mrb[0].mxu0
      %v6052 = vadd.f32 0.0, %v6051
      %v6053 = vpop.f32.mrb[0].mxu0
      %6054 = vmatprep.mubr.bf16.mxu0 0
      %6055 = vmatmul.mubr.bf16.gmra.mrb[0].mxu0 %v5858
      %v6056 = vpop.f32.mrb[0].mxu0
      %v6057 = vadd.f32 0.0, %v6056
      %v6058 = vpop.f32.mrb[0].mxu0
      %v6059 = vpop.f32.mrb[0].mxu0
      %v6060 = vadd.f32 0.0, %v6059
      %v6061 = vpop.f32.mrb[0].mxu0
      %6062 = vmatprep.mubr.bf16.mxu0 0
      %6063 = vmatmul.mubr.bf16.gmra.mrb[0].mxu0 %v5861
      %v6064 = vpop.f32.mrb[0].mxu0
      %v6065 = vadd.f32 0.0, %v6064
      %v6066 = vpop.f32.mrb[0].mxu0
      %v6067 = vpop.f32.mrb[0].mxu0
      %v6068 = vadd.f32 0.0, %v6067
      %v6069 = vpop.f32.mrb[0].mxu0
      %6070 = vmatprep.mubr.bf16.mxu0 0
      %6071 = vmatmul.mubr.bf16.gmra.mrb[0].mxu0 %v5864
      %v6072 = vpop.f32.mrb[0].mxu0
      %v6073 = vadd.f32 0.0, %v6072
      %v6074 = vpop.f32.mrb[0].mxu0
      %v6075 = vpop.f32.mrb[0].mxu0
      %v6076 = vadd.f32 0.0, %v6075
      %v6077 = vpop.f32.mrb[0].mxu0
      %6078 = vmatprep.mubr.bf16.mxu0 0
      %6079 = vmatmul.mubr.bf16.gmra.mrb[0].mxu0 %v5867
      %v6080 = vpop.f32.mrb[0].mxu0
      %v6081 = vadd.f32 0.0, %v6080
      %v6082 = vpop.f32.mrb[0].mxu0
      %v6083 = vpop.f32.mrb[0].mxu0
      %v6084 = vadd.f32 0.0, %v6083
      %v6085 = vpop.f32.mrb[0].mxu0
      %6086 = vmatprep.mubr.bf16.mxu0 0
      %6087 = vmatmul.mubr.bf16.gmra.mrb[0].mxu0 %v5870
      %v6088 = vpop.f32.mrb[0].mxu0
      %v6089 = vadd.f32 0.0, %v6088
      %v6090 = vpop.f32.mrb[0].mxu0
      %v6091 = vpop.f32.mrb[0].mxu0
      %v6092 = vadd.f32 0.0, %v6091
      %v6093 = vpop.f32.mrb[0].mxu0
      %6094 = vmatprep.mubr.bf16.mxu0 0
      %6095 = vmatmul.mubr.bf16.gmra.mrb[0].mxu0 %v5873
      %v6096 = vpop.f32.mrb[0].mxu0
      %v6097 = vadd.f32 0.0, %v6096
      %v6098 = vpop.f32.mrb[0].mxu0
      %v6099 = vpop.f32.mrb[0].mxu0
      %v6100 = vadd.f32 0.0, %v6099
      %v6101 = vpop.f32.mrb[0].mxu0
      %6102 = vdwg.mxu0
      %v6103 = vmul.f32 %v5913, %v5913
      %v6104 = vmul.f32 %v5916, %v5916
      %v6105 = vmul.f32 %v5921, %v5921
      %v6106 = vmul.f32 %v5924, %v5924
      %v6107 = vmul.f32 %v5929, %v5929
      %v6108 = vmul.f32 %v5932, %v5932
      %v6109 = vmul.f32 %v5937, %v5937
      %v6110 = vmul.f32 %v5940, %v5940
      %v6111 = vmul.f32 %v5945, %v5945
      %v6112 = vmul.f32 %v5948, %v5948
      %v6113 = vmul.f32 %v5953, %v5953
      %v6114 = vmul.f32 %v5956, %v5956
      %v6115 = vmul.f32 %v5961, %v5961
      %v6116 = vmul.f32 %v5964, %v5964
      %v6117 = vmul.f32 %v5969, %v5969
      %v6118 = vmul.f32 %v5972, %v5972
      %v6119 = vmul.f32 %v5977, %v5977
      %v6120 = vmul.f32 %v5980, %v5980
      %v6121 = vmul.f32 %v5985, %v5985
      %v6122 = vmul.f32 %v5988, %v5988
      %v6123 = vmul.f32 %v5993, %v5993
      %v6124 = vmul.f32 %v5996, %v5996
      %v6125 = vmul.f32 %v6001, %v6001
      %v6126 = vmul.f32 %v6004, %v6004
      %v6127 = vmul.f32 %v6009, %v6009
      %v6128 = vmul.f32 %v6012, %v6012
      %v6129 = vmul.f32 %v6017, %v6017
      %v6130 = vmul.f32 %v6020, %v6020
      %v6131 = vmul.f32 %v6025, %v6025
      %v6132 = vmul.f32 %v6028, %v6028
      %v6133 = vmul.f32 %v6033, %v6033
      %v6134 = vmul.f32 %v6036, %v6036
      %v6135 = vadd.f32 %v6103, %v6119
      %v6136 = vadd.f32 %v6104, %v6120
      %v6137 = vadd.f32 %v6105, %v6121
      %v6138 = vadd.f32 %v6106, %v6122
      %v6139 = vadd.f32 %v6107, %v6123
      %v6140 = vadd.f32 %v6108, %v6124
      %v6141 = vadd.f32 %v6109, %v6125
      %v6142 = vadd.f32 %v6110, %v6126
      %v6143 = vadd.f32 %v6111, %v6127
      %v6144 = vadd.f32 %v6112, %v6128
      %v6145 = vadd.f32 %v6113, %v6129
      %v6146 = vadd.f32 %v6114, %v6130
      %v6147 = vadd.f32 %v6115, %v6131
      %v6148 = vadd.f32 %v6116, %v6132
      %v6149 = vadd.f32 %v6117, %v6133
      %v6150 = vadd.f32 %v6118, %v6134
      %v6151 = vmul.f32 %v6041, %v6041
      %v6152 = vmul.f32 %v6044, %v6044
      %v6153 = vmul.f32 %v6049, %v6049
      %v6154 = vmul.f32 %v6052, %v6052
      %v6155 = vmul.f32 %v6057, %v6057
      %v6156 = vmul.f32 %v6060, %v6060
      %v6157 = vmul.f32 %v6065, %v6065
      %v6158 = vmul.f32 %v6068, %v6068
      %v6159 = vmul.f32 %v6073, %v6073
      %v6160 = vmul.f32 %v6076, %v6076
      %v6161 = vmul.f32 %v6081, %v6081
      %v6162 = vmul.f32 %v6084, %v6084
      %v6163 = vmul.f32 %v6089, %v6089
      %v6164 = vmul.f32 %v6092, %v6092
      %v6165 = vmul.f32 %v6097, %v6097
      %v6166 = vmul.f32 %v6100, %v6100
      %v6167 = vadd.f32 %v6135, %v6151
      %v6168 = vadd.f32 %v6136, %v6152
      %v6169 = vadd.f32 %v6137, %v6153
      %v6170 = vadd.f32 %v6138, %v6154
      %v6171 = vadd.f32 %v6139, %v6155
      %v6172 = vadd.f32 %v6140, %v6156
      %v6173 = vadd.f32 %v6141, %v6157
      %v6174 = vadd.f32 %v6142, %v6158
      %v6175 = vadd.f32 %v6143, %v6159
      %v6176 = vadd.f32 %v6144, %v6160
      %v6177 = vadd.f32 %v6145, %v6161
      %v6178 = vadd.f32 %v6146, %v6162
      %v6179 = vadd.f32 %v6147, %v6163
      %v6180 = vadd.f32 %v6148, %v6164
      %v6181 = vadd.f32 %v6149, %v6165
      %v6182 = vadd.f32 %v6150, %v6166
      %v6183 = vrsqrt.pop %v6167
      %v6184 = vmul.f32 %v6167, %v6183
      %vm6185 = vcmp.eq.f32.partialorder %v6167, inf
      %v6186 = vsel %vm6185, %v6167, %v6184
      %vm6187 = vcmp.eq.f32.partialorder %v6167, 0.0
      %v6188 = vand.u32 %v6167, 2147483648
      %v6189 = vsel %vm6187, %v6188, %v6186
      %v6190 = vrsqrt.pop %v6168
      %v6191 = vmul.f32 %v6168, %v6190
      %vm6192 = vcmp.eq.f32.partialorder %v6168, inf
      %v6193 = vsel %vm6192, %v6168, %v6191
      %vm6194 = vcmp.eq.f32.partialorder %v6168, 0.0
      %v6195 = vand.u32 %v6168, 2147483648
      %v6196 = vsel %vm6194, %v6195, %v6193
      %v6197 = vrsqrt.pop %v6169
      %v6198 = vmul.f32 %v6169, %v6197
      %vm6199 = vcmp.eq.f32.partialorder %v6169, inf
      %v6200 = vsel %vm6199, %v6169, %v6198
      %vm6201 = vcmp.eq.f32.partialorder %v6169, 0.0
      %v6202 = vand.u32 %v6169, 2147483648
      %v6203 = vsel %vm6201, %v6202, %v6200
      %v6204 = vrsqrt.pop %v6170
      %v6205 = vmul.f32 %v6170, %v6204
      %vm6206 = vcmp.eq.f32.partialorder %v6170, inf
      %v6207 = vsel %vm6206, %v6170, %v6205
      %vm6208 = vcmp.eq.f32.partialorder %v6170, 0.0
      %v6209 = vand.u32 %v6170, 2147483648
      %v6210 = vsel %vm6208, %v6209, %v6207
      %v6211 = vrsqrt.pop %v6171
      %v6212 = vmul.f32 %v6171, %v6211
      %vm6213 = vcmp.eq.f32.partialorder %v6171, inf
      %v6214 = vsel %vm6213, %v6171, %v6212
      %vm6215 = vcmp.eq.f32.partialorder %v6171, 0.0
      %v6216 = vand.u32 %v6171, 2147483648
      %v6217 = vsel %vm6215, %v6216, %v6214
      %v6218 = vrsqrt.pop %v6172
      %v6219 = vmul.f32 %v6172, %v6218
      %vm6220 = vcmp.eq.f32.partialorder %v6172, inf
      %v6221 = vsel %vm6220, %v6172, %v6219
      %vm6222 = vcmp.eq.f32.partialorder %v6172, 0.0
      %v6223 = vand.u32 %v6172, 2147483648
      %v6224 = vsel %vm6222, %v6223, %v6221
      %v6225 = vrsqrt.pop %v6173
      %v6226 = vmul.f32 %v6173, %v6225
      %vm6227 = vcmp.eq.f32.partialorder %v6173, inf
      %v6228 = vsel %vm6227, %v6173, %v6226
      %vm6229 = vcmp.eq.f32.partialorder %v6173, 0.0
      %v6230 = vand.u32 %v6173, 2147483648
      %v6231 = vsel %vm6229, %v6230, %v6228
      %v6232 = vrsqrt.pop %v6174
      %v6233 = vmul.f32 %v6174, %v6232
      %vm6234 = vcmp.eq.f32.partialorder %v6174, inf
      %v6235 = vsel %vm6234, %v6174, %v6233
      %vm6236 = vcmp.eq.f32.partialorder %v6174, 0.0
      %v6237 = vand.u32 %v6174, 2147483648
      %v6238 = vsel %vm6236, %v6237, %v6235
      %v6239 = vrsqrt.pop %v6175
      %v6240 = vmul.f32 %v6175, %v6239
      %vm6241 = vcmp.eq.f32.partialorder %v6175, inf
      %v6242 = vsel %vm6241, %v6175, %v6240
      %vm6243 = vcmp.eq.f32.partialorder %v6175, 0.0
      %v6244 = vand.u32 %v6175, 2147483648
      %v6245 = vsel %vm6243, %v6244, %v6242
      %v6246 = vrsqrt.pop %v6176
      %v6247 = vmul.f32 %v6176, %v6246
      %vm6248 = vcmp.eq.f32.partialorder %v6176, inf
      %v6249 = vsel %vm6248, %v6176, %v6247
      %vm6250 = vcmp.eq.f32.partialorder %v6176, 0.0
      %v6251 = vand.u32 %v6176, 2147483648
      %v6252 = vsel %vm6250, %v6251, %v6249
      %v6253 = vrsqrt.pop %v6177
      %v6254 = vmul.f32 %v6177, %v6253
      %vm6255 = vcmp.eq.f32.partialorder %v6177, inf
      %v6256 = vsel %vm6255, %v6177, %v6254
      %vm6257 = vcmp.eq.f32.partialorder %v6177, 0.0
      %v6258 = vand.u32 %v6177, 2147483648
      %v6259 = vsel %vm6257, %v6258, %v6256
      %v6260 = vrsqrt.pop %v6178
      %v6261 = vmul.f32 %v6178, %v6260
      %vm6262 = vcmp.eq.f32.partialorder %v6178, inf
      %v6263 = vsel %vm6262, %v6178, %v6261
      %vm6264 = vcmp.eq.f32.partialorder %v6178, 0.0
      %v6265 = vand.u32 %v6178, 2147483648
      %v6266 = vsel %vm6264, %v6265, %v6263
      %v6267 = vrsqrt.pop %v6179
      %v6268 = vmul.f32 %v6179, %v6267
      %vm6269 = vcmp.eq.f32.partialorder %v6179, inf
      %v6270 = vsel %vm6269, %v6179, %v6268
      %vm6271 = vcmp.eq.f32.partialorder %v6179, 0.0
      %v6272 = vand.u32 %v6179, 2147483648
      %v6273 = vsel %vm6271, %v6272, %v6270
      %v6274 = vrsqrt.pop %v6180
      %v6275 = vmul.f32 %v6180, %v6274
      %vm6276 = vcmp.eq.f32.partialorder %v6180, inf
      %v6277 = vsel %vm6276, %v6180, %v6275
      %vm6278 = vcmp.eq.f32.partialorder %v6180, 0.0
      %v6279 = vand.u32 %v6180, 2147483648
      %v6280 = vsel %vm6278, %v6279, %v6277
      %v6281 = vrsqrt.pop %v6181
      %v6282 = vmul.f32 %v6181, %v6281
      %vm6283 = vcmp.eq.f32.partialorder %v6181, inf
      %v6284 = vsel %vm6283, %v6181, %v6282
      %vm6285 = vcmp.eq.f32.partialorder %v6181, 0.0
      %v6286 = vand.u32 %v6181, 2147483648
      %v6287 = vsel %vm6285, %v6286, %v6284
      %v6288 = vrsqrt.pop %v6182
      %v6289 = vmul.f32 %v6182, %v6288
      %vm6290 = vcmp.eq.f32.partialorder %v6182, inf
      %v6291 = vsel %vm6290, %v6182, %v6289
      %vm6292 = vcmp.eq.f32.partialorder %v6182, 0.0
      %v6293 = vand.u32 %v6182, 2147483648
      %v6294 = vsel %vm6292, %v6293, %v6291
      %6311 = vrot.lane.b32.xlu0 %v4753, 8
      %v6312 = vpop.permute.xlu0 %6311
      %6313 = vrot.lane.b32.xlu0 %v4754, 8
      %v6314 = vpop.permute.xlu0 %6313
      %6315 = vrot.lane.b32.xlu0 %v4755, 8
      %v6316 = vpop.permute.xlu0 %6315
      %6317 = vrot.lane.b32.xlu0 %v4756, 8
      %v6318 = vpop.permute.xlu0 %6317
      %6319 = vrot.lane.b32.xlu0 %v4757, 8
      %v6320 = vpop.permute.xlu0 %6319
      %6321 = vrot.lane.b32.xlu0 %v4758, 8
      %v6322 = vpop.permute.xlu0 %6321
      %6323 = vrot.lane.b32.xlu0 %v4759, 8
      %v6324 = vpop.permute.xlu0 %6323
      %6325 = vrot.lane.b32.xlu0 %v4760, 8
      %v6326 = vpop.permute.xlu0 %6325
      %6327 = vrot.lane.b32.xlu0 %v4761, 8
      %v6328 = vpop.permute.xlu0 %6327
      %6329 = vrot.lane.b32.xlu0 %v4762, 8
      %v6330 = vpop.permute.xlu0 %6329
      %6331 = vrot.lane.b32.xlu0 %v4763, 8
      %v6332 = vpop.permute.xlu0 %6331
      %6333 = vrot.lane.b32.xlu0 %v4764, 8
      %v6334 = vpop.permute.xlu0 %6333
      %6335 = vrot.lane.b32.xlu0 %v4765, 8
      %v6336 = vpop.permute.xlu0 %6335
      %6337 = vrot.lane.b32.xlu0 %v4766, 8
      %v6338 = vpop.permute.xlu0 %6337
      %6339 = vrot.lane.b32.xlu0 %v4767, 8
      %v6340 = vpop.permute.xlu0 %6339
      %6341 = vrot.lane.b32.xlu0 %v4768, 8
      %v6342 = vpop.permute.xlu0 %6341
      %v6359 = vsel %vm5802, %v6189, %v6312
      %v6360 = vsel %vm5802, %v6196, %v6314
      %v6361 = vsel %vm5802, %v6203, %v6316
      %v6362 = vsel %vm5802, %v6210, %v6318
      %v6363 = vsel %vm5802, %v6217, %v6320
      %v6364 = vsel %vm5802, %v6224, %v6322
      %v6365 = vsel %vm5802, %v6231, %v6324
      %v6366 = vsel %vm5802, %v6238, %v6326
      %v6367 = vsel %vm5802, %v6245, %v6328
      %v6368 = vsel %vm5802, %v6252, %v6330
      %v6369 = vsel %vm5802, %v6259, %v6332
      %v6370 = vsel %vm5802, %v6266, %v6334
      %v6371 = vsel %vm5802, %v6273, %v6336
      %v6372 = vsel %vm5802, %v6280, %v6338
      %v6373 = vsel %vm5802, %v6287, %v6340
      %v6374 = vsel %vm5802, %v6294, %v6342
      %v6375 = vpack.c.bf16 %v6360, %v6359
      %v6376 = vpack.c.bf16 %v6362, %v6361
      %v6377 = vpack.c.bf16 %v6364, %v6363
      %v6378 = vpack.c.bf16 %v6366, %v6365
      %v6379 = vpack.c.bf16 %v6368, %v6367
      %v6380 = vpack.c.bf16 %v6370, %v6369
      %v6381 = vpack.c.bf16 %v6372, %v6371
      %v6382 = vpack.c.bf16 %v6374, %v6373
      %v6388 = vunpack.c.l.b16 %v5694
      %v6389 = vunpack.c.l.b16 %v5695
      %v6390 = vunpack.c.l.b16 %v5696
      %v6391 = vunpack.c.l.b16 %v5697
      %v6392 = vunpack.c.l.b16 %v5698
      %v6393 = vpack.c.b16 %v6389, %v6388
      %v6394 = vpack.c.b16 %v6391, %v6390
      %v6395 = vpack.c.b16 %v6392, %v6392
      %vm6398 = vcmask 326656
      %v6400 = vsel %vm6398, %v6375, 0
      %v6403 = vsel %vm6398, %v6376, 0
      %v6406 = vsel %vm6398, %v6377, 0
      %v6409 = vsel %vm6398, %v6378, 0
      %v6412 = vsel %vm6398, %v6379, 0
      %v6415 = vsel %vm6398, %v6380, 0
      %v6418 = vsel %vm6398, %v6381, 0
      %v6421 = vsel %vm6398, %v6382, 0
      %v6424 = vsel %vm1863, %v6395, 0
      %6426 = vmatprep.subr.bf16.mxu0 0
      %6427 = vmatpush1.bf16.msra.mxu0 %v6393
      %6428 = vmatprep.subr.bf16.mxu0 0
      %6429 = vmatpush1.bf16.msra.mxu0 %v6394
      %6430 = vmatprep.subr.bf16.mxu0 0
      %6431 = vmatpush1.bf16.msra.mxu0 %v6424
      %6432 = vmatprep.subr.bf16.mxu0 0
      %6433 = vmatpush1.bf16.msra.mxu0 0
      %6434 = vmatprep.subr.bf16.mxu0 0
      %6435 = vmatpush1.bf16.msra.mxu0 0
      %6436 = vmatprep.subr.bf16.mxu0 0
      %6437 = vmatpush1.bf16.msra.mxu0 0
      %6438 = vmatprep.subr.bf16.mxu0 0
      %6439 = vmatpush1.bf16.msra.mxu0 0
      %6440 = vmatprep.subr.bf16.mxu0 0
      %6441 = vmatpush1.bf16.msra.mxu0 0
      %6442 = vmatprep.subr.bf16.mxu0 0
      %6443 = vmatpush1.bf16.msra.mxu0 0
      %6444 = vmatprep.subr.bf16.mxu0 0
      %6445 = vmatpush1.bf16.msra.mxu0 0
      %6446 = vmatprep.subr.bf16.mxu0 0
      %6447 = vmatpush1.bf16.msra.mxu0 0
      %6448 = vmatprep.subr.bf16.mxu0 0
      %6449 = vmatpush1.bf16.msra.mxu0 0
      %6450 = vmatprep.subr.bf16.mxu0 0
      %6451 = vmatpush1.bf16.msra.mxu0 0
      %6452 = vmatprep.subr.bf16.mxu0 0
      %6453 = vmatpush1.bf16.msra.mxu0 0
      %6454 = vmatprep.subr.bf16.mxu0 0
      %6455 = vmatpush1.bf16.msra.mxu0 0
      %6456 = vmatprep.subr.bf16.mxu0 0
      %6457 = vmatpush1.bf16.msra.mxu0 0
      %6458 = vmatprep.mubr.bf16.mxu0 0
      %6459 = vmatmul.mubr.bf16.gmra.mrb[0].mxu0 %v6400
      %v6460 = vpop.f32.mrb[0].mxu0
      %v6461 = vadd.f32 0.0, %v6460
      %v6462 = vpop.f32.mrb[0].mxu0
      %v6463 = vpop.f32.mrb[0].mxu0
      %v6464 = vadd.f32 0.0, %v6463
      %v6465 = vpop.f32.mrb[0].mxu0
      %6466 = vmatprep.mubr.bf16.mxu0 0
      %6467 = vmatmul.mubr.bf16.gmra.mrb[0].mxu0 %v6403
      %v6468 = vpop.f32.mrb[0].mxu0
      %v6469 = vadd.f32 0.0, %v6468
      %v6470 = vpop.f32.mrb[0].mxu0
      %v6471 = vpop.f32.mrb[0].mxu0
      %v6472 = vadd.f32 0.0, %v6471
      %v6473 = vpop.f32.mrb[0].mxu0
      %6474 = vmatprep.mubr.bf16.mxu0 0
      %6475 = vmatmul.mubr.bf16.gmra.mrb[0].mxu0 %v6406
      %v6476 = vpop.f32.mrb[0].mxu0
      %v6477 = vadd.f32 0.0, %v6476
      %v6478 = vpop.f32.mrb[0].mxu0
      %v6479 = vpop.f32.mrb[0].mxu0
      %v6480 = vadd.f32 0.0, %v6479
      %v6481 = vpop.f32.mrb[0].mxu0
      %6482 = vmatprep.mubr.bf16.mxu0 0
      %6483 = vmatmul.mubr.bf16.gmra.mrb[0].mxu0 %v6409
      %v6484 = vpop.f32.mrb[0].mxu0
      %v6485 = vadd.f32 0.0, %v6484
      %v6486 = vpop.f32.mrb[0].mxu0
      %v6487 = vpop.f32.mrb[0].mxu0
      %v6488 = vadd.f32 0.0, %v6487
      %v6489 = vpop.f32.mrb[0].mxu0
      %6490 = vmatprep.mubr.bf16.mxu0 0
      %6491 = vmatmul.mubr.bf16.gmra.mrb[0].mxu0 %v6412
      %v6492 = vpop.f32.mrb[0].mxu0
      %v6493 = vadd.f32 0.0, %v6492
      %v6494 = vpop.f32.mrb[0].mxu0
      %v6495 = vpop.f32.mrb[0].mxu0
      %v6496 = vadd.f32 0.0, %v6495
      %v6497 = vpop.f32.mrb[0].mxu0
      %6498 = vmatprep.mubr.bf16.mxu0 0
      %6499 = vmatmul.mubr.bf16.gmra.mrb[0].mxu0 %v6415
      %v6500 = vpop.f32.mrb[0].mxu0
      %v6501 = vadd.f32 0.0, %v6500
      %v6502 = vpop.f32.mrb[0].mxu0
      %v6503 = vpop.f32.mrb[0].mxu0
      %v6504 = vadd.f32 0.0, %v6503
      %v6505 = vpop.f32.mrb[0].mxu0
      %6506 = vmatprep.mubr.bf16.mxu0 0
      %6507 = vmatmul.mubr.bf16.gmra.mrb[0].mxu0 %v6418
      %v6508 = vpop.f32.mrb[0].mxu0
      %v6509 = vadd.f32 0.0, %v6508
      %v6510 = vpop.f32.mrb[0].mxu0
      %v6511 = vpop.f32.mrb[0].mxu0
      %v6512 = vadd.f32 0.0, %v6511
      %v6513 = vpop.f32.mrb[0].mxu0
      %6514 = vmatprep.mubr.bf16.mxu0 0
      %6515 = vmatmul.mubr.bf16.gmra.mrb[0].mxu0 %v6421
      %v6516 = vpop.f32.mrb[0].mxu0
      %v6517 = vadd.f32 0.0, %v6516
      %v6518 = vpop.f32.mrb[0].mxu0
      %v6519 = vpop.f32.mrb[0].mxu0
      %v6520 = vadd.f32 0.0, %v6519
      %v6521 = vpop.f32.mrb[0].mxu0
      %6522 = vdwg.mxu0
      %v6523 = vpack.c.bf16 %v6464, %v6461
      %v6524 = vpack.c.bf16 %v6472, %v6469
      %v6525 = vpack.c.bf16 %v6480, %v6477
      %v6526 = vpack.c.bf16 %v6488, %v6485
      %v6527 = vpack.c.bf16 %v6496, %v6493
      %v6528 = vpack.c.bf16 %v6504, %v6501
      %v6529 = vpack.c.bf16 %v6512, %v6509
      %v6530 = vpack.c.bf16 %v6520, %v6517
      %v6532 = vlaneseq
      %v6533 = vshrl.u32 %v6532, 7
      %v6534 = vsub.s32 0, %v6533
      %v6535 = vrot.slane %v5705, %v6534
      %v6541 = vunpack.c.l.b16 %v5700
      %v6542 = vunpack.c.l.b16 %v5701
      %v6543 = vunpack.c.l.b16 %v5702
      %v6544 = vunpack.c.l.b16 %v5703
      %v6545 = vpack.c.b16 %v6542, %v6541
      %v6546 = vpack.c.b16 %v6544, %v6543
      %v6550 = vsel %vm2842, %v6523, 0
      %v6553 = vsel %vm2842, %v6524, 0
      %v6556 = vsel %vm2842, %v6525, 0
      %v6559 = vsel %vm2842, %v6526, 0
      %v6562 = vsel %vm2842, %v6527, 0
      %v6565 = vsel %vm2842, %v6528, 0
      %v6568 = vsel %vm2842, %v6529, 0
      %v6571 = vsel %vm2842, %v6530, 0
      %6573 = vmatprep.subr.bf16.mxu0 0
      %6574 = vmatpush1.bf16.msra.mxu0 %v6545
      %6575 = vmatprep.subr.bf16.mxu0 0
      %6576 = vmatpush1.bf16.msra.mxu0 %v6546
      %6577 = vmatprep.subr.bf16.mxu0 0
      %6578 = vmatpush1.bf16.msra.mxu0 0
      %6579 = vmatprep.subr.bf16.mxu0 0
      %6580 = vmatpush1.bf16.msra.mxu0 0
      %6581 = vmatprep.subr.bf16.mxu0 0
      %6582 = vmatpush1.bf16.msra.mxu0 0
      %6583 = vmatprep.subr.bf16.mxu0 0
      %6584 = vmatpush1.bf16.msra.mxu0 0
      %6585 = vmatprep.subr.bf16.mxu0 0
      %6586 = vmatpush1.bf16.msra.mxu0 0
      %6587 = vmatprep.subr.bf16.mxu0 0
      %6588 = vmatpush1.bf16.msra.mxu0 0
      %6589 = vmatprep.subr.bf16.mxu0 0
      %6590 = vmatpush1.bf16.msra.mxu0 0
      %6591 = vmatprep.subr.bf16.mxu0 0
      %6592 = vmatpush1.bf16.msra.mxu0 0
      %6593 = vmatprep.subr.bf16.mxu0 0
      %6594 = vmatpush1.bf16.msra.mxu0 0
      %6595 = vmatprep.subr.bf16.mxu0 0
      %6596 = vmatpush1.bf16.msra.mxu0 0
      %6597 = vmatprep.subr.bf16.mxu0 0
      %6598 = vmatpush1.bf16.msra.mxu0 0
      %6599 = vmatprep.subr.bf16.mxu0 0
      %6600 = vmatpush1.bf16.msra.mxu0 0
      %6601 = vmatprep.subr.bf16.mxu0 0
      %6602 = vmatpush1.bf16.msra.mxu0 0
      %6603 = vmatprep.subr.bf16.mxu0 0
      %6604 = vmatpush1.bf16.msra.mxu0 0
      %6605 = vmatprep.mubr.bf16.mxu0 0
      %6606 = vmatmul.mubr.bf16.gmra.mrb[0].mxu0 %v6550
      %v6607 = vpop.f32.mrb[0].mxu0
      %v6608 = vadd.f32 %v6535, %v6607
      %v6609 = vpop.f32.mrb[0].mxu0
      %v6610 = vpop.f32.mrb[0].mxu0
      %v6611 = vadd.f32 %v6535, %v6610
      %v6612 = vpop.f32.mrb[0].mxu0
      %6613 = vmatprep.mubr.bf16.mxu0 0
      %6614 = vmatmul.mubr.bf16.gmra.mrb[0].mxu0 %v6553
      %v6615 = vpop.f32.mrb[0].mxu0
      %v6616 = vadd.f32 %v6535, %v6615
      %v6617 = vpop.f32.mrb[0].mxu0
      %v6618 = vpop.f32.mrb[0].mxu0
      %v6619 = vadd.f32 %v6535, %v6618
      %v6620 = vpop.f32.mrb[0].mxu0
      %6621 = vmatprep.mubr.bf16.mxu0 0
      %6622 = vmatmul.mubr.bf16.gmra.mrb[0].mxu0 %v6556
      %v6623 = vpop.f32.mrb[0].mxu0
      %v6624 = vadd.f32 %v6535, %v6623
      %v6625 = vpop.f32.mrb[0].mxu0
      %v6626 = vpop.f32.mrb[0].mxu0
      %v6627 = vadd.f32 %v6535, %v6626
      %v6628 = vpop.f32.mrb[0].mxu0
      %6629 = vmatprep.mubr.bf16.mxu0 0
      %6630 = vmatmul.mubr.bf16.gmra.mrb[0].mxu0 %v6559
      %v6631 = vpop.f32.mrb[0].mxu0
      %v6632 = vadd.f32 %v6535, %v6631
      %v6633 = vpop.f32.mrb[0].mxu0
      %v6634 = vpop.f32.mrb[0].mxu0
      %v6635 = vadd.f32 %v6535, %v6634
      %v6636 = vpop.f32.mrb[0].mxu0
      %6637 = vmatprep.mubr.bf16.mxu0 0
      %6638 = vmatmul.mubr.bf16.gmra.mrb[0].mxu0 %v6562
      %v6639 = vpop.f32.mrb[0].mxu0
      %v6640 = vadd.f32 %v6535, %v6639
      %v6641 = vpop.f32.mrb[0].mxu0
      %v6642 = vpop.f32.mrb[0].mxu0
      %v6643 = vadd.f32 %v6535, %v6642
      %v6644 = vpop.f32.mrb[0].mxu0
      %6645 = vmatprep.mubr.bf16.mxu0 0
      %6646 = vmatmul.mubr.bf16.gmra.mrb[0].mxu0 %v6565
      %v6647 = vpop.f32.mrb[0].mxu0
      %v6648 = vadd.f32 %v6535, %v6647
      %v6649 = vpop.f32.mrb[0].mxu0
      %v6650 = vpop.f32.mrb[0].mxu0
      %v6651 = vadd.f32 %v6535, %v6650
      %v6652 = vpop.f32.mrb[0].mxu0
      %6653 = vmatprep.mubr.bf16.mxu0 0
      %6654 = vmatmul.mubr.bf16.gmra.mrb[0].mxu0 %v6568
      %v6655 = vpop.f32.mrb[0].mxu0
      %v6656 = vadd.f32 %v6535, %v6655
      %v6657 = vpop.f32.mrb[0].mxu0
      %v6658 = vpop.f32.mrb[0].mxu0
      %v6659 = vadd.f32 %v6535, %v6658
      %v6660 = vpop.f32.mrb[0].mxu0
      %6661 = vmatprep.mubr.bf16.mxu0 0
      %6662 = vmatmul.mubr.bf16.gmra.mrb[0].mxu0 %v6571
      %v6663 = vpop.f32.mrb[0].mxu0
      %v6664 = vadd.f32 %v6535, %v6663
      %v6665 = vpop.f32.mrb[0].mxu0
      %v6666 = vpop.f32.mrb[0].mxu0
      %v6667 = vadd.f32 %v6535, %v6666
      %v6668 = vpop.f32.mrb[0].mxu0
      %6669 = vdwg.mxu0
      %v6670 = vxor.u32 %v6608, 2147483648
      %v6671 = vxor.u32 %v6611, 2147483648
      %v6672 = vxor.u32 %v6616, 2147483648
      %v6673 = vxor.u32 %v6619, 2147483648
      %v6674 = vxor.u32 %v6624, 2147483648
      %v6675 = vxor.u32 %v6627, 2147483648
      %v6676 = vxor.u32 %v6632, 2147483648
      %v6677 = vxor.u32 %v6635, 2147483648
      %v6678 = vxor.u32 %v6640, 2147483648
      %v6679 = vxor.u32 %v6643, 2147483648
      %v6680 = vxor.u32 %v6648, 2147483648
      %v6681 = vxor.u32 %v6651, 2147483648
      %v6682 = vxor.u32 %v6656, 2147483648
      %v6683 = vxor.u32 %v6659, 2147483648
      %v6684 = vxor.u32 %v6664, 2147483648
      %v6685 = vxor.u32 %v6667, 2147483648
      %v6686 = vmul.f32 %v6670, 1.442695
      %v6687 = vpow.pop %v6686
      %v6688 = vmul.f32 %v6671, 1.442695
      %v6689 = vpow.pop %v6688
      %v6690 = vmul.f32 %v6672, 1.442695
      %v6691 = vpow.pop %v6690
      %v6692 = vmul.f32 %v6673, 1.442695
      %v6693 = vpow.pop %v6692
      %v6694 = vmul.f32 %v6674, 1.442695
      %v6695 = vpow.pop %v6694
      %v6696 = vmul.f32 %v6675, 1.442695
      %v6697 = vpow.pop %v6696
      %v6698 = vmul.f32 %v6676, 1.442695
      %v6699 = vpow.pop %v6698
      %v6700 = vmul.f32 %v6677, 1.442695
      %v6701 = vpow.pop %v6700
      %v6702 = vmul.f32 %v6678, 1.442695
      %v6703 = vpow.pop %v6702
      %v6704 = vmul.f32 %v6679, 1.442695
      %v6705 = vpow.pop %v6704
      %v6706 = vmul.f32 %v6680, 1.442695
      %v6707 = vpow.pop %v6706
      %v6708 = vmul.f32 %v6681, 1.442695
      %v6709 = vpow.pop %v6708
      %v6710 = vmul.f32 %v6682, 1.442695
      %v6711 = vpow.pop %v6710
      %v6712 = vmul.f32 %v6683, 1.442695
      %v6713 = vpow.pop %v6712
      %v6714 = vmul.f32 %v6684, 1.442695
      %v6715 = vpow.pop %v6714
      %v6716 = vmul.f32 %v6685, 1.442695
      %v6717 = vpow.pop %v6716
      %v6718 = vadd.f32 %v6687, 1.0
      %v6719 = vadd.f32 %v6689, 1.0
      %v6720 = vadd.f32 %v6691, 1.0
      %v6721 = vadd.f32 %v6693, 1.0
      %v6722 = vadd.f32 %v6695, 1.0
      %v6723 = vadd.f32 %v6697, 1.0
      %v6724 = vadd.f32 %v6699, 1.0
      %v6725 = vadd.f32 %v6701, 1.0
      %v6726 = vadd.f32 %v6703, 1.0
      %v6727 = vadd.f32 %v6705, 1.0
      %v6728 = vadd.f32 %v6707, 1.0
      %v6729 = vadd.f32 %v6709, 1.0
      %v6730 = vadd.f32 %v6711, 1.0
      %v6731 = vadd.f32 %v6713, 1.0
      %v6732 = vadd.f32 %v6715, 1.0
      %v6733 = vadd.f32 %v6717, 1.0
      %v6734 = vrcp.pop %v6718
      %v6735 = vmul.f32 1.0, %v6734
      %v6736 = vrcp.pop %v6719
      %v6737 = vmul.f32 1.0, %v6736
      %v6738 = vrcp.pop %v6720
      %v6739 = vmul.f32 1.0, %v6738
      %v6740 = vrcp.pop %v6721
      %v6741 = vmul.f32 1.0, %v6740
      %v6742 = vrcp.pop %v6722
      %v6743 = vmul.f32 1.0, %v6742
      %v6744 = vrcp.pop %v6723
      %v6745 = vmul.f32 1.0, %v6744
      %v6746 = vrcp.pop %v6724
      %v6747 = vmul.f32 1.0, %v6746
      %v6748 = vrcp.pop %v6725
      %v6749 = vmul.f32 1.0, %v6748
      %v6750 = vrcp.pop %v6726
      %v6751 = vmul.f32 1.0, %v6750
      %v6752 = vrcp.pop %v6727
      %v6753 = vmul.f32 1.0, %v6752
      %v6754 = vrcp.pop %v6728
      %v6755 = vmul.f32 1.0, %v6754
      %v6756 = vrcp.pop %v6729
      %v6757 = vmul.f32 1.0, %v6756
      %v6758 = vrcp.pop %v6730
      %v6759 = vmul.f32 1.0, %v6758
      %v6760 = vrcp.pop %v6731
      %v6761 = vmul.f32 1.0, %v6760
      %v6762 = vrcp.pop %v6732
      %v6763 = vmul.f32 1.0, %v6762
      %v6764 = vrcp.pop %v6733
      %v6765 = vmul.f32 1.0, %v6764
      %v6766 = vpack.c.bf16 %v5916, %v5913
      %v6767 = vpack.c.bf16 %v5924, %v5921
      %v6768 = vpack.c.bf16 %v5932, %v5929
      %v6769 = vpack.c.bf16 %v5940, %v5937
      %v6770 = vpack.c.bf16 %v5948, %v5945
      %v6771 = vpack.c.bf16 %v5956, %v5953
      %v6772 = vpack.c.bf16 %v5964, %v5961
      %v6773 = vpack.c.bf16 %v5972, %v5969
      %v6774 = vpack.c.bf16 %v5980, %v5977
      %v6775 = vpack.c.bf16 %v5988, %v5985
      %v6776 = vpack.c.bf16 %v5996, %v5993
      %v6777 = vpack.c.bf16 %v6004, %v6001
      %v6778 = vpack.c.bf16 %v6012, %v6009
      %v6779 = vpack.c.bf16 %v6020, %v6017
      %v6780 = vpack.c.bf16 %v6028, %v6025
      %v6781 = vpack.c.bf16 %v6036, %v6033
      %v6782 = vpack.c.bf16 %v6044, %v6041
      %v6783 = vpack.c.bf16 %v6052, %v6049
      %v6784 = vpack.c.bf16 %v6060, %v6057
      %v6785 = vpack.c.bf16 %v6068, %v6065
      %v6786 = vpack.c.bf16 %v6076, %v6073
      %v6787 = vpack.c.bf16 %v6084, %v6081
      %v6788 = vpack.c.bf16 %v6092, %v6089
      %v6789 = vpack.c.bf16 %v6100, %v6097
      %v6791 = vsel %vm5802, %v6766, 0
      %v6794 = vsel %vm5802, %v6767, 0
      %v6797 = vsel %vm5802, %v6768, 0
      %v6800 = vsel %vm5802, %v6769, 0
      %v6803 = vsel %vm5802, %v6770, 0
      %v6806 = vsel %vm5802, %v6771, 0
      %v6809 = vsel %vm5802, %v6772, 0
      %v6812 = vsel %vm5802, %v6773, 0
      %v6815 = vsel %vm5802, %v6774, 0
      %v6818 = vsel %vm5802, %v6775, 0
      %v6821 = vsel %vm5802, %v6776, 0
      %v6824 = vsel %vm5802, %v6777, 0
      %v6827 = vsel %vm5802, %v6778, 0
      %v6830 = vsel %vm5802, %v6779, 0
      %v6833 = vsel %vm5802, %v6780, 0
      %v6836 = vsel %vm5802, %v6781, 0
      %v6839 = vsel %vm5802, %v6782, 0
      %v6842 = vsel %vm5802, %v6783, 0
      %v6845 = vsel %vm5802, %v6784, 0
      %v6848 = vsel %vm5802, %v6785, 0
      %v6851 = vsel %vm5802, %v6786, 0
      %v6854 = vsel %vm5802, %v6787, 0
      %v6857 = vsel %vm5802, %v6788, 0
      %v6860 = vsel %vm5802, %v6789, 0
      %v6863 = vsel %vm1863, %v5692, 0
      %6865 = vmatprep.subr.bf16.mxu0 0
      %6866 = vmatpush1.bf16.msra.mxu0 %v6863
      %6867 = vmatprep.subr.bf16.mxu0 0
      %6868 = vmatpush1.bf16.msra.mxu0 0
      %6869 = vmatprep.subr.bf16.mxu0 0
      %6870 = vmatpush1.bf16.msra.mxu0 0
      %6871 = vmatprep.subr.bf16.mxu0 0
      %6872 = vmatpush1.bf16.msra.mxu0 0
      %6873 = vmatprep.subr.bf16.mxu0 0
      %6874 = vmatpush1.bf16.msra.mxu0 0
      %6875 = vmatprep.subr.bf16.mxu0 0
      %6876 = vmatpush1.bf16.msra.mxu0 0
      %6877 = vmatprep.subr.bf16.mxu0 0
      %6878 = vmatpush1.bf16.msra.mxu0 0
      %6879 = vmatprep.subr.bf16.mxu0 0
      %6880 = vmatpush1.bf16.msra.mxu0 0
      %6881 = vmatprep.subr.bf16.mxu0 0
      %6882 = vmatpush1.bf16.msra.mxu0 0
      %6883 = vmatprep.subr.bf16.mxu0 0
      %6884 = vmatpush1.bf16.msra.mxu0 0
      %6885 = vmatprep.subr.bf16.mxu0 0
      %6886 = vmatpush1.bf16.msra.mxu0 0
      %6887 = vmatprep.subr.bf16.mxu0 0
      %6888 = vmatpush1.bf16.msra.mxu0 0
      %6889 = vmatprep.subr.bf16.mxu0 0
      %6890 = vmatpush1.bf16.msra.mxu0 0
      %6891 = vmatprep.subr.bf16.mxu0 0
      %6892 = vmatpush1.bf16.msra.mxu0 0
      %6893 = vmatprep.subr.bf16.mxu0 0
      %6894 = vmatpush1.bf16.msra.mxu0 0
      %6895 = vmatprep.subr.bf16.mxu0 0
      %6896 = vmatpush1.bf16.msra.mxu0 0
      %6897 = vmatprep.mubr.bf16.mxu0 0
      %6898 = vmatmul.mubr.bf16.gmra.mrb[0].mxu0 %v6791
      %v6899 = vpop.f32.mrb[0].mxu0
      %v6900 = vadd.f32 0.0, %v6899
      %v6901 = vpop.f32.mrb[0].mxu0
      %v6902 = vpop.f32.mrb[0].mxu0
      %v6903 = vadd.f32 0.0, %v6902
      %v6904 = vpop.f32.mrb[0].mxu0
      %6905 = vmatprep.mubr.bf16.mxu0 0
      %6906 = vmatmul.mubr.bf16.gmra.mrb[0].mxu0 %v6794
      %v6907 = vpop.f32.mrb[0].mxu0
      %v6908 = vadd.f32 0.0, %v6907
      %v6909 = vpop.f32.mrb[0].mxu0
      %v6910 = vpop.f32.mrb[0].mxu0
      %v6911 = vadd.f32 0.0, %v6910
      %v6912 = vpop.f32.mrb[0].mxu0
      %6913 = vmatprep.mubr.bf16.mxu0 0
      %6914 = vmatmul.mubr.bf16.gmra.mrb[0].mxu0 %v6797
      %v6915 = vpop.f32.mrb[0].mxu0
      %v6916 = vadd.f32 0.0, %v6915
      %v6917 = vpop.f32.mrb[0].mxu0
      %v6918 = vpop.f32.mrb[0].mxu0
      %v6919 = vadd.f32 0.0, %v6918
      %v6920 = vpop.f32.mrb[0].mxu0
      %6921 = vmatprep.mubr.bf16.mxu0 0
      %6922 = vmatmul.mubr.bf16.gmra.mrb[0].mxu0 %v6800
      %v6923 = vpop.f32.mrb[0].mxu0
      %v6924 = vadd.f32 0.0, %v6923
      %v6925 = vpop.f32.mrb[0].mxu0
      %v6926 = vpop.f32.mrb[0].mxu0
      %v6927 = vadd.f32 0.0, %v6926
      %v6928 = vpop.f32.mrb[0].mxu0
      %6929 = vmatprep.mubr.bf16.mxu0 0
      %6930 = vmatmul.mubr.bf16.gmra.mrb[0].mxu0 %v6803
      %v6931 = vpop.f32.mrb[0].mxu0
      %v6932 = vadd.f32 0.0, %v6931
      %v6933 = vpop.f32.mrb[0].mxu0
      %v6934 = vpop.f32.mrb[0].mxu0
      %v6935 = vadd.f32 0.0, %v6934
      %v6936 = vpop.f32.mrb[0].mxu0
      %6937 = vmatprep.mubr.bf16.mxu0 0
      %6938 = vmatmul.mubr.bf16.gmra.mrb[0].mxu0 %v6806
      %v6939 = vpop.f32.mrb[0].mxu0
      %v6940 = vadd.f32 0.0, %v6939
      %v6941 = vpop.f32.mrb[0].mxu0
      %v6942 = vpop.f32.mrb[0].mxu0
      %v6943 = vadd.f32 0.0, %v6942
      %v6944 = vpop.f32.mrb[0].mxu0
      %6945 = vmatprep.mubr.bf16.mxu0 0
      %6946 = vmatmul.mubr.bf16.gmra.mrb[0].mxu0 %v6809
      %v6947 = vpop.f32.mrb[0].mxu0
      %v6948 = vadd.f32 0.0, %v6947
      %v6949 = vpop.f32.mrb[0].mxu0
      %v6950 = vpop.f32.mrb[0].mxu0
      %v6951 = vadd.f32 0.0, %v6950
      %v6952 = vpop.f32.mrb[0].mxu0
      %6953 = vmatprep.mubr.bf16.mxu0 0
      %6954 = vmatmul.mubr.bf16.gmra.mrb[0].mxu0 %v6812
      %v6955 = vpop.f32.mrb[0].mxu0
      %v6956 = vadd.f32 0.0, %v6955
      %v6957 = vpop.f32.mrb[0].mxu0
      %v6958 = vpop.f32.mrb[0].mxu0
      %v6959 = vadd.f32 0.0, %v6958
      %v6960 = vpop.f32.mrb[0].mxu0
      %6961 = vmatprep.mubr.bf16.mxu0 0
      %6962 = vmatmul.mubr.bf16.gmra.mrb[0].mxu0 %v6815
      %v6963 = vpop.f32.mrb[0].mxu0
      %v6964 = vadd.f32 0.0, %v6963
      %v6965 = vpop.f32.mrb[0].mxu0
      %v6966 = vpop.f32.mrb[0].mxu0
      %v6967 = vadd.f32 0.0, %v6966
      %v6968 = vpop.f32.mrb[0].mxu0
      %6969 = vmatprep.mubr.bf16.mxu0 0
      %6970 = vmatmul.mubr.bf16.gmra.mrb[0].mxu0 %v6818
      %v6971 = vpop.f32.mrb[0].mxu0
      %v6972 = vadd.f32 0.0, %v6971
      %v6973 = vpop.f32.mrb[0].mxu0
      %v6974 = vpop.f32.mrb[0].mxu0
      %v6975 = vadd.f32 0.0, %v6974
      %v6976 = vpop.f32.mrb[0].mxu0
      %6977 = vmatprep.mubr.bf16.mxu0 0
      %6978 = vmatmul.mubr.bf16.gmra.mrb[0].mxu0 %v6821
      %v6979 = vpop.f32.mrb[0].mxu0
      %v6980 = vadd.f32 0.0, %v6979
      %v6981 = vpop.f32.mrb[0].mxu0
      %v6982 = vpop.f32.mrb[0].mxu0
      %v6983 = vadd.f32 0.0, %v6982
      %v6984 = vpop.f32.mrb[0].mxu0
      %6985 = vmatprep.mubr.bf16.mxu0 0
      %6986 = vmatmul.mubr.bf16.gmra.mrb[0].mxu0 %v6824
      %v6987 = vpop.f32.mrb[0].mxu0
      %v6988 = vadd.f32 0.0, %v6987
      %v6989 = vpop.f32.mrb[0].mxu0
      %v6990 = vpop.f32.mrb[0].mxu0
      %v6991 = vadd.f32 0.0, %v6990
      %v6992 = vpop.f32.mrb[0].mxu0
      %6993 = vmatprep.mubr.bf16.mxu0 0
      %6994 = vmatmul.mubr.bf16.gmra.mrb[0].mxu0 %v6827
      %v6995 = vpop.f32.mrb[0].mxu0
      %v6996 = vadd.f32 0.0, %v6995
      %v6997 = vpop.f32.mrb[0].mxu0
      %v6998 = vpop.f32.mrb[0].mxu0
      %v6999 = vadd.f32 0.0, %v6998
      %v7000 = vpop.f32.mrb[0].mxu0
      %7001 = vmatprep.mubr.bf16.mxu0 0
      %7002 = vmatmul.mubr.bf16.gmra.mrb[0].mxu0 %v6830
      %v7003 = vpop.f32.mrb[0].mxu0
      %v7004 = vadd.f32 0.0, %v7003
      %v7005 = vpop.f32.mrb[0].mxu0
      %v7006 = vpop.f32.mrb[0].mxu0
      %v7007 = vadd.f32 0.0, %v7006
      %v7008 = vpop.f32.mrb[0].mxu0
      %7009 = vmatprep.mubr.bf16.mxu0 0
      %7010 = vmatmul.mubr.bf16.gmra.mrb[0].mxu0 %v6833
      %v7011 = vpop.f32.mrb[0].mxu0
      %v7012 = vadd.f32 0.0, %v7011
      %v7013 = vpop.f32.mrb[0].mxu0
      %v7014 = vpop.f32.mrb[0].mxu0
      %v7015 = vadd.f32 0.0, %v7014
      %v7016 = vpop.f32.mrb[0].mxu0
      %7017 = vmatprep.mubr.bf16.mxu0 0
      %7018 = vmatmul.mubr.bf16.gmra.mrb[0].mxu0 %v6836
      %v7019 = vpop.f32.mrb[0].mxu0
      %v7020 = vadd.f32 0.0, %v7019
      %v7021 = vpop.f32.mrb[0].mxu0
      %v7022 = vpop.f32.mrb[0].mxu0
      %v7023 = vadd.f32 0.0, %v7022
      %v7024 = vpop.f32.mrb[0].mxu0
      %7025 = vmatprep.mubr.bf16.mxu0 0
      %7026 = vmatmul.mubr.bf16.gmra.mrb[0].mxu0 %v6839
      %v7027 = vpop.f32.mrb[0].mxu0
      %v7028 = vadd.f32 0.0, %v7027
      %v7029 = vpop.f32.mrb[0].mxu0
      %v7030 = vpop.f32.mrb[0].mxu0
      %v7031 = vadd.f32 0.0, %v7030
      %v7032 = vpop.f32.mrb[0].mxu0
      %7033 = vmatprep.mubr.bf16.mxu0 0
      %7034 = vmatmul.mubr.bf16.gmra.mrb[0].mxu0 %v6842
      %v7035 = vpop.f32.mrb[0].mxu0
      %v7036 = vadd.f32 0.0, %v7035
      %v7037 = vpop.f32.mrb[0].mxu0
      %v7038 = vpop.f32.mrb[0].mxu0
      %v7039 = vadd.f32 0.0, %v7038
      %v7040 = vpop.f32.mrb[0].mxu0
      %7041 = vmatprep.mubr.bf16.mxu0 0
      %7042 = vmatmul.mubr.bf16.gmra.mrb[0].mxu0 %v6845
      %v7043 = vpop.f32.mrb[0].mxu0
      %v7044 = vadd.f32 0.0, %v7043
      %v7045 = vpop.f32.mrb[0].mxu0
      %v7046 = vpop.f32.mrb[0].mxu0
      %v7047 = vadd.f32 0.0, %v7046
      %v7048 = vpop.f32.mrb[0].mxu0
      %7049 = vmatprep.mubr.bf16.mxu0 0
      %7050 = vmatmul.mubr.bf16.gmra.mrb[0].mxu0 %v6848
      %v7051 = vpop.f32.mrb[0].mxu0
      %v7052 = vadd.f32 0.0, %v7051
      %v7053 = vpop.f32.mrb[0].mxu0
      %v7054 = vpop.f32.mrb[0].mxu0
      %v7055 = vadd.f32 0.0, %v7054
      %v7056 = vpop.f32.mrb[0].mxu0
      %7057 = vmatprep.mubr.bf16.mxu0 0
      %7058 = vmatmul.mubr.bf16.gmra.mrb[0].mxu0 %v6851
      %v7059 = vpop.f32.mrb[0].mxu0
      %v7060 = vadd.f32 0.0, %v7059
      %v7061 = vpop.f32.mrb[0].mxu0
      %v7062 = vpop.f32.mrb[0].mxu0
      %v7063 = vadd.f32 0.0, %v7062
      %v7064 = vpop.f32.mrb[0].mxu0
      %7065 = vmatprep.mubr.bf16.mxu0 0
      %7066 = vmatmul.mubr.bf16.gmra.mrb[0].mxu0 %v6854
      %v7067 = vpop.f32.mrb[0].mxu0
      %v7068 = vadd.f32 0.0, %v7067
      %v7069 = vpop.f32.mrb[0].mxu0
      %v7070 = vpop.f32.mrb[0].mxu0
      %v7071 = vadd.f32 0.0, %v7070
      %v7072 = vpop.f32.mrb[0].mxu0
      %7073 = vmatprep.mubr.bf16.mxu0 0
      %7074 = vmatmul.mubr.bf16.gmra.mrb[0].mxu0 %v6857
      %v7075 = vpop.f32.mrb[0].mxu0
      %v7076 = vadd.f32 0.0, %v7075
      %v7077 = vpop.f32.mrb[0].mxu0
      %v7078 = vpop.f32.mrb[0].mxu0
      %v7079 = vadd.f32 0.0, %v7078
      %v7080 = vpop.f32.mrb[0].mxu0
      %7081 = vmatprep.mubr.bf16.mxu0 0
      %7082 = vmatmul.mubr.bf16.gmra.mrb[0].mxu0 %v6860
      %v7083 = vpop.f32.mrb[0].mxu0
      %v7084 = vadd.f32 0.0, %v7083
      %v7085 = vpop.f32.mrb[0].mxu0
      %v7086 = vpop.f32.mrb[0].mxu0
      %v7087 = vadd.f32 0.0, %v7086
      %v7088 = vpop.f32.mrb[0].mxu0
      %7089 = vdwg.mxu0
      %v7090 = vmul.f32 %v6900, %v6735
      %v7091 = vmul.f32 %v6903, %v6737
      %v7092 = vmul.f32 %v6908, %v6739
      %v7093 = vmul.f32 %v6911, %v6741
      %v7094 = vmul.f32 %v6916, %v6743
      %v7095 = vmul.f32 %v6919, %v6745
      %v7096 = vmul.f32 %v6924, %v6747
      %v7097 = vmul.f32 %v6927, %v6749
      %v7098 = vmul.f32 %v6932, %v6751
      %v7099 = vmul.f32 %v6935, %v6753
      %v7100 = vmul.f32 %v6940, %v6755
      %v7101 = vmul.f32 %v6943, %v6757
      %v7102 = vmul.f32 %v6948, %v6759
      %v7103 = vmul.f32 %v6951, %v6761
      %v7104 = vmul.f32 %v6956, %v6763
      %v7105 = vmul.f32 %v6959, %v6765
      %v7106 = vmul.f32 %v6964, %v6735
      %v7107 = vmul.f32 %v6967, %v6737
      %v7108 = vmul.f32 %v6972, %v6739
      %v7109 = vmul.f32 %v6975, %v6741
      %v7110 = vmul.f32 %v6980, %v6743
      %v7111 = vmul.f32 %v6983, %v6745
      %v7112 = vmul.f32 %v6988, %v6747
      %v7113 = vmul.f32 %v6991, %v6749
      %v7114 = vmul.f32 %v6996, %v6751
      %v7115 = vmul.f32 %v6999, %v6753
      %v7116 = vmul.f32 %v7004, %v6755
      %v7117 = vmul.f32 %v7007, %v6757
      %v7118 = vmul.f32 %v7012, %v6759
      %v7119 = vmul.f32 %v7015, %v6761
      %v7120 = vmul.f32 %v7020, %v6763
      %v7121 = vmul.f32 %v7023, %v6765
      %v7122 = vmul.f32 %v7028, %v6735
      %v7123 = vmul.f32 %v7031, %v6737
      %v7124 = vmul.f32 %v7036, %v6739
      %v7125 = vmul.f32 %v7039, %v6741
      %v7126 = vmul.f32 %v7044, %v6743
      %v7127 = vmul.f32 %v7047, %v6745
      %v7128 = vmul.f32 %v7052, %v6747
      %v7129 = vmul.f32 %v7055, %v6749
      %v7130 = vmul.f32 %v7060, %v6751
      %v7131 = vmul.f32 %v7063, %v6753
      %v7132 = vmul.f32 %v7068, %v6755
      %v7133 = vmul.f32 %v7071, %v6757
      %v7134 = vmul.f32 %v7076, %v6759
      %v7135 = vmul.f32 %v7079, %v6761
      %v7136 = vmul.f32 %v7084, %v6763
      %v7137 = vmul.f32 %v7087, %v6765
      %7138 = vset.pattern.permute.xlu0 19
      %7139 = vperm.xlu0 %7138, %v1695
      %v7140 = vpop.permute.xlu0 %7139
      %7142 = vset.pattern.permute.xlu0 19
      %7143 = vperm.xlu0 %7142, %v1696
      %v7144 = vpop.permute.xlu0 %7143
      %7146 = vset.pattern.permute.xlu0 19
      %7147 = vperm.xlu0 %7146, %v1697
      %v7148 = vpop.permute.xlu0 %7147
      %7150 = vset.pattern.permute.xlu0 19
      %7151 = vperm.xlu0 %7150, %v1698
      %v7152 = vpop.permute.xlu0 %7151
      %7154 = vset.pattern.permute.xlu0 19
      %7155 = vperm.xlu0 %7154, %v1699
      %v7156 = vpop.permute.xlu0 %7155
      %7158 = vset.pattern.permute.xlu0 19
      %7159 = vperm.xlu0 %7158, %v1700
      %v7160 = vpop.permute.xlu0 %7159
      %7162 = vset.pattern.permute.xlu0 19
      %7163 = vperm.xlu0 %7162, %v1701
      %v7164 = vpop.permute.xlu0 %7163
      %7166 = vset.pattern.permute.xlu0 19
      %7167 = vperm.xlu0 %7166, %v1702
      %v7168 = vpop.permute.xlu0 %7167
      %7170 = vset.pattern.permute.xlu0 19
      %7171 = vperm.xlu0 %7170, %v1703
      %v7172 = vpop.permute.xlu0 %7171
      %7174 = vset.pattern.permute.xlu0 19
      %7175 = vperm.xlu0 %7174, %v1704
      %v7176 = vpop.permute.xlu0 %7175
      %7178 = vset.pattern.permute.xlu0 19
      %7179 = vperm.xlu0 %7178, %v1705
      %v7180 = vpop.permute.xlu0 %7179
      %7182 = vset.pattern.permute.xlu0 19
      %7183 = vperm.xlu0 %7182, %v1706
      %v7184 = vpop.permute.xlu0 %7183
      %7186 = vset.pattern.permute.xlu0 19
      %7187 = vperm.xlu0 %7186, %v1707
      %v7188 = vpop.permute.xlu0 %7187
      %7190 = vset.pattern.permute.xlu0 19
      %7191 = vperm.xlu0 %7190, %v1708
      %v7192 = vpop.permute.xlu0 %7191
      %7194 = vset.pattern.permute.xlu0 19
      %7195 = vperm.xlu0 %7194, %v1709
      %v7196 = vpop.permute.xlu0 %7195
      %7198 = vset.pattern.permute.xlu0 19
      %7199 = vperm.xlu0 %7198, %v1710
      %v7200 = vpop.permute.xlu0 %7199
      %v7202 = vmul.f32 %v6461, %v7140
      %v7203 = vmul.f32 %v6464, %v7144
      %v7204 = vmul.f32 %v6469, %v7148
      %v7205 = vmul.f32 %v6472, %v7152
      %v7206 = vmul.f32 %v6477, %v7156
      %v7207 = vmul.f32 %v6480, %v7160
      %v7208 = vmul.f32 %v6485, %v7164
      %v7209 = vmul.f32 %v6488, %v7168
      %v7210 = vmul.f32 %v6493, %v7172
      %v7211 = vmul.f32 %v6496, %v7176
      %v7212 = vmul.f32 %v6501, %v7180
      %v7213 = vmul.f32 %v6504, %v7184
      %v7214 = vmul.f32 %v6509, %v7188
      %v7215 = vmul.f32 %v6512, %v7192
      %v7216 = vmul.f32 %v6517, %v7196
      %v7217 = vmul.f32 %v6520, %v7200
      %v7218 = vmul.f32 %v7090, %v7140
      %v7219 = vmul.f32 %v7091, %v7144
      %v7220 = vmul.f32 %v7092, %v7148
      %v7221 = vmul.f32 %v7093, %v7152
      %v7222 = vmul.f32 %v7094, %v7156
      %v7223 = vmul.f32 %v7095, %v7160
      %v7224 = vmul.f32 %v7096, %v7164
      %v7225 = vmul.f32 %v7097, %v7168
      %v7226 = vmul.f32 %v7098, %v7172
      %v7227 = vmul.f32 %v7099, %v7176
      %v7228 = vmul.f32 %v7100, %v7180
      %v7229 = vmul.f32 %v7101, %v7184
      %v7230 = vmul.f32 %v7102, %v7188
      %v7231 = vmul.f32 %v7103, %v7192
      %v7232 = vmul.f32 %v7104, %v7196
      %v7233 = vmul.f32 %v7105, %v7200
      %v7234 = vmul.f32 %v7106, %v7140
      %v7235 = vmul.f32 %v7107, %v7144
      %v7236 = vmul.f32 %v7108, %v7148
      %v7237 = vmul.f32 %v7109, %v7152
      %v7238 = vmul.f32 %v7110, %v7156
      %v7239 = vmul.f32 %v7111, %v7160
      %v7240 = vmul.f32 %v7112, %v7164
      %v7241 = vmul.f32 %v7113, %v7168
      %v7242 = vmul.f32 %v7114, %v7172
      %v7243 = vmul.f32 %v7115, %v7176
      %v7244 = vmul.f32 %v7116, %v7180
      %v7245 = vmul.f32 %v7117, %v7184
      %v7246 = vmul.f32 %v7118, %v7188
      %v7247 = vmul.f32 %v7119, %v7192
      %v7248 = vmul.f32 %v7120, %v7196
      %v7249 = vmul.f32 %v7121, %v7200
      %v7250 = vmul.f32 %v7122, %v7140
      %v7251 = vmul.f32 %v7123, %v7144
      %v7252 = vmul.f32 %v7124, %v7148
      %v7253 = vmul.f32 %v7125, %v7152
      %v7254 = vmul.f32 %v7126, %v7156
      %v7255 = vmul.f32 %v7127, %v7160
      %v7256 = vmul.f32 %v7128, %v7164
      %v7257 = vmul.f32 %v7129, %v7168
      %v7258 = vmul.f32 %v7130, %v7172
      %v7259 = vmul.f32 %v7131, %v7176
      %v7260 = vmul.f32 %v7132, %v7180
      %v7261 = vmul.f32 %v7133, %v7184
      %v7262 = vmul.f32 %v7134, %v7188
      %v7263 = vmul.f32 %v7135, %v7192
      %v7264 = vmul.f32 %v7136, %v7196
      %v7265 = vmul.f32 %v7137, %v7200
      %7282 = vrot.lane.b32.xlu0 %v7218, 32
      %v7283 = vpop.permute.xlu0 %7282
      %7284 = vrot.lane.b32.xlu0 %v7219, 32
      %v7285 = vpop.permute.xlu0 %7284
      %7286 = vrot.lane.b32.xlu0 %v7220, 32
      %v7287 = vpop.permute.xlu0 %7286
      %7288 = vrot.lane.b32.xlu0 %v7221, 32
      %v7289 = vpop.permute.xlu0 %7288
      %7290 = vrot.lane.b32.xlu0 %v7222, 32
      %v7291 = vpop.permute.xlu0 %7290
      %7292 = vrot.lane.b32.xlu0 %v7223, 32
      %v7293 = vpop.permute.xlu0 %7292
      %7294 = vrot.lane.b32.xlu0 %v7224, 32
      %v7295 = vpop.permute.xlu0 %7294
      %7296 = vrot.lane.b32.xlu0 %v7225, 32
      %v7297 = vpop.permute.xlu0 %7296
      %7298 = vrot.lane.b32.xlu0 %v7226, 32
      %v7299 = vpop.permute.xlu0 %7298
      %7300 = vrot.lane.b32.xlu0 %v7227, 32
      %v7301 = vpop.permute.xlu0 %7300
      %7302 = vrot.lane.b32.xlu0 %v7228, 32
      %v7303 = vpop.permute.xlu0 %7302
      %7304 = vrot.lane.b32.xlu0 %v7229, 32
      %v7305 = vpop.permute.xlu0 %7304
      %7306 = vrot.lane.b32.xlu0 %v7230, 32
      %v7307 = vpop.permute.xlu0 %7306
      %7308 = vrot.lane.b32.xlu0 %v7231, 32
      %v7309 = vpop.permute.xlu0 %7308
      %7310 = vrot.lane.b32.xlu0 %v7232, 32
      %v7311 = vpop.permute.xlu0 %7310
      %7312 = vrot.lane.b32.xlu0 %v7233, 32
      %v7313 = vpop.permute.xlu0 %7312
      %7346 = vrot.lane.b32.xlu0 %v7234, 40
      %v7347 = vpop.permute.xlu0 %7346
      %7348 = vrot.lane.b32.xlu0 %v7235, 40
      %v7349 = vpop.permute.xlu0 %7348
      %7350 = vrot.lane.b32.xlu0 %v7236, 40
      %v7351 = vpop.permute.xlu0 %7350
      %7352 = vrot.lane.b32.xlu0 %v7237, 40
      %v7353 = vpop.permute.xlu0 %7352
      %7354 = vrot.lane.b32.xlu0 %v7238, 40
      %v7355 = vpop.permute.xlu0 %7354
      %7356 = vrot.lane.b32.xlu0 %v7239, 40
      %v7357 = vpop.permute.xlu0 %7356
      %7358 = vrot.lane.b32.xlu0 %v7240, 40
      %v7359 = vpop.permute.xlu0 %7358
      %7360 = vrot.lane.b32.xlu0 %v7241, 40
      %v7361 = vpop.permute.xlu0 %7360
      %7362 = vrot.lane.b32.xlu0 %v7242, 40
      %v7363 = vpop.permute.xlu0 %7362
      %7364 = vrot.lane.b32.xlu0 %v7243, 40
      %v7365 = vpop.permute.xlu0 %7364
      %7366 = vrot.lane.b32.xlu0 %v7244, 40
      %v7367 = vpop.permute.xlu0 %7366
      %7368 = vrot.lane.b32.xlu0 %v7245, 40
      %v7369 = vpop.permute.xlu0 %7368
      %7370 = vrot.lane.b32.xlu0 %v7246, 40
      %v7371 = vpop.permute.xlu0 %7370
      %7372 = vrot.lane.b32.xlu0 %v7247, 40
      %v7373 = vpop.permute.xlu0 %7372
      %7374 = vrot.lane.b32.xlu0 %v7248, 40
      %v7375 = vpop.permute.xlu0 %7374
      %7376 = vrot.lane.b32.xlu0 %v7249, 40
      %v7377 = vpop.permute.xlu0 %7376
      %7410 = vrot.lane.b32.xlu0 %v7250, 48
      %v7411 = vpop.permute.xlu0 %7410
      %7412 = vrot.lane.b32.xlu0 %v7251, 48
      %v7413 = vpop.permute.xlu0 %7412
      %7414 = vrot.lane.b32.xlu0 %v7252, 48
      %v7415 = vpop.permute.xlu0 %7414
      %7416 = vrot.lane.b32.xlu0 %v7253, 48
      %v7417 = vpop.permute.xlu0 %7416
      %7418 = vrot.lane.b32.xlu0 %v7254, 48
      %v7419 = vpop.permute.xlu0 %7418
      %7420 = vrot.lane.b32.xlu0 %v7255, 48
      %v7421 = vpop.permute.xlu0 %7420
      %7422 = vrot.lane.b32.xlu0 %v7256, 48
      %v7423 = vpop.permute.xlu0 %7422
      %7424 = vrot.lane.b32.xlu0 %v7257, 48
      %v7425 = vpop.permute.xlu0 %7424
      %7426 = vrot.lane.b32.xlu0 %v7258, 48
      %v7427 = vpop.permute.xlu0 %7426
      %7428 = vrot.lane.b32.xlu0 %v7259, 48
      %v7429 = vpop.permute.xlu0 %7428
      %7430 = vrot.lane.b32.xlu0 %v7260, 48
      %v7431 = vpop.permute.xlu0 %7430
      %7432 = vrot.lane.b32.xlu0 %v7261, 48
      %v7433 = vpop.permute.xlu0 %7432
      %7434 = vrot.lane.b32.xlu0 %v7262, 48
      %v7435 = vpop.permute.xlu0 %7434
      %7436 = vrot.lane.b32.xlu0 %v7263, 48
      %v7437 = vpop.permute.xlu0 %7436
      %7438 = vrot.lane.b32.xlu0 %v7264, 48
      %v7439 = vpop.permute.xlu0 %7438
      %7440 = vrot.lane.b32.xlu0 %v7265, 48
      %v7441 = vpop.permute.xlu0 %7440
      %v7458 = vsel %vm2842, %v7202, %v7283
      %v7459 = vsel %vm2842, %v7203, %v7285
      %v7460 = vsel %vm2842, %v7204, %v7287
      %v7461 = vsel %vm2842, %v7205, %v7289
      %v7462 = vsel %vm2842, %v7206, %v7291
      %v7463 = vsel %vm2842, %v7207, %v7293
      %v7464 = vsel %vm2842, %v7208, %v7295
      %v7465 = vsel %vm2842, %v7209, %v7297
      %v7466 = vsel %vm2842, %v7210, %v7299
      %v7467 = vsel %vm2842, %v7211, %v7301
      %v7468 = vsel %vm2842, %v7212, %v7303
      %v7469 = vsel %vm2842, %v7213, %v7305
      %v7470 = vsel %vm2842, %v7214, %v7307
      %v7471 = vsel %vm2842, %v7215, %v7309
      %v7472 = vsel %vm2842, %v7216, %v7311
      %v7473 = vsel %vm2842, %v7217, %v7313
      %v7474 = vsel %vm6398, %v7458, %v7347
      %v7475 = vsel %vm6398, %v7459, %v7349
      %v7476 = vsel %vm6398, %v7460, %v7351
      %v7477 = vsel %vm6398, %v7461, %v7353
      %v7478 = vsel %vm6398, %v7462, %v7355
      %v7479 = vsel %vm6398, %v7463, %v7357
      %v7480 = vsel %vm6398, %v7464, %v7359
      %v7481 = vsel %vm6398, %v7465, %v7361
      %v7482 = vsel %vm6398, %v7466, %v7363
      %v7483 = vsel %vm6398, %v7467, %v7365
      %v7484 = vsel %vm6398, %v7468, %v7367
      %v7485 = vsel %vm6398, %v7469, %v7369
      %v7486 = vsel %vm6398, %v7470, %v7371
      %v7487 = vsel %vm6398, %v7471, %v7373
      %v7488 = vsel %vm6398, %v7472, %v7375
      %v7489 = vsel %vm6398, %v7473, %v7377
      %vm7490 = vcmask 392192
      %v7491 = vsel %vm7490, %v7474, %v7411
      %v7492 = vsel %vm7490, %v7475, %v7413
      %v7493 = vsel %vm7490, %v7476, %v7415
      %v7494 = vsel %vm7490, %v7477, %v7417
      %v7495 = vsel %vm7490, %v7478, %v7419
      %v7496 = vsel %vm7490, %v7479, %v7421
      %v7497 = vsel %vm7490, %v7480, %v7423
      %v7498 = vsel %vm7490, %v7481, %v7425
      %v7499 = vsel %vm7490, %v7482, %v7427
      %v7500 = vsel %vm7490, %v7483, %v7429
      %v7501 = vsel %vm7490, %v7484, %v7431
      %v7502 = vsel %vm7490, %v7485, %v7433
      %v7503 = vsel %vm7490, %v7486, %v7435
      %v7504 = vsel %vm7490, %v7487, %v7437
      %v7505 = vsel %vm7490, %v7488, %v7439
      %v7506 = vsel %vm7490, %v7489, %v7441
      %v7507 = vpack.c.bf16 %v7492, %v7491
      %v7508 = vpack.c.bf16 %v7494, %v7493
      %v7509 = vpack.c.bf16 %v7496, %v7495
      %v7510 = vpack.c.bf16 %v7498, %v7497
      %v7511 = vpack.c.bf16 %v7500, %v7499
      %v7512 = vpack.c.bf16 %v7502, %v7501
      %v7513 = vpack.c.bf16 %v7504, %v7503
      %v7514 = vpack.c.bf16 %v7506, %v7505
      %v7515 = vld [vmem:[%s1037] sm:$0x1]
      %v7516 = vlaneseq
      %v7517 = vshrl.u32 %v7516, 7
      %v7518 = vadd.s32 %v7517, 8
      %v7519 = vadd.s32 %v7517, 16
      %v7520 = vlaneseq
      %v7521 = vshrl.u32 %v7520, 7
      %v7522 = vsub.s32 0, %v7521
      %v7523 = vrot.slane %v7515, %v7522
      %vm7524 = vcmp.eq.s32.totalorder %v7523, %v7517
      %vm7525 = vcmp.eq.s32.totalorder %v7523, %v7518
      %vm7526 = vcmp.eq.s32.totalorder %v7523, %v7519
      %v7527 = vsel %vm7524, 1, 0
      %v7528 = vsel %vm7525, 1, 0
      %v7529 = vsel %vm7526, 1, 0
      %v7530 = vcvt.s32.f32 %v7527
      %v7531 = vcvt.s32.f32 %v7528
      %v7532 = vcvt.s32.f32 %v7529
      %v7533 = vpack.c.bf16 %v7531, %v7530
      %v7534 = vpack.c.bf16 %v7532, %v7532
      %v7535 = vld [vmem:[#allocation5] sm:$0xff]
      %v7536 = vld [vmem:[#allocation5 + $0x8] sm:$0xff]
      %v7537 = vld [vmem:[#allocation5 + $0x10] sm:$0xff]
      %7538 = vmatprep.subr.bf16.mxu0 0
      %7539 = vmatpush1.bf16.msra.mxu0 %v7507
      %7540 = vmatprep.subr.bf16.mxu0 0
      %7541 = vmatpush1.bf16.msra.mxu0 %v7508
      %7542 = vmatprep.subr.bf16.mxu0 0
      %7543 = vmatpush1.bf16.msra.mxu0 %v7509
      %7544 = vmatprep.subr.bf16.mxu0 0
      %7545 = vmatpush1.bf16.msra.mxu0 %v7510
      %7546 = vmatprep.subr.bf16.mxu0 0
      %7547 = vmatpush1.bf16.msra.mxu0 %v7511
      %7548 = vmatprep.subr.bf16.mxu0 0
      %7549 = vmatpush1.bf16.msra.mxu0 %v7512
      %7550 = vmatprep.subr.bf16.mxu0 0
      %7551 = vmatpush1.bf16.msra.mxu0 %v7513
      %7552 = vmatprep.subr.bf16.mxu0 0
      %7553 = vmatpush1.bf16.msra.mxu0 %v7514
      %7554 = vmatprep.subr.bf16.mxu0 0
      %7555 = vmatpush1.bf16.msra.mxu0 0
      %7556 = vmatprep.subr.bf16.mxu0 0
      %7557 = vmatpush1.bf16.msra.mxu0 0
      %7558 = vmatprep.subr.bf16.mxu0 0
      %7559 = vmatpush1.bf16.msra.mxu0 0
      %7560 = vmatprep.subr.bf16.mxu0 0
      %7561 = vmatpush1.bf16.msra.mxu0 0
      %7562 = vmatprep.subr.bf16.mxu0 0
      %7563 = vmatpush1.bf16.msra.mxu0 0
      %7564 = vmatprep.subr.bf16.mxu0 0
      %7565 = vmatpush1.bf16.msra.mxu0 0
      %7566 = vmatprep.subr.bf16.mxu0 0
      %7567 = vmatpush1.bf16.msra.mxu0 0
      %7568 = vmatprep.subr.bf16.mxu0 0
      %7569 = vmatpush1.bf16.msra.mxu0 0
      %7570 = vmatprep.mubr.bf16.mxu0 0
      %7571 = vmatmul.mubr.bf16.gmra.mrb[0].mxu0 %v7533
      %v7572 = vpop.f32.mrb[0].mxu0
      %v7573 = vadd.f32 0.0, %v7572
      %v7574 = vpop.f32.mrb[0].mxu0
      %v7575 = vpop.f32.mrb[0].mxu0
      %v7576 = vadd.f32 0.0, %v7575
      %v7577 = vpop.f32.mrb[0].mxu0
      %7578 = vmatprep.mubr.bf16.mxu0 0
      %7579 = vmatmul.mubr.bf16.gmra.mrb[0].mxu0 %v7534
      %v7580 = vpop.f32.mrb[0].mxu0
      %v7581 = vadd.f32 0.0, %v7580
      %v7582 = vpop.f32.mrb[0].mxu0
      %v7583 = vpop.f32.mrb[0].mxu0
      %v7584 = vpop.f32.mrb[0].mxu0
      %7585 = vdwg.mxu0
      %v7586 = vadd.f32 %v7535, %v7573
      %v7587 = vadd.f32 %v7536, %v7576
      %v7588 = vadd.f32 %v7537, %v7581
      %vm7589 = vcmask 457728
      %7590 = vst.msk [vmem:[#allocation5] sm:$0xff] %vm7589, %v7586
      %7591 = vst.msk [vmem:[#allocation5 + $0x8] sm:$0xff] %vm7589, %v7587
      %7592 = vst.msk [vmem:[#allocation5 + $0x10] sm:$0xff] %vm7589, %v7588
      %p7593 = scmp.eq.s32.totalorder %s40, 1
      // Predicated region
      $region125: #{context_encoder_forward.1} parent=115 // pred_check
        %p7594 = pneg %p7593
      $region126: #{context_encoder_forward.1} parent=115 // pred_check_branch
        %7596 = sbr.rel (%p7594) target = $region128
      $region127: #{context_encoder_forward.1} parent=115 // pred_region
        %v7597 = vld [vmem:[#allocation2] sm:$0xff]
        %v7598 = vld [vmem:[#allocation2 + $0x8] sm:$0xff]
        %v7599 = vld [vmem:[#allocation2 + $0x10] sm:$0xff]
        %v7600 = vld [vmem:[#allocation3] sm:$0xff]
        %v7601 = vld [vmem:[#allocation3 + $0x8] sm:$0xff]
        %v7602 = vld [vmem:[#allocation3 + $0x10] sm:$0xff]
        %v7603 = vld [vmem:[#allocation3 + $0x18] sm:$0xff]
        %v7604 = vld [vmem:[#allocation3 + $0x20] sm:$0xff]
        %v7605 = vld [vmem:[#allocation3 + $0x28] sm:$0xff]
        %v7606 = vld [vmem:[#allocation3 + $0x30] sm:$0xff]
        %v7607 = vld [vmem:[#allocation3 + $0x38] sm:$0xff]
        %v7608 = vld [vmem:[#allocation3 + $0x40] sm:$0xff]
        %s7609 = scalar_lea.vmem %s1042, 8
        %v7610 = vld [vmem:[%s7609] sm:$0xf]
        %s7611 = scalar_lea.vmem %s1047, 8
        %v7612 = vld [vmem:[%s7611] sm:$0xf]
        %s7613 = scalar_lea.vmem %s1052, 40
        %v7614 = vld [vmem:[%s7613] sm:$0xf]
        %v7615 = vld [vmem:[%s7613 + $0x4] sm:$0xf]
        %v7616 = vld [vmem:[%s7613 + $0x8] sm:$0xf]
        %v7617 = vld [vmem:[%s7613 + $0xc] sm:$0xf]
        %v7618 = vld [vmem:[%s7613 + $0x10] sm:$0xf]
        %s7619 = scalar_lea.vmem %s1057, 32
        %v7620 = vld [vmem:[%s7619] sm:$0xf]
        %v7621 = vld [vmem:[%s7619 + $0x4] sm:$0xf]
        %v7622 = vld [vmem:[%s7619 + $0x8] sm:$0xf]
        %v7623 = vld [vmem:[%s7619 + $0xc] sm:$0xf]
        %s7624 = scalar_lea.vmem %s1061, 2
        %v7625 = vld [vmem:[%s7624] sm:$0x1]
        %v7626 = vpack.c.bf16 %v7601, %v7600
        %v7627 = vpack.c.bf16 %v7603, %v7602
        %v7628 = vpack.c.bf16 %v7605, %v7604
        %v7629 = vpack.c.bf16 %v7607, %v7606
        %v7630 = vpack.c.bf16 %v7608, %v7608
        %v7632 = vsel %vm5802, %v7626, 0
        %v7635 = vsel %vm5802, %v7627, 0
        %v7638 = vsel %vm5802, %v7628, 0
        %v7641 = vsel %vm5802, %v7629, 0
        %v7644 = vsel %vm5802, %v7630, 0
        %v7647 = vsel %vm1863, %v7610, 0
        %7649 = vmatprep.subr.bf16.mxu0 0
        %7650 = vmatpush1.bf16.msra.mxu0 %v7647
        %7651 = vmatprep.subr.bf16.mxu0 0
        %7652 = vmatpush1.bf16.msra.mxu0 0
        %7653 = vmatprep.subr.bf16.mxu0 0
        %7654 = vmatpush1.bf16.msra.mxu0 0
        %7655 = vmatprep.subr.bf16.mxu0 0
        %7656 = vmatpush1.bf16.msra.mxu0 0
        %7657 = vmatprep.subr.bf16.mxu0 0
        %7658 = vmatpush1.bf16.msra.mxu0 0
        %7659 = vmatprep.subr.bf16.mxu0 0
        %7660 = vmatpush1.bf16.msra.mxu0 0
        %7661 = vmatprep.subr.bf16.mxu0 0
        %7662 = vmatpush1.bf16.msra.mxu0 0
        %7663 = vmatprep.subr.bf16.mxu0 0
        %7664 = vmatpush1.bf16.msra.mxu0 0
        %7665 = vmatprep.subr.bf16.mxu0 0
        %7666 = vmatpush1.bf16.msra.mxu0 0
        %7667 = vmatprep.subr.bf16.mxu0 0
        %7668 = vmatpush1.bf16.msra.mxu0 0
        %7669 = vmatprep.subr.bf16.mxu0 0
        %7670 = vmatpush1.bf16.msra.mxu0 0
        %7671 = vmatprep.subr.bf16.mxu0 0
        %7672 = vmatpush1.bf16.msra.mxu0 0
        %7673 = vmatprep.subr.bf16.mxu0 0
        %7674 = vmatpush1.bf16.msra.mxu0 0
        %7675 = vmatprep.subr.bf16.mxu0 0
        %7676 = vmatpush1.bf16.msra.mxu0 0
        %7677 = vmatprep.subr.bf16.mxu0 0
        %7678 = vmatpush1.bf16.msra.mxu0 0
        %7679 = vmatprep.subr.bf16.mxu0 0
        %7680 = vmatpush1.bf16.msra.mxu0 0
        %7681 = vmatprep.mubr.bf16.mxu0 0
        %7682 = vmatmul.mubr.bf16.gmra.mrb[0].mxu0 %v7632
        %v7683 = vpop.f32.mrb[0].mxu0
        %v7684 = vadd.f32 0.0, %v7683
        %v7685 = vpop.f32.mrb[0].mxu0
        %v7686 = vpop.f32.mrb[0].mxu0
        %v7687 = vadd.f32 0.0, %v7686
        %v7688 = vpop.f32.mrb[0].mxu0
        %7689 = vmatprep.mubr.bf16.mxu0 0
        %7690 = vmatmul.mubr.bf16.gmra.mrb[0].mxu0 %v7635
        %v7691 = vpop.f32.mrb[0].mxu0
        %v7692 = vadd.f32 0.0, %v7691
        %v7693 = vpop.f32.mrb[0].mxu0
        %v7694 = vpop.f32.mrb[0].mxu0
        %v7695 = vadd.f32 0.0, %v7694
        %v7696 = vpop.f32.mrb[0].mxu0
        %7697 = vmatprep.mubr.bf16.mxu0 0
        %7698 = vmatmul.mubr.bf16.gmra.mrb[0].mxu0 %v7638
        %v7699 = vpop.f32.mrb[0].mxu0
        %v7700 = vadd.f32 0.0, %v7699
        %v7701 = vpop.f32.mrb[0].mxu0
        %v7702 = vpop.f32.mrb[0].mxu0
        %v7703 = vadd.f32 0.0, %v7702
        %v7704 = vpop.f32.mrb[0].mxu0
        %7705 = vmatprep.mubr.bf16.mxu0 0
        %7706 = vmatmul.mubr.bf16.gmra.mrb[0].mxu0 %v7641
        %v7707 = vpop.f32.mrb[0].mxu0
        %v7708 = vadd.f32 0.0, %v7707
        %v7709 = vpop.f32.mrb[0].mxu0
        %v7710 = vpop.f32.mrb[0].mxu0
        %v7711 = vadd.f32 0.0, %v7710
        %v7712 = vpop.f32.mrb[0].mxu0
        %7713 = vmatprep.mubr.bf16.mxu0 0
        %7714 = vmatmul.mubr.bf16.gmra.mrb[0].mxu0 %v7644
        %v7715 = vpop.f32.mrb[0].mxu0
        %v7716 = vadd.f32 0.0, %v7715
        %v7717 = vpop.f32.mrb[0].mxu0
        %v7718 = vpop.f32.mrb[0].mxu0
        %v7719 = vpop.f32.mrb[0].mxu0
        %7720 = vdwg.mxu0
        %v7721 = vmul.f32 %v7684, %v7684
        %v7722 = vmul.f32 %v7687, %v7687
        %v7723 = vmul.f32 %v7692, %v7692
        %v7724 = vmul.f32 %v7695, %v7695
        %v7725 = vmul.f32 %v7700, %v7700
        %v7726 = vmul.f32 %v7703, %v7703
        %v7727 = vadd.f32 %v7721, %v7724
        %v7728 = vadd.f32 %v7722, %v7725
        %v7729 = vadd.f32 %v7723, %v7726
        %v7730 = vmul.f32 %v7708, %v7708
        %v7731 = vmul.f32 %v7711, %v7711
        %v7732 = vmul.f32 %v7716, %v7716
        %v7733 = vadd.f32 %v7727, %v7730
        %v7734 = vadd.f32 %v7728, %v7731
        %v7735 = vadd.f32 %v7729, %v7732
        %v7736 = vrsqrt.pop %v7733
        %v7737 = vmul.f32 %v7733, %v7736
        %vm7738 = vcmp.eq.f32.partialorder %v7733, inf
        %v7739 = vsel %vm7738, %v7733, %v7737
        %vm7740 = vcmp.eq.f32.partialorder %v7733, 0.0
        %v7741 = vand.u32 %v7733, 2147483648
        %v7742 = vsel %vm7740, %v7741, %v7739
        %v7743 = vrsqrt.pop %v7734
        %v7744 = vmul.f32 %v7734, %v7743
        %vm7745 = vcmp.eq.f32.partialorder %v7734, inf
        %v7746 = vsel %vm7745, %v7734, %v7744
        %vm7747 = vcmp.eq.f32.partialorder %v7734, 0.0
        %v7748 = vand.u32 %v7734, 2147483648
        %v7749 = vsel %vm7747, %v7748, %v7746
        %v7750 = vrsqrt.pop %v7735
        %v7751 = vmul.f32 %v7735, %v7750
        %vm7752 = vcmp.eq.f32.partialorder %v7735, inf
        %v7753 = vsel %vm7752, %v7735, %v7751
        %vm7754 = vcmp.eq.f32.partialorder %v7735, 0.0
        %v7755 = vand.u32 %v7735, 2147483648
        %v7756 = vsel %vm7754, %v7755, %v7753
        %7760 = vrot.lane.b32.xlu0 %v7597, 8
        %v7761 = vpop.permute.xlu0 %7760
        %7762 = vrot.lane.b32.xlu0 %v7598, 8
        %v7763 = vpop.permute.xlu0 %7762
        %7764 = vrot.lane.b32.xlu0 %v7599, 8
        %v7765 = vpop.permute.xlu0 %7764
        %v7769 = vsel %vm5802, %v7742, %v7761
        %v7770 = vsel %vm5802, %v7749, %v7763
        %v7771 = vsel %vm5802, %v7756, %v7765
        %v7772 = vpack.c.bf16 %v7770, %v7769
        %v7773 = vpack.c.bf16 %v7771, %v7771
        %v7779 = vunpack.c.l.b16 %v7614
        %v7780 = vunpack.c.l.b16 %v7615
        %v7781 = vunpack.c.l.b16 %v7616
        %v7782 = vunpack.c.l.b16 %v7617
        %v7783 = vunpack.c.l.b16 %v7618
        %v7784 = vpack.c.b16 %v7780, %v7779
        %v7785 = vpack.c.b16 %v7782, %v7781
        %v7786 = vpack.c.b16 %v7783, %v7783
        %v7790 = vsel %vm6398, %v7772, 0
        %v7793 = vsel %vm6398, %v7773, 0
        %v7796 = vsel %vm1863, %v7786, 0
        %7798 = vmatprep.subr.bf16.mxu0 0
        %7799 = vmatpush1.bf16.msra.mxu0 %v7784
        %7800 = vmatprep.subr.bf16.mxu0 0
        %7801 = vmatpush1.bf16.msra.mxu0 %v7785
        %7802 = vmatprep.subr.bf16.mxu0 0
        %7803 = vmatpush1.bf16.msra.mxu0 %v7796
        %7804 = vmatprep.subr.bf16.mxu0 0
        %7805 = vmatpush1.bf16.msra.mxu0 0
        %7806 = vmatprep.subr.bf16.mxu0 0
        %7807 = vmatpush1.bf16.msra.mxu0 0
        %7808 = vmatprep.subr.bf16.mxu0 0
        %7809 = vmatpush1.bf16.msra.mxu0 0
        %7810 = vmatprep.subr.bf16.mxu0 0
        %7811 = vmatpush1.bf16.msra.mxu0 0
        %7812 = vmatprep.subr.bf16.mxu0 0
        %7813 = vmatpush1.bf16.msra.mxu0 0
        %7814 = vmatprep.subr.bf16.mxu0 0
        %7815 = vmatpush1.bf16.msra.mxu0 0
        %7816 = vmatprep.subr.bf16.mxu0 0
        %7817 = vmatpush1.bf16.msra.mxu0 0
        %7818 = vmatprep.subr.bf16.mxu0 0
        %7819 = vmatpush1.bf16.msra.mxu0 0
        %7820 = vmatprep.subr.bf16.mxu0 0
        %7821 = vmatpush1.bf16.msra.mxu0 0
        %7822 = vmatprep.subr.bf16.mxu0 0
        %7823 = vmatpush1.bf16.msra.mxu0 0
        %7824 = vmatprep.subr.bf16.mxu0 0
        %7825 = vmatpush1.bf16.msra.mxu0 0
        %7826 = vmatprep.subr.bf16.mxu0 0
        %7827 = vmatpush1.bf16.msra.mxu0 0
        %7828 = vmatprep.subr.bf16.mxu0 0
        %7829 = vmatpush1.bf16.msra.mxu0 0
        %7830 = vmatprep.mubr.bf16.mxu0 0
        %7831 = vmatmul.mubr.bf16.gmra.mrb[0].mxu0 %v7790
        %v7832 = vpop.f32.mrb[0].mxu0
        %v7833 = vadd.f32 0.0, %v7832
        %v7834 = vpop.f32.mrb[0].mxu0
        %v7835 = vpop.f32.mrb[0].mxu0
        %v7836 = vadd.f32 0.0, %v7835
        %v7837 = vpop.f32.mrb[0].mxu0
        %7838 = vmatprep.mubr.bf16.mxu0 0
        %7839 = vmatmul.mubr.bf16.gmra.mrb[0].mxu0 %v7793
        %v7840 = vpop.f32.mrb[0].mxu0
        %v7841 = vadd.f32 0.0, %v7840
        %v7842 = vpop.f32.mrb[0].mxu0
        %v7843 = vpop.f32.mrb[0].mxu0
        %v7844 = vpop.f32.mrb[0].mxu0
        %7845 = vdwg.mxu0
        %v7846 = vpack.c.bf16 %v7836, %v7833
        %v7847 = vpack.c.bf16 %v7841, %v7841
        %v7849 = vlaneseq
        %v7850 = vshrl.u32 %v7849, 7
        %v7851 = vsub.s32 0, %v7850
        %v7852 = vrot.slane %v7625, %v7851
        %v7858 = vunpack.c.l.b16 %v7620
        %v7859 = vunpack.c.l.b16 %v7621
        %v7860 = vunpack.c.l.b16 %v7622
        %v7861 = vunpack.c.l.b16 %v7623
        %v7862 = vpack.c.b16 %v7859, %v7858
        %v7863 = vpack.c.b16 %v7861, %v7860
        %v7867 = vsel %vm2842, %v7846, 0
        %v7870 = vsel %vm2842, %v7847, 0
        %7872 = vmatprep.subr.bf16.mxu0 0
        %7873 = vmatpush1.bf16.msra.mxu0 %v7862
        %7874 = vmatprep.subr.bf16.mxu0 0
        %7875 = vmatpush1.bf16.msra.mxu0 %v7863
        %7876 = vmatprep.subr.bf16.mxu0 0
        %7877 = vmatpush1.bf16.msra.mxu0 0
        %7878 = vmatprep.subr.bf16.mxu0 0
        %7879 = vmatpush1.bf16.msra.mxu0 0
        %7880 = vmatprep.subr.bf16.mxu0 0
        %7881 = vmatpush1.bf16.msra.mxu0 0
        %7882 = vmatprep.subr.bf16.mxu0 0
        %7883 = vmatpush1.bf16.msra.mxu0 0
        %7884 = vmatprep.subr.bf16.mxu0 0
        %7885 = vmatpush1.bf16.msra.mxu0 0
        %7886 = vmatprep.subr.bf16.mxu0 0
        %7887 = vmatpush1.bf16.msra.mxu0 0
        %7888 = vmatprep.subr.bf16.mxu0 0
        %7889 = vmatpush1.bf16.msra.mxu0 0
        %7890 = vmatprep.subr.bf16.mxu0 0
        %7891 = vmatpush1.bf16.msra.mxu0 0
        %7892 = vmatprep.subr.bf16.mxu0 0
        %7893 = vmatpush1.bf16.msra.mxu0 0
        %7894 = vmatprep.subr.bf16.mxu0 0
        %7895 = vmatpush1.bf16.msra.mxu0 0
        %7896 = vmatprep.subr.bf16.mxu0 0
        %7897 = vmatpush1.bf16.msra.mxu0 0
        %7898 = vmatprep.subr.bf16.mxu0 0
        %7899 = vmatpush1.bf16.msra.mxu0 0
        %7900 = vmatprep.subr.bf16.mxu0 0
        %7901 = vmatpush1.bf16.msra.mxu0 0
        %7902 = vmatprep.subr.bf16.mxu0 0
        %7903 = vmatpush1.bf16.msra.mxu0 0
        %7904 = vmatprep.mubr.bf16.mxu0 0
        %7905 = vmatmul.mubr.bf16.gmra.mrb[0].mxu0 %v7867
        %v7906 = vpop.f32.mrb[0].mxu0
        %v7907 = vadd.f32 %v7852, %v7906
        %v7908 = vpop.f32.mrb[0].mxu0
        %v7909 = vpop.f32.mrb[0].mxu0
        %v7910 = vadd.f32 %v7852, %v7909
        %v7911 = vpop.f32.mrb[0].mxu0
        %7912 = vmatprep.mubr.bf16.mxu0 0
        %7913 = vmatmul.mubr.bf16.gmra.mrb[0].mxu0 %v7870
        %v7914 = vpop.f32.mrb[0].mxu0
        %v7915 = vadd.f32 %v7852, %v7914
        %v7916 = vpop.f32.mrb[0].mxu0
        %v7917 = vpop.f32.mrb[0].mxu0
        %v7918 = vpop.f32.mrb[0].mxu0
        %7919 = vdwg.mxu0
        %v7920 = vxor.u32 %v7907, 2147483648
        %v7921 = vxor.u32 %v7910, 2147483648
        %v7922 = vxor.u32 %v7915, 2147483648
        %v7923 = vmul.f32 %v7920, 1.442695
        %v7924 = vpow.pop %v7923
        %v7925 = vmul.f32 %v7921, 1.442695
        %v7926 = vpow.pop %v7925
        %v7927 = vmul.f32 %v7922, 1.442695
        %v7928 = vpow.pop %v7927
        %v7929 = vadd.f32 %v7924, 1.0
        %v7930 = vadd.f32 %v7926, 1.0
        %v7931 = vadd.f32 %v7928, 1.0
        %v7932 = vrcp.pop %v7929
        %v7933 = vmul.f32 1.0, %v7932
        %v7934 = vrcp.pop %v7930
        %v7935 = vmul.f32 1.0, %v7934
        %v7936 = vrcp.pop %v7931
        %v7937 = vmul.f32 1.0, %v7936
        %v7938 = vpack.c.bf16 %v7687, %v7684
        %v7939 = vpack.c.bf16 %v7695, %v7692
        %v7940 = vpack.c.bf16 %v7703, %v7700
        %v7941 = vpack.c.bf16 %v7711, %v7708
        %v7942 = vpack.c.bf16 %v7716, %v7716
        %v7944 = vsel %vm5802, %v7938, 0
        %v7947 = vsel %vm5802, %v7939, 0
        %v7950 = vsel %vm5802, %v7940, 0
        %v7953 = vsel %vm5802, %v7941, 0
        %v7956 = vsel %vm5802, %v7942, 0
        %v7959 = vsel %vm1863, %v7612, 0
        %7961 = vmatprep.subr.bf16.mxu0 0
        %7962 = vmatpush1.bf16.msra.mxu0 %v7959
        %7963 = vmatprep.subr.bf16.mxu0 0
        %7964 = vmatpush1.bf16.msra.mxu0 0
        %7965 = vmatprep.subr.bf16.mxu0 0
        %7966 = vmatpush1.bf16.msra.mxu0 0
        %7967 = vmatprep.subr.bf16.mxu0 0
        %7968 = vmatpush1.bf16.msra.mxu0 0
        %7969 = vmatprep.subr.bf16.mxu0 0
        %7970 = vmatpush1.bf16.msra.mxu0 0
        %7971 = vmatprep.subr.bf16.mxu0 0
        %7972 = vmatpush1.bf16.msra.mxu0 0
        %7973 = vmatprep.subr.bf16.mxu0 0
        %7974 = vmatpush1.bf16.msra.mxu0 0
        %7975 = vmatprep.subr.bf16.mxu0 0
        %7976 = vmatpush1.bf16.msra.mxu0 0
        %7977 = vmatprep.subr.bf16.mxu0 0
        %7978 = vmatpush1.bf16.msra.mxu0 0
        %7979 = vmatprep.subr.bf16.mxu0 0
        %7980 = vmatpush1.bf16.msra.mxu0 0
        %7981 = vmatprep.subr.bf16.mxu0 0
        %7982 = vmatpush1.bf16.msra.mxu0 0
        %7983 = vmatprep.subr.bf16.mxu0 0
        %7984 = vmatpush1.bf16.msra.mxu0 0
        %7985 = vmatprep.subr.bf16.mxu0 0
        %7986 = vmatpush1.bf16.msra.mxu0 0
        %7987 = vmatprep.subr.bf16.mxu0 0
        %7988 = vmatpush1.bf16.msra.mxu0 0
        %7989 = vmatprep.subr.bf16.mxu0 0
        %7990 = vmatpush1.bf16.msra.mxu0 0
        %7991 = vmatprep.subr.bf16.mxu0 0
        %7992 = vmatpush1.bf16.msra.mxu0 0
        %7993 = vmatprep.mubr.bf16.mxu0 0
        %7994 = vmatmul.mubr.bf16.gmra.mrb[0].mxu0 %v7944
        %v7995 = vpop.f32.mrb[0].mxu0
        %v7996 = vadd.f32 0.0, %v7995
        %v7997 = vpop.f32.mrb[0].mxu0
        %v7998 = vpop.f32.mrb[0].mxu0
        %v7999 = vadd.f32 0.0, %v7998
        %v8000 = vpop.f32.mrb[0].mxu0
        %8001 = vmatprep.mubr.bf16.mxu0 0
        %8002 = vmatmul.mubr.bf16.gmra.mrb[0].mxu0 %v7947
        %v8003 = vpop.f32.mrb[0].mxu0
        %v8004 = vadd.f32 0.0, %v8003
        %v8005 = vpop.f32.mrb[0].mxu0
        %v8006 = vpop.f32.mrb[0].mxu0
        %v8007 = vadd.f32 0.0, %v8006
        %v8008 = vpop.f32.mrb[0].mxu0
        %8009 = vmatprep.mubr.bf16.mxu0 0
        %8010 = vmatmul.mubr.bf16.gmra.mrb[0].mxu0 %v7950
        %v8011 = vpop.f32.mrb[0].mxu0
        %v8012 = vadd.f32 0.0, %v8011
        %v8013 = vpop.f32.mrb[0].mxu0
        %v8014 = vpop.f32.mrb[0].mxu0
        %v8015 = vadd.f32 0.0, %v8014
        %v8016 = vpop.f32.mrb[0].mxu0
        %8017 = vmatprep.mubr.bf16.mxu0 0
        %8018 = vmatmul.mubr.bf16.gmra.mrb[0].mxu0 %v7953
        %v8019 = vpop.f32.mrb[0].mxu0
        %v8020 = vadd.f32 0.0, %v8019
        %v8021 = vpop.f32.mrb[0].mxu0
        %v8022 = vpop.f32.mrb[0].mxu0
        %v8023 = vadd.f32 0.0, %v8022
        %v8024 = vpop.f32.mrb[0].mxu0
        %8025 = vmatprep.mubr.bf16.mxu0 0
        %8026 = vmatmul.mubr.bf16.gmra.mrb[0].mxu0 %v7956
        %v8027 = vpop.f32.mrb[0].mxu0
        %v8028 = vadd.f32 0.0, %v8027
        %v8029 = vpop.f32.mrb[0].mxu0
        %v8030 = vpop.f32.mrb[0].mxu0
        %v8031 = vpop.f32.mrb[0].mxu0
        %8032 = vdwg.mxu0
        %v8033 = vmul.f32 %v7996, %v7933
        %v8034 = vmul.f32 %v7999, %v7935
        %v8035 = vmul.f32 %v8004, %v7937
        %v8036 = vmul.f32 %v8007, %v7933
        %v8037 = vmul.f32 %v8012, %v7935
        %v8038 = vmul.f32 %v8015, %v7937
        %v8039 = vmul.f32 %v8020, %v7933
        %v8040 = vmul.f32 %v8023, %v7935
        %v8041 = vmul.f32 %v8028, %v7937
        %v8042 = vld [vmem:[#allocation5] sm:$0xff]
        %v8043 = vld [vmem:[#allocation5 + $0x8] sm:$0xff]
        %v8044 = vld [vmem:[#allocation5 + $0x10] sm:$0xff]
        %v8045 = vadd.f32 %v8042, %v7833
        %v8046 = vadd.f32 %v8043, %v7836
        %v8047 = vadd.f32 %v8044, %v7841
        %8051 = vrot.lane.b32.xlu0 %v8033, 32
        %v8052 = vpop.permute.xlu0 %8051
        %8053 = vrot.lane.b32.xlu0 %v8034, 32
        %v8054 = vpop.permute.xlu0 %8053
        %8055 = vrot.lane.b32.xlu0 %v8035, 32
        %v8056 = vpop.permute.xlu0 %8055
        %v8060 = vadd.f32 %v8042, %v8052
        %v8061 = vadd.f32 %v8043, %v8054
        %v8062 = vadd.f32 %v8044, %v8056
        %8066 = vrot.lane.b32.xlu0 %v8036, 40
        %v8067 = vpop.permute.xlu0 %8066
        %8068 = vrot.lane.b32.xlu0 %v8037, 40
        %v8069 = vpop.permute.xlu0 %8068
        %8070 = vrot.lane.b32.xlu0 %v8038, 40
        %v8071 = vpop.permute.xlu0 %8070
        %v8075 = vadd.f32 %v8042, %v8067
        %v8076 = vadd.f32 %v8043, %v8069
        %v8077 = vadd.f32 %v8044, %v8071
        %8081 = vrot.lane.b32.xlu0 %v8039, 48
        %v8082 = vpop.permute.xlu0 %8081
        %8083 = vrot.lane.b32.xlu0 %v8040, 48
        %v8084 = vpop.permute.xlu0 %8083
        %8085 = vrot.lane.b32.xlu0 %v8041, 48
        %v8086 = vpop.permute.xlu0 %8085
        %v8090 = vadd.f32 %v8042, %v8082
        %v8091 = vadd.f32 %v8043, %v8084
        %v8092 = vadd.f32 %v8044, %v8086
        %v8093 = vld [vmem:[%s1124] sm:$0x3]
        %v8094 = vsel %vm2842, %v8045, 0.0
        %8095 = vadd.xlane.f32.xlu0 %v8094
        %v8096 = vpop.xlane.xlu0 %8095
        %v8097 = vsel %vm2842, %v8046, 0.0
        %8098 = vadd.xlane.f32.xlu0 %v8097
        %v8099 = vpop.xlane.xlu0 %8098
        %v8100 = vsel %vm2842, %v8047, 0.0
        %8101 = vadd.xlane.f32.xlu0 %v8100
        %v8102 = vpop.xlane.xlu0 %8101
        %v8103 = vrcp.pop 32.0
        %v8104 = vmul.f32 %v8096, %v8103
        %v8105 = vmul.f32 %v8099, %v8103
        %v8106 = vmul.f32 %v8102, %v8103
        %v8107 = vsub.f32 %v8045, %v8104
        %v8108 = vsub.f32 %v8046, %v8105
        %v8109 = vsub.f32 %v8047, %v8106
        %v8110 = vmul.f32 %v8107, %v8107
        %v8111 = vmul.f32 %v8108, %v8108
        %v8112 = vmul.f32 %v8109, %v8109
        %v8113 = vsel %vm2842, %v8110, 0.0
        %8114 = vadd.xlane.f32.xlu0 %v8113
        %v8115 = vpop.xlane.xlu0 %8114
        %v8116 = vsel %vm2842, %v8111, 0.0
        %8117 = vadd.xlane.f32.xlu0 %v8116
        %v8118 = vpop.xlane.xlu0 %8117
        %v8119 = vsel %vm2842, %v8112, 0.0
        %8120 = vadd.xlane.f32.xlu0 %v8119
        %v8121 = vpop.xlane.xlu0 %8120
        %v8122 = vmul.f32 %v8115, %v8103
        %v8123 = vmul.f32 %v8118, %v8103
        %v8124 = vmul.f32 %v8121, %v8103
        %v8125 = vadd.f32 %v8122, 1e-05
        %v8126 = vadd.f32 %v8123, 1e-05
        %v8127 = vadd.f32 %v8124, 1e-05
        %v8128 = vrsqrt.pop %v8125
        %v8129 = vrsqrt.pop %v8126
        %v8130 = vrsqrt.pop %v8127
        %v8131 = vmul.f32 %v8107, %v8128
        %v8132 = vmul.f32 %v8108, %v8129
        %v8133 = vmul.f32 %v8109, %v8130
        %v8134 = vlaneseq
        %v8135 = vshrl.u32 %v8134, 7
        %v8136 = vsub.s32 0, %v8135
        %v8137 = vrot.slane %v8093, %v8136
        %v8138 = vmul.f32 %v8131, %v8137
        %v8139 = vmul.f32 %v8132, %v8137
        %v8140 = vmul.f32 %v8133, %v8137
        %v8141 = vlaneseq
        %v8142 = vshrl.u32 %v8141, 7
        %v8143 = vsub.s32 1, %v8142
        %v8144 = vrot.slane %v8093, %v8143
        %v8145 = vadd.f32 %v8138, %v8144
        %v8146 = vadd.f32 %v8139, %v8144
        %v8147 = vadd.f32 %v8140, %v8144
        %v8148 = vld [vmem:[%s1128] sm:$0x3f]
        %8152 = vrot.lane.b32.xlu0 %v8075, 120
        %v8153 = vpop.permute.xlu0 %8152
        %8154 = vrot.lane.b32.xlu0 %v8076, 120
        %v8155 = vpop.permute.xlu0 %8154
        %8156 = vrot.lane.b32.xlu0 %v8077, 120
        %v8157 = vpop.permute.xlu0 %8156
        %v8161 = vadd.f32 %v8060, %v8153
        %v8162 = vadd.f32 %v8061, %v8155
        %v8163 = vadd.f32 %v8062, %v8157
        %8167 = vrot.lane.b32.xlu0 %v8090, 112
        %v8168 = vpop.permute.xlu0 %8167
        %8169 = vrot.lane.b32.xlu0 %v8091, 112
        %v8170 = vpop.permute.xlu0 %8169
        %8171 = vrot.lane.b32.xlu0 %v8092, 112
        %v8172 = vpop.permute.xlu0 %8171
        %v8176 = vadd.f32 %v8161, %v8168
        %v8177 = vadd.f32 %v8162, %v8170
        %v8178 = vadd.f32 %v8163, %v8172
        %8182 = vrot.lane.b32.xlu0 %v8176, 96
        %v8183 = vpop.permute.xlu0 %8182
        %8184 = vrot.lane.b32.xlu0 %v8177, 96
        %v8185 = vpop.permute.xlu0 %8184
        %8186 = vrot.lane.b32.xlu0 %v8178, 96
        %v8187 = vpop.permute.xlu0 %8186
        %v8191 = vsel %vm5802, %v8183, 0.0
        %8192 = vadd.xlane.f32.xlu0 %v8191
        %v8193 = vpop.xlane.xlu0 %8192
        %v8194 = vsel %vm5802, %v8185, 0.0
        %8195 = vadd.xlane.f32.xlu0 %v8194
        %v8196 = vpop.xlane.xlu0 %8195
        %v8197 = vsel %vm5802, %v8187, 0.0
        %8198 = vadd.xlane.f32.xlu0 %v8197
        %v8199 = vpop.xlane.xlu0 %8198
        %v8200 = vrcp.pop 24.0
        %v8201 = vmul.f32 %v8193, %v8200
        %v8202 = vmul.f32 %v8196, %v8200
        %v8203 = vmul.f32 %v8199, %v8200
        %v8204 = vsub.f32 %v8060, %v8201
        %v8205 = vsub.f32 %v8061, %v8202
        %v8206 = vsub.f32 %v8062, %v8203
        %v8207 = vsub.f32 %v8075, %v8201
        %v8208 = vsub.f32 %v8076, %v8202
        %v8209 = vsub.f32 %v8077, %v8203
        %v8210 = vsub.f32 %v8090, %v8201
        %v8211 = vsub.f32 %v8091, %v8202
        %v8212 = vsub.f32 %v8092, %v8203
        %v8213 = vmul.f32 %v8204, %v8204
        %v8214 = vmul.f32 %v8205, %v8205
        %v8215 = vmul.f32 %v8206, %v8206
        %8219 = vrot.lane.b32.xlu0 %v8213, 96
        %v8220 = vpop.permute.xlu0 %8219
        %8221 = vrot.lane.b32.xlu0 %v8214, 96
        %v8222 = vpop.permute.xlu0 %8221
        %8223 = vrot.lane.b32.xlu0 %v8215, 96
        %v8224 = vpop.permute.xlu0 %8223
        %v8228 = vsel %vm5802, %v8220, 0.0
        %8229 = vadd.xlane.f32.xlu0 %v8228
        %v8230 = vpop.xlane.xlu0 %8229
        %v8231 = vsel %vm5802, %v8222, 0.0
        %8232 = vadd.xlane.f32.xlu0 %v8231
        %v8233 = vpop.xlane.xlu0 %8232
        %v8234 = vsel %vm5802, %v8224, 0.0
        %8235 = vadd.xlane.f32.xlu0 %v8234
        %v8236 = vpop.xlane.xlu0 %8235
        %v8237 = vmul.f32 %v8207, %v8207
        %v8238 = vmul.f32 %v8208, %v8208
        %v8239 = vmul.f32 %v8209, %v8209
        %8243 = vrot.lane.b32.xlu0 %v8237, 88
        %v8244 = vpop.permute.xlu0 %8243
        %8245 = vrot.lane.b32.xlu0 %v8238, 88
        %v8246 = vpop.permute.xlu0 %8245
        %8247 = vrot.lane.b32.xlu0 %v8239, 88
        %v8248 = vpop.permute.xlu0 %8247
        %v8252 = vsel %vm5802, %v8244, 0.0
        %8253 = vadd.xlane.f32.xlu0 %v8252
        %v8254 = vpop.xlane.xlu0 %8253
        %v8255 = vsel %vm5802, %v8246, 0.0
        %8256 = vadd.xlane.f32.xlu0 %v8255
        %v8257 = vpop.xlane.xlu0 %8256
        %v8258 = vsel %vm5802, %v8248, 0.0
        %8259 = vadd.xlane.f32.xlu0 %v8258
        %v8260 = vpop.xlane.xlu0 %8259
        %v8261 = vadd.f32 %v8230, %v8254
        %v8262 = vadd.f32 %v8233, %v8257
        %v8263 = vadd.f32 %v8236, %v8260
        %v8264 = vmul.f32 %v8210, %v8210
        %v8265 = vmul.f32 %v8211, %v8211
        %v8266 = vmul.f32 %v8212, %v8212
        %8270 = vrot.lane.b32.xlu0 %v8264, 80
        %v8271 = vpop.permute.xlu0 %8270
        %8272 = vrot.lane.b32.xlu0 %v8265, 80
        %v8273 = vpop.permute.xlu0 %8272
        %8274 = vrot.lane.b32.xlu0 %v8266, 80
        %v8275 = vpop.permute.xlu0 %8274
        %v8279 = vsel %vm5802, %v8271, 0.0
        %8280 = vadd.xlane.f32.xlu0 %v8279
        %v8281 = vpop.xlane.xlu0 %8280
        %v8282 = vsel %vm5802, %v8273, 0.0
        %8283 = vadd.xlane.f32.xlu0 %v8282
        %v8284 = vpop.xlane.xlu0 %8283
        %v8285 = vsel %vm5802, %v8275, 0.0
        %8286 = vadd.xlane.f32.xlu0 %v8285
        %v8287 = vpop.xlane.xlu0 %8286
        %v8288 = vadd.f32 %v8261, %v8281
        %v8289 = vadd.f32 %v8262, %v8284
        %v8290 = vadd.f32 %v8263, %v8287
        %v8291 = vmul.f32 %v8288, %v8200
        %v8292 = vmul.f32 %v8289, %v8200
        %v8293 = vmul.f32 %v8290, %v8200
        %v8294 = vadd.f32 %v8291, 1e-05
        %v8295 = vadd.f32 %v8292, 1e-05
        %v8296 = vadd.f32 %v8293, 1e-05
        %v8297 = vrsqrt.pop %v8294
        %v8298 = vrsqrt.pop %v8295
        %v8299 = vrsqrt.pop %v8296
        %v8300 = vmul.f32 %v8204, %v8297
        %v8301 = vmul.f32 %v8205, %v8298
        %v8302 = vmul.f32 %v8206, %v8299
        %v8303 = vlaneseq
        %v8304 = vshrl.u32 %v8303, 7
        %v8305 = vsub.s32 0, %v8304
        %v8306 = vrot.slane %v8148, %v8305
        %8308 = vrot.lane.b32.xlu0 %v8306, 32
        %v8309 = vpop.permute.xlu0 %8308
        %v8311 = vmul.f32 %v8300, %v8309
        %v8312 = vmul.f32 %v8301, %v8309
        %v8313 = vmul.f32 %v8302, %v8309
        %v8314 = vlaneseq
        %v8315 = vshrl.u32 %v8314, 7
        %v8316 = vsub.s32 3, %v8315
        %v8317 = vrot.slane %v8148, %v8316
        %8319 = vrot.lane.b32.xlu0 %v8317, 32
        %v8320 = vpop.permute.xlu0 %8319
        %v8322 = vadd.f32 %v8311, %v8320
        %v8323 = vadd.f32 %v8312, %v8320
        %v8324 = vadd.f32 %v8313, %v8320
        %v8325 = vmul.f32 %v8207, %v8297
        %v8326 = vmul.f32 %v8208, %v8298
        %v8327 = vmul.f32 %v8209, %v8299
        %v8328 = vlaneseq
        %v8329 = vshrl.u32 %v8328, 7
        %v8330 = vsub.s32 1, %v8329
        %v8331 = vrot.slane %v8148, %v8330
        %8333 = vrot.lane.b32.xlu0 %v8331, 40
        %v8334 = vpop.permute.xlu0 %8333
        %v8336 = vmul.f32 %v8325, %v8334
        %v8337 = vmul.f32 %v8326, %v8334
        %v8338 = vmul.f32 %v8327, %v8334
        %v8339 = vlaneseq
        %v8340 = vshrl.u32 %v8339, 7
        %v8341 = vsub.s32 4, %v8340
        %v8342 = vrot.slane %v8148, %v8341
        %8344 = vrot.lane.b32.xlu0 %v8342, 40
        %v8345 = vpop.permute.xlu0 %8344
        %v8347 = vadd.f32 %v8336, %v8345
        %v8348 = vadd.f32 %v8337, %v8345
        %v8349 = vadd.f32 %v8338, %v8345
        %v8350 = vmul.f32 %v8210, %v8297
        %v8351 = vmul.f32 %v8211, %v8298
        %v8352 = vmul.f32 %v8212, %v8299
        %v8353 = vlaneseq
        %v8354 = vshrl.u32 %v8353, 7
        %v8355 = vsub.s32 2, %v8354
        %v8356 = vrot.slane %v8148, %v8355
        %8358 = vrot.lane.b32.xlu0 %v8356, 48
        %v8359 = vpop.permute.xlu0 %8358
        %v8361 = vmul.f32 %v8350, %v8359
        %v8362 = vmul.f32 %v8351, %v8359
        %v8363 = vmul.f32 %v8352, %v8359
        %v8364 = vlaneseq
        %v8365 = vshrl.u32 %v8364, 7
        %v8366 = vsub.s32 5, %v8365
        %v8367 = vrot.slane %v8148, %v8366
        %8369 = vrot.lane.b32.xlu0 %v8367, 48
        %v8370 = vpop.permute.xlu0 %8369
        %v8372 = vadd.f32 %v8361, %v8370
        %v8373 = vadd.f32 %v8362, %v8370
        %v8374 = vadd.f32 %v8363, %v8370
        %8378 = vrot.lane.b32.xlu0 %v8347, 120
        %v8379 = vpop.permute.xlu0 %8378
        %8380 = vrot.lane.b32.xlu0 %v8348, 120
        %v8381 = vpop.permute.xlu0 %8380
        %8382 = vrot.lane.b32.xlu0 %v8349, 120
        %v8383 = vpop.permute.xlu0 %8382
        %8390 = vrot.lane.b32.xlu0 %v8372, 112
        %v8391 = vpop.permute.xlu0 %8390
        %8392 = vrot.lane.b32.xlu0 %v8373, 112
        %v8393 = vpop.permute.xlu0 %8392
        %8394 = vrot.lane.b32.xlu0 %v8374, 112
        %v8395 = vpop.permute.xlu0 %8394
        %v8399 = vld [vmem:[%s1093] sm:$0xf]
        %vm8400 = vcmp.ge.f32.partialorder %v8145, 0.0
        %vm8401 = vcmp.ge.f32.partialorder %v8146, 0.0
        %vm8402 = vcmp.ge.f32.partialorder %v8147, 0.0
        %v8403 = vmul.f32 %v8145, 0.01
        %v8404 = vmul.f32 %v8146, 0.01
        %v8405 = vmul.f32 %v8147, 0.01
        %v8406 = vsel %vm8400, %v8145, %v8403
        %v8407 = vsel %vm8401, %v8146, %v8404
        %v8408 = vsel %vm8402, %v8147, %v8405
        %v8409 = vpack.c.bf16 %v8323, %v8322
        %v8410 = vpack.c.bf16 %v8379, %v8324
        %v8411 = vpack.c.bf16 %v8383, %v8381
        %v8412 = vpack.c.bf16 %v8393, %v8391
        %v8413 = vpack.c.bf16 %v8395, %v8395
        %8419 = vrot.lane.b32.xlu0 %v8409, 96
        %v8420 = vpop.permute.xlu0 %8419
        %8421 = vrot.lane.b32.xlu0 %v8410, 96
        %v8422 = vpop.permute.xlu0 %8421
        %8423 = vrot.lane.b32.xlu0 %v8411, 96
        %v8424 = vpop.permute.xlu0 %8423
        %8425 = vrot.lane.b32.xlu0 %v8412, 96
        %v8426 = vpop.permute.xlu0 %8425
        %8427 = vrot.lane.b32.xlu0 %v8413, 96
        %v8428 = vpop.permute.xlu0 %8427
        %v8430 = vsel %vm5802, %v8420, 0
        %v8433 = vsel %vm5802, %v8422, 0
        %v8436 = vsel %vm5802, %v8424, 0
        %v8439 = vsel %vm5802, %v8426, 0
        %v8442 = vsel %vm5802, %v8428, 0
        %v8445 = vsel %vm1863, %v8399, 0
        %8447 = vmatprep.subr.bf16.mxu0 0
        %8448 = vmatpush1.bf16.msra.mxu0 %v8445
        %8449 = vmatprep.subr.bf16.mxu0 0
        %8450 = vmatpush1.bf16.msra.mxu0 0
        %8451 = vmatprep.subr.bf16.mxu0 0
        %8452 = vmatpush1.bf16.msra.mxu0 0
        %8453 = vmatprep.subr.bf16.mxu0 0
        %8454 = vmatpush1.bf16.msra.mxu0 0
        %8455 = vmatprep.subr.bf16.mxu0 0
        %8456 = vmatpush1.bf16.msra.mxu0 0
        %8457 = vmatprep.subr.bf16.mxu0 0
        %8458 = vmatpush1.bf16.msra.mxu0 0
        %8459 = vmatprep.subr.bf16.mxu0 0
        %8460 = vmatpush1.bf16.msra.mxu0 0
        %8461 = vmatprep.subr.bf16.mxu0 0
        %8462 = vmatpush1.bf16.msra.mxu0 0
        %8463 = vmatprep.subr.bf16.mxu0 0
        %8464 = vmatpush1.bf16.msra.mxu0 0
        %8465 = vmatprep.subr.bf16.mxu0 0
        %8466 = vmatpush1.bf16.msra.mxu0 0
        %8467 = vmatprep.subr.bf16.mxu0 0
        %8468 = vmatpush1.bf16.msra.mxu0 0
        %8469 = vmatprep.subr.bf16.mxu0 0
        %8470 = vmatpush1.bf16.msra.mxu0 0
        %8471 = vmatprep.subr.bf16.mxu0 0
        %8472 = vmatpush1.bf16.msra.mxu0 0
        %8473 = vmatprep.subr.bf16.mxu0 0
        %8474 = vmatpush1.bf16.msra.mxu0 0
        %8475 = vmatprep.subr.bf16.mxu0 0
        %8476 = vmatpush1.bf16.msra.mxu0 0
        %8477 = vmatprep.subr.bf16.mxu0 0
        %8478 = vmatpush1.bf16.msra.mxu0 0
        %8479 = vmatprep.mubr.bf16.mxu0 0
        %8480 = vmatmul.mubr.bf16.gmra.mrb[0].mxu0 %v8430
        %v8481 = vpop.f32.mrb[0].mxu0
        %v8482 = vadd.f32 0.0, %v8481
        %v8483 = vpop.f32.mrb[0].mxu0
        %v8484 = vpop.f32.mrb[0].mxu0
        %v8485 = vadd.f32 0.0, %v8484
        %v8486 = vpop.f32.mrb[0].mxu0
        %8487 = vmatprep.mubr.bf16.mxu0 0
        %8488 = vmatmul.mubr.bf16.gmra.mrb[0].mxu0 %v8433
        %v8489 = vpop.f32.mrb[0].mxu0
        %v8490 = vadd.f32 0.0, %v8489
        %v8491 = vpop.f32.mrb[0].mxu0
        %v8492 = vpop.f32.mrb[0].mxu0
        %v8493 = vadd.f32 0.0, %v8492
        %v8494 = vpop.f32.mrb[0].mxu0
        %8495 = vmatprep.mubr.bf16.mxu0 0
        %8496 = vmatmul.mubr.bf16.gmra.mrb[0].mxu0 %v8436
        %v8497 = vpop.f32.mrb[0].mxu0
        %v8498 = vadd.f32 0.0, %v8497
        %v8499 = vpop.f32.mrb[0].mxu0
        %v8500 = vpop.f32.mrb[0].mxu0
        %v8501 = vadd.f32 0.0, %v8500
        %v8502 = vpop.f32.mrb[0].mxu0
        %8503 = vmatprep.mubr.bf16.mxu0 0
        %8504 = vmatmul.mubr.bf16.gmra.mrb[0].mxu0 %v8439
        %v8505 = vpop.f32.mrb[0].mxu0
        %v8506 = vadd.f32 0.0, %v8505
        %v8507 = vpop.f32.mrb[0].mxu0
        %v8508 = vpop.f32.mrb[0].mxu0
        %v8509 = vadd.f32 0.0, %v8508
        %v8510 = vpop.f32.mrb[0].mxu0
        %8511 = vmatprep.mubr.bf16.mxu0 0
        %8512 = vmatmul.mubr.bf16.gmra.mrb[0].mxu0 %v8442
        %v8513 = vpop.f32.mrb[0].mxu0
        %v8514 = vadd.f32 0.0, %v8513
        %v8515 = vpop.f32.mrb[0].mxu0
        %v8516 = vpop.f32.mrb[0].mxu0
        %v8517 = vpop.f32.mrb[0].mxu0
        %8518 = vdwg.mxu0
        %8522 = vrot.lane.b32.xlu0 %v8482, 32
        %v8523 = vpop.permute.xlu0 %8522
        %8524 = vrot.lane.b32.xlu0 %v8485, 32
        %v8525 = vpop.permute.xlu0 %8524
        %8526 = vrot.lane.b32.xlu0 %v8490, 32
        %v8527 = vpop.permute.xlu0 %8526
        %v8531 = vmul.f32 %v8322, %v8523
        %v8532 = vmul.f32 %v8323, %v8525
        %v8533 = vmul.f32 %v8324, %v8527
        %8537 = vrot.lane.b32.xlu0 %v8493, 32
        %v8538 = vpop.permute.xlu0 %8537
        %8539 = vrot.lane.b32.xlu0 %v8498, 32
        %v8540 = vpop.permute.xlu0 %8539
        %8541 = vrot.lane.b32.xlu0 %v8501, 32
        %v8542 = vpop.permute.xlu0 %8541
        %v8546 = vmul.f32 %v8379, %v8538
        %v8547 = vmul.f32 %v8381, %v8540
        %v8548 = vmul.f32 %v8383, %v8542
        %v8549 = vadd.f32 %v8531, %v8546
        %v8550 = vadd.f32 %v8532, %v8547
        %v8551 = vadd.f32 %v8533, %v8548
        %8555 = vrot.lane.b32.xlu0 %v8506, 32
        %v8556 = vpop.permute.xlu0 %8555
        %8557 = vrot.lane.b32.xlu0 %v8509, 32
        %v8558 = vpop.permute.xlu0 %8557
        %8559 = vrot.lane.b32.xlu0 %v8514, 32
        %v8560 = vpop.permute.xlu0 %8559
        %v8564 = vmul.f32 %v8391, %v8556
        %v8565 = vmul.f32 %v8393, %v8558
        %v8566 = vmul.f32 %v8395, %v8560
        %v8567 = vadd.f32 %v8549, %v8564
        %v8568 = vadd.f32 %v8550, %v8565
        %v8569 = vadd.f32 %v8551, %v8566
        %v8570 = vmul.f32 %v8482, %v8482
        %v8571 = vmul.f32 %v8485, %v8485
        %v8572 = vmul.f32 %v8490, %v8490
        %v8573 = vmul.f32 %v8493, %v8493
        %v8574 = vmul.f32 %v8498, %v8498
        %v8575 = vmul.f32 %v8501, %v8501
        %v8576 = vadd.f32 %v8570, %v8573
        %v8577 = vadd.f32 %v8571, %v8574
        %v8578 = vadd.f32 %v8572, %v8575
        %v8579 = vmul.f32 %v8506, %v8506
        %v8580 = vmul.f32 %v8509, %v8509
        %v8581 = vmul.f32 %v8514, %v8514
        %v8582 = vadd.f32 %v8576, %v8579
        %v8583 = vadd.f32 %v8577, %v8580
        %v8584 = vadd.f32 %v8578, %v8581
        %vm8585 = vcmp.ge.f32.partialorder %v8567, 0.0
        %vm8586 = vcmp.ge.f32.partialorder %v8568, 0.0
        %vm8587 = vcmp.ge.f32.partialorder %v8569, 0.0
        %v8588 = vsel %vm8585, 1, 0
        %v8589 = vsel %vm8586, 1, 0
        %v8590 = vsel %vm8587, 1, 0
        %v8591 = vcvt.s32.f32 %v8588
        %v8592 = vcvt.s32.f32 %v8589
        %v8593 = vcvt.s32.f32 %v8590
        %v8594 = vadd.f32 %v8582, 1e-06
        %v8595 = vadd.f32 %v8583, 1e-06
        %v8596 = vadd.f32 %v8584, 1e-06
        %8600 = vrot.lane.b32.xlu0 %v8594, 32
        %v8601 = vpop.permute.xlu0 %8600
        %8602 = vrot.lane.b32.xlu0 %v8595, 32
        %v8603 = vpop.permute.xlu0 %8602
        %8604 = vrot.lane.b32.xlu0 %v8596, 32
        %v8605 = vpop.permute.xlu0 %8604
        %v8609 = vrcp.pop %v8601
        %v8610 = vmul.f32 %v8567, %v8609
        %v8611 = vrcp.pop %v8603
        %v8612 = vmul.f32 %v8568, %v8611
        %v8613 = vrcp.pop %v8605
        %v8614 = vmul.f32 %v8569, %v8613
        %v8615 = vmul.f32 %v8322, 0.2
        %v8616 = vmul.f32 %v8323, 0.2
        %v8617 = vmul.f32 %v8324, 0.2
        %v8618 = vmul.f32 %v8591, %v8322
        %v8619 = vmul.f32 %v8592, %v8323
        %v8620 = vmul.f32 %v8593, %v8324
        %v8621 = vsub.f32 1.0, %v8591
        %v8622 = vsub.f32 1.0, %v8592
        %v8623 = vsub.f32 1.0, %v8593
        %v8624 = vmul.f32 %v8610, %v8523
        %v8625 = vmul.f32 %v8612, %v8525
        %v8626 = vmul.f32 %v8614, %v8527
        %v8627 = vsub.f32 %v8322, %v8624
        %v8628 = vsub.f32 %v8323, %v8625
        %v8629 = vsub.f32 %v8324, %v8626
        %v8630 = vmul.f32 %v8621, %v8627
        %v8631 = vmul.f32 %v8622, %v8628
        %v8632 = vmul.f32 %v8623, %v8629
        %v8633 = vadd.f32 %v8618, %v8630
        %v8634 = vadd.f32 %v8619, %v8631
        %v8635 = vadd.f32 %v8620, %v8632
        %v8636 = vmul.f32 %v8633, 0.8
        %v8637 = vmul.f32 %v8634, 0.8
        %v8638 = vmul.f32 %v8635, 0.8
        %v8639 = vadd.f32 %v8615, %v8636
        %v8640 = vadd.f32 %v8616, %v8637
        %v8641 = vadd.f32 %v8617, %v8638
        %v8642 = vmul.f32 %v8379, 0.2
        %v8643 = vmul.f32 %v8381, 0.2
        %v8644 = vmul.f32 %v8383, 0.2
        %v8645 = vmul.f32 %v8591, %v8379
        %v8646 = vmul.f32 %v8592, %v8381
        %v8647 = vmul.f32 %v8593, %v8383
        %v8648 = vmul.f32 %v8610, %v8538
        %v8649 = vmul.f32 %v8612, %v8540
        %v8650 = vmul.f32 %v8614, %v8542
        %v8651 = vsub.f32 %v8379, %v8648
        %v8652 = vsub.f32 %v8381, %v8649
        %v8653 = vsub.f32 %v8383, %v8650
        %v8654 = vmul.f32 %v8621, %v8651
        %v8655 = vmul.f32 %v8622, %v8652
        %v8656 = vmul.f32 %v8623, %v8653
        %v8657 = vadd.f32 %v8645, %v8654
        %v8658 = vadd.f32 %v8646, %v8655
        %v8659 = vadd.f32 %v8647, %v8656
        %v8660 = vmul.f32 %v8657, 0.8
        %v8661 = vmul.f32 %v8658, 0.8
        %v8662 = vmul.f32 %v8659, 0.8
        %v8663 = vadd.f32 %v8642, %v8660
        %v8664 = vadd.f32 %v8643, %v8661
        %v8665 = vadd.f32 %v8644, %v8662
        %v8666 = vmul.f32 %v8391, 0.2
        %v8667 = vmul.f32 %v8393, 0.2
        %v8668 = vmul.f32 %v8395, 0.2
        %v8669 = vmul.f32 %v8591, %v8391
        %v8670 = vmul.f32 %v8592, %v8393
        %v8671 = vmul.f32 %v8593, %v8395
        %v8672 = vmul.f32 %v8610, %v8556
        %v8673 = vmul.f32 %v8612, %v8558
        %v8674 = vmul.f32 %v8614, %v8560
        %v8675 = vsub.f32 %v8391, %v8672
        %v8676 = vsub.f32 %v8393, %v8673
        %v8677 = vsub.f32 %v8395, %v8674
        %v8678 = vmul.f32 %v8621, %v8675
        %v8679 = vmul.f32 %v8622, %v8676
        %v8680 = vmul.f32 %v8623, %v8677
        %v8681 = vadd.f32 %v8669, %v8678
        %v8682 = vadd.f32 %v8670, %v8679
        %v8683 = vadd.f32 %v8671, %v8680
        %v8684 = vmul.f32 %v8681, 0.8
        %v8685 = vmul.f32 %v8682, 0.8
        %v8686 = vmul.f32 %v8683, 0.8
        %v8687 = vadd.f32 %v8666, %v8684
        %v8688 = vadd.f32 %v8667, %v8685
        %v8689 = vadd.f32 %v8668, %v8686
        %s8690 = scalar_lea.vmem %s1042, 12
        %v8691 = vld [vmem:[%s8690] sm:$0xf]
        %s8692 = scalar_lea.vmem %s1047, 12
        %v8693 = vld [vmem:[%s8692] sm:$0xf]
        %s8694 = scalar_lea.vmem %s1052, 60
        %v8695 = vld [vmem:[%s8694] sm:$0xf]
        %v8696 = vld [vmem:[%s8694 + $0x4] sm:$0xf]
        %v8697 = vld [vmem:[%s8694 + $0x8] sm:$0xf]
        %v8698 = vld [vmem:[%s8694 + $0xc] sm:$0xf]
        %v8699 = vld [vmem:[%s8694 + $0x10] sm:$0xf]
        %s8700 = scalar_lea.vmem %s1057, 48
        %v8701 = vld [vmem:[%s8700] sm:$0xf]
        %v8702 = vld [vmem:[%s8700 + $0x4] sm:$0xf]
        %v8703 = vld [vmem:[%s8700 + $0x8] sm:$0xf]
        %v8704 = vld [vmem:[%s8700 + $0xc] sm:$0xf]
        %s8705 = scalar_lea.vmem %s1061, 3
        %v8706 = vld [vmem:[%s8705] sm:$0x1]
        %v8707 = vpack.c.bf16 %v8640, %v8639
        %v8708 = vpack.c.bf16 %v8663, %v8641
        %v8709 = vpack.c.bf16 %v8665, %v8664
        %v8710 = vpack.c.bf16 %v8688, %v8687
        %v8711 = vpack.c.bf16 %v8689, %v8689
        %8717 = vrot.lane.b32.xlu0 %v8707, 96
        %v8718 = vpop.permute.xlu0 %8717
        %8719 = vrot.lane.b32.xlu0 %v8708, 96
        %v8720 = vpop.permute.xlu0 %8719
        %8721 = vrot.lane.b32.xlu0 %v8709, 96
        %v8722 = vpop.permute.xlu0 %8721
        %8723 = vrot.lane.b32.xlu0 %v8710, 96
        %v8724 = vpop.permute.xlu0 %8723
        %8725 = vrot.lane.b32.xlu0 %v8711, 96
        %v8726 = vpop.permute.xlu0 %8725
        %v8728 = vsel %vm5802, %v8718, 0
        %v8731 = vsel %vm5802, %v8720, 0
        %v8734 = vsel %vm5802, %v8722, 0
        %v8737 = vsel %vm5802, %v8724, 0
        %v8740 = vsel %vm5802, %v8726, 0
        %v8743 = vsel %vm1863, %v8691, 0
        %8745 = vmatprep.subr.bf16.mxu0 0
        %8746 = vmatpush1.bf16.msra.mxu0 %v8743
        %8747 = vmatprep.subr.bf16.mxu0 0
        %8748 = vmatpush1.bf16.msra.mxu0 0
        %8749 = vmatprep.subr.bf16.mxu0 0
        %8750 = vmatpush1.bf16.msra.mxu0 0
        %8751 = vmatprep.subr.bf16.mxu0 0
        %8752 = vmatpush1.bf16.msra.mxu0 0
        %8753 = vmatprep.subr.bf16.mxu0 0
        %8754 = vmatpush1.bf16.msra.mxu0 0
        %8755 = vmatprep.subr.bf16.mxu0 0
        %8756 = vmatpush1.bf16.msra.mxu0 0
        %8757 = vmatprep.subr.bf16.mxu0 0
        %8758 = vmatpush1.bf16.msra.mxu0 0
        %8759 = vmatprep.subr.bf16.mxu0 0
        %8760 = vmatpush1.bf16.msra.mxu0 0
        %8761 = vmatprep.subr.bf16.mxu0 0
        %8762 = vmatpush1.bf16.msra.mxu0 0
        %8763 = vmatprep.subr.bf16.mxu0 0
        %8764 = vmatpush1.bf16.msra.mxu0 0
        %8765 = vmatprep.subr.bf16.mxu0 0
        %8766 = vmatpush1.bf16.msra.mxu0 0
        %8767 = vmatprep.subr.bf16.mxu0 0
        %8768 = vmatpush1.bf16.msra.mxu0 0
        %8769 = vmatprep.subr.bf16.mxu0 0
        %8770 = vmatpush1.bf16.msra.mxu0 0
        %8771 = vmatprep.subr.bf16.mxu0 0
        %8772 = vmatpush1.bf16.msra.mxu0 0
        %8773 = vmatprep.subr.bf16.mxu0 0
        %8774 = vmatpush1.bf16.msra.mxu0 0
        %8775 = vmatprep.subr.bf16.mxu0 0
        %8776 = vmatpush1.bf16.msra.mxu0 0
        %8777 = vmatprep.mubr.bf16.mxu0 0
        %8778 = vmatmul.mubr.bf16.gmra.mrb[0].mxu0 %v8728
        %v8779 = vpop.f32.mrb[0].mxu0
        %v8780 = vadd.f32 0.0, %v8779
        %v8781 = vpop.f32.mrb[0].mxu0
        %v8782 = vpop.f32.mrb[0].mxu0
        %v8783 = vadd.f32 0.0, %v8782
        %v8784 = vpop.f32.mrb[0].mxu0
        %8785 = vmatprep.mubr.bf16.mxu0 0
        %8786 = vmatmul.mubr.bf16.gmra.mrb[0].mxu0 %v8731
        %v8787 = vpop.f32.mrb[0].mxu0
        %v8788 = vadd.f32 0.0, %v8787
        %v8789 = vpop.f32.mrb[0].mxu0
        %v8790 = vpop.f32.mrb[0].mxu0
        %v8791 = vadd.f32 0.0, %v8790
        %v8792 = vpop.f32.mrb[0].mxu0
        %8793 = vmatprep.mubr.bf16.mxu0 0
        %8794 = vmatmul.mubr.bf16.gmra.mrb[0].mxu0 %v8734
        %v8795 = vpop.f32.mrb[0].mxu0
        %v8796 = vadd.f32 0.0, %v8795
        %v8797 = vpop.f32.mrb[0].mxu0
        %v8798 = vpop.f32.mrb[0].mxu0
        %v8799 = vadd.f32 0.0, %v8798
        %v8800 = vpop.f32.mrb[0].mxu0
        %8801 = vmatprep.mubr.bf16.mxu0 0
        %8802 = vmatmul.mubr.bf16.gmra.mrb[0].mxu0 %v8737
        %v8803 = vpop.f32.mrb[0].mxu0
        %v8804 = vadd.f32 0.0, %v8803
        %v8805 = vpop.f32.mrb[0].mxu0
        %v8806 = vpop.f32.mrb[0].mxu0
        %v8807 = vadd.f32 0.0, %v8806
        %v8808 = vpop.f32.mrb[0].mxu0
        %8809 = vmatprep.mubr.bf16.mxu0 0
        %8810 = vmatmul.mubr.bf16.gmra.mrb[0].mxu0 %v8740
        %v8811 = vpop.f32.mrb[0].mxu0
        %v8812 = vadd.f32 0.0, %v8811
        %v8813 = vpop.f32.mrb[0].mxu0
        %v8814 = vpop.f32.mrb[0].mxu0
        %v8815 = vpop.f32.mrb[0].mxu0
        %8816 = vdwg.mxu0
        %v8817 = vmul.f32 %v8780, %v8780
        %v8818 = vmul.f32 %v8783, %v8783
        %v8819 = vmul.f32 %v8788, %v8788
        %v8820 = vmul.f32 %v8791, %v8791
        %v8821 = vmul.f32 %v8796, %v8796
        %v8822 = vmul.f32 %v8799, %v8799
        %v8823 = vadd.f32 %v8817, %v8820
        %v8824 = vadd.f32 %v8818, %v8821
        %v8825 = vadd.f32 %v8819, %v8822
        %v8826 = vmul.f32 %v8804, %v8804
        %v8827 = vmul.f32 %v8807, %v8807
        %v8828 = vmul.f32 %v8812, %v8812
        %v8829 = vadd.f32 %v8823, %v8826
        %v8830 = vadd.f32 %v8824, %v8827
        %v8831 = vadd.f32 %v8825, %v8828
        %v8832 = vrsqrt.pop %v8829
        %v8833 = vmul.f32 %v8829, %v8832
        %vm8834 = vcmp.eq.f32.partialorder %v8829, inf
        %v8835 = vsel %vm8834, %v8829, %v8833
        %vm8836 = vcmp.eq.f32.partialorder %v8829, 0.0
        %v8837 = vand.u32 %v8829, 2147483648
        %v8838 = vsel %vm8836, %v8837, %v8835
        %v8839 = vrsqrt.pop %v8830
        %v8840 = vmul.f32 %v8830, %v8839
        %vm8841 = vcmp.eq.f32.partialorder %v8830, inf
        %v8842 = vsel %vm8841, %v8830, %v8840
        %vm8843 = vcmp.eq.f32.partialorder %v8830, 0.0
        %v8844 = vand.u32 %v8830, 2147483648
        %v8845 = vsel %vm8843, %v8844, %v8842
        %v8846 = vrsqrt.pop %v8831
        %v8847 = vmul.f32 %v8831, %v8846
        %vm8848 = vcmp.eq.f32.partialorder %v8831, inf
        %v8849 = vsel %vm8848, %v8831, %v8847
        %vm8850 = vcmp.eq.f32.partialorder %v8831, 0.0
        %v8851 = vand.u32 %v8831, 2147483648
        %v8852 = vsel %vm8850, %v8851, %v8849
        %8856 = vrot.lane.b32.xlu0 %v8406, 8
        %v8857 = vpop.permute.xlu0 %8856
        %8858 = vrot.lane.b32.xlu0 %v8407, 8
        %v8859 = vpop.permute.xlu0 %8858
        %8860 = vrot.lane.b32.xlu0 %v8408, 8
        %v8861 = vpop.permute.xlu0 %8860
        %v8865 = vsel %vm5802, %v8838, %v8857
        %v8866 = vsel %vm5802, %v8845, %v8859
        %v8867 = vsel %vm5802, %v8852, %v8861
        %v8868 = vpack.c.bf16 %v8866, %v8865
        %v8869 = vpack.c.bf16 %v8867, %v8867
        %v8875 = vunpack.c.l.b16 %v8695
        %v8876 = vunpack.c.l.b16 %v8696
        %v8877 = vunpack.c.l.b16 %v8697
        %v8878 = vunpack.c.l.b16 %v8698
        %v8879 = vunpack.c.l.b16 %v8699
        %v8880 = vpack.c.b16 %v8876, %v8875
        %v8881 = vpack.c.b16 %v8878, %v8877
        %v8882 = vpack.c.b16 %v8879, %v8879
        %v8886 = vsel %vm6398, %v8868, 0
        %v8889 = vsel %vm6398, %v8869, 0
        %v8892 = vsel %vm1863, %v8882, 0
        %8894 = vmatprep.subr.bf16.mxu0 0
        %8895 = vmatpush1.bf16.msra.mxu0 %v8880
        %8896 = vmatprep.subr.bf16.mxu0 0
        %8897 = vmatpush1.bf16.msra.mxu0 %v8881
        %8898 = vmatprep.subr.bf16.mxu0 0
        %8899 = vmatpush1.bf16.msra.mxu0 %v8892
        %8900 = vmatprep.subr.bf16.mxu0 0
        %8901 = vmatpush1.bf16.msra.mxu0 0
        %8902 = vmatprep.subr.bf16.mxu0 0
        %8903 = vmatpush1.bf16.msra.mxu0 0
        %8904 = vmatprep.subr.bf16.mxu0 0
        %8905 = vmatpush1.bf16.msra.mxu0 0
        %8906 = vmatprep.subr.bf16.mxu0 0
        %8907 = vmatpush1.bf16.msra.mxu0 0
        %8908 = vmatprep.subr.bf16.mxu0 0
        %8909 = vmatpush1.bf16.msra.mxu0 0
        %8910 = vmatprep.subr.bf16.mxu0 0
        %8911 = vmatpush1.bf16.msra.mxu0 0
        %8912 = vmatprep.subr.bf16.mxu0 0
        %8913 = vmatpush1.bf16.msra.mxu0 0
        %8914 = vmatprep.subr.bf16.mxu0 0
        %8915 = vmatpush1.bf16.msra.mxu0 0
        %8916 = vmatprep.subr.bf16.mxu0 0
        %8917 = vmatpush1.bf16.msra.mxu0 0
        %8918 = vmatprep.subr.bf16.mxu0 0
        %8919 = vmatpush1.bf16.msra.mxu0 0
        %8920 = vmatprep.subr.bf16.mxu0 0
        %8921 = vmatpush1.bf16.msra.mxu0 0
        %8922 = vmatprep.subr.bf16.mxu0 0
        %8923 = vmatpush1.bf16.msra.mxu0 0
        %8924 = vmatprep.subr.bf16.mxu0 0
        %8925 = vmatpush1.bf16.msra.mxu0 0
        %8926 = vmatprep.mubr.bf16.mxu0 0
        %8927 = vmatmul.mubr.bf16.gmra.mrb[0].mxu0 %v8886
        %v8928 = vpop.f32.mrb[0].mxu0
        %v8929 = vadd.f32 0.0, %v8928
        %v8930 = vpop.f32.mrb[0].mxu0
        %v8931 = vpop.f32.mrb[0].mxu0
        %v8932 = vadd.f32 0.0, %v8931
        %v8933 = vpop.f32.mrb[0].mxu0
        %8934 = vmatprep.mubr.bf16.mxu0 0
        %8935 = vmatmul.mubr.bf16.gmra.mrb[0].mxu0 %v8889
        %v8936 = vpop.f32.mrb[0].mxu0
        %v8937 = vadd.f32 0.0, %v8936
        %v8938 = vpop.f32.mrb[0].mxu0
        %v8939 = vpop.f32.mrb[0].mxu0
        %v8940 = vpop.f32.mrb[0].mxu0
        %8941 = vdwg.mxu0
        %v8942 = vpack.c.bf16 %v8932, %v8929
        %v8943 = vpack.c.bf16 %v8937, %v8937
        %v8945 = vlaneseq
        %v8946 = vshrl.u32 %v8945, 7
        %v8947 = vsub.s32 0, %v8946
        %v8948 = vrot.slane %v8706, %v8947
        %v8954 = vunpack.c.l.b16 %v8701
        %v8955 = vunpack.c.l.b16 %v8702
        %v8956 = vunpack.c.l.b16 %v8703
        %v8957 = vunpack.c.l.b16 %v8704
        %v8958 = vpack.c.b16 %v8955, %v8954
        %v8959 = vpack.c.b16 %v8957, %v8956
        %v8963 = vsel %vm2842, %v8942, 0
        %v8966 = vsel %vm2842, %v8943, 0
        %8968 = vmatprep.subr.bf16.mxu0 0
        %8969 = vmatpush1.bf16.msra.mxu0 %v8958
        %8970 = vmatprep.subr.bf16.mxu0 0
        %8971 = vmatpush1.bf16.msra.mxu0 %v8959
        %8972 = vmatprep.subr.bf16.mxu0 0
        %8973 = vmatpush1.bf16.msra.mxu0 0
        %8974 = vmatprep.subr.bf16.mxu0 0
        %8975 = vmatpush1.bf16.msra.mxu0 0
        %8976 = vmatprep.subr.bf16.mxu0 0
        %8977 = vmatpush1.bf16.msra.mxu0 0
        %8978 = vmatprep.subr.bf16.mxu0 0
        %8979 = vmatpush1.bf16.msra.mxu0 0
        %8980 = vmatprep.subr.bf16.mxu0 0
        %8981 = vmatpush1.bf16.msra.mxu0 0
        %8982 = vmatprep.subr.bf16.mxu0 0
        %8983 = vmatpush1.bf16.msra.mxu0 0
        %8984 = vmatprep.subr.bf16.mxu0 0
        %8985 = vmatpush1.bf16.msra.mxu0 0
        %8986 = vmatprep.subr.bf16.mxu0 0
        %8987 = vmatpush1.bf16.msra.mxu0 0
        %8988 = vmatprep.subr.bf16.mxu0 0
        %8989 = vmatpush1.bf16.msra.mxu0 0
        %8990 = vmatprep.subr.bf16.mxu0 0
        %8991 = vmatpush1.bf16.msra.mxu0 0
        %8992 = vmatprep.subr.bf16.mxu0 0
        %8993 = vmatpush1.bf16.msra.mxu0 0
        %8994 = vmatprep.subr.bf16.mxu0 0
        %8995 = vmatpush1.bf16.msra.mxu0 0
        %8996 = vmatprep.subr.bf16.mxu0 0
        %8997 = vmatpush1.bf16.msra.mxu0 0
        %8998 = vmatprep.subr.bf16.mxu0 0
        %8999 = vmatpush1.bf16.msra.mxu0 0
        %9000 = vmatprep.mubr.bf16.mxu0 0
        %9001 = vmatmul.mubr.bf16.gmra.mrb[0].mxu0 %v8963
        %v9002 = vpop.f32.mrb[0].mxu0
        %v9003 = vadd.f32 %v8948, %v9002
        %v9004 = vpop.f32.mrb[0].mxu0
        %v9005 = vpop.f32.mrb[0].mxu0
        %v9006 = vadd.f32 %v8948, %v9005
        %v9007 = vpop.f32.mrb[0].mxu0
        %9008 = vmatprep.mubr.bf16.mxu0 0
        %9009 = vmatmul.mubr.bf16.gmra.mrb[0].mxu0 %v8966
        %v9010 = vpop.f32.mrb[0].mxu0
        %v9011 = vadd.f32 %v8948, %v9010
        %v9012 = vpop.f32.mrb[0].mxu0
        %v9013 = vpop.f32.mrb[0].mxu0
        %v9014 = vpop.f32.mrb[0].mxu0
        %9015 = vdwg.mxu0
        %v9016 = vxor.u32 %v9003, 2147483648
        %v9017 = vxor.u32 %v9006, 2147483648
        %v9018 = vxor.u32 %v9011, 2147483648
        %v9019 = vmul.f32 %v9016, 1.442695
        %v9020 = vpow.pop %v9019
        %v9021 = vmul.f32 %v9017, 1.442695
        %v9022 = vpow.pop %v9021
        %v9023 = vmul.f32 %v9018, 1.442695
        %v9024 = vpow.pop %v9023
        %v9025 = vadd.f32 %v9020, 1.0
        %v9026 = vadd.f32 %v9022, 1.0
        %v9027 = vadd.f32 %v9024, 1.0
        %v9028 = vrcp.pop %v9025
        %v9029 = vmul.f32 1.0, %v9028
        %v9030 = vrcp.pop %v9026
        %v9031 = vmul.f32 1.0, %v9030
        %v9032 = vrcp.pop %v9027
        %v9033 = vmul.f32 1.0, %v9032
        %v9034 = vpack.c.bf16 %v8783, %v8780
        %v9035 = vpack.c.bf16 %v8791, %v8788
        %v9036 = vpack.c.bf16 %v8799, %v8796
        %v9037 = vpack.c.bf16 %v8807, %v8804
        %v9038 = vpack.c.bf16 %v8812, %v8812
        %v9040 = vsel %vm5802, %v9034, 0
        %v9043 = vsel %vm5802, %v9035, 0
        %v9046 = vsel %vm5802, %v9036, 0
        %v9049 = vsel %vm5802, %v9037, 0
        %v9052 = vsel %vm5802, %v9038, 0
        %v9055 = vsel %vm1863, %v8693, 0
        %9057 = vmatprep.subr.bf16.mxu0 0
        %9058 = vmatpush1.bf16.msra.mxu0 %v9055
        %9059 = vmatprep.subr.bf16.mxu0 0
        %9060 = vmatpush1.bf16.msra.mxu0 0
        %9061 = vmatprep.subr.bf16.mxu0 0
        %9062 = vmatpush1.bf16.msra.mxu0 0
        %9063 = vmatprep.subr.bf16.mxu0 0
        %9064 = vmatpush1.bf16.msra.mxu0 0
        %9065 = vmatprep.subr.bf16.mxu0 0
        %9066 = vmatpush1.bf16.msra.mxu0 0
        %9067 = vmatprep.subr.bf16.mxu0 0
        %9068 = vmatpush1.bf16.msra.mxu0 0
        %9069 = vmatprep.subr.bf16.mxu0 0
        %9070 = vmatpush1.bf16.msra.mxu0 0
        %9071 = vmatprep.subr.bf16.mxu0 0
        %9072 = vmatpush1.bf16.msra.mxu0 0
        %9073 = vmatprep.subr.bf16.mxu0 0
        %9074 = vmatpush1.bf16.msra.mxu0 0
        %9075 = vmatprep.subr.bf16.mxu0 0
        %9076 = vmatpush1.bf16.msra.mxu0 0
        %9077 = vmatprep.subr.bf16.mxu0 0
        %9078 = vmatpush1.bf16.msra.mxu0 0
        %9079 = vmatprep.subr.bf16.mxu0 0
        %9080 = vmatpush1.bf16.msra.mxu0 0
        %9081 = vmatprep.subr.bf16.mxu0 0
        %9082 = vmatpush1.bf16.msra.mxu0 0
        %9083 = vmatprep.subr.bf16.mxu0 0
        %9084 = vmatpush1.bf16.msra.mxu0 0
        %9085 = vmatprep.subr.bf16.mxu0 0
        %9086 = vmatpush1.bf16.msra.mxu0 0
        %9087 = vmatprep.subr.bf16.mxu0 0
        %9088 = vmatpush1.bf16.msra.mxu0 0
        %9089 = vmatprep.mubr.bf16.mxu0 0
        %9090 = vmatmul.mubr.bf16.gmra.mrb[0].mxu0 %v9040
        %v9091 = vpop.f32.mrb[0].mxu0
        %v9092 = vadd.f32 0.0, %v9091
        %v9093 = vpop.f32.mrb[0].mxu0
        %v9094 = vpop.f32.mrb[0].mxu0
        %v9095 = vadd.f32 0.0, %v9094
        %v9096 = vpop.f32.mrb[0].mxu0
        %9097 = vmatprep.mubr.bf16.mxu0 0
        %9098 = vmatmul.mubr.bf16.gmra.mrb[0].mxu0 %v9043
        %v9099 = vpop.f32.mrb[0].mxu0
        %v9100 = vadd.f32 0.0, %v9099
        %v9101 = vpop.f32.mrb[0].mxu0
        %v9102 = vpop.f32.mrb[0].mxu0
        %v9103 = vadd.f32 0.0, %v9102
        %v9104 = vpop.f32.mrb[0].mxu0
        %9105 = vmatprep.mubr.bf16.mxu0 0
        %9106 = vmatmul.mubr.bf16.gmra.mrb[0].mxu0 %v9046
        %v9107 = vpop.f32.mrb[0].mxu0
        %v9108 = vadd.f32 0.0, %v9107
        %v9109 = vpop.f32.mrb[0].mxu0
        %v9110 = vpop.f32.mrb[0].mxu0
        %v9111 = vadd.f32 0.0, %v9110
        %v9112 = vpop.f32.mrb[0].mxu0
        %9113 = vmatprep.mubr.bf16.mxu0 0
        %9114 = vmatmul.mubr.bf16.gmra.mrb[0].mxu0 %v9049
        %v9115 = vpop.f32.mrb[0].mxu0
        %v9116 = vadd.f32 0.0, %v9115
        %v9117 = vpop.f32.mrb[0].mxu0
        %v9118 = vpop.f32.mrb[0].mxu0
        %v9119 = vadd.f32 0.0, %v9118
        %v9120 = vpop.f32.mrb[0].mxu0
        %9121 = vmatprep.mubr.bf16.mxu0 0
        %9122 = vmatmul.mubr.bf16.gmra.mrb[0].mxu0 %v9052
        %v9123 = vpop.f32.mrb[0].mxu0
        %v9124 = vadd.f32 0.0, %v9123
        %v9125 = vpop.f32.mrb[0].mxu0
        %v9126 = vpop.f32.mrb[0].mxu0
        %v9127 = vpop.f32.mrb[0].mxu0
        %9128 = vdwg.mxu0
        %v9129 = vmul.f32 %v9092, %v9029
        %v9130 = vmul.f32 %v9095, %v9031
        %v9131 = vmul.f32 %v9100, %v9033
        %v9132 = vmul.f32 %v9103, %v9029
        %v9133 = vmul.f32 %v9108, %v9031
        %v9134 = vmul.f32 %v9111, %v9033
        %v9135 = vmul.f32 %v9116, %v9029
        %v9136 = vmul.f32 %v9119, %v9031
        %v9137 = vmul.f32 %v9124, %v9033
        %v9138 = vadd.f32 %v7597, %v8929
        %v9139 = vadd.f32 %v7598, %v8932
        %v9140 = vadd.f32 %v7599, %v8937
        %9141 = vst.msk [vmem:[#allocation2] sm:$0xff] %vm2842, %v9138
        %9142 = vst.msk [vmem:[#allocation2 + $0x8] sm:$0xff] %vm2842, %v9139
        %9143 = vst.msk [vmem:[#allocation2 + $0x10] sm:$0xff] %vm2842, %v9140
        %v9144 = vadd.f32 %v7600, %v9129
        %v9145 = vadd.f32 %v7601, %v9130
        %v9146 = vadd.f32 %v7602, %v9131
        %v9147 = vadd.f32 %v7603, %v9132
        %v9148 = vadd.f32 %v7604, %v9133
        %v9149 = vadd.f32 %v7605, %v9134
        %v9150 = vadd.f32 %v7606, %v9135
        %v9151 = vadd.f32 %v7607, %v9136
        %v9152 = vadd.f32 %v7608, %v9137
        %9153 = vst.msk [vmem:[#allocation3] sm:$0xff] %vm5802, %v9144
        %9154 = vst.msk [vmem:[#allocation3 + $0x8] sm:$0xff] %vm5802, %v9145
        %9155 = vst.msk [vmem:[#allocation3 + $0x10] sm:$0xff] %vm5802, %v9146
        %9156 = vst.msk [vmem:[#allocation3 + $0x18] sm:$0xff] %vm5802, %v9147
        %9157 = vst.msk [vmem:[#allocation3 + $0x20] sm:$0xff] %vm5802, %v9148
        %9158 = vst.msk [vmem:[#allocation3 + $0x28] sm:$0xff] %vm5802, %v9149
        %9159 = vst.msk [vmem:[#allocation3 + $0x30] sm:$0xff] %vm5802, %v9150
        %9160 = vst.msk [vmem:[#allocation3 + $0x38] sm:$0xff] %vm5802, %v9151
        %9161 = vst.msk [vmem:[#allocation3 + $0x40] sm:$0xff] %vm5802, %v9152
      $region128: #{context_encoder_forward.1} parent=115 // pred_fallthru
        _
      %p9162 = scmp.eq.s32.totalorder %s39, 1
      %p9163 = pnand %p9162, %p7593
      %p9164 = pneg %p9163
      // Predicated region
      $region129: #{context_encoder_forward.1} parent=115 // pred_check
        _
      $region130: #{context_encoder_forward.1} parent=115 // pred_check_branch
        %9166 = sbr.rel (%p9163) target = $region132
      $region131: #{context_encoder_forward.1} parent=115 // pred_region
        %v9167 = vld [vmem:[#allocation3] sm:$0xff]
        %v9168 = vld [vmem:[#allocation3 + $0x8] sm:$0xff]
        %v9169 = vld [vmem:[#allocation3 + $0x10] sm:$0xff]
        %v9170 = vld [vmem:[#allocation3 + $0x18] sm:$0xff]
        %v9171 = vld [vmem:[#allocation3 + $0x20] sm:$0xff]
        %v9172 = vld [vmem:[#allocation3 + $0x28] sm:$0xff]
        %v9173 = vld [vmem:[#allocation3 + $0x30] sm:$0xff]
        %v9174 = vld [vmem:[#allocation3 + $0x38] sm:$0xff]
        %v9175 = vld [vmem:[#allocation3 + $0x40] sm:$0xff]
        %v9176 = vld [vmem:[#allocation2] sm:$0xff]
        %v9177 = vld [vmem:[#allocation2 + $0x8] sm:$0xff]
        %v9178 = vld [vmem:[#allocation2 + $0x10] sm:$0xff]
        %9182 = vrot.lane.b32.xlu0 %v9167, 32
        %v9183 = vpop.permute.xlu0 %9182
        %9184 = vrot.lane.b32.xlu0 %v9168, 32
        %v9185 = vpop.permute.xlu0 %9184
        %9186 = vrot.lane.b32.xlu0 %v9169, 32
        %v9187 = vpop.permute.xlu0 %9186
        %9194 = vrot.lane.b32.xlu0 %v9170, 40
        %v9195 = vpop.permute.xlu0 %9194
        %9196 = vrot.lane.b32.xlu0 %v9171, 40
        %v9197 = vpop.permute.xlu0 %9196
        %9198 = vrot.lane.b32.xlu0 %v9172, 40
        %v9199 = vpop.permute.xlu0 %9198
        %9206 = vrot.lane.b32.xlu0 %v9173, 48
        %v9207 = vpop.permute.xlu0 %9206
        %9208 = vrot.lane.b32.xlu0 %v9174, 48
        %v9209 = vpop.permute.xlu0 %9208
        %9210 = vrot.lane.b32.xlu0 %v9175, 48
        %v9211 = vpop.permute.xlu0 %9210
        %v9215 = vsel %vm2842, %v9176, %v9183
        %v9216 = vsel %vm2842, %v9177, %v9185
        %v9217 = vsel %vm2842, %v9178, %v9187
        %v9218 = vsel %vm6398, %v9215, %v9195
        %v9219 = vsel %vm6398, %v9216, %v9197
        %v9220 = vsel %vm6398, %v9217, %v9199
        %v9221 = vsel %vm7490, %v9218, %v9207
        %v9222 = vsel %vm7490, %v9219, %v9209
        %v9223 = vsel %vm7490, %v9220, %v9211
        %9224 = vst.msk [vmem:[%s24] sm:$0xff] %vm7589, %v9221
        %9225 = vst.msk [vmem:[%s24 + $0x8] sm:$0xff] %vm7589, %v9222
        %9226 = vst.msk [vmem:[%s24 + $0x10] sm:$0xff] %vm7589, %v9223
      $region132: #{context_encoder_forward.1} parent=115 // pred_fallthru
        _
      // Predicated region
      $region133: #{context_encoder_forward.1} parent=115 // pred_check
        %p9227 = pneg %p679
      $region134: #{context_encoder_forward.1} parent=115 // pred_check_branch
        %9229 = sbr.rel (%p9227) target = $region136
      $region135: #{context_encoder_forward.1} parent=115 // pred_region
        _
      $region136: #{context_encoder_forward.1} parent=115 // pred_fallthru
        _
      // Predicated region
      $region137: #{context_encoder_forward.1} parent=115 // pred_check
        %p9230 = pneg %p679
      $region138: #{context_encoder_forward.1} parent=115 // pred_check_branch
        %9232 = sbr.rel (%p9230) target = $region140
      $region139: #{context_encoder_forward.1} parent=115 // pred_region
        _
      $region140: #{context_encoder_forward.1} parent=115 // pred_fallthru
        _
    $region116: #{context_encoder_forward.1} parent=5 // pred_fallthru
      _
    %p9233 = scmp.le.s32.totalorder 2, %s30
    // Predicated region
    $region141: #{context_encoder_forward.1} parent=5 // pred_check
      %p9234 = pneg %p9233
    $region142: #{context_encoder_forward.1} parent=5 // pred_check_branch
      %9236 = sbr.rel (%p9234) target = $region144
    $region143: #{context_encoder_forward.1} parent=5 // pred_region
      %s9237 = ssub.s32 %s30, 2
    $region144: #{context_encoder_forward.1} parent=5 // pred_fallthru
      _
  $region6: #{context_encoder_forward.1} parent=0 // loop_footer
    %s34 = sadd.s32 1, %s30
  $region7: #{context_encoder_forward.1} parent=0 // loop_footer_branch
    %29 = sbr.rel target = $region3
  $region8: #{context_encoder_forward.1} parent=0 // loop_exit
    _

</llo_original>
